<compile_context>
chip_gen: v7x
topology: tpu7x:2x2x1
jax: 0.10.0
libtpu: 0.0.40
codegen_flags: <defaults>
</compile_context>

<pallas_src>
import jax
import jax.numpy as jnp
from jax.experimental import pallas as pl
from jax.experimental.pallas import tpu as pltpu


def reviewer_kernel(ids_ref, emb_hbm, wih_ref, whh_ref, b_ref,
                    whead_ref, bhead_ref, out_ref, xbuf, sem):
    """Fused embedding-gather + LSTM + mean-pool + fused-head.

    ids_ref   : (T*Bp,) int32 in SMEM, time-major padded token ids (row = t*Bp + b)
    emb_hbm   : (vocab, D) f32 embedding table left in HBM (pl.ANY)
    wih_ref   : (D, 4D) bf16 input->gates weight, gate order (i, f, o, g)
    whh_ref   : (D, 4D) bf16 hidden->gates weight, gate order (i, f, o, g)
    b_ref     : (1, 4D) f32 combined bias (b_ih + b_hh), gate order (i, f, o, g)
    whead_ref : (1, D) f32 fused head weight  (w2 @ w1)
    bhead_ref : (1, 1) f32 fused head bias    (w2 @ b1 + b2)
    out_ref   : (Bp, 1) f32
    xbuf      : (T*Bp, D) f32 VMEM scratch for gathered embeddings
    sem       : (8,) DMA semaphores for the gather
    """
    TBp, D = xbuf.shape
    Bp = out_ref.shape[0]
    T = TBp // Bp
    NSEM = sem.shape[0]

    # ---- In-kernel embedding gather: one row DMA per (t, b) token, table in HBM.
    copies = []
    for r in range(TBp):
        cp = pltpu.make_async_copy(
            emb_hbm.at[pl.ds(ids_ref[r], 1)],    # (1, D) row of the HBM table
            xbuf.at[pl.ds(r, 1)],                # (1, D) row of VMEM scratch
            sem.at[r % NSEM])
        cp.start()
        copies.append(cp)
    for cp in copies:
        cp.wait()

    # ---- Hoisted input projection: all timesteps' pre-gates in one MXU matmul.
    x_bf = xbuf[...].astype(jnp.bfloat16)
    pregates = (jnp.dot(x_bf, wih_ref[...], preferred_element_type=jnp.float32)
                + b_ref[...])                                     # (T*Bp, 4D) f32

    whh = whh_ref[...]                                            # (D, 4D) bf16

    # ---- Recurrence: state carried in vregs, loop fully unrolled (T static, small).
    h = jnp.zeros((Bp, D), jnp.float32)
    c = jnp.zeros((Bp, D), jnp.float32)
    s = jnp.zeros((Bp, D), jnp.float32)

    # TODO(synk): at larger T switch to lax.fori_loop(unroll=2..4) with (h, c, s)
    # carries, or a T grid ("arbitrary") with scratch-carried state + a "parallel"
    # batch axis for v7x's two TensorCores; re-derive block sizes / vmem_limit_bytes
    # for v7x's 64 MiB VMEM when gridding.
    for t in range(T):
        gates = (pregates[t * Bp:(t + 1) * Bp, :]                 # (8,128)-aligned slice
                 + jnp.dot(h.astype(jnp.bfloat16), whh,
                           preferred_element_type=jnp.float32))   # (Bp, 4D) f32
        # Gate order (i, f, o, g): sigmoid over first 3D lanes, tanh over last D.
        sig = jax.nn.sigmoid(gates[:, :3 * D])
        g_g = jnp.tanh(gates[:, 3 * D:])
        i_g = sig[:, 0 * D:1 * D]
        f_g = sig[:, 1 * D:2 * D]
        o_g = sig[:, 2 * D:3 * D]
        c = f_g * c + i_g * g_g
        h = o_g * jnp.tanh(c)
        s = s + h

    # ---- Mean pool over time + fused head (Linear -> Dropout(eval) -> Linear).
    mean = s * (1.0 / T)                                          # (Bp, D)
    lin = jnp.sum(mean * whead_ref[...], axis=-1, keepdims=True) + bhead_ref[...]
    # TODO(synk): at production batch sizes emit a lane-dense (1, B) output instead
    # of this last-dim-1 masked store.
    out_ref[...] = jax.nn.sigmoid(lin)


def reviewer_forward(token_ids, params):
    """token_ids: (B, T) int32 -> (B, 1) float32 (eval / inference semantics)."""
    B, T = token_ids.shape
    D = params["emb"].shape[1]
    Bp = ((B + 7) // 8) * 8          # pad batch up to a sublane multiple

    # Time-major padded ids (row r = t*Bp + b); padded lanes use token 0 and are
    # computed but sliced off on output (batch entries are independent).
    ids_tb = jnp.transpose(token_ids).astype(jnp.int32)           # (T, B)
    ids_tb = jnp.pad(ids_tb, ((0, 0), (0, Bp - B)))               # (T, Bp)
    ids_flat = ids_tb.reshape(-1)                                 # (T*Bp,)

    vspec = pl.BlockSpec(memory_space=pltpu.MemorySpace.VMEM)

    out = pl.pallas_call(
        reviewer_kernel,
        out_shape=jax.ShapeDtypeStruct((Bp, 1), jnp.float32),
        in_specs=[
            pl.BlockSpec(memory_space=pltpu.MemorySpace.SMEM),    # token ids (scalars)
            pl.BlockSpec(memory_space=pl.ANY),                    # emb table stays in HBM
            vspec, vspec, vspec, vspec, vspec,
        ],
        out_specs=vspec,
        scratch_shapes=[
            pltpu.VMEM((T * Bp, D), jnp.float32),                 # gathered embeddings
            pltpu.SemaphoreType.DMA((8,)),                        # gather DMA sems
        ],
    )(
        ids_flat, params["emb"],
        params["wih_t"], params["whh_t"], params["b_lstm"],
        params["w_head"], params["b_head"],
    )
    return out[:B]


def init_params(vocab, dim, hidden=128):
    """Deterministic synthetic parameters (shapes match the torch module),
    pre-transformed for the kernel: transposed, gate-reordered, bf16 MXU weights,
    and the two head Linears folded (eval-only transform, Dropout == identity)."""
    key = jax.random.PRNGKey(0)
    ks = jax.random.split(key, 8)
    s = 0.1
    emb  = s * jax.random.normal(ks[0], (vocab, dim), jnp.float32)
    w_ih = s * jax.random.normal(ks[1], (4 * dim, dim), jnp.float32)   # torch (4D, D)
    w_hh = s * jax.random.normal(ks[2], (4 * dim, dim), jnp.float32)
    b_ih = s * jax.random.normal(ks[3], (4 * dim,), jnp.float32)
    b_hh = s * jax.random.normal(ks[4], (4 * dim,), jnp.float32)
    w1   = s * jax.random.normal(ks[5], (hidden, dim), jnp.float32)    # torch (128, D)
    b1   = s * jax.random.normal(ks[6], (hidden,), jnp.float32)
    w2   = s * jax.random.normal(ks[7], (1, hidden), jnp.float32)      # torch (1, 128)
    b2   = jnp.zeros((1,), jnp.float32)

    def reorder_gates(m):  # last axis 4D in torch order (i,f,g,o) -> (i,f,o,g)
        i, f, g, o = jnp.split(m, 4, axis=-1)
        return jnp.concatenate([i, f, o, g], axis=-1)

    wih_t  = reorder_gates(jnp.transpose(w_ih)).astype(jnp.bfloat16)   # (D, 4D) bf16
    whh_t  = reorder_gates(jnp.transpose(w_hh)).astype(jnp.bfloat16)   # (D, 4D) bf16
    b_lstm = reorder_gates((b_ih + b_hh).reshape(1, 4 * dim))          # (1, 4D) f32

    # Fused head: lin2(drop(lin1(mean))) == mean @ (w2 @ w1)^T + (w2 @ b1 + b2).
    w_head = (w2 @ w1)                                                 # (1, D) f32
    b_head = (w2 @ b1 + b2).reshape(1, 1)                              # (1, 1) f32

    return {
        "emb": emb,
        "wih_t": wih_t,
        "whh_t": whh_t,
        "b_lstm": b_lstm,
        "w_head": w_head,
        "b_head": b_head,
    }


if __name__ == "__main__":
    VOCAB, DIM = 64, 32
    B, T = 2, 8

    params = init_params(VOCAB, DIM)
    token_ids = jax.random.randint(jax.random.PRNGKey(0), (B, T), 0, VOCAB,
                                   dtype=jnp.int32)

    out = reviewer_forward(token_ids, params)
    out = jax.block_until_ready(out)
    assert out.shape == (B, 1)
    assert bool(jnp.all((out >= 0.0) & (out <= 1.0)))
    print("KERNEL_OK")
</pallas_src>

<mosaic_0001>
module attributes {stable_mosaic.version = 11 : i64} {
  func.func @reviewer_kernel(%arg0: memref<64xi32, #tpu.memory_space<smem>>, %arg1: memref<64x32xf32, #tpu.memory_space<any>>, %arg2: memref<32x128xbf16, #tpu.memory_space<vmem>>, %arg3: memref<32x128xbf16, #tpu.memory_space<vmem>>, %arg4: memref<1x128xf32, #tpu.memory_space<vmem>>, %arg5: memref<1x32xf32, #tpu.memory_space<vmem>>, %arg6: memref<1x1xf32, #tpu.memory_space<vmem>>, %arg7: memref<8x1xf32, #tpu.memory_space<vmem>>, %arg8: memref<64x32xf32, #tpu.memory_space<vmem>>, %arg9: memref<8x!tpu.dma_semaphore, #tpu.memory_space<semaphore_mem>>) attributes {dimension_semantics = [], scalar_prefetch = 0 : i64, scratch_operands = 2 : i64, tpu.core_type = #tpu.core_type<tc>} {
    %c0 = arith.constant 0 : index
    %0 = memref.load %arg0[%c0] : memref<64xi32, #tpu.memory_space<smem>>
    %c0_i32 = arith.constant 0 : i32
    %c0_i32_0 = arith.constant 0 : i32
    %1 = tpu.memref_slice %arg1[%0, %c0_i32_0] : memref<64x32xf32, #tpu.memory_space<any>> -> memref<1x32xf32, #tpu.memory_space<any>>
    %c0_i32_1 = arith.constant 0 : i32
    %c0_i32_2 = arith.constant 0 : i32
    %2 = tpu.memref_slice %arg8[%c0_i32_1, %c0_i32_2] : memref<64x32xf32, #tpu.memory_space<vmem>> -> memref<1x32xf32, #tpu.memory_space<vmem>>
    %3 = tpu.memref_slice %arg9[%c0_i32] : memref<8x!tpu.dma_semaphore, #tpu.memory_space<semaphore_mem>> -> memref<1x!tpu.dma_semaphore, #tpu.memory_space<semaphore_mem>>
    %4 = tpu.memref_squeeze %3 : memref<1x!tpu.dma_semaphore, #tpu.memory_space<semaphore_mem>> -> memref<!tpu.dma_semaphore, #tpu.memory_space<semaphore_mem>>
    tpu.enqueue_dma source(%1 : memref<1x32xf32, #tpu.memory_space<any>>) target(%2 : memref<1x32xf32, #tpu.memory_space<vmem>>) target_semaphore(%4 : memref<!tpu.dma_semaphore, #tpu.memory_space<semaphore_mem>>)
    %c1 = arith.constant 1 : index
    %5 = memref.load %arg0[%c1] : memref<64xi32, #tpu.memory_space<smem>>
    %c1_i32 = arith.constant 1 : i32
    %c0_i32_3 = arith.constant 0 : i32
    %6 = tpu.memref_slice %arg1[%5, %c0_i32_3] : memref<64x32xf32, #tpu.memory_space<any>> -> memref<1x32xf32, #tpu.memory_space<any>>
    %c1_i32_4 = arith.constant 1 : i32
    %c0_i32_5 = arith.constant 0 : i32
    %7 = tpu.memref_slice %arg8[%c1_i32_4, %c0_i32_5] : memref<64x32xf32, #tpu.memory_space<vmem>> -> memref<1x32xf32, #tpu.memory_space<vmem>>
    %8 = tpu.memref_slice %arg9[%c1_i32] : memref<8x!tpu.dma_semaphore, #tpu.memory_space<semaphore_mem>> -> memref<1x!tpu.dma_semaphore, #tpu.memory_space<semaphore_mem>>
    %9 = tpu.memref_squeeze %8 : memref<1x!tpu.dma_semaphore, #tpu.memory_space<semaphore_mem>> -> memref<!tpu.dma_semaphore, #tpu.memory_space<semaphore_mem>>
    tpu.enqueue_dma source(%6 : memref<1x32xf32, #tpu.memory_space<any>>) target(%7 : memref<1x32xf32, #tpu.memory_space<vmem>>) target_semaphore(%9 : memref<!tpu.dma_semaphore, #tpu.memory_space<semaphore_mem>>)
    %c2 = arith.constant 2 : index
    %10 = memref.load %arg0[%c2] : memref<64xi32, #tpu.memory_space<smem>>
    %c2_i32 = arith.constant 2 : i32
    %c0_i32_6 = arith.constant 0 : i32
    %11 = tpu.memref_slice %arg1[%10, %c0_i32_6] : memref<64x32xf32, #tpu.memory_space<any>> -> memref<1x32xf32, #tpu.memory_space<any>>
    %c2_i32_7 = arith.constant 2 : i32
    %c0_i32_8 = arith.constant 0 : i32
    %12 = tpu.memref_slice %arg8[%c2_i32_7, %c0_i32_8] : memref<64x32xf32, #tpu.memory_space<vmem>> -> memref<1x32xf32, #tpu.memory_space<vmem>>
    %13 = tpu.memref_slice %arg9[%c2_i32] : memref<8x!tpu.dma_semaphore, #tpu.memory_space<semaphore_mem>> -> memref<1x!tpu.dma_semaphore, #tpu.memory_space<semaphore_mem>>
    %14 = tpu.memref_squeeze %13 : memref<1x!tpu.dma_semaphore, #tpu.memory_space<semaphore_mem>> -> memref<!tpu.dma_semaphore, #tpu.memory_space<semaphore_mem>>
    tpu.enqueue_dma source(%11 : memref<1x32xf32, #tpu.memory_space<any>>) target(%12 : memref<1x32xf32, #tpu.memory_space<vmem>>) target_semaphore(%14 : memref<!tpu.dma_semaphore, #tpu.memory_space<semaphore_mem>>)
    %c3 = arith.constant 3 : index
    %15 = memref.load %arg0[%c3] : memref<64xi32, #tpu.memory_space<smem>>
    %c3_i32 = arith.constant 3 : i32
    %c0_i32_9 = arith.constant 0 : i32
    %16 = tpu.memref_slice %arg1[%15, %c0_i32_9] : memref<64x32xf32, #tpu.memory_space<any>> -> memref<1x32xf32, #tpu.memory_space<any>>
    %c3_i32_10 = arith.constant 3 : i32
    %c0_i32_11 = arith.constant 0 : i32
    %17 = tpu.memref_slice %arg8[%c3_i32_10, %c0_i32_11] : memref<64x32xf32, #tpu.memory_space<vmem>> -> memref<1x32xf32, #tpu.memory_space<vmem>>
    %18 = tpu.memref_slice %arg9[%c3_i32] : memref<8x!tpu.dma_semaphore, #tpu.memory_space<semaphore_mem>> -> memref<1x!tpu.dma_semaphore, #tpu.memory_space<semaphore_mem>>
    %19 = tpu.memref_squeeze %18 : memref<1x!tpu.dma_semaphore, #tpu.memory_space<semaphore_mem>> -> memref<!tpu.dma_semaphore, #tpu.memory_space<semaphore_mem>>
    tpu.enqueue_dma source(%16 : memref<1x32xf32, #tpu.memory_space<any>>) target(%17 : memref<1x32xf32, #tpu.memory_space<vmem>>) target_semaphore(%19 : memref<!tpu.dma_semaphore, #tpu.memory_space<semaphore_mem>>)
    %c4 = arith.constant 4 : index
    %20 = memref.load %arg0[%c4] : memref<64xi32, #tpu.memory_space<smem>>
    %c4_i32 = arith.constant 4 : i32
    %c0_i32_12 = arith.constant 0 : i32
    %21 = tpu.memref_slice %arg1[%20, %c0_i32_12] : memref<64x32xf32, #tpu.memory_space<any>> -> memref<1x32xf32, #tpu.memory_space<any>>
    %c4_i32_13 = arith.constant 4 : i32
    %c0_i32_14 = arith.constant 0 : i32
    %22 = tpu.memref_slice %arg8[%c4_i32_13, %c0_i32_14] : memref<64x32xf32, #tpu.memory_space<vmem>> -> memref<1x32xf32, #tpu.memory_space<vmem>>
    %23 = tpu.memref_slice %arg9[%c4_i32] : memref<8x!tpu.dma_semaphore, #tpu.memory_space<semaphore_mem>> -> memref<1x!tpu.dma_semaphore, #tpu.memory_space<semaphore_mem>>
    %24 = tpu.memref_squeeze %23 : memref<1x!tpu.dma_semaphore, #tpu.memory_space<semaphore_mem>> -> memref<!tpu.dma_semaphore, #tpu.memory_space<semaphore_mem>>
    tpu.enqueue_dma source(%21 : memref<1x32xf32, #tpu.memory_space<any>>) target(%22 : memref<1x32xf32, #tpu.memory_space<vmem>>) target_semaphore(%24 : memref<!tpu.dma_semaphore, #tpu.memory_space<semaphore_mem>>)
    %c5 = arith.constant 5 : index
    %25 = memref.load %arg0[%c5] : memref<64xi32, #tpu.memory_space<smem>>
    %c5_i32 = arith.constant 5 : i32
    %c0_i32_15 = arith.constant 0 : i32
    %26 = tpu.memref_slice %arg1[%25, %c0_i32_15] : memref<64x32xf32, #tpu.memory_space<any>> -> memref<1x32xf32, #tpu.memory_space<any>>
    %c5_i32_16 = arith.constant 5 : i32
    %c0_i32_17 = arith.constant 0 : i32
    %27 = tpu.memref_slice %arg8[%c5_i32_16, %c0_i32_17] : memref<64x32xf32, #tpu.memory_space<vmem>> -> memref<1x32xf32, #tpu.memory_space<vmem>>
    %28 = tpu.memref_slice %arg9[%c5_i32] : memref<8x!tpu.dma_semaphore, #tpu.memory_space<semaphore_mem>> -> memref<1x!tpu.dma_semaphore, #tpu.memory_space<semaphore_mem>>
    %29 = tpu.memref_squeeze %28 : memref<1x!tpu.dma_semaphore, #tpu.memory_space<semaphore_mem>> -> memref<!tpu.dma_semaphore, #tpu.memory_space<semaphore_mem>>
    tpu.enqueue_dma source(%26 : memref<1x32xf32, #tpu.memory_space<any>>) target(%27 : memref<1x32xf32, #tpu.memory_space<vmem>>) target_semaphore(%29 : memref<!tpu.dma_semaphore, #tpu.memory_space<semaphore_mem>>)
    %c6 = arith.constant 6 : index
    %30 = memref.load %arg0[%c6] : memref<64xi32, #tpu.memory_space<smem>>
    %c6_i32 = arith.constant 6 : i32
    %c0_i32_18 = arith.constant 0 : i32
    %31 = tpu.memref_slice %arg1[%30, %c0_i32_18] : memref<64x32xf32, #tpu.memory_space<any>> -> memref<1x32xf32, #tpu.memory_space<any>>
    %c6_i32_19 = arith.constant 6 : i32
    %c0_i32_20 = arith.constant 0 : i32
    %32 = tpu.memref_slice %arg8[%c6_i32_19, %c0_i32_20] : memref<64x32xf32, #tpu.memory_space<vmem>> -> memref<1x32xf32, #tpu.memory_space<vmem>>
    %33 = tpu.memref_slice %arg9[%c6_i32] : memref<8x!tpu.dma_semaphore, #tpu.memory_space<semaphore_mem>> -> memref<1x!tpu.dma_semaphore, #tpu.memory_space<semaphore_mem>>
    %34 = tpu.memref_squeeze %33 : memref<1x!tpu.dma_semaphore, #tpu.memory_space<semaphore_mem>> -> memref<!tpu.dma_semaphore, #tpu.memory_space<semaphore_mem>>
    tpu.enqueue_dma source(%31 : memref<1x32xf32, #tpu.memory_space<any>>) target(%32 : memref<1x32xf32, #tpu.memory_space<vmem>>) target_semaphore(%34 : memref<!tpu.dma_semaphore, #tpu.memory_space<semaphore_mem>>)
    %c7 = arith.constant 7 : index
    %35 = memref.load %arg0[%c7] : memref<64xi32, #tpu.memory_space<smem>>
    %c7_i32 = arith.constant 7 : i32
    %c0_i32_21 = arith.constant 0 : i32
    %36 = tpu.memref_slice %arg1[%35, %c0_i32_21] : memref<64x32xf32, #tpu.memory_space<any>> -> memref<1x32xf32, #tpu.memory_space<any>>
    %c7_i32_22 = arith.constant 7 : i32
    %c0_i32_23 = arith.constant 0 : i32
    %37 = tpu.memref_slice %arg8[%c7_i32_22, %c0_i32_23] : memref<64x32xf32, #tpu.memory_space<vmem>> -> memref<1x32xf32, #tpu.memory_space<vmem>>
    %38 = tpu.memref_slice %arg9[%c7_i32] : memref<8x!tpu.dma_semaphore, #tpu.memory_space<semaphore_mem>> -> memref<1x!tpu.dma_semaphore, #tpu.memory_space<semaphore_mem>>
    %39 = tpu.memref_squeeze %38 : memref<1x!tpu.dma_semaphore, #tpu.memory_space<semaphore_mem>> -> memref<!tpu.dma_semaphore, #tpu.memory_space<semaphore_mem>>
    tpu.enqueue_dma source(%36 : memref<1x32xf32, #tpu.memory_space<any>>) target(%37 : memref<1x32xf32, #tpu.memory_space<vmem>>) target_semaphore(%39 : memref<!tpu.dma_semaphore, #tpu.memory_space<semaphore_mem>>)
    %c8 = arith.constant 8 : index
    %40 = memref.load %arg0[%c8] : memref<64xi32, #tpu.memory_space<smem>>
    %c0_i32_24 = arith.constant 0 : i32
    %c0_i32_25 = arith.constant 0 : i32
    %41 = tpu.memref_slice %arg1[%40, %c0_i32_25] : memref<64x32xf32, #tpu.memory_space<any>> -> memref<1x32xf32, #tpu.memory_space<any>>
    %c8_i32 = arith.constant 8 : i32
    %c0_i32_26 = arith.constant 0 : i32
    %42 = tpu.memref_slice %arg8[%c8_i32, %c0_i32_26] : memref<64x32xf32, #tpu.memory_space<vmem>> -> memref<1x32xf32, #tpu.memory_space<vmem>>
    %43 = tpu.memref_slice %arg9[%c0_i32_24] : memref<8x!tpu.dma_semaphore, #tpu.memory_space<semaphore_mem>> -> memref<1x!tpu.dma_semaphore, #tpu.memory_space<semaphore_mem>>
    %44 = tpu.memref_squeeze %43 : memref<1x!tpu.dma_semaphore, #tpu.memory_space<semaphore_mem>> -> memref<!tpu.dma_semaphore, #tpu.memory_space<semaphore_mem>>
    tpu.enqueue_dma source(%41 : memref<1x32xf32, #tpu.memory_space<any>>) target(%42 : memref<1x32xf32, #tpu.memory_space<vmem>>) target_semaphore(%44 : memref<!tpu.dma_semaphore, #tpu.memory_space<semaphore_mem>>)
    %c9 = arith.constant 9 : index
    %45 = memref.load %arg0[%c9] : memref<64xi32, #tpu.memory_space<smem>>
    %c1_i32_27 = arith.constant 1 : i32
    %c0_i32_28 = arith.constant 0 : i32
    %46 = tpu.memref_slice %arg1[%45, %c0_i32_28] : memref<64x32xf32, #tpu.memory_space<any>> -> memref<1x32xf32, #tpu.memory_space<any>>
    %c9_i32 = arith.constant 9 : i32
    %c0_i32_29 = arith.constant 0 : i32
    %47 = tpu.memref_slice %arg8[%c9_i32, %c0_i32_29] : memref<64x32xf32, #tpu.memory_space<vmem>> -> memref<1x32xf32, #tpu.memory_space<vmem>>
    %48 = tpu.memref_slice %arg9[%c1_i32_27] : memref<8x!tpu.dma_semaphore, #tpu.memory_space<semaphore_mem>> -> memref<1x!tpu.dma_semaphore, #tpu.memory_space<semaphore_mem>>
    %49 = tpu.memref_squeeze %48 : memref<1x!tpu.dma_semaphore, #tpu.memory_space<semaphore_mem>> -> memref<!tpu.dma_semaphore, #tpu.memory_space<semaphore_mem>>
    tpu.enqueue_dma source(%46 : memref<1x32xf32, #tpu.memory_space<any>>) target(%47 : memref<1x32xf32, #tpu.memory_space<vmem>>) target_semaphore(%49 : memref<!tpu.dma_semaphore, #tpu.memory_space<semaphore_mem>>)
    %c10 = arith.constant 10 : index
    %50 = memref.load %arg0[%c10] : memref<64xi32, #tpu.memory_space<smem>>
    %c2_i32_30 = arith.constant 2 : i32
    %c0_i32_31 = arith.constant 0 : i32
    %51 = tpu.memref_slice %arg1[%50, %c0_i32_31] : memref<64x32xf32, #tpu.memory_space<any>> -> memref<1x32xf32, #tpu.memory_space<any>>
    %c10_i32 = arith.constant 10 : i32
    %c0_i32_32 = arith.constant 0 : i32
    %52 = tpu.memref_slice %arg8[%c10_i32, %c0_i32_32] : memref<64x32xf32, #tpu.memory_space<vmem>> -> memref<1x32xf32, #tpu.memory_space<vmem>>
    %53 = tpu.memref_slice %arg9[%c2_i32_30] : memref<8x!tpu.dma_semaphore, #tpu.memory_space<semaphore_mem>> -> memref<1x!tpu.dma_semaphore, #tpu.memory_space<semaphore_mem>>
    %54 = tpu.memref_squeeze %53 : memref<1x!tpu.dma_semaphore, #tpu.memory_space<semaphore_mem>> -> memref<!tpu.dma_semaphore, #tpu.memory_space<semaphore_mem>>
    tpu.enqueue_dma source(%51 : memref<1x32xf32, #tpu.memory_space<any>>) target(%52 : memref<1x32xf32, #tpu.memory_space<vmem>>) target_semaphore(%54 : memref<!tpu.dma_semaphore, #tpu.memory_space<semaphore_mem>>)
    %c11 = arith.constant 11 : index
    %55 = memref.load %arg0[%c11] : memref<64xi32, #tpu.memory_space<smem>>
    %c3_i32_33 = arith.constant 3 : i32
    %c0_i32_34 = arith.constant 0 : i32
    %56 = tpu.memref_slice %arg1[%55, %c0_i32_34] : memref<64x32xf32, #tpu.memory_space<any>> -> memref<1x32xf32, #tpu.memory_space<any>>
    %c11_i32 = arith.constant 11 : i32
    %c0_i32_35 = arith.constant 0 : i32
    %57 = tpu.memref_slice %arg8[%c11_i32, %c0_i32_35] : memref<64x32xf32, #tpu.memory_space<vmem>> -> memref<1x32xf32, #tpu.memory_space<vmem>>
    %58 = tpu.memref_slice %arg9[%c3_i32_33] : memref<8x!tpu.dma_semaphore, #tpu.memory_space<semaphore_mem>> -> memref<1x!tpu.dma_semaphore, #tpu.memory_space<semaphore_mem>>
    %59 = tpu.memref_squeeze %58 : memref<1x!tpu.dma_semaphore, #tpu.memory_space<semaphore_mem>> -> memref<!tpu.dma_semaphore, #tpu.memory_space<semaphore_mem>>
    tpu.enqueue_dma source(%56 : memref<1x32xf32, #tpu.memory_space<any>>) target(%57 : memref<1x32xf32, #tpu.memory_space<vmem>>) target_semaphore(%59 : memref<!tpu.dma_semaphore, #tpu.memory_space<semaphore_mem>>)
    %c12 = arith.constant 12 : index
    %60 = memref.load %arg0[%c12] : memref<64xi32, #tpu.memory_space<smem>>
    %c4_i32_36 = arith.constant 4 : i32
    %c0_i32_37 = arith.constant 0 : i32
    %61 = tpu.memref_slice %arg1[%60, %c0_i32_37] : memref<64x32xf32, #tpu.memory_space<any>> -> memref<1x32xf32, #tpu.memory_space<any>>
    %c12_i32 = arith.constant 12 : i32
    %c0_i32_38 = arith.constant 0 : i32
    %62 = tpu.memref_slice %arg8[%c12_i32, %c0_i32_38] : memref<64x32xf32, #tpu.memory_space<vmem>> -> memref<1x32xf32, #tpu.memory_space<vmem>>
    %63 = tpu.memref_slice %arg9[%c4_i32_36] : memref<8x!tpu.dma_semaphore, #tpu.memory_space<semaphore_mem>> -> memref<1x!tpu.dma_semaphore, #tpu.memory_space<semaphore_mem>>
    %64 = tpu.memref_squeeze %63 : memref<1x!tpu.dma_semaphore, #tpu.memory_space<semaphore_mem>> -> memref<!tpu.dma_semaphore, #tpu.memory_space<semaphore_mem>>
    tpu.enqueue_dma source(%61 : memref<1x32xf32, #tpu.memory_space<any>>) target(%62 : memref<1x32xf32, #tpu.memory_space<vmem>>) target_semaphore(%64 : memref<!tpu.dma_semaphore, #tpu.memory_space<semaphore_mem>>)
    %c13 = arith.constant 13 : index
    %65 = memref.load %arg0[%c13] : memref<64xi32, #tpu.memory_space<smem>>
    %c5_i32_39 = arith.constant 5 : i32
    %c0_i32_40 = arith.constant 0 : i32
    %66 = tpu.memref_slice %arg1[%65, %c0_i32_40] : memref<64x32xf32, #tpu.memory_space<any>> -> memref<1x32xf32, #tpu.memory_space<any>>
    %c13_i32 = arith.constant 13 : i32
    %c0_i32_41 = arith.constant 0 : i32
    %67 = tpu.memref_slice %arg8[%c13_i32, %c0_i32_41] : memref<64x32xf32, #tpu.memory_space<vmem>> -> memref<1x32xf32, #tpu.memory_space<vmem>>
    %68 = tpu.memref_slice %arg9[%c5_i32_39] : memref<8x!tpu.dma_semaphore, #tpu.memory_space<semaphore_mem>> -> memref<1x!tpu.dma_semaphore, #tpu.memory_space<semaphore_mem>>
    %69 = tpu.memref_squeeze %68 : memref<1x!tpu.dma_semaphore, #tpu.memory_space<semaphore_mem>> -> memref<!tpu.dma_semaphore, #tpu.memory_space<semaphore_mem>>
    tpu.enqueue_dma source(%66 : memref<1x32xf32, #tpu.memory_space<any>>) target(%67 : memref<1x32xf32, #tpu.memory_space<vmem>>) target_semaphore(%69 : memref<!tpu.dma_semaphore, #tpu.memory_space<semaphore_mem>>)
    %c14 = arith.constant 14 : index
    %70 = memref.load %arg0[%c14] : memref<64xi32, #tpu.memory_space<smem>>
    %c6_i32_42 = arith.constant 6 : i32
    %c0_i32_43 = arith.constant 0 : i32
    %71 = tpu.memref_slice %arg1[%70, %c0_i32_43] : memref<64x32xf32, #tpu.memory_space<any>> -> memref<1x32xf32, #tpu.memory_space<any>>
    %c14_i32 = arith.constant 14 : i32
    %c0_i32_44 = arith.constant 0 : i32
    %72 = tpu.memref_slice %arg8[%c14_i32, %c0_i32_44] : memref<64x32xf32, #tpu.memory_space<vmem>> -> memref<1x32xf32, #tpu.memory_space<vmem>>
    %73 = tpu.memref_slice %arg9[%c6_i32_42] : memref<8x!tpu.dma_semaphore, #tpu.memory_space<semaphore_mem>> -> memref<1x!tpu.dma_semaphore, #tpu.memory_space<semaphore_mem>>
    %74 = tpu.memref_squeeze %73 : memref<1x!tpu.dma_semaphore, #tpu.memory_space<semaphore_mem>> -> memref<!tpu.dma_semaphore, #tpu.memory_space<semaphore_mem>>
    tpu.enqueue_dma source(%71 : memref<1x32xf32, #tpu.memory_space<any>>) target(%72 : memref<1x32xf32, #tpu.memory_space<vmem>>) target_semaphore(%74 : memref<!tpu.dma_semaphore, #tpu.memory_space<semaphore_mem>>)
    %c15 = arith.constant 15 : index
    %75 = memref.load %arg0[%c15] : memref<64xi32, #tpu.memory_space<smem>>
    %c7_i32_45 = arith.constant 7 : i32
    %c0_i32_46 = arith.constant 0 : i32
    %76 = tpu.memref_slice %arg1[%75, %c0_i32_46] : memref<64x32xf32, #tpu.memory_space<any>> -> memref<1x32xf32, #tpu.memory_space<any>>
    %c15_i32 = arith.constant 15 : i32
    %c0_i32_47 = arith.constant 0 : i32
    %77 = tpu.memref_slice %arg8[%c15_i32, %c0_i32_47] : memref<64x32xf32, #tpu.memory_space<vmem>> -> memref<1x32xf32, #tpu.memory_space<vmem>>
    %78 = tpu.memref_slice %arg9[%c7_i32_45] : memref<8x!tpu.dma_semaphore, #tpu.memory_space<semaphore_mem>> -> memref<1x!tpu.dma_semaphore, #tpu.memory_space<semaphore_mem>>
    %79 = tpu.memref_squeeze %78 : memref<1x!tpu.dma_semaphore, #tpu.memory_space<semaphore_mem>> -> memref<!tpu.dma_semaphore, #tpu.memory_space<semaphore_mem>>
    tpu.enqueue_dma source(%76 : memref<1x32xf32, #tpu.memory_space<any>>) target(%77 : memref<1x32xf32, #tpu.memory_space<vmem>>) target_semaphore(%79 : memref<!tpu.dma_semaphore, #tpu.memory_space<semaphore_mem>>)
    %c16 = arith.constant 16 : index
    %80 = memref.load %arg0[%c16] : memref<64xi32, #tpu.memory_space<smem>>
    %c0_i32_48 = arith.constant 0 : i32
    %c0_i32_49 = arith.constant 0 : i32
    %81 = tpu.memref_slice %arg1[%80, %c0_i32_49] : memref<64x32xf32, #tpu.memory_space<any>> -> memref<1x32xf32, #tpu.memory_space<any>>
    %c16_i32 = arith.constant 16 : i32
    %c0_i32_50 = arith.constant 0 : i32
    %82 = tpu.memref_slice %arg8[%c16_i32, %c0_i32_50] : memref<64x32xf32, #tpu.memory_space<vmem>> -> memref<1x32xf32, #tpu.memory_space<vmem>>
    %83 = tpu.memref_slice %arg9[%c0_i32_48] : memref<8x!tpu.dma_semaphore, #tpu.memory_space<semaphore_mem>> -> memref<1x!tpu.dma_semaphore, #tpu.memory_space<semaphore_mem>>
    %84 = tpu.memref_squeeze %83 : memref<1x!tpu.dma_semaphore, #tpu.memory_space<semaphore_mem>> -> memref<!tpu.dma_semaphore, #tpu.memory_space<semaphore_mem>>
    tpu.enqueue_dma source(%81 : memref<1x32xf32, #tpu.memory_space<any>>) target(%82 : memref<1x32xf32, #tpu.memory_space<vmem>>) target_semaphore(%84 : memref<!tpu.dma_semaphore, #tpu.memory_space<semaphore_mem>>)
    %c17 = arith.constant 17 : index
    %85 = memref.load %arg0[%c17] : memref<64xi32, #tpu.memory_space<smem>>
    %c1_i32_51 = arith.constant 1 : i32
    %c0_i32_52 = arith.constant 0 : i32
    %86 = tpu.memref_slice %arg1[%85, %c0_i32_52] : memref<64x32xf32, #tpu.memory_space<any>> -> memref<1x32xf32, #tpu.memory_space<any>>
    %c17_i32 = arith.constant 17 : i32
    %c0_i32_53 = arith.constant 0 : i32
    %87 = tpu.memref_slice %arg8[%c17_i32, %c0_i32_53] : memref<64x32xf32, #tpu.memory_space<vmem>> -> memref<1x32xf32, #tpu.memory_space<vmem>>
    %88 = tpu.memref_slice %arg9[%c1_i32_51] : memref<8x!tpu.dma_semaphore, #tpu.memory_space<semaphore_mem>> -> memref<1x!tpu.dma_semaphore, #tpu.memory_space<semaphore_mem>>
    %89 = tpu.memref_squeeze %88 : memref<1x!tpu.dma_semaphore, #tpu.memory_space<semaphore_mem>> -> memref<!tpu.dma_semaphore, #tpu.memory_space<semaphore_mem>>
    tpu.enqueue_dma source(%86 : memref<1x32xf32, #tpu.memory_space<any>>) target(%87 : memref<1x32xf32, #tpu.memory_space<vmem>>) target_semaphore(%89 : memref<!tpu.dma_semaphore, #tpu.memory_space<semaphore_mem>>)
    %c18 = arith.constant 18 : index
    %90 = memref.load %arg0[%c18] : memref<64xi32, #tpu.memory_space<smem>>
    %c2_i32_54 = arith.constant 2 : i32
    %c0_i32_55 = arith.constant 0 : i32
    %91 = tpu.memref_slice %arg1[%90, %c0_i32_55] : memref<64x32xf32, #tpu.memory_space<any>> -> memref<1x32xf32, #tpu.memory_space<any>>
    %c18_i32 = arith.constant 18 : i32
    %c0_i32_56 = arith.constant 0 : i32
    %92 = tpu.memref_slice %arg8[%c18_i32, %c0_i32_56] : memref<64x32xf32, #tpu.memory_space<vmem>> -> memref<1x32xf32, #tpu.memory_space<vmem>>
    %93 = tpu.memref_slice %arg9[%c2_i32_54] : memref<8x!tpu.dma_semaphore, #tpu.memory_space<semaphore_mem>> -> memref<1x!tpu.dma_semaphore, #tpu.memory_space<semaphore_mem>>
    %94 = tpu.memref_squeeze %93 : memref<1x!tpu.dma_semaphore, #tpu.memory_space<semaphore_mem>> -> memref<!tpu.dma_semaphore, #tpu.memory_space<semaphore_mem>>
    tpu.enqueue_dma source(%91 : memref<1x32xf32, #tpu.memory_space<any>>) target(%92 : memref<1x32xf32, #tpu.memory_space<vmem>>) target_semaphore(%94 : memref<!tpu.dma_semaphore, #tpu.memory_space<semaphore_mem>>)
    %c19 = arith.constant 19 : index
    %95 = memref.load %arg0[%c19] : memref<64xi32, #tpu.memory_space<smem>>
    %c3_i32_57 = arith.constant 3 : i32
    %c0_i32_58 = arith.constant 0 : i32
    %96 = tpu.memref_slice %arg1[%95, %c0_i32_58] : memref<64x32xf32, #tpu.memory_space<any>> -> memref<1x32xf32, #tpu.memory_space<any>>
    %c19_i32 = arith.constant 19 : i32
    %c0_i32_59 = arith.constant 0 : i32
    %97 = tpu.memref_slice %arg8[%c19_i32, %c0_i32_59] : memref<64x32xf32, #tpu.memory_space<vmem>> -> memref<1x32xf32, #tpu.memory_space<vmem>>
    %98 = tpu.memref_slice %arg9[%c3_i32_57] : memref<8x!tpu.dma_semaphore, #tpu.memory_space<semaphore_mem>> -> memref<1x!tpu.dma_semaphore, #tpu.memory_space<semaphore_mem>>
    %99 = tpu.memref_squeeze %98 : memref<1x!tpu.dma_semaphore, #tpu.memory_space<semaphore_mem>> -> memref<!tpu.dma_semaphore, #tpu.memory_space<semaphore_mem>>
    tpu.enqueue_dma source(%96 : memref<1x32xf32, #tpu.memory_space<any>>) target(%97 : memref<1x32xf32, #tpu.memory_space<vmem>>) target_semaphore(%99 : memref<!tpu.dma_semaphore, #tpu.memory_space<semaphore_mem>>)
    %c20 = arith.constant 20 : index
    %100 = memref.load %arg0[%c20] : memref<64xi32, #tpu.memory_space<smem>>
    %c4_i32_60 = arith.constant 4 : i32
    %c0_i32_61 = arith.constant 0 : i32
    %101 = tpu.memref_slice %arg1[%100, %c0_i32_61] : memref<64x32xf32, #tpu.memory_space<any>> -> memref<1x32xf32, #tpu.memory_space<any>>
    %c20_i32 = arith.constant 20 : i32
    %c0_i32_62 = arith.constant 0 : i32
    %102 = tpu.memref_slice %arg8[%c20_i32, %c0_i32_62] : memref<64x32xf32, #tpu.memory_space<vmem>> -> memref<1x32xf32, #tpu.memory_space<vmem>>
    %103 = tpu.memref_slice %arg9[%c4_i32_60] : memref<8x!tpu.dma_semaphore, #tpu.memory_space<semaphore_mem>> -> memref<1x!tpu.dma_semaphore, #tpu.memory_space<semaphore_mem>>
    %104 = tpu.memref_squeeze %103 : memref<1x!tpu.dma_semaphore, #tpu.memory_space<semaphore_mem>> -> memref<!tpu.dma_semaphore, #tpu.memory_space<semaphore_mem>>
    tpu.enqueue_dma source(%101 : memref<1x32xf32, #tpu.memory_space<any>>) target(%102 : memref<1x32xf32, #tpu.memory_space<vmem>>) target_semaphore(%104 : memref<!tpu.dma_semaphore, #tpu.memory_space<semaphore_mem>>)
    %c21 = arith.constant 21 : index
    %105 = memref.load %arg0[%c21] : memref<64xi32, #tpu.memory_space<smem>>
    %c5_i32_63 = arith.constant 5 : i32
    %c0_i32_64 = arith.constant 0 : i32
    %106 = tpu.memref_slice %arg1[%105, %c0_i32_64] : memref<64x32xf32, #tpu.memory_space<any>> -> memref<1x32xf32, #tpu.memory_space<any>>
    %c21_i32 = arith.constant 21 : i32
    %c0_i32_65 = arith.constant 0 : i32
    %107 = tpu.memref_slice %arg8[%c21_i32, %c0_i32_65] : memref<64x32xf32, #tpu.memory_space<vmem>> -> memref<1x32xf32, #tpu.memory_space<vmem>>
    %108 = tpu.memref_slice %arg9[%c5_i32_63] : memref<8x!tpu.dma_semaphore, #tpu.memory_space<semaphore_mem>> -> memref<1x!tpu.dma_semaphore, #tpu.memory_space<semaphore_mem>>
    %109 = tpu.memref_squeeze %108 : memref<1x!tpu.dma_semaphore, #tpu.memory_space<semaphore_mem>> -> memref<!tpu.dma_semaphore, #tpu.memory_space<semaphore_mem>>
    tpu.enqueue_dma source(%106 : memref<1x32xf32, #tpu.memory_space<any>>) target(%107 : memref<1x32xf32, #tpu.memory_space<vmem>>) target_semaphore(%109 : memref<!tpu.dma_semaphore, #tpu.memory_space<semaphore_mem>>)
    %c22 = arith.constant 22 : index
    %110 = memref.load %arg0[%c22] : memref<64xi32, #tpu.memory_space<smem>>
    %c6_i32_66 = arith.constant 6 : i32
    %c0_i32_67 = arith.constant 0 : i32
    %111 = tpu.memref_slice %arg1[%110, %c0_i32_67] : memref<64x32xf32, #tpu.memory_space<any>> -> memref<1x32xf32, #tpu.memory_space<any>>
    %c22_i32 = arith.constant 22 : i32
    %c0_i32_68 = arith.constant 0 : i32
    %112 = tpu.memref_slice %arg8[%c22_i32, %c0_i32_68] : memref<64x32xf32, #tpu.memory_space<vmem>> -> memref<1x32xf32, #tpu.memory_space<vmem>>
    %113 = tpu.memref_slice %arg9[%c6_i32_66] : memref<8x!tpu.dma_semaphore, #tpu.memory_space<semaphore_mem>> -> memref<1x!tpu.dma_semaphore, #tpu.memory_space<semaphore_mem>>
    %114 = tpu.memref_squeeze %113 : memref<1x!tpu.dma_semaphore, #tpu.memory_space<semaphore_mem>> -> memref<!tpu.dma_semaphore, #tpu.memory_space<semaphore_mem>>
    tpu.enqueue_dma source(%111 : memref<1x32xf32, #tpu.memory_space<any>>) target(%112 : memref<1x32xf32, #tpu.memory_space<vmem>>) target_semaphore(%114 : memref<!tpu.dma_semaphore, #tpu.memory_space<semaphore_mem>>)
    %c23 = arith.constant 23 : index
    %115 = memref.load %arg0[%c23] : memref<64xi32, #tpu.memory_space<smem>>
    %c7_i32_69 = arith.constant 7 : i32
    %c0_i32_70 = arith.constant 0 : i32
    %116 = tpu.memref_slice %arg1[%115, %c0_i32_70] : memref<64x32xf32, #tpu.memory_space<any>> -> memref<1x32xf32, #tpu.memory_space<any>>
    %c23_i32 = arith.constant 23 : i32
    %c0_i32_71 = arith.constant 0 : i32
    %117 = tpu.memref_slice %arg8[%c23_i32, %c0_i32_71] : memref<64x32xf32, #tpu.memory_space<vmem>> -> memref<1x32xf32, #tpu.memory_space<vmem>>
    %118 = tpu.memref_slice %arg9[%c7_i32_69] : memref<8x!tpu.dma_semaphore, #tpu.memory_space<semaphore_mem>> -> memref<1x!tpu.dma_semaphore, #tpu.memory_space<semaphore_mem>>
    %119 = tpu.memref_squeeze %118 : memref<1x!tpu.dma_semaphore, #tpu.memory_space<semaphore_mem>> -> memref<!tpu.dma_semaphore, #tpu.memory_space<semaphore_mem>>
    tpu.enqueue_dma source(%116 : memref<1x32xf32, #tpu.memory_space<any>>) target(%117 : memref<1x32xf32, #tpu.memory_space<vmem>>) target_semaphore(%119 : memref<!tpu.dma_semaphore, #tpu.memory_space<semaphore_mem>>)
    %c24 = arith.constant 24 : index
    %120 = memref.load %arg0[%c24] : memref<64xi32, #tpu.memory_space<smem>>
    %c0_i32_72 = arith.constant 0 : i32
    %c0_i32_73 = arith.constant 0 : i32
    %121 = tpu.memref_slice %arg1[%120, %c0_i32_73] : memref<64x32xf32, #tpu.memory_space<any>> -> memref<1x32xf32, #tpu.memory_space<any>>
    %c24_i32 = arith.constant 24 : i32
    %c0_i32_74 = arith.constant 0 : i32
    %122 = tpu.memref_slice %arg8[%c24_i32, %c0_i32_74] : memref<64x32xf32, #tpu.memory_space<vmem>> -> memref<1x32xf32, #tpu.memory_space<vmem>>
    %123 = tpu.memref_slice %arg9[%c0_i32_72] : memref<8x!tpu.dma_semaphore, #tpu.memory_space<semaphore_mem>> -> memref<1x!tpu.dma_semaphore, #tpu.memory_space<semaphore_mem>>
    %124 = tpu.memref_squeeze %123 : memref<1x!tpu.dma_semaphore, #tpu.memory_space<semaphore_mem>> -> memref<!tpu.dma_semaphore, #tpu.memory_space<semaphore_mem>>
    tpu.enqueue_dma source(%121 : memref<1x32xf32, #tpu.memory_space<any>>) target(%122 : memref<1x32xf32, #tpu.memory_space<vmem>>) target_semaphore(%124 : memref<!tpu.dma_semaphore, #tpu.memory_space<semaphore_mem>>)
    %c25 = arith.constant 25 : index
    %125 = memref.load %arg0[%c25] : memref<64xi32, #tpu.memory_space<smem>>
    %c1_i32_75 = arith.constant 1 : i32
    %c0_i32_76 = arith.constant 0 : i32
    %126 = tpu.memref_slice %arg1[%125, %c0_i32_76] : memref<64x32xf32, #tpu.memory_space<any>> -> memref<1x32xf32, #tpu.memory_space<any>>
    %c25_i32 = arith.constant 25 : i32
    %c0_i32_77 = arith.constant 0 : i32
    %127 = tpu.memref_slice %arg8[%c25_i32, %c0_i32_77] : memref<64x32xf32, #tpu.memory_space<vmem>> -> memref<1x32xf32, #tpu.memory_space<vmem>>
    %128 = tpu.memref_slice %arg9[%c1_i32_75] : memref<8x!tpu.dma_semaphore, #tpu.memory_space<semaphore_mem>> -> memref<1x!tpu.dma_semaphore, #tpu.memory_space<semaphore_mem>>
    %129 = tpu.memref_squeeze %128 : memref<1x!tpu.dma_semaphore, #tpu.memory_space<semaphore_mem>> -> memref<!tpu.dma_semaphore, #tpu.memory_space<semaphore_mem>>
    tpu.enqueue_dma source(%126 : memref<1x32xf32, #tpu.memory_space<any>>) target(%127 : memref<1x32xf32, #tpu.memory_space<vmem>>) target_semaphore(%129 : memref<!tpu.dma_semaphore, #tpu.memory_space<semaphore_mem>>)
    %c26 = arith.constant 26 : index
    %130 = memref.load %arg0[%c26] : memref<64xi32, #tpu.memory_space<smem>>
    %c2_i32_78 = arith.constant 2 : i32
    %c0_i32_79 = arith.constant 0 : i32
    %131 = tpu.memref_slice %arg1[%130, %c0_i32_79] : memref<64x32xf32, #tpu.memory_space<any>> -> memref<1x32xf32, #tpu.memory_space<any>>
    %c26_i32 = arith.constant 26 : i32
    %c0_i32_80 = arith.constant 0 : i32
    %132 = tpu.memref_slice %arg8[%c26_i32, %c0_i32_80] : memref<64x32xf32, #tpu.memory_space<vmem>> -> memref<1x32xf32, #tpu.memory_space<vmem>>
    %133 = tpu.memref_slice %arg9[%c2_i32_78] : memref<8x!tpu.dma_semaphore, #tpu.memory_space<semaphore_mem>> -> memref<1x!tpu.dma_semaphore, #tpu.memory_space<semaphore_mem>>
    %134 = tpu.memref_squeeze %133 : memref<1x!tpu.dma_semaphore, #tpu.memory_space<semaphore_mem>> -> memref<!tpu.dma_semaphore, #tpu.memory_space<semaphore_mem>>
    tpu.enqueue_dma source(%131 : memref<1x32xf32, #tpu.memory_space<any>>) target(%132 : memref<1x32xf32, #tpu.memory_space<vmem>>) target_semaphore(%134 : memref<!tpu.dma_semaphore, #tpu.memory_space<semaphore_mem>>)
    %c27 = arith.constant 27 : index
    %135 = memref.load %arg0[%c27] : memref<64xi32, #tpu.memory_space<smem>>
    %c3_i32_81 = arith.constant 3 : i32
    %c0_i32_82 = arith.constant 0 : i32
    %136 = tpu.memref_slice %arg1[%135, %c0_i32_82] : memref<64x32xf32, #tpu.memory_space<any>> -> memref<1x32xf32, #tpu.memory_space<any>>
    %c27_i32 = arith.constant 27 : i32
    %c0_i32_83 = arith.constant 0 : i32
    %137 = tpu.memref_slice %arg8[%c27_i32, %c0_i32_83] : memref<64x32xf32, #tpu.memory_space<vmem>> -> memref<1x32xf32, #tpu.memory_space<vmem>>
    %138 = tpu.memref_slice %arg9[%c3_i32_81] : memref<8x!tpu.dma_semaphore, #tpu.memory_space<semaphore_mem>> -> memref<1x!tpu.dma_semaphore, #tpu.memory_space<semaphore_mem>>
    %139 = tpu.memref_squeeze %138 : memref<1x!tpu.dma_semaphore, #tpu.memory_space<semaphore_mem>> -> memref<!tpu.dma_semaphore, #tpu.memory_space<semaphore_mem>>
    tpu.enqueue_dma source(%136 : memref<1x32xf32, #tpu.memory_space<any>>) target(%137 : memref<1x32xf32, #tpu.memory_space<vmem>>) target_semaphore(%139 : memref<!tpu.dma_semaphore, #tpu.memory_space<semaphore_mem>>)
    %c28 = arith.constant 28 : index
    %140 = memref.load %arg0[%c28] : memref<64xi32, #tpu.memory_space<smem>>
    %c4_i32_84 = arith.constant 4 : i32
    %c0_i32_85 = arith.constant 0 : i32
    %141 = tpu.memref_slice %arg1[%140, %c0_i32_85] : memref<64x32xf32, #tpu.memory_space<any>> -> memref<1x32xf32, #tpu.memory_space<any>>
    %c28_i32 = arith.constant 28 : i32
    %c0_i32_86 = arith.constant 0 : i32
    %142 = tpu.memref_slice %arg8[%c28_i32, %c0_i32_86] : memref<64x32xf32, #tpu.memory_space<vmem>> -> memref<1x32xf32, #tpu.memory_space<vmem>>
    %143 = tpu.memref_slice %arg9[%c4_i32_84] : memref<8x!tpu.dma_semaphore, #tpu.memory_space<semaphore_mem>> -> memref<1x!tpu.dma_semaphore, #tpu.memory_space<semaphore_mem>>
    %144 = tpu.memref_squeeze %143 : memref<1x!tpu.dma_semaphore, #tpu.memory_space<semaphore_mem>> -> memref<!tpu.dma_semaphore, #tpu.memory_space<semaphore_mem>>
    tpu.enqueue_dma source(%141 : memref<1x32xf32, #tpu.memory_space<any>>) target(%142 : memref<1x32xf32, #tpu.memory_space<vmem>>) target_semaphore(%144 : memref<!tpu.dma_semaphore, #tpu.memory_space<semaphore_mem>>)
    %c29 = arith.constant 29 : index
    %145 = memref.load %arg0[%c29] : memref<64xi32, #tpu.memory_space<smem>>
    %c5_i32_87 = arith.constant 5 : i32
    %c0_i32_88 = arith.constant 0 : i32
    %146 = tpu.memref_slice %arg1[%145, %c0_i32_88] : memref<64x32xf32, #tpu.memory_space<any>> -> memref<1x32xf32, #tpu.memory_space<any>>
    %c29_i32 = arith.constant 29 : i32
    %c0_i32_89 = arith.constant 0 : i32
    %147 = tpu.memref_slice %arg8[%c29_i32, %c0_i32_89] : memref<64x32xf32, #tpu.memory_space<vmem>> -> memref<1x32xf32, #tpu.memory_space<vmem>>
    %148 = tpu.memref_slice %arg9[%c5_i32_87] : memref<8x!tpu.dma_semaphore, #tpu.memory_space<semaphore_mem>> -> memref<1x!tpu.dma_semaphore, #tpu.memory_space<semaphore_mem>>
    %149 = tpu.memref_squeeze %148 : memref<1x!tpu.dma_semaphore, #tpu.memory_space<semaphore_mem>> -> memref<!tpu.dma_semaphore, #tpu.memory_space<semaphore_mem>>
    tpu.enqueue_dma source(%146 : memref<1x32xf32, #tpu.memory_space<any>>) target(%147 : memref<1x32xf32, #tpu.memory_space<vmem>>) target_semaphore(%149 : memref<!tpu.dma_semaphore, #tpu.memory_space<semaphore_mem>>)
    %c30 = arith.constant 30 : index
    %150 = memref.load %arg0[%c30] : memref<64xi32, #tpu.memory_space<smem>>
    %c6_i32_90 = arith.constant 6 : i32
    %c0_i32_91 = arith.constant 0 : i32
    %151 = tpu.memref_slice %arg1[%150, %c0_i32_91] : memref<64x32xf32, #tpu.memory_space<any>> -> memref<1x32xf32, #tpu.memory_space<any>>
    %c30_i32 = arith.constant 30 : i32
    %c0_i32_92 = arith.constant 0 : i32
    %152 = tpu.memref_slice %arg8[%c30_i32, %c0_i32_92] : memref<64x32xf32, #tpu.memory_space<vmem>> -> memref<1x32xf32, #tpu.memory_space<vmem>>
    %153 = tpu.memref_slice %arg9[%c6_i32_90] : memref<8x!tpu.dma_semaphore, #tpu.memory_space<semaphore_mem>> -> memref<1x!tpu.dma_semaphore, #tpu.memory_space<semaphore_mem>>
    %154 = tpu.memref_squeeze %153 : memref<1x!tpu.dma_semaphore, #tpu.memory_space<semaphore_mem>> -> memref<!tpu.dma_semaphore, #tpu.memory_space<semaphore_mem>>
    tpu.enqueue_dma source(%151 : memref<1x32xf32, #tpu.memory_space<any>>) target(%152 : memref<1x32xf32, #tpu.memory_space<vmem>>) target_semaphore(%154 : memref<!tpu.dma_semaphore, #tpu.memory_space<semaphore_mem>>)
    %c31 = arith.constant 31 : index
    %155 = memref.load %arg0[%c31] : memref<64xi32, #tpu.memory_space<smem>>
    %c7_i32_93 = arith.constant 7 : i32
    %c0_i32_94 = arith.constant 0 : i32
    %156 = tpu.memref_slice %arg1[%155, %c0_i32_94] : memref<64x32xf32, #tpu.memory_space<any>> -> memref<1x32xf32, #tpu.memory_space<any>>
    %c31_i32 = arith.constant 31 : i32
    %c0_i32_95 = arith.constant 0 : i32
    %157 = tpu.memref_slice %arg8[%c31_i32, %c0_i32_95] : memref<64x32xf32, #tpu.memory_space<vmem>> -> memref<1x32xf32, #tpu.memory_space<vmem>>
    %158 = tpu.memref_slice %arg9[%c7_i32_93] : memref<8x!tpu.dma_semaphore, #tpu.memory_space<semaphore_mem>> -> memref<1x!tpu.dma_semaphore, #tpu.memory_space<semaphore_mem>>
    %159 = tpu.memref_squeeze %158 : memref<1x!tpu.dma_semaphore, #tpu.memory_space<semaphore_mem>> -> memref<!tpu.dma_semaphore, #tpu.memory_space<semaphore_mem>>
    tpu.enqueue_dma source(%156 : memref<1x32xf32, #tpu.memory_space<any>>) target(%157 : memref<1x32xf32, #tpu.memory_space<vmem>>) target_semaphore(%159 : memref<!tpu.dma_semaphore, #tpu.memory_space<semaphore_mem>>)
    %c32 = arith.constant 32 : index
    %160 = memref.load %arg0[%c32] : memref<64xi32, #tpu.memory_space<smem>>
    %c0_i32_96 = arith.constant 0 : i32
    %c0_i32_97 = arith.constant 0 : i32
    %161 = tpu.memref_slice %arg1[%160, %c0_i32_97] : memref<64x32xf32, #tpu.memory_space<any>> -> memref<1x32xf32, #tpu.memory_space<any>>
    %c32_i32 = arith.constant 32 : i32
    %c0_i32_98 = arith.constant 0 : i32
    %162 = tpu.memref_slice %arg8[%c32_i32, %c0_i32_98] : memref<64x32xf32, #tpu.memory_space<vmem>> -> memref<1x32xf32, #tpu.memory_space<vmem>>
    %163 = tpu.memref_slice %arg9[%c0_i32_96] : memref<8x!tpu.dma_semaphore, #tpu.memory_space<semaphore_mem>> -> memref<1x!tpu.dma_semaphore, #tpu.memory_space<semaphore_mem>>
    %164 = tpu.memref_squeeze %163 : memref<1x!tpu.dma_semaphore, #tpu.memory_space<semaphore_mem>> -> memref<!tpu.dma_semaphore, #tpu.memory_space<semaphore_mem>>
    tpu.enqueue_dma source(%161 : memref<1x32xf32, #tpu.memory_space<any>>) target(%162 : memref<1x32xf32, #tpu.memory_space<vmem>>) target_semaphore(%164 : memref<!tpu.dma_semaphore, #tpu.memory_space<semaphore_mem>>)
    %c33 = arith.constant 33 : index
    %165 = memref.load %arg0[%c33] : memref<64xi32, #tpu.memory_space<smem>>
    %c1_i32_99 = arith.constant 1 : i32
    %c0_i32_100 = arith.constant 0 : i32
    %166 = tpu.memref_slice %arg1[%165, %c0_i32_100] : memref<64x32xf32, #tpu.memory_space<any>> -> memref<1x32xf32, #tpu.memory_space<any>>
    %c33_i32 = arith.constant 33 : i32
    %c0_i32_101 = arith.constant 0 : i32
    %167 = tpu.memref_slice %arg8[%c33_i32, %c0_i32_101] : memref<64x32xf32, #tpu.memory_space<vmem>> -> memref<1x32xf32, #tpu.memory_space<vmem>>
    %168 = tpu.memref_slice %arg9[%c1_i32_99] : memref<8x!tpu.dma_semaphore, #tpu.memory_space<semaphore_mem>> -> memref<1x!tpu.dma_semaphore, #tpu.memory_space<semaphore_mem>>
    %169 = tpu.memref_squeeze %168 : memref<1x!tpu.dma_semaphore, #tpu.memory_space<semaphore_mem>> -> memref<!tpu.dma_semaphore, #tpu.memory_space<semaphore_mem>>
    tpu.enqueue_dma source(%166 : memref<1x32xf32, #tpu.memory_space<any>>) target(%167 : memref<1x32xf32, #tpu.memory_space<vmem>>) target_semaphore(%169 : memref<!tpu.dma_semaphore, #tpu.memory_space<semaphore_mem>>)
    %c34 = arith.constant 34 : index
    %170 = memref.load %arg0[%c34] : memref<64xi32, #tpu.memory_space<smem>>
    %c2_i32_102 = arith.constant 2 : i32
    %c0_i32_103 = arith.constant 0 : i32
    %171 = tpu.memref_slice %arg1[%170, %c0_i32_103] : memref<64x32xf32, #tpu.memory_space<any>> -> memref<1x32xf32, #tpu.memory_space<any>>
    %c34_i32 = arith.constant 34 : i32
    %c0_i32_104 = arith.constant 0 : i32
    %172 = tpu.memref_slice %arg8[%c34_i32, %c0_i32_104] : memref<64x32xf32, #tpu.memory_space<vmem>> -> memref<1x32xf32, #tpu.memory_space<vmem>>
    %173 = tpu.memref_slice %arg9[%c2_i32_102] : memref<8x!tpu.dma_semaphore, #tpu.memory_space<semaphore_mem>> -> memref<1x!tpu.dma_semaphore, #tpu.memory_space<semaphore_mem>>
    %174 = tpu.memref_squeeze %173 : memref<1x!tpu.dma_semaphore, #tpu.memory_space<semaphore_mem>> -> memref<!tpu.dma_semaphore, #tpu.memory_space<semaphore_mem>>
    tpu.enqueue_dma source(%171 : memref<1x32xf32, #tpu.memory_space<any>>) target(%172 : memref<1x32xf32, #tpu.memory_space<vmem>>) target_semaphore(%174 : memref<!tpu.dma_semaphore, #tpu.memory_space<semaphore_mem>>)
    %c35 = arith.constant 35 : index
    %175 = memref.load %arg0[%c35] : memref<64xi32, #tpu.memory_space<smem>>
    %c3_i32_105 = arith.constant 3 : i32
    %c0_i32_106 = arith.constant 0 : i32
    %176 = tpu.memref_slice %arg1[%175, %c0_i32_106] : memref<64x32xf32, #tpu.memory_space<any>> -> memref<1x32xf32, #tpu.memory_space<any>>
    %c35_i32 = arith.constant 35 : i32
    %c0_i32_107 = arith.constant 0 : i32
    %177 = tpu.memref_slice %arg8[%c35_i32, %c0_i32_107] : memref<64x32xf32, #tpu.memory_space<vmem>> -> memref<1x32xf32, #tpu.memory_space<vmem>>
    %178 = tpu.memref_slice %arg9[%c3_i32_105] : memref<8x!tpu.dma_semaphore, #tpu.memory_space<semaphore_mem>> -> memref<1x!tpu.dma_semaphore, #tpu.memory_space<semaphore_mem>>
    %179 = tpu.memref_squeeze %178 : memref<1x!tpu.dma_semaphore, #tpu.memory_space<semaphore_mem>> -> memref<!tpu.dma_semaphore, #tpu.memory_space<semaphore_mem>>
    tpu.enqueue_dma source(%176 : memref<1x32xf32, #tpu.memory_space<any>>) target(%177 : memref<1x32xf32, #tpu.memory_space<vmem>>) target_semaphore(%179 : memref<!tpu.dma_semaphore, #tpu.memory_space<semaphore_mem>>)
    %c36 = arith.constant 36 : index
    %180 = memref.load %arg0[%c36] : memref<64xi32, #tpu.memory_space<smem>>
    %c4_i32_108 = arith.constant 4 : i32
    %c0_i32_109 = arith.constant 0 : i32
    %181 = tpu.memref_slice %arg1[%180, %c0_i32_109] : memref<64x32xf32, #tpu.memory_space<any>> -> memref<1x32xf32, #tpu.memory_space<any>>
    %c36_i32 = arith.constant 36 : i32
    %c0_i32_110 = arith.constant 0 : i32
    %182 = tpu.memref_slice %arg8[%c36_i32, %c0_i32_110] : memref<64x32xf32, #tpu.memory_space<vmem>> -> memref<1x32xf32, #tpu.memory_space<vmem>>
    %183 = tpu.memref_slice %arg9[%c4_i32_108] : memref<8x!tpu.dma_semaphore, #tpu.memory_space<semaphore_mem>> -> memref<1x!tpu.dma_semaphore, #tpu.memory_space<semaphore_mem>>
    %184 = tpu.memref_squeeze %183 : memref<1x!tpu.dma_semaphore, #tpu.memory_space<semaphore_mem>> -> memref<!tpu.dma_semaphore, #tpu.memory_space<semaphore_mem>>
    tpu.enqueue_dma source(%181 : memref<1x32xf32, #tpu.memory_space<any>>) target(%182 : memref<1x32xf32, #tpu.memory_space<vmem>>) target_semaphore(%184 : memref<!tpu.dma_semaphore, #tpu.memory_space<semaphore_mem>>)
    %c37 = arith.constant 37 : index
    %185 = memref.load %arg0[%c37] : memref<64xi32, #tpu.memory_space<smem>>
    %c5_i32_111 = arith.constant 5 : i32
    %c0_i32_112 = arith.constant 0 : i32
    %186 = tpu.memref_slice %arg1[%185, %c0_i32_112] : memref<64x32xf32, #tpu.memory_space<any>> -> memref<1x32xf32, #tpu.memory_space<any>>
    %c37_i32 = arith.constant 37 : i32
    %c0_i32_113 = arith.constant 0 : i32
    %187 = tpu.memref_slice %arg8[%c37_i32, %c0_i32_113] : memref<64x32xf32, #tpu.memory_space<vmem>> -> memref<1x32xf32, #tpu.memory_space<vmem>>
    %188 = tpu.memref_slice %arg9[%c5_i32_111] : memref<8x!tpu.dma_semaphore, #tpu.memory_space<semaphore_mem>> -> memref<1x!tpu.dma_semaphore, #tpu.memory_space<semaphore_mem>>
    %189 = tpu.memref_squeeze %188 : memref<1x!tpu.dma_semaphore, #tpu.memory_space<semaphore_mem>> -> memref<!tpu.dma_semaphore, #tpu.memory_space<semaphore_mem>>
    tpu.enqueue_dma source(%186 : memref<1x32xf32, #tpu.memory_space<any>>) target(%187 : memref<1x32xf32, #tpu.memory_space<vmem>>) target_semaphore(%189 : memref<!tpu.dma_semaphore, #tpu.memory_space<semaphore_mem>>)
    %c38 = arith.constant 38 : index
    %190 = memref.load %arg0[%c38] : memref<64xi32, #tpu.memory_space<smem>>
    %c6_i32_114 = arith.constant 6 : i32
    %c0_i32_115 = arith.constant 0 : i32
    %191 = tpu.memref_slice %arg1[%190, %c0_i32_115] : memref<64x32xf32, #tpu.memory_space<any>> -> memref<1x32xf32, #tpu.memory_space<any>>
    %c38_i32 = arith.constant 38 : i32
    %c0_i32_116 = arith.constant 0 : i32
    %192 = tpu.memref_slice %arg8[%c38_i32, %c0_i32_116] : memref<64x32xf32, #tpu.memory_space<vmem>> -> memref<1x32xf32, #tpu.memory_space<vmem>>
    %193 = tpu.memref_slice %arg9[%c6_i32_114] : memref<8x!tpu.dma_semaphore, #tpu.memory_space<semaphore_mem>> -> memref<1x!tpu.dma_semaphore, #tpu.memory_space<semaphore_mem>>
    %194 = tpu.memref_squeeze %193 : memref<1x!tpu.dma_semaphore, #tpu.memory_space<semaphore_mem>> -> memref<!tpu.dma_semaphore, #tpu.memory_space<semaphore_mem>>
    tpu.enqueue_dma source(%191 : memref<1x32xf32, #tpu.memory_space<any>>) target(%192 : memref<1x32xf32, #tpu.memory_space<vmem>>) target_semaphore(%194 : memref<!tpu.dma_semaphore, #tpu.memory_space<semaphore_mem>>)
    %c39 = arith.constant 39 : index
    %195 = memref.load %arg0[%c39] : memref<64xi32, #tpu.memory_space<smem>>
    %c7_i32_117 = arith.constant 7 : i32
    %c0_i32_118 = arith.constant 0 : i32
    %196 = tpu.memref_slice %arg1[%195, %c0_i32_118] : memref<64x32xf32, #tpu.memory_space<any>> -> memref<1x32xf32, #tpu.memory_space<any>>
    %c39_i32 = arith.constant 39 : i32
    %c0_i32_119 = arith.constant 0 : i32
    %197 = tpu.memref_slice %arg8[%c39_i32, %c0_i32_119] : memref<64x32xf32, #tpu.memory_space<vmem>> -> memref<1x32xf32, #tpu.memory_space<vmem>>
    %198 = tpu.memref_slice %arg9[%c7_i32_117] : memref<8x!tpu.dma_semaphore, #tpu.memory_space<semaphore_mem>> -> memref<1x!tpu.dma_semaphore, #tpu.memory_space<semaphore_mem>>
    %199 = tpu.memref_squeeze %198 : memref<1x!tpu.dma_semaphore, #tpu.memory_space<semaphore_mem>> -> memref<!tpu.dma_semaphore, #tpu.memory_space<semaphore_mem>>
    tpu.enqueue_dma source(%196 : memref<1x32xf32, #tpu.memory_space<any>>) target(%197 : memref<1x32xf32, #tpu.memory_space<vmem>>) target_semaphore(%199 : memref<!tpu.dma_semaphore, #tpu.memory_space<semaphore_mem>>)
    %c40 = arith.constant 40 : index
    %200 = memref.load %arg0[%c40] : memref<64xi32, #tpu.memory_space<smem>>
    %c0_i32_120 = arith.constant 0 : i32
    %c0_i32_121 = arith.constant 0 : i32
    %201 = tpu.memref_slice %arg1[%200, %c0_i32_121] : memref<64x32xf32, #tpu.memory_space<any>> -> memref<1x32xf32, #tpu.memory_space<any>>
    %c40_i32 = arith.constant 40 : i32
    %c0_i32_122 = arith.constant 0 : i32
    %202 = tpu.memref_slice %arg8[%c40_i32, %c0_i32_122] : memref<64x32xf32, #tpu.memory_space<vmem>> -> memref<1x32xf32, #tpu.memory_space<vmem>>
    %203 = tpu.memref_slice %arg9[%c0_i32_120] : memref<8x!tpu.dma_semaphore, #tpu.memory_space<semaphore_mem>> -> memref<1x!tpu.dma_semaphore, #tpu.memory_space<semaphore_mem>>
    %204 = tpu.memref_squeeze %203 : memref<1x!tpu.dma_semaphore, #tpu.memory_space<semaphore_mem>> -> memref<!tpu.dma_semaphore, #tpu.memory_space<semaphore_mem>>
    tpu.enqueue_dma source(%201 : memref<1x32xf32, #tpu.memory_space<any>>) target(%202 : memref<1x32xf32, #tpu.memory_space<vmem>>) target_semaphore(%204 : memref<!tpu.dma_semaphore, #tpu.memory_space<semaphore_mem>>)
    %c41 = arith.constant 41 : index
    %205 = memref.load %arg0[%c41] : memref<64xi32, #tpu.memory_space<smem>>
    %c1_i32_123 = arith.constant 1 : i32
    %c0_i32_124 = arith.constant 0 : i32
    %206 = tpu.memref_slice %arg1[%205, %c0_i32_124] : memref<64x32xf32, #tpu.memory_space<any>> -> memref<1x32xf32, #tpu.memory_space<any>>
    %c41_i32 = arith.constant 41 : i32
    %c0_i32_125 = arith.constant 0 : i32
    %207 = tpu.memref_slice %arg8[%c41_i32, %c0_i32_125] : memref<64x32xf32, #tpu.memory_space<vmem>> -> memref<1x32xf32, #tpu.memory_space<vmem>>
    %208 = tpu.memref_slice %arg9[%c1_i32_123] : memref<8x!tpu.dma_semaphore, #tpu.memory_space<semaphore_mem>> -> memref<1x!tpu.dma_semaphore, #tpu.memory_space<semaphore_mem>>
    %209 = tpu.memref_squeeze %208 : memref<1x!tpu.dma_semaphore, #tpu.memory_space<semaphore_mem>> -> memref<!tpu.dma_semaphore, #tpu.memory_space<semaphore_mem>>
    tpu.enqueue_dma source(%206 : memref<1x32xf32, #tpu.memory_space<any>>) target(%207 : memref<1x32xf32, #tpu.memory_space<vmem>>) target_semaphore(%209 : memref<!tpu.dma_semaphore, #tpu.memory_space<semaphore_mem>>)
    %c42 = arith.constant 42 : index
    %210 = memref.load %arg0[%c42] : memref<64xi32, #tpu.memory_space<smem>>
    %c2_i32_126 = arith.constant 2 : i32
    %c0_i32_127 = arith.constant 0 : i32
    %211 = tpu.memref_slice %arg1[%210, %c0_i32_127] : memref<64x32xf32, #tpu.memory_space<any>> -> memref<1x32xf32, #tpu.memory_space<any>>
    %c42_i32 = arith.constant 42 : i32
    %c0_i32_128 = arith.constant 0 : i32
    %212 = tpu.memref_slice %arg8[%c42_i32, %c0_i32_128] : memref<64x32xf32, #tpu.memory_space<vmem>> -> memref<1x32xf32, #tpu.memory_space<vmem>>
    %213 = tpu.memref_slice %arg9[%c2_i32_126] : memref<8x!tpu.dma_semaphore, #tpu.memory_space<semaphore_mem>> -> memref<1x!tpu.dma_semaphore, #tpu.memory_space<semaphore_mem>>
    %214 = tpu.memref_squeeze %213 : memref<1x!tpu.dma_semaphore, #tpu.memory_space<semaphore_mem>> -> memref<!tpu.dma_semaphore, #tpu.memory_space<semaphore_mem>>
    tpu.enqueue_dma source(%211 : memref<1x32xf32, #tpu.memory_space<any>>) target(%212 : memref<1x32xf32, #tpu.memory_space<vmem>>) target_semaphore(%214 : memref<!tpu.dma_semaphore, #tpu.memory_space<semaphore_mem>>)
    %c43 = arith.constant 43 : index
    %215 = memref.load %arg0[%c43] : memref<64xi32, #tpu.memory_space<smem>>
    %c3_i32_129 = arith.constant 3 : i32
    %c0_i32_130 = arith.constant 0 : i32
    %216 = tpu.memref_slice %arg1[%215, %c0_i32_130] : memref<64x32xf32, #tpu.memory_space<any>> -> memref<1x32xf32, #tpu.memory_space<any>>
    %c43_i32 = arith.constant 43 : i32
    %c0_i32_131 = arith.constant 0 : i32
    %217 = tpu.memref_slice %arg8[%c43_i32, %c0_i32_131] : memref<64x32xf32, #tpu.memory_space<vmem>> -> memref<1x32xf32, #tpu.memory_space<vmem>>
    %218 = tpu.memref_slice %arg9[%c3_i32_129] : memref<8x!tpu.dma_semaphore, #tpu.memory_space<semaphore_mem>> -> memref<1x!tpu.dma_semaphore, #tpu.memory_space<semaphore_mem>>
    %219 = tpu.memref_squeeze %218 : memref<1x!tpu.dma_semaphore, #tpu.memory_space<semaphore_mem>> -> memref<!tpu.dma_semaphore, #tpu.memory_space<semaphore_mem>>
    tpu.enqueue_dma source(%216 : memref<1x32xf32, #tpu.memory_space<any>>) target(%217 : memref<1x32xf32, #tpu.memory_space<vmem>>) target_semaphore(%219 : memref<!tpu.dma_semaphore, #tpu.memory_space<semaphore_mem>>)
    %c44 = arith.constant 44 : index
    %220 = memref.load %arg0[%c44] : memref<64xi32, #tpu.memory_space<smem>>
    %c4_i32_132 = arith.constant 4 : i32
    %c0_i32_133 = arith.constant 0 : i32
    %221 = tpu.memref_slice %arg1[%220, %c0_i32_133] : memref<64x32xf32, #tpu.memory_space<any>> -> memref<1x32xf32, #tpu.memory_space<any>>
    %c44_i32 = arith.constant 44 : i32
    %c0_i32_134 = arith.constant 0 : i32
    %222 = tpu.memref_slice %arg8[%c44_i32, %c0_i32_134] : memref<64x32xf32, #tpu.memory_space<vmem>> -> memref<1x32xf32, #tpu.memory_space<vmem>>
    %223 = tpu.memref_slice %arg9[%c4_i32_132] : memref<8x!tpu.dma_semaphore, #tpu.memory_space<semaphore_mem>> -> memref<1x!tpu.dma_semaphore, #tpu.memory_space<semaphore_mem>>
    %224 = tpu.memref_squeeze %223 : memref<1x!tpu.dma_semaphore, #tpu.memory_space<semaphore_mem>> -> memref<!tpu.dma_semaphore, #tpu.memory_space<semaphore_mem>>
    tpu.enqueue_dma source(%221 : memref<1x32xf32, #tpu.memory_space<any>>) target(%222 : memref<1x32xf32, #tpu.memory_space<vmem>>) target_semaphore(%224 : memref<!tpu.dma_semaphore, #tpu.memory_space<semaphore_mem>>)
    %c45 = arith.constant 45 : index
    %225 = memref.load %arg0[%c45] : memref<64xi32, #tpu.memory_space<smem>>
    %c5_i32_135 = arith.constant 5 : i32
    %c0_i32_136 = arith.constant 0 : i32
    %226 = tpu.memref_slice %arg1[%225, %c0_i32_136] : memref<64x32xf32, #tpu.memory_space<any>> -> memref<1x32xf32, #tpu.memory_space<any>>
    %c45_i32 = arith.constant 45 : i32
    %c0_i32_137 = arith.constant 0 : i32
    %227 = tpu.memref_slice %arg8[%c45_i32, %c0_i32_137] : memref<64x32xf32, #tpu.memory_space<vmem>> -> memref<1x32xf32, #tpu.memory_space<vmem>>
    %228 = tpu.memref_slice %arg9[%c5_i32_135] : memref<8x!tpu.dma_semaphore, #tpu.memory_space<semaphore_mem>> -> memref<1x!tpu.dma_semaphore, #tpu.memory_space<semaphore_mem>>
    %229 = tpu.memref_squeeze %228 : memref<1x!tpu.dma_semaphore, #tpu.memory_space<semaphore_mem>> -> memref<!tpu.dma_semaphore, #tpu.memory_space<semaphore_mem>>
    tpu.enqueue_dma source(%226 : memref<1x32xf32, #tpu.memory_space<any>>) target(%227 : memref<1x32xf32, #tpu.memory_space<vmem>>) target_semaphore(%229 : memref<!tpu.dma_semaphore, #tpu.memory_space<semaphore_mem>>)
    %c46 = arith.constant 46 : index
    %230 = memref.load %arg0[%c46] : memref<64xi32, #tpu.memory_space<smem>>
    %c6_i32_138 = arith.constant 6 : i32
    %c0_i32_139 = arith.constant 0 : i32
    %231 = tpu.memref_slice %arg1[%230, %c0_i32_139] : memref<64x32xf32, #tpu.memory_space<any>> -> memref<1x32xf32, #tpu.memory_space<any>>
    %c46_i32 = arith.constant 46 : i32
    %c0_i32_140 = arith.constant 0 : i32
    %232 = tpu.memref_slice %arg8[%c46_i32, %c0_i32_140] : memref<64x32xf32, #tpu.memory_space<vmem>> -> memref<1x32xf32, #tpu.memory_space<vmem>>
    %233 = tpu.memref_slice %arg9[%c6_i32_138] : memref<8x!tpu.dma_semaphore, #tpu.memory_space<semaphore_mem>> -> memref<1x!tpu.dma_semaphore, #tpu.memory_space<semaphore_mem>>
    %234 = tpu.memref_squeeze %233 : memref<1x!tpu.dma_semaphore, #tpu.memory_space<semaphore_mem>> -> memref<!tpu.dma_semaphore, #tpu.memory_space<semaphore_mem>>
    tpu.enqueue_dma source(%231 : memref<1x32xf32, #tpu.memory_space<any>>) target(%232 : memref<1x32xf32, #tpu.memory_space<vmem>>) target_semaphore(%234 : memref<!tpu.dma_semaphore, #tpu.memory_space<semaphore_mem>>)
    %c47 = arith.constant 47 : index
    %235 = memref.load %arg0[%c47] : memref<64xi32, #tpu.memory_space<smem>>
    %c7_i32_141 = arith.constant 7 : i32
    %c0_i32_142 = arith.constant 0 : i32
    %236 = tpu.memref_slice %arg1[%235, %c0_i32_142] : memref<64x32xf32, #tpu.memory_space<any>> -> memref<1x32xf32, #tpu.memory_space<any>>
    %c47_i32 = arith.constant 47 : i32
    %c0_i32_143 = arith.constant 0 : i32
    %237 = tpu.memref_slice %arg8[%c47_i32, %c0_i32_143] : memref<64x32xf32, #tpu.memory_space<vmem>> -> memref<1x32xf32, #tpu.memory_space<vmem>>
    %238 = tpu.memref_slice %arg9[%c7_i32_141] : memref<8x!tpu.dma_semaphore, #tpu.memory_space<semaphore_mem>> -> memref<1x!tpu.dma_semaphore, #tpu.memory_space<semaphore_mem>>
    %239 = tpu.memref_squeeze %238 : memref<1x!tpu.dma_semaphore, #tpu.memory_space<semaphore_mem>> -> memref<!tpu.dma_semaphore, #tpu.memory_space<semaphore_mem>>
    tpu.enqueue_dma source(%236 : memref<1x32xf32, #tpu.memory_space<any>>) target(%237 : memref<1x32xf32, #tpu.memory_space<vmem>>) target_semaphore(%239 : memref<!tpu.dma_semaphore, #tpu.memory_space<semaphore_mem>>)
    %c48 = arith.constant 48 : index
    %240 = memref.load %arg0[%c48] : memref<64xi32, #tpu.memory_space<smem>>
    %c0_i32_144 = arith.constant 0 : i32
    %c0_i32_145 = arith.constant 0 : i32
    %241 = tpu.memref_slice %arg1[%240, %c0_i32_145] : memref<64x32xf32, #tpu.memory_space<any>> -> memref<1x32xf32, #tpu.memory_space<any>>
    %c48_i32 = arith.constant 48 : i32
    %c0_i32_146 = arith.constant 0 : i32
    %242 = tpu.memref_slice %arg8[%c48_i32, %c0_i32_146] : memref<64x32xf32, #tpu.memory_space<vmem>> -> memref<1x32xf32, #tpu.memory_space<vmem>>
    %243 = tpu.memref_slice %arg9[%c0_i32_144] : memref<8x!tpu.dma_semaphore, #tpu.memory_space<semaphore_mem>> -> memref<1x!tpu.dma_semaphore, #tpu.memory_space<semaphore_mem>>
    %244 = tpu.memref_squeeze %243 : memref<1x!tpu.dma_semaphore, #tpu.memory_space<semaphore_mem>> -> memref<!tpu.dma_semaphore, #tpu.memory_space<semaphore_mem>>
    tpu.enqueue_dma source(%241 : memref<1x32xf32, #tpu.memory_space<any>>) target(%242 : memref<1x32xf32, #tpu.memory_space<vmem>>) target_semaphore(%244 : memref<!tpu.dma_semaphore, #tpu.memory_space<semaphore_mem>>)
    %c49 = arith.constant 49 : index
    %245 = memref.load %arg0[%c49] : memref<64xi32, #tpu.memory_space<smem>>
    %c1_i32_147 = arith.constant 1 : i32
    %c0_i32_148 = arith.constant 0 : i32
    %246 = tpu.memref_slice %arg1[%245, %c0_i32_148] : memref<64x32xf32, #tpu.memory_space<any>> -> memref<1x32xf32, #tpu.memory_space<any>>
    %c49_i32 = arith.constant 49 : i32
    %c0_i32_149 = arith.constant 0 : i32
    %247 = tpu.memref_slice %arg8[%c49_i32, %c0_i32_149] : memref<64x32xf32, #tpu.memory_space<vmem>> -> memref<1x32xf32, #tpu.memory_space<vmem>>
    %248 = tpu.memref_slice %arg9[%c1_i32_147] : memref<8x!tpu.dma_semaphore, #tpu.memory_space<semaphore_mem>> -> memref<1x!tpu.dma_semaphore, #tpu.memory_space<semaphore_mem>>
    %249 = tpu.memref_squeeze %248 : memref<1x!tpu.dma_semaphore, #tpu.memory_space<semaphore_mem>> -> memref<!tpu.dma_semaphore, #tpu.memory_space<semaphore_mem>>
    tpu.enqueue_dma source(%246 : memref<1x32xf32, #tpu.memory_space<any>>) target(%247 : memref<1x32xf32, #tpu.memory_space<vmem>>) target_semaphore(%249 : memref<!tpu.dma_semaphore, #tpu.memory_space<semaphore_mem>>)
    %c50 = arith.constant 50 : index
    %250 = memref.load %arg0[%c50] : memref<64xi32, #tpu.memory_space<smem>>
    %c2_i32_150 = arith.constant 2 : i32
    %c0_i32_151 = arith.constant 0 : i32
    %251 = tpu.memref_slice %arg1[%250, %c0_i32_151] : memref<64x32xf32, #tpu.memory_space<any>> -> memref<1x32xf32, #tpu.memory_space<any>>
    %c50_i32 = arith.constant 50 : i32
    %c0_i32_152 = arith.constant 0 : i32
    %252 = tpu.memref_slice %arg8[%c50_i32, %c0_i32_152] : memref<64x32xf32, #tpu.memory_space<vmem>> -> memref<1x32xf32, #tpu.memory_space<vmem>>
    %253 = tpu.memref_slice %arg9[%c2_i32_150] : memref<8x!tpu.dma_semaphore, #tpu.memory_space<semaphore_mem>> -> memref<1x!tpu.dma_semaphore, #tpu.memory_space<semaphore_mem>>
    %254 = tpu.memref_squeeze %253 : memref<1x!tpu.dma_semaphore, #tpu.memory_space<semaphore_mem>> -> memref<!tpu.dma_semaphore, #tpu.memory_space<semaphore_mem>>
    tpu.enqueue_dma source(%251 : memref<1x32xf32, #tpu.memory_space<any>>) target(%252 : memref<1x32xf32, #tpu.memory_space<vmem>>) target_semaphore(%254 : memref<!tpu.dma_semaphore, #tpu.memory_space<semaphore_mem>>)
    %c51 = arith.constant 51 : index
    %255 = memref.load %arg0[%c51] : memref<64xi32, #tpu.memory_space<smem>>
    %c3_i32_153 = arith.constant 3 : i32
    %c0_i32_154 = arith.constant 0 : i32
    %256 = tpu.memref_slice %arg1[%255, %c0_i32_154] : memref<64x32xf32, #tpu.memory_space<any>> -> memref<1x32xf32, #tpu.memory_space<any>>
    %c51_i32 = arith.constant 51 : i32
    %c0_i32_155 = arith.constant 0 : i32
    %257 = tpu.memref_slice %arg8[%c51_i32, %c0_i32_155] : memref<64x32xf32, #tpu.memory_space<vmem>> -> memref<1x32xf32, #tpu.memory_space<vmem>>
    %258 = tpu.memref_slice %arg9[%c3_i32_153] : memref<8x!tpu.dma_semaphore, #tpu.memory_space<semaphore_mem>> -> memref<1x!tpu.dma_semaphore, #tpu.memory_space<semaphore_mem>>
    %259 = tpu.memref_squeeze %258 : memref<1x!tpu.dma_semaphore, #tpu.memory_space<semaphore_mem>> -> memref<!tpu.dma_semaphore, #tpu.memory_space<semaphore_mem>>
    tpu.enqueue_dma source(%256 : memref<1x32xf32, #tpu.memory_space<any>>) target(%257 : memref<1x32xf32, #tpu.memory_space<vmem>>) target_semaphore(%259 : memref<!tpu.dma_semaphore, #tpu.memory_space<semaphore_mem>>)
    %c52 = arith.constant 52 : index
    %260 = memref.load %arg0[%c52] : memref<64xi32, #tpu.memory_space<smem>>
    %c4_i32_156 = arith.constant 4 : i32
    %c0_i32_157 = arith.constant 0 : i32
    %261 = tpu.memref_slice %arg1[%260, %c0_i32_157] : memref<64x32xf32, #tpu.memory_space<any>> -> memref<1x32xf32, #tpu.memory_space<any>>
    %c52_i32 = arith.constant 52 : i32
    %c0_i32_158 = arith.constant 0 : i32
    %262 = tpu.memref_slice %arg8[%c52_i32, %c0_i32_158] : memref<64x32xf32, #tpu.memory_space<vmem>> -> memref<1x32xf32, #tpu.memory_space<vmem>>
    %263 = tpu.memref_slice %arg9[%c4_i32_156] : memref<8x!tpu.dma_semaphore, #tpu.memory_space<semaphore_mem>> -> memref<1x!tpu.dma_semaphore, #tpu.memory_space<semaphore_mem>>
    %264 = tpu.memref_squeeze %263 : memref<1x!tpu.dma_semaphore, #tpu.memory_space<semaphore_mem>> -> memref<!tpu.dma_semaphore, #tpu.memory_space<semaphore_mem>>
    tpu.enqueue_dma source(%261 : memref<1x32xf32, #tpu.memory_space<any>>) target(%262 : memref<1x32xf32, #tpu.memory_space<vmem>>) target_semaphore(%264 : memref<!tpu.dma_semaphore, #tpu.memory_space<semaphore_mem>>)
    %c53 = arith.constant 53 : index
    %265 = memref.load %arg0[%c53] : memref<64xi32, #tpu.memory_space<smem>>
    %c5_i32_159 = arith.constant 5 : i32
    %c0_i32_160 = arith.constant 0 : i32
    %266 = tpu.memref_slice %arg1[%265, %c0_i32_160] : memref<64x32xf32, #tpu.memory_space<any>> -> memref<1x32xf32, #tpu.memory_space<any>>
    %c53_i32 = arith.constant 53 : i32
    %c0_i32_161 = arith.constant 0 : i32
    %267 = tpu.memref_slice %arg8[%c53_i32, %c0_i32_161] : memref<64x32xf32, #tpu.memory_space<vmem>> -> memref<1x32xf32, #tpu.memory_space<vmem>>
    %268 = tpu.memref_slice %arg9[%c5_i32_159] : memref<8x!tpu.dma_semaphore, #tpu.memory_space<semaphore_mem>> -> memref<1x!tpu.dma_semaphore, #tpu.memory_space<semaphore_mem>>
    %269 = tpu.memref_squeeze %268 : memref<1x!tpu.dma_semaphore, #tpu.memory_space<semaphore_mem>> -> memref<!tpu.dma_semaphore, #tpu.memory_space<semaphore_mem>>
    tpu.enqueue_dma source(%266 : memref<1x32xf32, #tpu.memory_space<any>>) target(%267 : memref<1x32xf32, #tpu.memory_space<vmem>>) target_semaphore(%269 : memref<!tpu.dma_semaphore, #tpu.memory_space<semaphore_mem>>)
    %c54 = arith.constant 54 : index
    %270 = memref.load %arg0[%c54] : memref<64xi32, #tpu.memory_space<smem>>
    %c6_i32_162 = arith.constant 6 : i32
    %c0_i32_163 = arith.constant 0 : i32
    %271 = tpu.memref_slice %arg1[%270, %c0_i32_163] : memref<64x32xf32, #tpu.memory_space<any>> -> memref<1x32xf32, #tpu.memory_space<any>>
    %c54_i32 = arith.constant 54 : i32
    %c0_i32_164 = arith.constant 0 : i32
    %272 = tpu.memref_slice %arg8[%c54_i32, %c0_i32_164] : memref<64x32xf32, #tpu.memory_space<vmem>> -> memref<1x32xf32, #tpu.memory_space<vmem>>
    %273 = tpu.memref_slice %arg9[%c6_i32_162] : memref<8x!tpu.dma_semaphore, #tpu.memory_space<semaphore_mem>> -> memref<1x!tpu.dma_semaphore, #tpu.memory_space<semaphore_mem>>
    %274 = tpu.memref_squeeze %273 : memref<1x!tpu.dma_semaphore, #tpu.memory_space<semaphore_mem>> -> memref<!tpu.dma_semaphore, #tpu.memory_space<semaphore_mem>>
    tpu.enqueue_dma source(%271 : memref<1x32xf32, #tpu.memory_space<any>>) target(%272 : memref<1x32xf32, #tpu.memory_space<vmem>>) target_semaphore(%274 : memref<!tpu.dma_semaphore, #tpu.memory_space<semaphore_mem>>)
    %c55 = arith.constant 55 : index
    %275 = memref.load %arg0[%c55] : memref<64xi32, #tpu.memory_space<smem>>
    %c7_i32_165 = arith.constant 7 : i32
    %c0_i32_166 = arith.constant 0 : i32
    %276 = tpu.memref_slice %arg1[%275, %c0_i32_166] : memref<64x32xf32, #tpu.memory_space<any>> -> memref<1x32xf32, #tpu.memory_space<any>>
    %c55_i32 = arith.constant 55 : i32
    %c0_i32_167 = arith.constant 0 : i32
    %277 = tpu.memref_slice %arg8[%c55_i32, %c0_i32_167] : memref<64x32xf32, #tpu.memory_space<vmem>> -> memref<1x32xf32, #tpu.memory_space<vmem>>
    %278 = tpu.memref_slice %arg9[%c7_i32_165] : memref<8x!tpu.dma_semaphore, #tpu.memory_space<semaphore_mem>> -> memref<1x!tpu.dma_semaphore, #tpu.memory_space<semaphore_mem>>
    %279 = tpu.memref_squeeze %278 : memref<1x!tpu.dma_semaphore, #tpu.memory_space<semaphore_mem>> -> memref<!tpu.dma_semaphore, #tpu.memory_space<semaphore_mem>>
    tpu.enqueue_dma source(%276 : memref<1x32xf32, #tpu.memory_space<any>>) target(%277 : memref<1x32xf32, #tpu.memory_space<vmem>>) target_semaphore(%279 : memref<!tpu.dma_semaphore, #tpu.memory_space<semaphore_mem>>)
    %c56 = arith.constant 56 : index
    %280 = memref.load %arg0[%c56] : memref<64xi32, #tpu.memory_space<smem>>
    %c0_i32_168 = arith.constant 0 : i32
    %c0_i32_169 = arith.constant 0 : i32
    %281 = tpu.memref_slice %arg1[%280, %c0_i32_169] : memref<64x32xf32, #tpu.memory_space<any>> -> memref<1x32xf32, #tpu.memory_space<any>>
    %c56_i32 = arith.constant 56 : i32
    %c0_i32_170 = arith.constant 0 : i32
    %282 = tpu.memref_slice %arg8[%c56_i32, %c0_i32_170] : memref<64x32xf32, #tpu.memory_space<vmem>> -> memref<1x32xf32, #tpu.memory_space<vmem>>
    %283 = tpu.memref_slice %arg9[%c0_i32_168] : memref<8x!tpu.dma_semaphore, #tpu.memory_space<semaphore_mem>> -> memref<1x!tpu.dma_semaphore, #tpu.memory_space<semaphore_mem>>
    %284 = tpu.memref_squeeze %283 : memref<1x!tpu.dma_semaphore, #tpu.memory_space<semaphore_mem>> -> memref<!tpu.dma_semaphore, #tpu.memory_space<semaphore_mem>>
    tpu.enqueue_dma source(%281 : memref<1x32xf32, #tpu.memory_space<any>>) target(%282 : memref<1x32xf32, #tpu.memory_space<vmem>>) target_semaphore(%284 : memref<!tpu.dma_semaphore, #tpu.memory_space<semaphore_mem>>)
    %c57 = arith.constant 57 : index
    %285 = memref.load %arg0[%c57] : memref<64xi32, #tpu.memory_space<smem>>
    %c1_i32_171 = arith.constant 1 : i32
    %c0_i32_172 = arith.constant 0 : i32
    %286 = tpu.memref_slice %arg1[%285, %c0_i32_172] : memref<64x32xf32, #tpu.memory_space<any>> -> memref<1x32xf32, #tpu.memory_space<any>>
    %c57_i32 = arith.constant 57 : i32
    %c0_i32_173 = arith.constant 0 : i32
    %287 = tpu.memref_slice %arg8[%c57_i32, %c0_i32_173] : memref<64x32xf32, #tpu.memory_space<vmem>> -> memref<1x32xf32, #tpu.memory_space<vmem>>
    %288 = tpu.memref_slice %arg9[%c1_i32_171] : memref<8x!tpu.dma_semaphore, #tpu.memory_space<semaphore_mem>> -> memref<1x!tpu.dma_semaphore, #tpu.memory_space<semaphore_mem>>
    %289 = tpu.memref_squeeze %288 : memref<1x!tpu.dma_semaphore, #tpu.memory_space<semaphore_mem>> -> memref<!tpu.dma_semaphore, #tpu.memory_space<semaphore_mem>>
    tpu.enqueue_dma source(%286 : memref<1x32xf32, #tpu.memory_space<any>>) target(%287 : memref<1x32xf32, #tpu.memory_space<vmem>>) target_semaphore(%289 : memref<!tpu.dma_semaphore, #tpu.memory_space<semaphore_mem>>)
    %c58 = arith.constant 58 : index
    %290 = memref.load %arg0[%c58] : memref<64xi32, #tpu.memory_space<smem>>
    %c2_i32_174 = arith.constant 2 : i32
    %c0_i32_175 = arith.constant 0 : i32
    %291 = tpu.memref_slice %arg1[%290, %c0_i32_175] : memref<64x32xf32, #tpu.memory_space<any>> -> memref<1x32xf32, #tpu.memory_space<any>>
    %c58_i32 = arith.constant 58 : i32
    %c0_i32_176 = arith.constant 0 : i32
    %292 = tpu.memref_slice %arg8[%c58_i32, %c0_i32_176] : memref<64x32xf32, #tpu.memory_space<vmem>> -> memref<1x32xf32, #tpu.memory_space<vmem>>
    %293 = tpu.memref_slice %arg9[%c2_i32_174] : memref<8x!tpu.dma_semaphore, #tpu.memory_space<semaphore_mem>> -> memref<1x!tpu.dma_semaphore, #tpu.memory_space<semaphore_mem>>
    %294 = tpu.memref_squeeze %293 : memref<1x!tpu.dma_semaphore, #tpu.memory_space<semaphore_mem>> -> memref<!tpu.dma_semaphore, #tpu.memory_space<semaphore_mem>>
    tpu.enqueue_dma source(%291 : memref<1x32xf32, #tpu.memory_space<any>>) target(%292 : memref<1x32xf32, #tpu.memory_space<vmem>>) target_semaphore(%294 : memref<!tpu.dma_semaphore, #tpu.memory_space<semaphore_mem>>)
    %c59 = arith.constant 59 : index
    %295 = memref.load %arg0[%c59] : memref<64xi32, #tpu.memory_space<smem>>
    %c3_i32_177 = arith.constant 3 : i32
    %c0_i32_178 = arith.constant 0 : i32
    %296 = tpu.memref_slice %arg1[%295, %c0_i32_178] : memref<64x32xf32, #tpu.memory_space<any>> -> memref<1x32xf32, #tpu.memory_space<any>>
    %c59_i32 = arith.constant 59 : i32
    %c0_i32_179 = arith.constant 0 : i32
    %297 = tpu.memref_slice %arg8[%c59_i32, %c0_i32_179] : memref<64x32xf32, #tpu.memory_space<vmem>> -> memref<1x32xf32, #tpu.memory_space<vmem>>
    %298 = tpu.memref_slice %arg9[%c3_i32_177] : memref<8x!tpu.dma_semaphore, #tpu.memory_space<semaphore_mem>> -> memref<1x!tpu.dma_semaphore, #tpu.memory_space<semaphore_mem>>
    %299 = tpu.memref_squeeze %298 : memref<1x!tpu.dma_semaphore, #tpu.memory_space<semaphore_mem>> -> memref<!tpu.dma_semaphore, #tpu.memory_space<semaphore_mem>>
    tpu.enqueue_dma source(%296 : memref<1x32xf32, #tpu.memory_space<any>>) target(%297 : memref<1x32xf32, #tpu.memory_space<vmem>>) target_semaphore(%299 : memref<!tpu.dma_semaphore, #tpu.memory_space<semaphore_mem>>)
    %c60 = arith.constant 60 : index
    %300 = memref.load %arg0[%c60] : memref<64xi32, #tpu.memory_space<smem>>
    %c4_i32_180 = arith.constant 4 : i32
    %c0_i32_181 = arith.constant 0 : i32
    %301 = tpu.memref_slice %arg1[%300, %c0_i32_181] : memref<64x32xf32, #tpu.memory_space<any>> -> memref<1x32xf32, #tpu.memory_space<any>>
    %c60_i32 = arith.constant 60 : i32
    %c0_i32_182 = arith.constant 0 : i32
    %302 = tpu.memref_slice %arg8[%c60_i32, %c0_i32_182] : memref<64x32xf32, #tpu.memory_space<vmem>> -> memref<1x32xf32, #tpu.memory_space<vmem>>
    %303 = tpu.memref_slice %arg9[%c4_i32_180] : memref<8x!tpu.dma_semaphore, #tpu.memory_space<semaphore_mem>> -> memref<1x!tpu.dma_semaphore, #tpu.memory_space<semaphore_mem>>
    %304 = tpu.memref_squeeze %303 : memref<1x!tpu.dma_semaphore, #tpu.memory_space<semaphore_mem>> -> memref<!tpu.dma_semaphore, #tpu.memory_space<semaphore_mem>>
    tpu.enqueue_dma source(%301 : memref<1x32xf32, #tpu.memory_space<any>>) target(%302 : memref<1x32xf32, #tpu.memory_space<vmem>>) target_semaphore(%304 : memref<!tpu.dma_semaphore, #tpu.memory_space<semaphore_mem>>)
    %c61 = arith.constant 61 : index
    %305 = memref.load %arg0[%c61] : memref<64xi32, #tpu.memory_space<smem>>
    %c5_i32_183 = arith.constant 5 : i32
    %c0_i32_184 = arith.constant 0 : i32
    %306 = tpu.memref_slice %arg1[%305, %c0_i32_184] : memref<64x32xf32, #tpu.memory_space<any>> -> memref<1x32xf32, #tpu.memory_space<any>>
    %c61_i32 = arith.constant 61 : i32
    %c0_i32_185 = arith.constant 0 : i32
    %307 = tpu.memref_slice %arg8[%c61_i32, %c0_i32_185] : memref<64x32xf32, #tpu.memory_space<vmem>> -> memref<1x32xf32, #tpu.memory_space<vmem>>
    %308 = tpu.memref_slice %arg9[%c5_i32_183] : memref<8x!tpu.dma_semaphore, #tpu.memory_space<semaphore_mem>> -> memref<1x!tpu.dma_semaphore, #tpu.memory_space<semaphore_mem>>
    %309 = tpu.memref_squeeze %308 : memref<1x!tpu.dma_semaphore, #tpu.memory_space<semaphore_mem>> -> memref<!tpu.dma_semaphore, #tpu.memory_space<semaphore_mem>>
    tpu.enqueue_dma source(%306 : memref<1x32xf32, #tpu.memory_space<any>>) target(%307 : memref<1x32xf32, #tpu.memory_space<vmem>>) target_semaphore(%309 : memref<!tpu.dma_semaphore, #tpu.memory_space<semaphore_mem>>)
    %c62 = arith.constant 62 : index
    %310 = memref.load %arg0[%c62] : memref<64xi32, #tpu.memory_space<smem>>
    %c6_i32_186 = arith.constant 6 : i32
    %c0_i32_187 = arith.constant 0 : i32
    %311 = tpu.memref_slice %arg1[%310, %c0_i32_187] : memref<64x32xf32, #tpu.memory_space<any>> -> memref<1x32xf32, #tpu.memory_space<any>>
    %c62_i32 = arith.constant 62 : i32
    %c0_i32_188 = arith.constant 0 : i32
    %312 = tpu.memref_slice %arg8[%c62_i32, %c0_i32_188] : memref<64x32xf32, #tpu.memory_space<vmem>> -> memref<1x32xf32, #tpu.memory_space<vmem>>
    %313 = tpu.memref_slice %arg9[%c6_i32_186] : memref<8x!tpu.dma_semaphore, #tpu.memory_space<semaphore_mem>> -> memref<1x!tpu.dma_semaphore, #tpu.memory_space<semaphore_mem>>
    %314 = tpu.memref_squeeze %313 : memref<1x!tpu.dma_semaphore, #tpu.memory_space<semaphore_mem>> -> memref<!tpu.dma_semaphore, #tpu.memory_space<semaphore_mem>>
    tpu.enqueue_dma source(%311 : memref<1x32xf32, #tpu.memory_space<any>>) target(%312 : memref<1x32xf32, #tpu.memory_space<vmem>>) target_semaphore(%314 : memref<!tpu.dma_semaphore, #tpu.memory_space<semaphore_mem>>)
    %c63 = arith.constant 63 : index
    %315 = memref.load %arg0[%c63] : memref<64xi32, #tpu.memory_space<smem>>
    %c7_i32_189 = arith.constant 7 : i32
    %c0_i32_190 = arith.constant 0 : i32
    %316 = tpu.memref_slice %arg1[%315, %c0_i32_190] : memref<64x32xf32, #tpu.memory_space<any>> -> memref<1x32xf32, #tpu.memory_space<any>>
    %c63_i32 = arith.constant 63 : i32
    %c0_i32_191 = arith.constant 0 : i32
    %317 = tpu.memref_slice %arg8[%c63_i32, %c0_i32_191] : memref<64x32xf32, #tpu.memory_space<vmem>> -> memref<1x32xf32, #tpu.memory_space<vmem>>
    %318 = tpu.memref_slice %arg9[%c7_i32_189] : memref<8x!tpu.dma_semaphore, #tpu.memory_space<semaphore_mem>> -> memref<1x!tpu.dma_semaphore, #tpu.memory_space<semaphore_mem>>
    %319 = tpu.memref_squeeze %318 : memref<1x!tpu.dma_semaphore, #tpu.memory_space<semaphore_mem>> -> memref<!tpu.dma_semaphore, #tpu.memory_space<semaphore_mem>>
    tpu.enqueue_dma source(%316 : memref<1x32xf32, #tpu.memory_space<any>>) target(%317 : memref<1x32xf32, #tpu.memory_space<vmem>>) target_semaphore(%319 : memref<!tpu.dma_semaphore, #tpu.memory_space<semaphore_mem>>)
    %c0_i32_192 = arith.constant 0 : i32
    %c0_i32_193 = arith.constant 0 : i32
    %320 = tpu.memref_slice %arg1[%0, %c0_i32_193] : memref<64x32xf32, #tpu.memory_space<any>> -> memref<1x32xf32, #tpu.memory_space<any>>
    %c0_i32_194 = arith.constant 0 : i32
    %c0_i32_195 = arith.constant 0 : i32
    %321 = tpu.memref_slice %arg8[%c0_i32_194, %c0_i32_195] : memref<64x32xf32, #tpu.memory_space<vmem>> -> memref<1x32xf32, #tpu.memory_space<vmem>>
    %322 = tpu.memref_slice %arg9[%c0_i32_192] : memref<8x!tpu.dma_semaphore, #tpu.memory_space<semaphore_mem>> -> memref<1x!tpu.dma_semaphore, #tpu.memory_space<semaphore_mem>>
    %323 = tpu.memref_squeeze %322 : memref<1x!tpu.dma_semaphore, #tpu.memory_space<semaphore_mem>> -> memref<!tpu.dma_semaphore, #tpu.memory_space<semaphore_mem>>
    tpu.wait_dma2 semaphore(%323 : memref<!tpu.dma_semaphore, #tpu.memory_space<semaphore_mem>>) src(%320 : memref<1x32xf32, #tpu.memory_space<any>>) dst(%321 : memref<1x32xf32, #tpu.memory_space<vmem>>)
    %c1_i32_196 = arith.constant 1 : i32
    %c0_i32_197 = arith.constant 0 : i32
    %324 = tpu.memref_slice %arg1[%5, %c0_i32_197] : memref<64x32xf32, #tpu.memory_space<any>> -> memref<1x32xf32, #tpu.memory_space<any>>
    %c1_i32_198 = arith.constant 1 : i32
    %c0_i32_199 = arith.constant 0 : i32
    %325 = tpu.memref_slice %arg8[%c1_i32_198, %c0_i32_199] : memref<64x32xf32, #tpu.memory_space<vmem>> -> memref<1x32xf32, #tpu.memory_space<vmem>>
    %326 = tpu.memref_slice %arg9[%c1_i32_196] : memref<8x!tpu.dma_semaphore, #tpu.memory_space<semaphore_mem>> -> memref<1x!tpu.dma_semaphore, #tpu.memory_space<semaphore_mem>>
    %327 = tpu.memref_squeeze %326 : memref<1x!tpu.dma_semaphore, #tpu.memory_space<semaphore_mem>> -> memref<!tpu.dma_semaphore, #tpu.memory_space<semaphore_mem>>
    tpu.wait_dma2 semaphore(%327 : memref<!tpu.dma_semaphore, #tpu.memory_space<semaphore_mem>>) src(%324 : memref<1x32xf32, #tpu.memory_space<any>>) dst(%325 : memref<1x32xf32, #tpu.memory_space<vmem>>)
    %c2_i32_200 = arith.constant 2 : i32
    %c0_i32_201 = arith.constant 0 : i32
    %328 = tpu.memref_slice %arg1[%10, %c0_i32_201] : memref<64x32xf32, #tpu.memory_space<any>> -> memref<1x32xf32, #tpu.memory_space<any>>
    %c2_i32_202 = arith.constant 2 : i32
    %c0_i32_203 = arith.constant 0 : i32
    %329 = tpu.memref_slice %arg8[%c2_i32_202, %c0_i32_203] : memref<64x32xf32, #tpu.memory_space<vmem>> -> memref<1x32xf32, #tpu.memory_space<vmem>>
    %330 = tpu.memref_slice %arg9[%c2_i32_200] : memref<8x!tpu.dma_semaphore, #tpu.memory_space<semaphore_mem>> -> memref<1x!tpu.dma_semaphore, #tpu.memory_space<semaphore_mem>>
    %331 = tpu.memref_squeeze %330 : memref<1x!tpu.dma_semaphore, #tpu.memory_space<semaphore_mem>> -> memref<!tpu.dma_semaphore, #tpu.memory_space<semaphore_mem>>
    tpu.wait_dma2 semaphore(%331 : memref<!tpu.dma_semaphore, #tpu.memory_space<semaphore_mem>>) src(%328 : memref<1x32xf32, #tpu.memory_space<any>>) dst(%329 : memref<1x32xf32, #tpu.memory_space<vmem>>)
    %c3_i32_204 = arith.constant 3 : i32
    %c0_i32_205 = arith.constant 0 : i32
    %332 = tpu.memref_slice %arg1[%15, %c0_i32_205] : memref<64x32xf32, #tpu.memory_space<any>> -> memref<1x32xf32, #tpu.memory_space<any>>
    %c3_i32_206 = arith.constant 3 : i32
    %c0_i32_207 = arith.constant 0 : i32
    %333 = tpu.memref_slice %arg8[%c3_i32_206, %c0_i32_207] : memref<64x32xf32, #tpu.memory_space<vmem>> -> memref<1x32xf32, #tpu.memory_space<vmem>>
    %334 = tpu.memref_slice %arg9[%c3_i32_204] : memref<8x!tpu.dma_semaphore, #tpu.memory_space<semaphore_mem>> -> memref<1x!tpu.dma_semaphore, #tpu.memory_space<semaphore_mem>>
    %335 = tpu.memref_squeeze %334 : memref<1x!tpu.dma_semaphore, #tpu.memory_space<semaphore_mem>> -> memref<!tpu.dma_semaphore, #tpu.memory_space<semaphore_mem>>
    tpu.wait_dma2 semaphore(%335 : memref<!tpu.dma_semaphore, #tpu.memory_space<semaphore_mem>>) src(%332 : memref<1x32xf32, #tpu.memory_space<any>>) dst(%333 : memref<1x32xf32, #tpu.memory_space<vmem>>)
    %c4_i32_208 = arith.constant 4 : i32
    %c0_i32_209 = arith.constant 0 : i32
    %336 = tpu.memref_slice %arg1[%20, %c0_i32_209] : memref<64x32xf32, #tpu.memory_space<any>> -> memref<1x32xf32, #tpu.memory_space<any>>
    %c4_i32_210 = arith.constant 4 : i32
    %c0_i32_211 = arith.constant 0 : i32
    %337 = tpu.memref_slice %arg8[%c4_i32_210, %c0_i32_211] : memref<64x32xf32, #tpu.memory_space<vmem>> -> memref<1x32xf32, #tpu.memory_space<vmem>>
    %338 = tpu.memref_slice %arg9[%c4_i32_208] : memref<8x!tpu.dma_semaphore, #tpu.memory_space<semaphore_mem>> -> memref<1x!tpu.dma_semaphore, #tpu.memory_space<semaphore_mem>>
    %339 = tpu.memref_squeeze %338 : memref<1x!tpu.dma_semaphore, #tpu.memory_space<semaphore_mem>> -> memref<!tpu.dma_semaphore, #tpu.memory_space<semaphore_mem>>
    tpu.wait_dma2 semaphore(%339 : memref<!tpu.dma_semaphore, #tpu.memory_space<semaphore_mem>>) src(%336 : memref<1x32xf32, #tpu.memory_space<any>>) dst(%337 : memref<1x32xf32, #tpu.memory_space<vmem>>)
    %c5_i32_212 = arith.constant 5 : i32
    %c0_i32_213 = arith.constant 0 : i32
    %340 = tpu.memref_slice %arg1[%25, %c0_i32_213] : memref<64x32xf32, #tpu.memory_space<any>> -> memref<1x32xf32, #tpu.memory_space<any>>
    %c5_i32_214 = arith.constant 5 : i32
    %c0_i32_215 = arith.constant 0 : i32
    %341 = tpu.memref_slice %arg8[%c5_i32_214, %c0_i32_215] : memref<64x32xf32, #tpu.memory_space<vmem>> -> memref<1x32xf32, #tpu.memory_space<vmem>>
    %342 = tpu.memref_slice %arg9[%c5_i32_212] : memref<8x!tpu.dma_semaphore, #tpu.memory_space<semaphore_mem>> -> memref<1x!tpu.dma_semaphore, #tpu.memory_space<semaphore_mem>>
    %343 = tpu.memref_squeeze %342 : memref<1x!tpu.dma_semaphore, #tpu.memory_space<semaphore_mem>> -> memref<!tpu.dma_semaphore, #tpu.memory_space<semaphore_mem>>
    tpu.wait_dma2 semaphore(%343 : memref<!tpu.dma_semaphore, #tpu.memory_space<semaphore_mem>>) src(%340 : memref<1x32xf32, #tpu.memory_space<any>>) dst(%341 : memref<1x32xf32, #tpu.memory_space<vmem>>)
    %c6_i32_216 = arith.constant 6 : i32
    %c0_i32_217 = arith.constant 0 : i32
    %344 = tpu.memref_slice %arg1[%30, %c0_i32_217] : memref<64x32xf32, #tpu.memory_space<any>> -> memref<1x32xf32, #tpu.memory_space<any>>
    %c6_i32_218 = arith.constant 6 : i32
    %c0_i32_219 = arith.constant 0 : i32
    %345 = tpu.memref_slice %arg8[%c6_i32_218, %c0_i32_219] : memref<64x32xf32, #tpu.memory_space<vmem>> -> memref<1x32xf32, #tpu.memory_space<vmem>>
    %346 = tpu.memref_slice %arg9[%c6_i32_216] : memref<8x!tpu.dma_semaphore, #tpu.memory_space<semaphore_mem>> -> memref<1x!tpu.dma_semaphore, #tpu.memory_space<semaphore_mem>>
    %347 = tpu.memref_squeeze %346 : memref<1x!tpu.dma_semaphore, #tpu.memory_space<semaphore_mem>> -> memref<!tpu.dma_semaphore, #tpu.memory_space<semaphore_mem>>
    tpu.wait_dma2 semaphore(%347 : memref<!tpu.dma_semaphore, #tpu.memory_space<semaphore_mem>>) src(%344 : memref<1x32xf32, #tpu.memory_space<any>>) dst(%345 : memref<1x32xf32, #tpu.memory_space<vmem>>)
    %c7_i32_220 = arith.constant 7 : i32
    %c0_i32_221 = arith.constant 0 : i32
    %348 = tpu.memref_slice %arg1[%35, %c0_i32_221] : memref<64x32xf32, #tpu.memory_space<any>> -> memref<1x32xf32, #tpu.memory_space<any>>
    %c7_i32_222 = arith.constant 7 : i32
    %c0_i32_223 = arith.constant 0 : i32
    %349 = tpu.memref_slice %arg8[%c7_i32_222, %c0_i32_223] : memref<64x32xf32, #tpu.memory_space<vmem>> -> memref<1x32xf32, #tpu.memory_space<vmem>>
    %350 = tpu.memref_slice %arg9[%c7_i32_220] : memref<8x!tpu.dma_semaphore, #tpu.memory_space<semaphore_mem>> -> memref<1x!tpu.dma_semaphore, #tpu.memory_space<semaphore_mem>>
    %351 = tpu.memref_squeeze %350 : memref<1x!tpu.dma_semaphore, #tpu.memory_space<semaphore_mem>> -> memref<!tpu.dma_semaphore, #tpu.memory_space<semaphore_mem>>
    tpu.wait_dma2 semaphore(%351 : memref<!tpu.dma_semaphore, #tpu.memory_space<semaphore_mem>>) src(%348 : memref<1x32xf32, #tpu.memory_space<any>>) dst(%349 : memref<1x32xf32, #tpu.memory_space<vmem>>)
    %c0_i32_224 = arith.constant 0 : i32
    %c0_i32_225 = arith.constant 0 : i32
    %352 = tpu.memref_slice %arg1[%40, %c0_i32_225] : memref<64x32xf32, #tpu.memory_space<any>> -> memref<1x32xf32, #tpu.memory_space<any>>
    %c8_i32_226 = arith.constant 8 : i32
    %c0_i32_227 = arith.constant 0 : i32
    %353 = tpu.memref_slice %arg8[%c8_i32_226, %c0_i32_227] : memref<64x32xf32, #tpu.memory_space<vmem>> -> memref<1x32xf32, #tpu.memory_space<vmem>>
    %354 = tpu.memref_slice %arg9[%c0_i32_224] : memref<8x!tpu.dma_semaphore, #tpu.memory_space<semaphore_mem>> -> memref<1x!tpu.dma_semaphore, #tpu.memory_space<semaphore_mem>>
    %355 = tpu.memref_squeeze %354 : memref<1x!tpu.dma_semaphore, #tpu.memory_space<semaphore_mem>> -> memref<!tpu.dma_semaphore, #tpu.memory_space<semaphore_mem>>
    tpu.wait_dma2 semaphore(%355 : memref<!tpu.dma_semaphore, #tpu.memory_space<semaphore_mem>>) src(%352 : memref<1x32xf32, #tpu.memory_space<any>>) dst(%353 : memref<1x32xf32, #tpu.memory_space<vmem>>)
    %c1_i32_228 = arith.constant 1 : i32
    %c0_i32_229 = arith.constant 0 : i32
    %356 = tpu.memref_slice %arg1[%45, %c0_i32_229] : memref<64x32xf32, #tpu.memory_space<any>> -> memref<1x32xf32, #tpu.memory_space<any>>
    %c9_i32_230 = arith.constant 9 : i32
    %c0_i32_231 = arith.constant 0 : i32
    %357 = tpu.memref_slice %arg8[%c9_i32_230, %c0_i32_231] : memref<64x32xf32, #tpu.memory_space<vmem>> -> memref<1x32xf32, #tpu.memory_space<vmem>>
    %358 = tpu.memref_slice %arg9[%c1_i32_228] : memref<8x!tpu.dma_semaphore, #tpu.memory_space<semaphore_mem>> -> memref<1x!tpu.dma_semaphore, #tpu.memory_space<semaphore_mem>>
    %359 = tpu.memref_squeeze %358 : memref<1x!tpu.dma_semaphore, #tpu.memory_space<semaphore_mem>> -> memref<!tpu.dma_semaphore, #tpu.memory_space<semaphore_mem>>
    tpu.wait_dma2 semaphore(%359 : memref<!tpu.dma_semaphore, #tpu.memory_space<semaphore_mem>>) src(%356 : memref<1x32xf32, #tpu.memory_space<any>>) dst(%357 : memref<1x32xf32, #tpu.memory_space<vmem>>)
    %c2_i32_232 = arith.constant 2 : i32
    %c0_i32_233 = arith.constant 0 : i32
    %360 = tpu.memref_slice %arg1[%50, %c0_i32_233] : memref<64x32xf32, #tpu.memory_space<any>> -> memref<1x32xf32, #tpu.memory_space<any>>
    %c10_i32_234 = arith.constant 10 : i32
    %c0_i32_235 = arith.constant 0 : i32
    %361 = tpu.memref_slice %arg8[%c10_i32_234, %c0_i32_235] : memref<64x32xf32, #tpu.memory_space<vmem>> -> memref<1x32xf32, #tpu.memory_space<vmem>>
    %362 = tpu.memref_slice %arg9[%c2_i32_232] : memref<8x!tpu.dma_semaphore, #tpu.memory_space<semaphore_mem>> -> memref<1x!tpu.dma_semaphore, #tpu.memory_space<semaphore_mem>>
    %363 = tpu.memref_squeeze %362 : memref<1x!tpu.dma_semaphore, #tpu.memory_space<semaphore_mem>> -> memref<!tpu.dma_semaphore, #tpu.memory_space<semaphore_mem>>
    tpu.wait_dma2 semaphore(%363 : memref<!tpu.dma_semaphore, #tpu.memory_space<semaphore_mem>>) src(%360 : memref<1x32xf32, #tpu.memory_space<any>>) dst(%361 : memref<1x32xf32, #tpu.memory_space<vmem>>)
    %c3_i32_236 = arith.constant 3 : i32
    %c0_i32_237 = arith.constant 0 : i32
    %364 = tpu.memref_slice %arg1[%55, %c0_i32_237] : memref<64x32xf32, #tpu.memory_space<any>> -> memref<1x32xf32, #tpu.memory_space<any>>
    %c11_i32_238 = arith.constant 11 : i32
    %c0_i32_239 = arith.constant 0 : i32
    %365 = tpu.memref_slice %arg8[%c11_i32_238, %c0_i32_239] : memref<64x32xf32, #tpu.memory_space<vmem>> -> memref<1x32xf32, #tpu.memory_space<vmem>>
    %366 = tpu.memref_slice %arg9[%c3_i32_236] : memref<8x!tpu.dma_semaphore, #tpu.memory_space<semaphore_mem>> -> memref<1x!tpu.dma_semaphore, #tpu.memory_space<semaphore_mem>>
    %367 = tpu.memref_squeeze %366 : memref<1x!tpu.dma_semaphore, #tpu.memory_space<semaphore_mem>> -> memref<!tpu.dma_semaphore, #tpu.memory_space<semaphore_mem>>
    tpu.wait_dma2 semaphore(%367 : memref<!tpu.dma_semaphore, #tpu.memory_space<semaphore_mem>>) src(%364 : memref<1x32xf32, #tpu.memory_space<any>>) dst(%365 : memref<1x32xf32, #tpu.memory_space<vmem>>)
    %c4_i32_240 = arith.constant 4 : i32
    %c0_i32_241 = arith.constant 0 : i32
    %368 = tpu.memref_slice %arg1[%60, %c0_i32_241] : memref<64x32xf32, #tpu.memory_space<any>> -> memref<1x32xf32, #tpu.memory_space<any>>
    %c12_i32_242 = arith.constant 12 : i32
    %c0_i32_243 = arith.constant 0 : i32
    %369 = tpu.memref_slice %arg8[%c12_i32_242, %c0_i32_243] : memref<64x32xf32, #tpu.memory_space<vmem>> -> memref<1x32xf32, #tpu.memory_space<vmem>>
    %370 = tpu.memref_slice %arg9[%c4_i32_240] : memref<8x!tpu.dma_semaphore, #tpu.memory_space<semaphore_mem>> -> memref<1x!tpu.dma_semaphore, #tpu.memory_space<semaphore_mem>>
    %371 = tpu.memref_squeeze %370 : memref<1x!tpu.dma_semaphore, #tpu.memory_space<semaphore_mem>> -> memref<!tpu.dma_semaphore, #tpu.memory_space<semaphore_mem>>
    tpu.wait_dma2 semaphore(%371 : memref<!tpu.dma_semaphore, #tpu.memory_space<semaphore_mem>>) src(%368 : memref<1x32xf32, #tpu.memory_space<any>>) dst(%369 : memref<1x32xf32, #tpu.memory_space<vmem>>)
    %c5_i32_244 = arith.constant 5 : i32
    %c0_i32_245 = arith.constant 0 : i32
    %372 = tpu.memref_slice %arg1[%65, %c0_i32_245] : memref<64x32xf32, #tpu.memory_space<any>> -> memref<1x32xf32, #tpu.memory_space<any>>
    %c13_i32_246 = arith.constant 13 : i32
    %c0_i32_247 = arith.constant 0 : i32
    %373 = tpu.memref_slice %arg8[%c13_i32_246, %c0_i32_247] : memref<64x32xf32, #tpu.memory_space<vmem>> -> memref<1x32xf32, #tpu.memory_space<vmem>>
    %374 = tpu.memref_slice %arg9[%c5_i32_244] : memref<8x!tpu.dma_semaphore, #tpu.memory_space<semaphore_mem>> -> memref<1x!tpu.dma_semaphore, #tpu.memory_space<semaphore_mem>>
    %375 = tpu.memref_squeeze %374 : memref<1x!tpu.dma_semaphore, #tpu.memory_space<semaphore_mem>> -> memref<!tpu.dma_semaphore, #tpu.memory_space<semaphore_mem>>
    tpu.wait_dma2 semaphore(%375 : memref<!tpu.dma_semaphore, #tpu.memory_space<semaphore_mem>>) src(%372 : memref<1x32xf32, #tpu.memory_space<any>>) dst(%373 : memref<1x32xf32, #tpu.memory_space<vmem>>)
    %c6_i32_248 = arith.constant 6 : i32
    %c0_i32_249 = arith.constant 0 : i32
    %376 = tpu.memref_slice %arg1[%70, %c0_i32_249] : memref<64x32xf32, #tpu.memory_space<any>> -> memref<1x32xf32, #tpu.memory_space<any>>
    %c14_i32_250 = arith.constant 14 : i32
    %c0_i32_251 = arith.constant 0 : i32
    %377 = tpu.memref_slice %arg8[%c14_i32_250, %c0_i32_251] : memref<64x32xf32, #tpu.memory_space<vmem>> -> memref<1x32xf32, #tpu.memory_space<vmem>>
    %378 = tpu.memref_slice %arg9[%c6_i32_248] : memref<8x!tpu.dma_semaphore, #tpu.memory_space<semaphore_mem>> -> memref<1x!tpu.dma_semaphore, #tpu.memory_space<semaphore_mem>>
    %379 = tpu.memref_squeeze %378 : memref<1x!tpu.dma_semaphore, #tpu.memory_space<semaphore_mem>> -> memref<!tpu.dma_semaphore, #tpu.memory_space<semaphore_mem>>
    tpu.wait_dma2 semaphore(%379 : memref<!tpu.dma_semaphore, #tpu.memory_space<semaphore_mem>>) src(%376 : memref<1x32xf32, #tpu.memory_space<any>>) dst(%377 : memref<1x32xf32, #tpu.memory_space<vmem>>)
    %c7_i32_252 = arith.constant 7 : i32
    %c0_i32_253 = arith.constant 0 : i32
    %380 = tpu.memref_slice %arg1[%75, %c0_i32_253] : memref<64x32xf32, #tpu.memory_space<any>> -> memref<1x32xf32, #tpu.memory_space<any>>
    %c15_i32_254 = arith.constant 15 : i32
    %c0_i32_255 = arith.constant 0 : i32
    %381 = tpu.memref_slice %arg8[%c15_i32_254, %c0_i32_255] : memref<64x32xf32, #tpu.memory_space<vmem>> -> memref<1x32xf32, #tpu.memory_space<vmem>>
    %382 = tpu.memref_slice %arg9[%c7_i32_252] : memref<8x!tpu.dma_semaphore, #tpu.memory_space<semaphore_mem>> -> memref<1x!tpu.dma_semaphore, #tpu.memory_space<semaphore_mem>>
    %383 = tpu.memref_squeeze %382 : memref<1x!tpu.dma_semaphore, #tpu.memory_space<semaphore_mem>> -> memref<!tpu.dma_semaphore, #tpu.memory_space<semaphore_mem>>
    tpu.wait_dma2 semaphore(%383 : memref<!tpu.dma_semaphore, #tpu.memory_space<semaphore_mem>>) src(%380 : memref<1x32xf32, #tpu.memory_space<any>>) dst(%381 : memref<1x32xf32, #tpu.memory_space<vmem>>)
    %c0_i32_256 = arith.constant 0 : i32
    %c0_i32_257 = arith.constant 0 : i32
    %384 = tpu.memref_slice %arg1[%80, %c0_i32_257] : memref<64x32xf32, #tpu.memory_space<any>> -> memref<1x32xf32, #tpu.memory_space<any>>
    %c16_i32_258 = arith.constant 16 : i32
    %c0_i32_259 = arith.constant 0 : i32
    %385 = tpu.memref_slice %arg8[%c16_i32_258, %c0_i32_259] : memref<64x32xf32, #tpu.memory_space<vmem>> -> memref<1x32xf32, #tpu.memory_space<vmem>>
    %386 = tpu.memref_slice %arg9[%c0_i32_256] : memref<8x!tpu.dma_semaphore, #tpu.memory_space<semaphore_mem>> -> memref<1x!tpu.dma_semaphore, #tpu.memory_space<semaphore_mem>>
    %387 = tpu.memref_squeeze %386 : memref<1x!tpu.dma_semaphore, #tpu.memory_space<semaphore_mem>> -> memref<!tpu.dma_semaphore, #tpu.memory_space<semaphore_mem>>
    tpu.wait_dma2 semaphore(%387 : memref<!tpu.dma_semaphore, #tpu.memory_space<semaphore_mem>>) src(%384 : memref<1x32xf32, #tpu.memory_space<any>>) dst(%385 : memref<1x32xf32, #tpu.memory_space<vmem>>)
    %c1_i32_260 = arith.constant 1 : i32
    %c0_i32_261 = arith.constant 0 : i32
    %388 = tpu.memref_slice %arg1[%85, %c0_i32_261] : memref<64x32xf32, #tpu.memory_space<any>> -> memref<1x32xf32, #tpu.memory_space<any>>
    %c17_i32_262 = arith.constant 17 : i32
    %c0_i32_263 = arith.constant 0 : i32
    %389 = tpu.memref_slice %arg8[%c17_i32_262, %c0_i32_263] : memref<64x32xf32, #tpu.memory_space<vmem>> -> memref<1x32xf32, #tpu.memory_space<vmem>>
    %390 = tpu.memref_slice %arg9[%c1_i32_260] : memref<8x!tpu.dma_semaphore, #tpu.memory_space<semaphore_mem>> -> memref<1x!tpu.dma_semaphore, #tpu.memory_space<semaphore_mem>>
    %391 = tpu.memref_squeeze %390 : memref<1x!tpu.dma_semaphore, #tpu.memory_space<semaphore_mem>> -> memref<!tpu.dma_semaphore, #tpu.memory_space<semaphore_mem>>
    tpu.wait_dma2 semaphore(%391 : memref<!tpu.dma_semaphore, #tpu.memory_space<semaphore_mem>>) src(%388 : memref<1x32xf32, #tpu.memory_space<any>>) dst(%389 : memref<1x32xf32, #tpu.memory_space<vmem>>)
    %c2_i32_264 = arith.constant 2 : i32
    %c0_i32_265 = arith.constant 0 : i32
    %392 = tpu.memref_slice %arg1[%90, %c0_i32_265] : memref<64x32xf32, #tpu.memory_space<any>> -> memref<1x32xf32, #tpu.memory_space<any>>
    %c18_i32_266 = arith.constant 18 : i32
    %c0_i32_267 = arith.constant 0 : i32
    %393 = tpu.memref_slice %arg8[%c18_i32_266, %c0_i32_267] : memref<64x32xf32, #tpu.memory_space<vmem>> -> memref<1x32xf32, #tpu.memory_space<vmem>>
    %394 = tpu.memref_slice %arg9[%c2_i32_264] : memref<8x!tpu.dma_semaphore, #tpu.memory_space<semaphore_mem>> -> memref<1x!tpu.dma_semaphore, #tpu.memory_space<semaphore_mem>>
    %395 = tpu.memref_squeeze %394 : memref<1x!tpu.dma_semaphore, #tpu.memory_space<semaphore_mem>> -> memref<!tpu.dma_semaphore, #tpu.memory_space<semaphore_mem>>
    tpu.wait_dma2 semaphore(%395 : memref<!tpu.dma_semaphore, #tpu.memory_space<semaphore_mem>>) src(%392 : memref<1x32xf32, #tpu.memory_space<any>>) dst(%393 : memref<1x32xf32, #tpu.memory_space<vmem>>)
    %c3_i32_268 = arith.constant 3 : i32
    %c0_i32_269 = arith.constant 0 : i32
    %396 = tpu.memref_slice %arg1[%95, %c0_i32_269] : memref<64x32xf32, #tpu.memory_space<any>> -> memref<1x32xf32, #tpu.memory_space<any>>
    %c19_i32_270 = arith.constant 19 : i32
    %c0_i32_271 = arith.constant 0 : i32
    %397 = tpu.memref_slice %arg8[%c19_i32_270, %c0_i32_271] : memref<64x32xf32, #tpu.memory_space<vmem>> -> memref<1x32xf32, #tpu.memory_space<vmem>>
    %398 = tpu.memref_slice %arg9[%c3_i32_268] : memref<8x!tpu.dma_semaphore, #tpu.memory_space<semaphore_mem>> -> memref<1x!tpu.dma_semaphore, #tpu.memory_space<semaphore_mem>>
    %399 = tpu.memref_squeeze %398 : memref<1x!tpu.dma_semaphore, #tpu.memory_space<semaphore_mem>> -> memref<!tpu.dma_semaphore, #tpu.memory_space<semaphore_mem>>
    tpu.wait_dma2 semaphore(%399 : memref<!tpu.dma_semaphore, #tpu.memory_space<semaphore_mem>>) src(%396 : memref<1x32xf32, #tpu.memory_space<any>>) dst(%397 : memref<1x32xf32, #tpu.memory_space<vmem>>)
    %c4_i32_272 = arith.constant 4 : i32
    %c0_i32_273 = arith.constant 0 : i32
    %400 = tpu.memref_slice %arg1[%100, %c0_i32_273] : memref<64x32xf32, #tpu.memory_space<any>> -> memref<1x32xf32, #tpu.memory_space<any>>
    %c20_i32_274 = arith.constant 20 : i32
    %c0_i32_275 = arith.constant 0 : i32
    %401 = tpu.memref_slice %arg8[%c20_i32_274, %c0_i32_275] : memref<64x32xf32, #tpu.memory_space<vmem>> -> memref<1x32xf32, #tpu.memory_space<vmem>>
    %402 = tpu.memref_slice %arg9[%c4_i32_272] : memref<8x!tpu.dma_semaphore, #tpu.memory_space<semaphore_mem>> -> memref<1x!tpu.dma_semaphore, #tpu.memory_space<semaphore_mem>>
    %403 = tpu.memref_squeeze %402 : memref<1x!tpu.dma_semaphore, #tpu.memory_space<semaphore_mem>> -> memref<!tpu.dma_semaphore, #tpu.memory_space<semaphore_mem>>
    tpu.wait_dma2 semaphore(%403 : memref<!tpu.dma_semaphore, #tpu.memory_space<semaphore_mem>>) src(%400 : memref<1x32xf32, #tpu.memory_space<any>>) dst(%401 : memref<1x32xf32, #tpu.memory_space<vmem>>)
    %c5_i32_276 = arith.constant 5 : i32
    %c0_i32_277 = arith.constant 0 : i32
    %404 = tpu.memref_slice %arg1[%105, %c0_i32_277] : memref<64x32xf32, #tpu.memory_space<any>> -> memref<1x32xf32, #tpu.memory_space<any>>
    %c21_i32_278 = arith.constant 21 : i32
    %c0_i32_279 = arith.constant 0 : i32
    %405 = tpu.memref_slice %arg8[%c21_i32_278, %c0_i32_279] : memref<64x32xf32, #tpu.memory_space<vmem>> -> memref<1x32xf32, #tpu.memory_space<vmem>>
    %406 = tpu.memref_slice %arg9[%c5_i32_276] : memref<8x!tpu.dma_semaphore, #tpu.memory_space<semaphore_mem>> -> memref<1x!tpu.dma_semaphore, #tpu.memory_space<semaphore_mem>>
    %407 = tpu.memref_squeeze %406 : memref<1x!tpu.dma_semaphore, #tpu.memory_space<semaphore_mem>> -> memref<!tpu.dma_semaphore, #tpu.memory_space<semaphore_mem>>
    tpu.wait_dma2 semaphore(%407 : memref<!tpu.dma_semaphore, #tpu.memory_space<semaphore_mem>>) src(%404 : memref<1x32xf32, #tpu.memory_space<any>>) dst(%405 : memref<1x32xf32, #tpu.memory_space<vmem>>)
    %c6_i32_280 = arith.constant 6 : i32
    %c0_i32_281 = arith.constant 0 : i32
    %408 = tpu.memref_slice %arg1[%110, %c0_i32_281] : memref<64x32xf32, #tpu.memory_space<any>> -> memref<1x32xf32, #tpu.memory_space<any>>
    %c22_i32_282 = arith.constant 22 : i32
    %c0_i32_283 = arith.constant 0 : i32
    %409 = tpu.memref_slice %arg8[%c22_i32_282, %c0_i32_283] : memref<64x32xf32, #tpu.memory_space<vmem>> -> memref<1x32xf32, #tpu.memory_space<vmem>>
    %410 = tpu.memref_slice %arg9[%c6_i32_280] : memref<8x!tpu.dma_semaphore, #tpu.memory_space<semaphore_mem>> -> memref<1x!tpu.dma_semaphore, #tpu.memory_space<semaphore_mem>>
    %411 = tpu.memref_squeeze %410 : memref<1x!tpu.dma_semaphore, #tpu.memory_space<semaphore_mem>> -> memref<!tpu.dma_semaphore, #tpu.memory_space<semaphore_mem>>
    tpu.wait_dma2 semaphore(%411 : memref<!tpu.dma_semaphore, #tpu.memory_space<semaphore_mem>>) src(%408 : memref<1x32xf32, #tpu.memory_space<any>>) dst(%409 : memref<1x32xf32, #tpu.memory_space<vmem>>)
    %c7_i32_284 = arith.constant 7 : i32
    %c0_i32_285 = arith.constant 0 : i32
    %412 = tpu.memref_slice %arg1[%115, %c0_i32_285] : memref<64x32xf32, #tpu.memory_space<any>> -> memref<1x32xf32, #tpu.memory_space<any>>
    %c23_i32_286 = arith.constant 23 : i32
    %c0_i32_287 = arith.constant 0 : i32
    %413 = tpu.memref_slice %arg8[%c23_i32_286, %c0_i32_287] : memref<64x32xf32, #tpu.memory_space<vmem>> -> memref<1x32xf32, #tpu.memory_space<vmem>>
    %414 = tpu.memref_slice %arg9[%c7_i32_284] : memref<8x!tpu.dma_semaphore, #tpu.memory_space<semaphore_mem>> -> memref<1x!tpu.dma_semaphore, #tpu.memory_space<semaphore_mem>>
    %415 = tpu.memref_squeeze %414 : memref<1x!tpu.dma_semaphore, #tpu.memory_space<semaphore_mem>> -> memref<!tpu.dma_semaphore, #tpu.memory_space<semaphore_mem>>
    tpu.wait_dma2 semaphore(%415 : memref<!tpu.dma_semaphore, #tpu.memory_space<semaphore_mem>>) src(%412 : memref<1x32xf32, #tpu.memory_space<any>>) dst(%413 : memref<1x32xf32, #tpu.memory_space<vmem>>)
    %c0_i32_288 = arith.constant 0 : i32
    %c0_i32_289 = arith.constant 0 : i32
    %416 = tpu.memref_slice %arg1[%120, %c0_i32_289] : memref<64x32xf32, #tpu.memory_space<any>> -> memref<1x32xf32, #tpu.memory_space<any>>
    %c24_i32_290 = arith.constant 24 : i32
    %c0_i32_291 = arith.constant 0 : i32
    %417 = tpu.memref_slice %arg8[%c24_i32_290, %c0_i32_291] : memref<64x32xf32, #tpu.memory_space<vmem>> -> memref<1x32xf32, #tpu.memory_space<vmem>>
    %418 = tpu.memref_slice %arg9[%c0_i32_288] : memref<8x!tpu.dma_semaphore, #tpu.memory_space<semaphore_mem>> -> memref<1x!tpu.dma_semaphore, #tpu.memory_space<semaphore_mem>>
    %419 = tpu.memref_squeeze %418 : memref<1x!tpu.dma_semaphore, #tpu.memory_space<semaphore_mem>> -> memref<!tpu.dma_semaphore, #tpu.memory_space<semaphore_mem>>
    tpu.wait_dma2 semaphore(%419 : memref<!tpu.dma_semaphore, #tpu.memory_space<semaphore_mem>>) src(%416 : memref<1x32xf32, #tpu.memory_space<any>>) dst(%417 : memref<1x32xf32, #tpu.memory_space<vmem>>)
    %c1_i32_292 = arith.constant 1 : i32
    %c0_i32_293 = arith.constant 0 : i32
    %420 = tpu.memref_slice %arg1[%125, %c0_i32_293] : memref<64x32xf32, #tpu.memory_space<any>> -> memref<1x32xf32, #tpu.memory_space<any>>
    %c25_i32_294 = arith.constant 25 : i32
    %c0_i32_295 = arith.constant 0 : i32
    %421 = tpu.memref_slice %arg8[%c25_i32_294, %c0_i32_295] : memref<64x32xf32, #tpu.memory_space<vmem>> -> memref<1x32xf32, #tpu.memory_space<vmem>>
    %422 = tpu.memref_slice %arg9[%c1_i32_292] : memref<8x!tpu.dma_semaphore, #tpu.memory_space<semaphore_mem>> -> memref<1x!tpu.dma_semaphore, #tpu.memory_space<semaphore_mem>>
    %423 = tpu.memref_squeeze %422 : memref<1x!tpu.dma_semaphore, #tpu.memory_space<semaphore_mem>> -> memref<!tpu.dma_semaphore, #tpu.memory_space<semaphore_mem>>
    tpu.wait_dma2 semaphore(%423 : memref<!tpu.dma_semaphore, #tpu.memory_space<semaphore_mem>>) src(%420 : memref<1x32xf32, #tpu.memory_space<any>>) dst(%421 : memref<1x32xf32, #tpu.memory_space<vmem>>)
    %c2_i32_296 = arith.constant 2 : i32
    %c0_i32_297 = arith.constant 0 : i32
    %424 = tpu.memref_slice %arg1[%130, %c0_i32_297] : memref<64x32xf32, #tpu.memory_space<any>> -> memref<1x32xf32, #tpu.memory_space<any>>
    %c26_i32_298 = arith.constant 26 : i32
    %c0_i32_299 = arith.constant 0 : i32
    %425 = tpu.memref_slice %arg8[%c26_i32_298, %c0_i32_299] : memref<64x32xf32, #tpu.memory_space<vmem>> -> memref<1x32xf32, #tpu.memory_space<vmem>>
    %426 = tpu.memref_slice %arg9[%c2_i32_296] : memref<8x!tpu.dma_semaphore, #tpu.memory_space<semaphore_mem>> -> memref<1x!tpu.dma_semaphore, #tpu.memory_space<semaphore_mem>>
    %427 = tpu.memref_squeeze %426 : memref<1x!tpu.dma_semaphore, #tpu.memory_space<semaphore_mem>> -> memref<!tpu.dma_semaphore, #tpu.memory_space<semaphore_mem>>
    tpu.wait_dma2 semaphore(%427 : memref<!tpu.dma_semaphore, #tpu.memory_space<semaphore_mem>>) src(%424 : memref<1x32xf32, #tpu.memory_space<any>>) dst(%425 : memref<1x32xf32, #tpu.memory_space<vmem>>)
    %c3_i32_300 = arith.constant 3 : i32
    %c0_i32_301 = arith.constant 0 : i32
    %428 = tpu.memref_slice %arg1[%135, %c0_i32_301] : memref<64x32xf32, #tpu.memory_space<any>> -> memref<1x32xf32, #tpu.memory_space<any>>
    %c27_i32_302 = arith.constant 27 : i32
    %c0_i32_303 = arith.constant 0 : i32
    %429 = tpu.memref_slice %arg8[%c27_i32_302, %c0_i32_303] : memref<64x32xf32, #tpu.memory_space<vmem>> -> memref<1x32xf32, #tpu.memory_space<vmem>>
    %430 = tpu.memref_slice %arg9[%c3_i32_300] : memref<8x!tpu.dma_semaphore, #tpu.memory_space<semaphore_mem>> -> memref<1x!tpu.dma_semaphore, #tpu.memory_space<semaphore_mem>>
    %431 = tpu.memref_squeeze %430 : memref<1x!tpu.dma_semaphore, #tpu.memory_space<semaphore_mem>> -> memref<!tpu.dma_semaphore, #tpu.memory_space<semaphore_mem>>
    tpu.wait_dma2 semaphore(%431 : memref<!tpu.dma_semaphore, #tpu.memory_space<semaphore_mem>>) src(%428 : memref<1x32xf32, #tpu.memory_space<any>>) dst(%429 : memref<1x32xf32, #tpu.memory_space<vmem>>)
    %c4_i32_304 = arith.constant 4 : i32
    %c0_i32_305 = arith.constant 0 : i32
    %432 = tpu.memref_slice %arg1[%140, %c0_i32_305] : memref<64x32xf32, #tpu.memory_space<any>> -> memref<1x32xf32, #tpu.memory_space<any>>
    %c28_i32_306 = arith.constant 28 : i32
    %c0_i32_307 = arith.constant 0 : i32
    %433 = tpu.memref_slice %arg8[%c28_i32_306, %c0_i32_307] : memref<64x32xf32, #tpu.memory_space<vmem>> -> memref<1x32xf32, #tpu.memory_space<vmem>>
    %434 = tpu.memref_slice %arg9[%c4_i32_304] : memref<8x!tpu.dma_semaphore, #tpu.memory_space<semaphore_mem>> -> memref<1x!tpu.dma_semaphore, #tpu.memory_space<semaphore_mem>>
    %435 = tpu.memref_squeeze %434 : memref<1x!tpu.dma_semaphore, #tpu.memory_space<semaphore_mem>> -> memref<!tpu.dma_semaphore, #tpu.memory_space<semaphore_mem>>
    tpu.wait_dma2 semaphore(%435 : memref<!tpu.dma_semaphore, #tpu.memory_space<semaphore_mem>>) src(%432 : memref<1x32xf32, #tpu.memory_space<any>>) dst(%433 : memref<1x32xf32, #tpu.memory_space<vmem>>)
    %c5_i32_308 = arith.constant 5 : i32
    %c0_i32_309 = arith.constant 0 : i32
    %436 = tpu.memref_slice %arg1[%145, %c0_i32_309] : memref<64x32xf32, #tpu.memory_space<any>> -> memref<1x32xf32, #tpu.memory_space<any>>
    %c29_i32_310 = arith.constant 29 : i32
    %c0_i32_311 = arith.constant 0 : i32
    %437 = tpu.memref_slice %arg8[%c29_i32_310, %c0_i32_311] : memref<64x32xf32, #tpu.memory_space<vmem>> -> memref<1x32xf32, #tpu.memory_space<vmem>>
    %438 = tpu.memref_slice %arg9[%c5_i32_308] : memref<8x!tpu.dma_semaphore, #tpu.memory_space<semaphore_mem>> -> memref<1x!tpu.dma_semaphore, #tpu.memory_space<semaphore_mem>>
    %439 = tpu.memref_squeeze %438 : memref<1x!tpu.dma_semaphore, #tpu.memory_space<semaphore_mem>> -> memref<!tpu.dma_semaphore, #tpu.memory_space<semaphore_mem>>
    tpu.wait_dma2 semaphore(%439 : memref<!tpu.dma_semaphore, #tpu.memory_space<semaphore_mem>>) src(%436 : memref<1x32xf32, #tpu.memory_space<any>>) dst(%437 : memref<1x32xf32, #tpu.memory_space<vmem>>)
    %c6_i32_312 = arith.constant 6 : i32
    %c0_i32_313 = arith.constant 0 : i32
    %440 = tpu.memref_slice %arg1[%150, %c0_i32_313] : memref<64x32xf32, #tpu.memory_space<any>> -> memref<1x32xf32, #tpu.memory_space<any>>
    %c30_i32_314 = arith.constant 30 : i32
    %c0_i32_315 = arith.constant 0 : i32
    %441 = tpu.memref_slice %arg8[%c30_i32_314, %c0_i32_315] : memref<64x32xf32, #tpu.memory_space<vmem>> -> memref<1x32xf32, #tpu.memory_space<vmem>>
    %442 = tpu.memref_slice %arg9[%c6_i32_312] : memref<8x!tpu.dma_semaphore, #tpu.memory_space<semaphore_mem>> -> memref<1x!tpu.dma_semaphore, #tpu.memory_space<semaphore_mem>>
    %443 = tpu.memref_squeeze %442 : memref<1x!tpu.dma_semaphore, #tpu.memory_space<semaphore_mem>> -> memref<!tpu.dma_semaphore, #tpu.memory_space<semaphore_mem>>
    tpu.wait_dma2 semaphore(%443 : memref<!tpu.dma_semaphore, #tpu.memory_space<semaphore_mem>>) src(%440 : memref<1x32xf32, #tpu.memory_space<any>>) dst(%441 : memref<1x32xf32, #tpu.memory_space<vmem>>)
    %c7_i32_316 = arith.constant 7 : i32
    %c0_i32_317 = arith.constant 0 : i32
    %444 = tpu.memref_slice %arg1[%155, %c0_i32_317] : memref<64x32xf32, #tpu.memory_space<any>> -> memref<1x32xf32, #tpu.memory_space<any>>
    %c31_i32_318 = arith.constant 31 : i32
    %c0_i32_319 = arith.constant 0 : i32
    %445 = tpu.memref_slice %arg8[%c31_i32_318, %c0_i32_319] : memref<64x32xf32, #tpu.memory_space<vmem>> -> memref<1x32xf32, #tpu.memory_space<vmem>>
    %446 = tpu.memref_slice %arg9[%c7_i32_316] : memref<8x!tpu.dma_semaphore, #tpu.memory_space<semaphore_mem>> -> memref<1x!tpu.dma_semaphore, #tpu.memory_space<semaphore_mem>>
    %447 = tpu.memref_squeeze %446 : memref<1x!tpu.dma_semaphore, #tpu.memory_space<semaphore_mem>> -> memref<!tpu.dma_semaphore, #tpu.memory_space<semaphore_mem>>
    tpu.wait_dma2 semaphore(%447 : memref<!tpu.dma_semaphore, #tpu.memory_space<semaphore_mem>>) src(%444 : memref<1x32xf32, #tpu.memory_space<any>>) dst(%445 : memref<1x32xf32, #tpu.memory_space<vmem>>)
    %c0_i32_320 = arith.constant 0 : i32
    %c0_i32_321 = arith.constant 0 : i32
    %448 = tpu.memref_slice %arg1[%160, %c0_i32_321] : memref<64x32xf32, #tpu.memory_space<any>> -> memref<1x32xf32, #tpu.memory_space<any>>
    %c32_i32_322 = arith.constant 32 : i32
    %c0_i32_323 = arith.constant 0 : i32
    %449 = tpu.memref_slice %arg8[%c32_i32_322, %c0_i32_323] : memref<64x32xf32, #tpu.memory_space<vmem>> -> memref<1x32xf32, #tpu.memory_space<vmem>>
    %450 = tpu.memref_slice %arg9[%c0_i32_320] : memref<8x!tpu.dma_semaphore, #tpu.memory_space<semaphore_mem>> -> memref<1x!tpu.dma_semaphore, #tpu.memory_space<semaphore_mem>>
    %451 = tpu.memref_squeeze %450 : memref<1x!tpu.dma_semaphore, #tpu.memory_space<semaphore_mem>> -> memref<!tpu.dma_semaphore, #tpu.memory_space<semaphore_mem>>
    tpu.wait_dma2 semaphore(%451 : memref<!tpu.dma_semaphore, #tpu.memory_space<semaphore_mem>>) src(%448 : memref<1x32xf32, #tpu.memory_space<any>>) dst(%449 : memref<1x32xf32, #tpu.memory_space<vmem>>)
    %c1_i32_324 = arith.constant 1 : i32
    %c0_i32_325 = arith.constant 0 : i32
    %452 = tpu.memref_slice %arg1[%165, %c0_i32_325] : memref<64x32xf32, #tpu.memory_space<any>> -> memref<1x32xf32, #tpu.memory_space<any>>
    %c33_i32_326 = arith.constant 33 : i32
    %c0_i32_327 = arith.constant 0 : i32
    %453 = tpu.memref_slice %arg8[%c33_i32_326, %c0_i32_327] : memref<64x32xf32, #tpu.memory_space<vmem>> -> memref<1x32xf32, #tpu.memory_space<vmem>>
    %454 = tpu.memref_slice %arg9[%c1_i32_324] : memref<8x!tpu.dma_semaphore, #tpu.memory_space<semaphore_mem>> -> memref<1x!tpu.dma_semaphore, #tpu.memory_space<semaphore_mem>>
    %455 = tpu.memref_squeeze %454 : memref<1x!tpu.dma_semaphore, #tpu.memory_space<semaphore_mem>> -> memref<!tpu.dma_semaphore, #tpu.memory_space<semaphore_mem>>
    tpu.wait_dma2 semaphore(%455 : memref<!tpu.dma_semaphore, #tpu.memory_space<semaphore_mem>>) src(%452 : memref<1x32xf32, #tpu.memory_space<any>>) dst(%453 : memref<1x32xf32, #tpu.memory_space<vmem>>)
    %c2_i32_328 = arith.constant 2 : i32
    %c0_i32_329 = arith.constant 0 : i32
    %456 = tpu.memref_slice %arg1[%170, %c0_i32_329] : memref<64x32xf32, #tpu.memory_space<any>> -> memref<1x32xf32, #tpu.memory_space<any>>
    %c34_i32_330 = arith.constant 34 : i32
    %c0_i32_331 = arith.constant 0 : i32
    %457 = tpu.memref_slice %arg8[%c34_i32_330, %c0_i32_331] : memref<64x32xf32, #tpu.memory_space<vmem>> -> memref<1x32xf32, #tpu.memory_space<vmem>>
    %458 = tpu.memref_slice %arg9[%c2_i32_328] : memref<8x!tpu.dma_semaphore, #tpu.memory_space<semaphore_mem>> -> memref<1x!tpu.dma_semaphore, #tpu.memory_space<semaphore_mem>>
    %459 = tpu.memref_squeeze %458 : memref<1x!tpu.dma_semaphore, #tpu.memory_space<semaphore_mem>> -> memref<!tpu.dma_semaphore, #tpu.memory_space<semaphore_mem>>
    tpu.wait_dma2 semaphore(%459 : memref<!tpu.dma_semaphore, #tpu.memory_space<semaphore_mem>>) src(%456 : memref<1x32xf32, #tpu.memory_space<any>>) dst(%457 : memref<1x32xf32, #tpu.memory_space<vmem>>)
    %c3_i32_332 = arith.constant 3 : i32
    %c0_i32_333 = arith.constant 0 : i32
    %460 = tpu.memref_slice %arg1[%175, %c0_i32_333] : memref<64x32xf32, #tpu.memory_space<any>> -> memref<1x32xf32, #tpu.memory_space<any>>
    %c35_i32_334 = arith.constant 35 : i32
    %c0_i32_335 = arith.constant 0 : i32
    %461 = tpu.memref_slice %arg8[%c35_i32_334, %c0_i32_335] : memref<64x32xf32, #tpu.memory_space<vmem>> -> memref<1x32xf32, #tpu.memory_space<vmem>>
    %462 = tpu.memref_slice %arg9[%c3_i32_332] : memref<8x!tpu.dma_semaphore, #tpu.memory_space<semaphore_mem>> -> memref<1x!tpu.dma_semaphore, #tpu.memory_space<semaphore_mem>>
    %463 = tpu.memref_squeeze %462 : memref<1x!tpu.dma_semaphore, #tpu.memory_space<semaphore_mem>> -> memref<!tpu.dma_semaphore, #tpu.memory_space<semaphore_mem>>
    tpu.wait_dma2 semaphore(%463 : memref<!tpu.dma_semaphore, #tpu.memory_space<semaphore_mem>>) src(%460 : memref<1x32xf32, #tpu.memory_space<any>>) dst(%461 : memref<1x32xf32, #tpu.memory_space<vmem>>)
    %c4_i32_336 = arith.constant 4 : i32
    %c0_i32_337 = arith.constant 0 : i32
    %464 = tpu.memref_slice %arg1[%180, %c0_i32_337] : memref<64x32xf32, #tpu.memory_space<any>> -> memref<1x32xf32, #tpu.memory_space<any>>
    %c36_i32_338 = arith.constant 36 : i32
    %c0_i32_339 = arith.constant 0 : i32
    %465 = tpu.memref_slice %arg8[%c36_i32_338, %c0_i32_339] : memref<64x32xf32, #tpu.memory_space<vmem>> -> memref<1x32xf32, #tpu.memory_space<vmem>>
    %466 = tpu.memref_slice %arg9[%c4_i32_336] : memref<8x!tpu.dma_semaphore, #tpu.memory_space<semaphore_mem>> -> memref<1x!tpu.dma_semaphore, #tpu.memory_space<semaphore_mem>>
    %467 = tpu.memref_squeeze %466 : memref<1x!tpu.dma_semaphore, #tpu.memory_space<semaphore_mem>> -> memref<!tpu.dma_semaphore, #tpu.memory_space<semaphore_mem>>
    tpu.wait_dma2 semaphore(%467 : memref<!tpu.dma_semaphore, #tpu.memory_space<semaphore_mem>>) src(%464 : memref<1x32xf32, #tpu.memory_space<any>>) dst(%465 : memref<1x32xf32, #tpu.memory_space<vmem>>)
    %c5_i32_340 = arith.constant 5 : i32
    %c0_i32_341 = arith.constant 0 : i32
    %468 = tpu.memref_slice %arg1[%185, %c0_i32_341] : memref<64x32xf32, #tpu.memory_space<any>> -> memref<1x32xf32, #tpu.memory_space<any>>
    %c37_i32_342 = arith.constant 37 : i32
    %c0_i32_343 = arith.constant 0 : i32
    %469 = tpu.memref_slice %arg8[%c37_i32_342, %c0_i32_343] : memref<64x32xf32, #tpu.memory_space<vmem>> -> memref<1x32xf32, #tpu.memory_space<vmem>>
    %470 = tpu.memref_slice %arg9[%c5_i32_340] : memref<8x!tpu.dma_semaphore, #tpu.memory_space<semaphore_mem>> -> memref<1x!tpu.dma_semaphore, #tpu.memory_space<semaphore_mem>>
    %471 = tpu.memref_squeeze %470 : memref<1x!tpu.dma_semaphore, #tpu.memory_space<semaphore_mem>> -> memref<!tpu.dma_semaphore, #tpu.memory_space<semaphore_mem>>
    tpu.wait_dma2 semaphore(%471 : memref<!tpu.dma_semaphore, #tpu.memory_space<semaphore_mem>>) src(%468 : memref<1x32xf32, #tpu.memory_space<any>>) dst(%469 : memref<1x32xf32, #tpu.memory_space<vmem>>)
    %c6_i32_344 = arith.constant 6 : i32
    %c0_i32_345 = arith.constant 0 : i32
    %472 = tpu.memref_slice %arg1[%190, %c0_i32_345] : memref<64x32xf32, #tpu.memory_space<any>> -> memref<1x32xf32, #tpu.memory_space<any>>
    %c38_i32_346 = arith.constant 38 : i32
    %c0_i32_347 = arith.constant 0 : i32
    %473 = tpu.memref_slice %arg8[%c38_i32_346, %c0_i32_347] : memref<64x32xf32, #tpu.memory_space<vmem>> -> memref<1x32xf32, #tpu.memory_space<vmem>>
    %474 = tpu.memref_slice %arg9[%c6_i32_344] : memref<8x!tpu.dma_semaphore, #tpu.memory_space<semaphore_mem>> -> memref<1x!tpu.dma_semaphore, #tpu.memory_space<semaphore_mem>>
    %475 = tpu.memref_squeeze %474 : memref<1x!tpu.dma_semaphore, #tpu.memory_space<semaphore_mem>> -> memref<!tpu.dma_semaphore, #tpu.memory_space<semaphore_mem>>
    tpu.wait_dma2 semaphore(%475 : memref<!tpu.dma_semaphore, #tpu.memory_space<semaphore_mem>>) src(%472 : memref<1x32xf32, #tpu.memory_space<any>>) dst(%473 : memref<1x32xf32, #tpu.memory_space<vmem>>)
    %c7_i32_348 = arith.constant 7 : i32
    %c0_i32_349 = arith.constant 0 : i32
    %476 = tpu.memref_slice %arg1[%195, %c0_i32_349] : memref<64x32xf32, #tpu.memory_space<any>> -> memref<1x32xf32, #tpu.memory_space<any>>
    %c39_i32_350 = arith.constant 39 : i32
    %c0_i32_351 = arith.constant 0 : i32
    %477 = tpu.memref_slice %arg8[%c39_i32_350, %c0_i32_351] : memref<64x32xf32, #tpu.memory_space<vmem>> -> memref<1x32xf32, #tpu.memory_space<vmem>>
    %478 = tpu.memref_slice %arg9[%c7_i32_348] : memref<8x!tpu.dma_semaphore, #tpu.memory_space<semaphore_mem>> -> memref<1x!tpu.dma_semaphore, #tpu.memory_space<semaphore_mem>>
    %479 = tpu.memref_squeeze %478 : memref<1x!tpu.dma_semaphore, #tpu.memory_space<semaphore_mem>> -> memref<!tpu.dma_semaphore, #tpu.memory_space<semaphore_mem>>
    tpu.wait_dma2 semaphore(%479 : memref<!tpu.dma_semaphore, #tpu.memory_space<semaphore_mem>>) src(%476 : memref<1x32xf32, #tpu.memory_space<any>>) dst(%477 : memref<1x32xf32, #tpu.memory_space<vmem>>)
    %c0_i32_352 = arith.constant 0 : i32
    %c0_i32_353 = arith.constant 0 : i32
    %480 = tpu.memref_slice %arg1[%200, %c0_i32_353] : memref<64x32xf32, #tpu.memory_space<any>> -> memref<1x32xf32, #tpu.memory_space<any>>
    %c40_i32_354 = arith.constant 40 : i32
    %c0_i32_355 = arith.constant 0 : i32
    %481 = tpu.memref_slice %arg8[%c40_i32_354, %c0_i32_355] : memref<64x32xf32, #tpu.memory_space<vmem>> -> memref<1x32xf32, #tpu.memory_space<vmem>>
    %482 = tpu.memref_slice %arg9[%c0_i32_352] : memref<8x!tpu.dma_semaphore, #tpu.memory_space<semaphore_mem>> -> memref<1x!tpu.dma_semaphore, #tpu.memory_space<semaphore_mem>>
    %483 = tpu.memref_squeeze %482 : memref<1x!tpu.dma_semaphore, #tpu.memory_space<semaphore_mem>> -> memref<!tpu.dma_semaphore, #tpu.memory_space<semaphore_mem>>
    tpu.wait_dma2 semaphore(%483 : memref<!tpu.dma_semaphore, #tpu.memory_space<semaphore_mem>>) src(%480 : memref<1x32xf32, #tpu.memory_space<any>>) dst(%481 : memref<1x32xf32, #tpu.memory_space<vmem>>)
    %c1_i32_356 = arith.constant 1 : i32
    %c0_i32_357 = arith.constant 0 : i32
    %484 = tpu.memref_slice %arg1[%205, %c0_i32_357] : memref<64x32xf32, #tpu.memory_space<any>> -> memref<1x32xf32, #tpu.memory_space<any>>
    %c41_i32_358 = arith.constant 41 : i32
    %c0_i32_359 = arith.constant 0 : i32
    %485 = tpu.memref_slice %arg8[%c41_i32_358, %c0_i32_359] : memref<64x32xf32, #tpu.memory_space<vmem>> -> memref<1x32xf32, #tpu.memory_space<vmem>>
    %486 = tpu.memref_slice %arg9[%c1_i32_356] : memref<8x!tpu.dma_semaphore, #tpu.memory_space<semaphore_mem>> -> memref<1x!tpu.dma_semaphore, #tpu.memory_space<semaphore_mem>>
    %487 = tpu.memref_squeeze %486 : memref<1x!tpu.dma_semaphore, #tpu.memory_space<semaphore_mem>> -> memref<!tpu.dma_semaphore, #tpu.memory_space<semaphore_mem>>
    tpu.wait_dma2 semaphore(%487 : memref<!tpu.dma_semaphore, #tpu.memory_space<semaphore_mem>>) src(%484 : memref<1x32xf32, #tpu.memory_space<any>>) dst(%485 : memref<1x32xf32, #tpu.memory_space<vmem>>)
    %c2_i32_360 = arith.constant 2 : i32
    %c0_i32_361 = arith.constant 0 : i32
    %488 = tpu.memref_slice %arg1[%210, %c0_i32_361] : memref<64x32xf32, #tpu.memory_space<any>> -> memref<1x32xf32, #tpu.memory_space<any>>
    %c42_i32_362 = arith.constant 42 : i32
    %c0_i32_363 = arith.constant 0 : i32
    %489 = tpu.memref_slice %arg8[%c42_i32_362, %c0_i32_363] : memref<64x32xf32, #tpu.memory_space<vmem>> -> memref<1x32xf32, #tpu.memory_space<vmem>>
    %490 = tpu.memref_slice %arg9[%c2_i32_360] : memref<8x!tpu.dma_semaphore, #tpu.memory_space<semaphore_mem>> -> memref<1x!tpu.dma_semaphore, #tpu.memory_space<semaphore_mem>>
    %491 = tpu.memref_squeeze %490 : memref<1x!tpu.dma_semaphore, #tpu.memory_space<semaphore_mem>> -> memref<!tpu.dma_semaphore, #tpu.memory_space<semaphore_mem>>
    tpu.wait_dma2 semaphore(%491 : memref<!tpu.dma_semaphore, #tpu.memory_space<semaphore_mem>>) src(%488 : memref<1x32xf32, #tpu.memory_space<any>>) dst(%489 : memref<1x32xf32, #tpu.memory_space<vmem>>)
    %c3_i32_364 = arith.constant 3 : i32
    %c0_i32_365 = arith.constant 0 : i32
    %492 = tpu.memref_slice %arg1[%215, %c0_i32_365] : memref<64x32xf32, #tpu.memory_space<any>> -> memref<1x32xf32, #tpu.memory_space<any>>
    %c43_i32_366 = arith.constant 43 : i32
    %c0_i32_367 = arith.constant 0 : i32
    %493 = tpu.memref_slice %arg8[%c43_i32_366, %c0_i32_367] : memref<64x32xf32, #tpu.memory_space<vmem>> -> memref<1x32xf32, #tpu.memory_space<vmem>>
    %494 = tpu.memref_slice %arg9[%c3_i32_364] : memref<8x!tpu.dma_semaphore, #tpu.memory_space<semaphore_mem>> -> memref<1x!tpu.dma_semaphore, #tpu.memory_space<semaphore_mem>>
    %495 = tpu.memref_squeeze %494 : memref<1x!tpu.dma_semaphore, #tpu.memory_space<semaphore_mem>> -> memref<!tpu.dma_semaphore, #tpu.memory_space<semaphore_mem>>
    tpu.wait_dma2 semaphore(%495 : memref<!tpu.dma_semaphore, #tpu.memory_space<semaphore_mem>>) src(%492 : memref<1x32xf32, #tpu.memory_space<any>>) dst(%493 : memref<1x32xf32, #tpu.memory_space<vmem>>)
    %c4_i32_368 = arith.constant 4 : i32
    %c0_i32_369 = arith.constant 0 : i32
    %496 = tpu.memref_slice %arg1[%220, %c0_i32_369] : memref<64x32xf32, #tpu.memory_space<any>> -> memref<1x32xf32, #tpu.memory_space<any>>
    %c44_i32_370 = arith.constant 44 : i32
    %c0_i32_371 = arith.constant 0 : i32
    %497 = tpu.memref_slice %arg8[%c44_i32_370, %c0_i32_371] : memref<64x32xf32, #tpu.memory_space<vmem>> -> memref<1x32xf32, #tpu.memory_space<vmem>>
    %498 = tpu.memref_slice %arg9[%c4_i32_368] : memref<8x!tpu.dma_semaphore, #tpu.memory_space<semaphore_mem>> -> memref<1x!tpu.dma_semaphore, #tpu.memory_space<semaphore_mem>>
    %499 = tpu.memref_squeeze %498 : memref<1x!tpu.dma_semaphore, #tpu.memory_space<semaphore_mem>> -> memref<!tpu.dma_semaphore, #tpu.memory_space<semaphore_mem>>
    tpu.wait_dma2 semaphore(%499 : memref<!tpu.dma_semaphore, #tpu.memory_space<semaphore_mem>>) src(%496 : memref<1x32xf32, #tpu.memory_space<any>>) dst(%497 : memref<1x32xf32, #tpu.memory_space<vmem>>)
    %c5_i32_372 = arith.constant 5 : i32
    %c0_i32_373 = arith.constant 0 : i32
    %500 = tpu.memref_slice %arg1[%225, %c0_i32_373] : memref<64x32xf32, #tpu.memory_space<any>> -> memref<1x32xf32, #tpu.memory_space<any>>
    %c45_i32_374 = arith.constant 45 : i32
    %c0_i32_375 = arith.constant 0 : i32
    %501 = tpu.memref_slice %arg8[%c45_i32_374, %c0_i32_375] : memref<64x32xf32, #tpu.memory_space<vmem>> -> memref<1x32xf32, #tpu.memory_space<vmem>>
    %502 = tpu.memref_slice %arg9[%c5_i32_372] : memref<8x!tpu.dma_semaphore, #tpu.memory_space<semaphore_mem>> -> memref<1x!tpu.dma_semaphore, #tpu.memory_space<semaphore_mem>>
    %503 = tpu.memref_squeeze %502 : memref<1x!tpu.dma_semaphore, #tpu.memory_space<semaphore_mem>> -> memref<!tpu.dma_semaphore, #tpu.memory_space<semaphore_mem>>
    tpu.wait_dma2 semaphore(%503 : memref<!tpu.dma_semaphore, #tpu.memory_space<semaphore_mem>>) src(%500 : memref<1x32xf32, #tpu.memory_space<any>>) dst(%501 : memref<1x32xf32, #tpu.memory_space<vmem>>)
    %c6_i32_376 = arith.constant 6 : i32
    %c0_i32_377 = arith.constant 0 : i32
    %504 = tpu.memref_slice %arg1[%230, %c0_i32_377] : memref<64x32xf32, #tpu.memory_space<any>> -> memref<1x32xf32, #tpu.memory_space<any>>
    %c46_i32_378 = arith.constant 46 : i32
    %c0_i32_379 = arith.constant 0 : i32
    %505 = tpu.memref_slice %arg8[%c46_i32_378, %c0_i32_379] : memref<64x32xf32, #tpu.memory_space<vmem>> -> memref<1x32xf32, #tpu.memory_space<vmem>>
    %506 = tpu.memref_slice %arg9[%c6_i32_376] : memref<8x!tpu.dma_semaphore, #tpu.memory_space<semaphore_mem>> -> memref<1x!tpu.dma_semaphore, #tpu.memory_space<semaphore_mem>>
    %507 = tpu.memref_squeeze %506 : memref<1x!tpu.dma_semaphore, #tpu.memory_space<semaphore_mem>> -> memref<!tpu.dma_semaphore, #tpu.memory_space<semaphore_mem>>
    tpu.wait_dma2 semaphore(%507 : memref<!tpu.dma_semaphore, #tpu.memory_space<semaphore_mem>>) src(%504 : memref<1x32xf32, #tpu.memory_space<any>>) dst(%505 : memref<1x32xf32, #tpu.memory_space<vmem>>)
    %c7_i32_380 = arith.constant 7 : i32
    %c0_i32_381 = arith.constant 0 : i32
    %508 = tpu.memref_slice %arg1[%235, %c0_i32_381] : memref<64x32xf32, #tpu.memory_space<any>> -> memref<1x32xf32, #tpu.memory_space<any>>
    %c47_i32_382 = arith.constant 47 : i32
    %c0_i32_383 = arith.constant 0 : i32
    %509 = tpu.memref_slice %arg8[%c47_i32_382, %c0_i32_383] : memref<64x32xf32, #tpu.memory_space<vmem>> -> memref<1x32xf32, #tpu.memory_space<vmem>>
    %510 = tpu.memref_slice %arg9[%c7_i32_380] : memref<8x!tpu.dma_semaphore, #tpu.memory_space<semaphore_mem>> -> memref<1x!tpu.dma_semaphore, #tpu.memory_space<semaphore_mem>>
    %511 = tpu.memref_squeeze %510 : memref<1x!tpu.dma_semaphore, #tpu.memory_space<semaphore_mem>> -> memref<!tpu.dma_semaphore, #tpu.memory_space<semaphore_mem>>
    tpu.wait_dma2 semaphore(%511 : memref<!tpu.dma_semaphore, #tpu.memory_space<semaphore_mem>>) src(%508 : memref<1x32xf32, #tpu.memory_space<any>>) dst(%509 : memref<1x32xf32, #tpu.memory_space<vmem>>)
    %c0_i32_384 = arith.constant 0 : i32
    %c0_i32_385 = arith.constant 0 : i32
    %512 = tpu.memref_slice %arg1[%240, %c0_i32_385] : memref<64x32xf32, #tpu.memory_space<any>> -> memref<1x32xf32, #tpu.memory_space<any>>
    %c48_i32_386 = arith.constant 48 : i32
    %c0_i32_387 = arith.constant 0 : i32
    %513 = tpu.memref_slice %arg8[%c48_i32_386, %c0_i32_387] : memref<64x32xf32, #tpu.memory_space<vmem>> -> memref<1x32xf32, #tpu.memory_space<vmem>>
    %514 = tpu.memref_slice %arg9[%c0_i32_384] : memref<8x!tpu.dma_semaphore, #tpu.memory_space<semaphore_mem>> -> memref<1x!tpu.dma_semaphore, #tpu.memory_space<semaphore_mem>>
    %515 = tpu.memref_squeeze %514 : memref<1x!tpu.dma_semaphore, #tpu.memory_space<semaphore_mem>> -> memref<!tpu.dma_semaphore, #tpu.memory_space<semaphore_mem>>
    tpu.wait_dma2 semaphore(%515 : memref<!tpu.dma_semaphore, #tpu.memory_space<semaphore_mem>>) src(%512 : memref<1x32xf32, #tpu.memory_space<any>>) dst(%513 : memref<1x32xf32, #tpu.memory_space<vmem>>)
    %c1_i32_388 = arith.constant 1 : i32
    %c0_i32_389 = arith.constant 0 : i32
    %516 = tpu.memref_slice %arg1[%245, %c0_i32_389] : memref<64x32xf32, #tpu.memory_space<any>> -> memref<1x32xf32, #tpu.memory_space<any>>
    %c49_i32_390 = arith.constant 49 : i32
    %c0_i32_391 = arith.constant 0 : i32
    %517 = tpu.memref_slice %arg8[%c49_i32_390, %c0_i32_391] : memref<64x32xf32, #tpu.memory_space<vmem>> -> memref<1x32xf32, #tpu.memory_space<vmem>>
    %518 = tpu.memref_slice %arg9[%c1_i32_388] : memref<8x!tpu.dma_semaphore, #tpu.memory_space<semaphore_mem>> -> memref<1x!tpu.dma_semaphore, #tpu.memory_space<semaphore_mem>>
    %519 = tpu.memref_squeeze %518 : memref<1x!tpu.dma_semaphore, #tpu.memory_space<semaphore_mem>> -> memref<!tpu.dma_semaphore, #tpu.memory_space<semaphore_mem>>
    tpu.wait_dma2 semaphore(%519 : memref<!tpu.dma_semaphore, #tpu.memory_space<semaphore_mem>>) src(%516 : memref<1x32xf32, #tpu.memory_space<any>>) dst(%517 : memref<1x32xf32, #tpu.memory_space<vmem>>)
    %c2_i32_392 = arith.constant 2 : i32
    %c0_i32_393 = arith.constant 0 : i32
    %520 = tpu.memref_slice %arg1[%250, %c0_i32_393] : memref<64x32xf32, #tpu.memory_space<any>> -> memref<1x32xf32, #tpu.memory_space<any>>
    %c50_i32_394 = arith.constant 50 : i32
    %c0_i32_395 = arith.constant 0 : i32
    %521 = tpu.memref_slice %arg8[%c50_i32_394, %c0_i32_395] : memref<64x32xf32, #tpu.memory_space<vmem>> -> memref<1x32xf32, #tpu.memory_space<vmem>>
    %522 = tpu.memref_slice %arg9[%c2_i32_392] : memref<8x!tpu.dma_semaphore, #tpu.memory_space<semaphore_mem>> -> memref<1x!tpu.dma_semaphore, #tpu.memory_space<semaphore_mem>>
    %523 = tpu.memref_squeeze %522 : memref<1x!tpu.dma_semaphore, #tpu.memory_space<semaphore_mem>> -> memref<!tpu.dma_semaphore, #tpu.memory_space<semaphore_mem>>
    tpu.wait_dma2 semaphore(%523 : memref<!tpu.dma_semaphore, #tpu.memory_space<semaphore_mem>>) src(%520 : memref<1x32xf32, #tpu.memory_space<any>>) dst(%521 : memref<1x32xf32, #tpu.memory_space<vmem>>)
    %c3_i32_396 = arith.constant 3 : i32
    %c0_i32_397 = arith.constant 0 : i32
    %524 = tpu.memref_slice %arg1[%255, %c0_i32_397] : memref<64x32xf32, #tpu.memory_space<any>> -> memref<1x32xf32, #tpu.memory_space<any>>
    %c51_i32_398 = arith.constant 51 : i32
    %c0_i32_399 = arith.constant 0 : i32
    %525 = tpu.memref_slice %arg8[%c51_i32_398, %c0_i32_399] : memref<64x32xf32, #tpu.memory_space<vmem>> -> memref<1x32xf32, #tpu.memory_space<vmem>>
    %526 = tpu.memref_slice %arg9[%c3_i32_396] : memref<8x!tpu.dma_semaphore, #tpu.memory_space<semaphore_mem>> -> memref<1x!tpu.dma_semaphore, #tpu.memory_space<semaphore_mem>>
    %527 = tpu.memref_squeeze %526 : memref<1x!tpu.dma_semaphore, #tpu.memory_space<semaphore_mem>> -> memref<!tpu.dma_semaphore, #tpu.memory_space<semaphore_mem>>
    tpu.wait_dma2 semaphore(%527 : memref<!tpu.dma_semaphore, #tpu.memory_space<semaphore_mem>>) src(%524 : memref<1x32xf32, #tpu.memory_space<any>>) dst(%525 : memref<1x32xf32, #tpu.memory_space<vmem>>)
    %c4_i32_400 = arith.constant 4 : i32
    %c0_i32_401 = arith.constant 0 : i32
    %528 = tpu.memref_slice %arg1[%260, %c0_i32_401] : memref<64x32xf32, #tpu.memory_space<any>> -> memref<1x32xf32, #tpu.memory_space<any>>
    %c52_i32_402 = arith.constant 52 : i32
    %c0_i32_403 = arith.constant 0 : i32
    %529 = tpu.memref_slice %arg8[%c52_i32_402, %c0_i32_403] : memref<64x32xf32, #tpu.memory_space<vmem>> -> memref<1x32xf32, #tpu.memory_space<vmem>>
    %530 = tpu.memref_slice %arg9[%c4_i32_400] : memref<8x!tpu.dma_semaphore, #tpu.memory_space<semaphore_mem>> -> memref<1x!tpu.dma_semaphore, #tpu.memory_space<semaphore_mem>>
    %531 = tpu.memref_squeeze %530 : memref<1x!tpu.dma_semaphore, #tpu.memory_space<semaphore_mem>> -> memref<!tpu.dma_semaphore, #tpu.memory_space<semaphore_mem>>
    tpu.wait_dma2 semaphore(%531 : memref<!tpu.dma_semaphore, #tpu.memory_space<semaphore_mem>>) src(%528 : memref<1x32xf32, #tpu.memory_space<any>>) dst(%529 : memref<1x32xf32, #tpu.memory_space<vmem>>)
    %c5_i32_404 = arith.constant 5 : i32
    %c0_i32_405 = arith.constant 0 : i32
    %532 = tpu.memref_slice %arg1[%265, %c0_i32_405] : memref<64x32xf32, #tpu.memory_space<any>> -> memref<1x32xf32, #tpu.memory_space<any>>
    %c53_i32_406 = arith.constant 53 : i32
    %c0_i32_407 = arith.constant 0 : i32
    %533 = tpu.memref_slice %arg8[%c53_i32_406, %c0_i32_407] : memref<64x32xf32, #tpu.memory_space<vmem>> -> memref<1x32xf32, #tpu.memory_space<vmem>>
    %534 = tpu.memref_slice %arg9[%c5_i32_404] : memref<8x!tpu.dma_semaphore, #tpu.memory_space<semaphore_mem>> -> memref<1x!tpu.dma_semaphore, #tpu.memory_space<semaphore_mem>>
    %535 = tpu.memref_squeeze %534 : memref<1x!tpu.dma_semaphore, #tpu.memory_space<semaphore_mem>> -> memref<!tpu.dma_semaphore, #tpu.memory_space<semaphore_mem>>
    tpu.wait_dma2 semaphore(%535 : memref<!tpu.dma_semaphore, #tpu.memory_space<semaphore_mem>>) src(%532 : memref<1x32xf32, #tpu.memory_space<any>>) dst(%533 : memref<1x32xf32, #tpu.memory_space<vmem>>)
    %c6_i32_408 = arith.constant 6 : i32
    %c0_i32_409 = arith.constant 0 : i32
    %536 = tpu.memref_slice %arg1[%270, %c0_i32_409] : memref<64x32xf32, #tpu.memory_space<any>> -> memref<1x32xf32, #tpu.memory_space<any>>
    %c54_i32_410 = arith.constant 54 : i32
    %c0_i32_411 = arith.constant 0 : i32
    %537 = tpu.memref_slice %arg8[%c54_i32_410, %c0_i32_411] : memref<64x32xf32, #tpu.memory_space<vmem>> -> memref<1x32xf32, #tpu.memory_space<vmem>>
    %538 = tpu.memref_slice %arg9[%c6_i32_408] : memref<8x!tpu.dma_semaphore, #tpu.memory_space<semaphore_mem>> -> memref<1x!tpu.dma_semaphore, #tpu.memory_space<semaphore_mem>>
    %539 = tpu.memref_squeeze %538 : memref<1x!tpu.dma_semaphore, #tpu.memory_space<semaphore_mem>> -> memref<!tpu.dma_semaphore, #tpu.memory_space<semaphore_mem>>
    tpu.wait_dma2 semaphore(%539 : memref<!tpu.dma_semaphore, #tpu.memory_space<semaphore_mem>>) src(%536 : memref<1x32xf32, #tpu.memory_space<any>>) dst(%537 : memref<1x32xf32, #tpu.memory_space<vmem>>)
    %c7_i32_412 = arith.constant 7 : i32
    %c0_i32_413 = arith.constant 0 : i32
    %540 = tpu.memref_slice %arg1[%275, %c0_i32_413] : memref<64x32xf32, #tpu.memory_space<any>> -> memref<1x32xf32, #tpu.memory_space<any>>
    %c55_i32_414 = arith.constant 55 : i32
    %c0_i32_415 = arith.constant 0 : i32
    %541 = tpu.memref_slice %arg8[%c55_i32_414, %c0_i32_415] : memref<64x32xf32, #tpu.memory_space<vmem>> -> memref<1x32xf32, #tpu.memory_space<vmem>>
    %542 = tpu.memref_slice %arg9[%c7_i32_412] : memref<8x!tpu.dma_semaphore, #tpu.memory_space<semaphore_mem>> -> memref<1x!tpu.dma_semaphore, #tpu.memory_space<semaphore_mem>>
    %543 = tpu.memref_squeeze %542 : memref<1x!tpu.dma_semaphore, #tpu.memory_space<semaphore_mem>> -> memref<!tpu.dma_semaphore, #tpu.memory_space<semaphore_mem>>
    tpu.wait_dma2 semaphore(%543 : memref<!tpu.dma_semaphore, #tpu.memory_space<semaphore_mem>>) src(%540 : memref<1x32xf32, #tpu.memory_space<any>>) dst(%541 : memref<1x32xf32, #tpu.memory_space<vmem>>)
    %c0_i32_416 = arith.constant 0 : i32
    %c0_i32_417 = arith.constant 0 : i32
    %544 = tpu.memref_slice %arg1[%280, %c0_i32_417] : memref<64x32xf32, #tpu.memory_space<any>> -> memref<1x32xf32, #tpu.memory_space<any>>
    %c56_i32_418 = arith.constant 56 : i32
    %c0_i32_419 = arith.constant 0 : i32
    %545 = tpu.memref_slice %arg8[%c56_i32_418, %c0_i32_419] : memref<64x32xf32, #tpu.memory_space<vmem>> -> memref<1x32xf32, #tpu.memory_space<vmem>>
    %546 = tpu.memref_slice %arg9[%c0_i32_416] : memref<8x!tpu.dma_semaphore, #tpu.memory_space<semaphore_mem>> -> memref<1x!tpu.dma_semaphore, #tpu.memory_space<semaphore_mem>>
    %547 = tpu.memref_squeeze %546 : memref<1x!tpu.dma_semaphore, #tpu.memory_space<semaphore_mem>> -> memref<!tpu.dma_semaphore, #tpu.memory_space<semaphore_mem>>
    tpu.wait_dma2 semaphore(%547 : memref<!tpu.dma_semaphore, #tpu.memory_space<semaphore_mem>>) src(%544 : memref<1x32xf32, #tpu.memory_space<any>>) dst(%545 : memref<1x32xf32, #tpu.memory_space<vmem>>)
    %c1_i32_420 = arith.constant 1 : i32
    %c0_i32_421 = arith.constant 0 : i32
    %548 = tpu.memref_slice %arg1[%285, %c0_i32_421] : memref<64x32xf32, #tpu.memory_space<any>> -> memref<1x32xf32, #tpu.memory_space<any>>
    %c57_i32_422 = arith.constant 57 : i32
    %c0_i32_423 = arith.constant 0 : i32
    %549 = tpu.memref_slice %arg8[%c57_i32_422, %c0_i32_423] : memref<64x32xf32, #tpu.memory_space<vmem>> -> memref<1x32xf32, #tpu.memory_space<vmem>>
    %550 = tpu.memref_slice %arg9[%c1_i32_420] : memref<8x!tpu.dma_semaphore, #tpu.memory_space<semaphore_mem>> -> memref<1x!tpu.dma_semaphore, #tpu.memory_space<semaphore_mem>>
    %551 = tpu.memref_squeeze %550 : memref<1x!tpu.dma_semaphore, #tpu.memory_space<semaphore_mem>> -> memref<!tpu.dma_semaphore, #tpu.memory_space<semaphore_mem>>
    tpu.wait_dma2 semaphore(%551 : memref<!tpu.dma_semaphore, #tpu.memory_space<semaphore_mem>>) src(%548 : memref<1x32xf32, #tpu.memory_space<any>>) dst(%549 : memref<1x32xf32, #tpu.memory_space<vmem>>)
    %c2_i32_424 = arith.constant 2 : i32
    %c0_i32_425 = arith.constant 0 : i32
    %552 = tpu.memref_slice %arg1[%290, %c0_i32_425] : memref<64x32xf32, #tpu.memory_space<any>> -> memref<1x32xf32, #tpu.memory_space<any>>
    %c58_i32_426 = arith.constant 58 : i32
    %c0_i32_427 = arith.constant 0 : i32
    %553 = tpu.memref_slice %arg8[%c58_i32_426, %c0_i32_427] : memref<64x32xf32, #tpu.memory_space<vmem>> -> memref<1x32xf32, #tpu.memory_space<vmem>>
    %554 = tpu.memref_slice %arg9[%c2_i32_424] : memref<8x!tpu.dma_semaphore, #tpu.memory_space<semaphore_mem>> -> memref<1x!tpu.dma_semaphore, #tpu.memory_space<semaphore_mem>>
    %555 = tpu.memref_squeeze %554 : memref<1x!tpu.dma_semaphore, #tpu.memory_space<semaphore_mem>> -> memref<!tpu.dma_semaphore, #tpu.memory_space<semaphore_mem>>
    tpu.wait_dma2 semaphore(%555 : memref<!tpu.dma_semaphore, #tpu.memory_space<semaphore_mem>>) src(%552 : memref<1x32xf32, #tpu.memory_space<any>>) dst(%553 : memref<1x32xf32, #tpu.memory_space<vmem>>)
    %c3_i32_428 = arith.constant 3 : i32
    %c0_i32_429 = arith.constant 0 : i32
    %556 = tpu.memref_slice %arg1[%295, %c0_i32_429] : memref<64x32xf32, #tpu.memory_space<any>> -> memref<1x32xf32, #tpu.memory_space<any>>
    %c59_i32_430 = arith.constant 59 : i32
    %c0_i32_431 = arith.constant 0 : i32
    %557 = tpu.memref_slice %arg8[%c59_i32_430, %c0_i32_431] : memref<64x32xf32, #tpu.memory_space<vmem>> -> memref<1x32xf32, #tpu.memory_space<vmem>>
    %558 = tpu.memref_slice %arg9[%c3_i32_428] : memref<8x!tpu.dma_semaphore, #tpu.memory_space<semaphore_mem>> -> memref<1x!tpu.dma_semaphore, #tpu.memory_space<semaphore_mem>>
    %559 = tpu.memref_squeeze %558 : memref<1x!tpu.dma_semaphore, #tpu.memory_space<semaphore_mem>> -> memref<!tpu.dma_semaphore, #tpu.memory_space<semaphore_mem>>
    tpu.wait_dma2 semaphore(%559 : memref<!tpu.dma_semaphore, #tpu.memory_space<semaphore_mem>>) src(%556 : memref<1x32xf32, #tpu.memory_space<any>>) dst(%557 : memref<1x32xf32, #tpu.memory_space<vmem>>)
    %c4_i32_432 = arith.constant 4 : i32
    %c0_i32_433 = arith.constant 0 : i32
    %560 = tpu.memref_slice %arg1[%300, %c0_i32_433] : memref<64x32xf32, #tpu.memory_space<any>> -> memref<1x32xf32, #tpu.memory_space<any>>
    %c60_i32_434 = arith.constant 60 : i32
    %c0_i32_435 = arith.constant 0 : i32
    %561 = tpu.memref_slice %arg8[%c60_i32_434, %c0_i32_435] : memref<64x32xf32, #tpu.memory_space<vmem>> -> memref<1x32xf32, #tpu.memory_space<vmem>>
    %562 = tpu.memref_slice %arg9[%c4_i32_432] : memref<8x!tpu.dma_semaphore, #tpu.memory_space<semaphore_mem>> -> memref<1x!tpu.dma_semaphore, #tpu.memory_space<semaphore_mem>>
    %563 = tpu.memref_squeeze %562 : memref<1x!tpu.dma_semaphore, #tpu.memory_space<semaphore_mem>> -> memref<!tpu.dma_semaphore, #tpu.memory_space<semaphore_mem>>
    tpu.wait_dma2 semaphore(%563 : memref<!tpu.dma_semaphore, #tpu.memory_space<semaphore_mem>>) src(%560 : memref<1x32xf32, #tpu.memory_space<any>>) dst(%561 : memref<1x32xf32, #tpu.memory_space<vmem>>)
    %c5_i32_436 = arith.constant 5 : i32
    %c0_i32_437 = arith.constant 0 : i32
    %564 = tpu.memref_slice %arg1[%305, %c0_i32_437] : memref<64x32xf32, #tpu.memory_space<any>> -> memref<1x32xf32, #tpu.memory_space<any>>
    %c61_i32_438 = arith.constant 61 : i32
    %c0_i32_439 = arith.constant 0 : i32
    %565 = tpu.memref_slice %arg8[%c61_i32_438, %c0_i32_439] : memref<64x32xf32, #tpu.memory_space<vmem>> -> memref<1x32xf32, #tpu.memory_space<vmem>>
    %566 = tpu.memref_slice %arg9[%c5_i32_436] : memref<8x!tpu.dma_semaphore, #tpu.memory_space<semaphore_mem>> -> memref<1x!tpu.dma_semaphore, #tpu.memory_space<semaphore_mem>>
    %567 = tpu.memref_squeeze %566 : memref<1x!tpu.dma_semaphore, #tpu.memory_space<semaphore_mem>> -> memref<!tpu.dma_semaphore, #tpu.memory_space<semaphore_mem>>
    tpu.wait_dma2 semaphore(%567 : memref<!tpu.dma_semaphore, #tpu.memory_space<semaphore_mem>>) src(%564 : memref<1x32xf32, #tpu.memory_space<any>>) dst(%565 : memref<1x32xf32, #tpu.memory_space<vmem>>)
    %c6_i32_440 = arith.constant 6 : i32
    %c0_i32_441 = arith.constant 0 : i32
    %568 = tpu.memref_slice %arg1[%310, %c0_i32_441] : memref<64x32xf32, #tpu.memory_space<any>> -> memref<1x32xf32, #tpu.memory_space<any>>
    %c62_i32_442 = arith.constant 62 : i32
    %c0_i32_443 = arith.constant 0 : i32
    %569 = tpu.memref_slice %arg8[%c62_i32_442, %c0_i32_443] : memref<64x32xf32, #tpu.memory_space<vmem>> -> memref<1x32xf32, #tpu.memory_space<vmem>>
    %570 = tpu.memref_slice %arg9[%c6_i32_440] : memref<8x!tpu.dma_semaphore, #tpu.memory_space<semaphore_mem>> -> memref<1x!tpu.dma_semaphore, #tpu.memory_space<semaphore_mem>>
    %571 = tpu.memref_squeeze %570 : memref<1x!tpu.dma_semaphore, #tpu.memory_space<semaphore_mem>> -> memref<!tpu.dma_semaphore, #tpu.memory_space<semaphore_mem>>
    tpu.wait_dma2 semaphore(%571 : memref<!tpu.dma_semaphore, #tpu.memory_space<semaphore_mem>>) src(%568 : memref<1x32xf32, #tpu.memory_space<any>>) dst(%569 : memref<1x32xf32, #tpu.memory_space<vmem>>)
    %c7_i32_444 = arith.constant 7 : i32
    %c0_i32_445 = arith.constant 0 : i32
    %572 = tpu.memref_slice %arg1[%315, %c0_i32_445] : memref<64x32xf32, #tpu.memory_space<any>> -> memref<1x32xf32, #tpu.memory_space<any>>
    %c63_i32_446 = arith.constant 63 : i32
    %c0_i32_447 = arith.constant 0 : i32
    %573 = tpu.memref_slice %arg8[%c63_i32_446, %c0_i32_447] : memref<64x32xf32, #tpu.memory_space<vmem>> -> memref<1x32xf32, #tpu.memory_space<vmem>>
    %574 = tpu.memref_slice %arg9[%c7_i32_444] : memref<8x!tpu.dma_semaphore, #tpu.memory_space<semaphore_mem>> -> memref<1x!tpu.dma_semaphore, #tpu.memory_space<semaphore_mem>>
    %575 = tpu.memref_squeeze %574 : memref<1x!tpu.dma_semaphore, #tpu.memory_space<semaphore_mem>> -> memref<!tpu.dma_semaphore, #tpu.memory_space<semaphore_mem>>
    tpu.wait_dma2 semaphore(%575 : memref<!tpu.dma_semaphore, #tpu.memory_space<semaphore_mem>>) src(%572 : memref<1x32xf32, #tpu.memory_space<any>>) dst(%573 : memref<1x32xf32, #tpu.memory_space<vmem>>)
    %c0_448 = arith.constant 0 : index
    %c0_449 = arith.constant 0 : index
    %576 = vector.load %arg8[%c0_448, %c0_449] : memref<64x32xf32, #tpu.memory_space<vmem>>, vector<64x32xf32>
    %577 = arith.truncf %576 : vector<64x32xf32> to vector<64x32xbf16>
    %c0_450 = arith.constant 0 : index
    %c0_451 = arith.constant 0 : index
    %578 = vector.load %arg2[%c0_450, %c0_451] : memref<32x128xbf16, #tpu.memory_space<vmem>>, vector<32x128xbf16>
    %cst = arith.constant dense<0.000000e+00> : vector<64x128xf32>
    %579 = tpu.matmul %577, %578, %cst {dimension_numbers = #tpu.dot_dimension_numbers<[1], [0], [0], [1], [0, 0, 1, 1], [], []>} : vector<64x32xbf16>, vector<32x128xbf16>, vector<64x128xf32> -> vector<64x128xf32>
    %c0_452 = arith.constant 0 : index
    %c0_453 = arith.constant 0 : index
    %580 = vector.load %arg4[%c0_452, %c0_453] : memref<1x128xf32, #tpu.memory_space<vmem>>, vector<1x128xf32>
    %581 = vector.broadcast %580 : vector<1x128xf32> to vector<64x128xf32>
    %582 = arith.addf %579, %581 : vector<64x128xf32>
    %c0_454 = arith.constant 0 : index
    %c0_455 = arith.constant 0 : index
    %583 = vector.load %arg3[%c0_454, %c0_455] : memref<32x128xbf16, #tpu.memory_space<vmem>>, vector<32x128xbf16>
    %cst_456 = arith.constant 0.000000e+00 : f32
    %584 = vector.broadcast %cst_456 : f32 to vector<8x32xf32>
    %cst_457 = arith.constant 0.000000e+00 : f32
    %585 = vector.broadcast %cst_457 : f32 to vector<8x32xf32>
    %cst_458 = arith.constant 0.000000e+00 : f32
    %586 = vector.broadcast %cst_458 : f32 to vector<8x32xf32>
    %587 = vector.extract_strided_slice %582 {offsets = [0, 0], sizes = [8, 128], strides = [1, 1]} : vector<64x128xf32> to vector<8x128xf32>
    %588 = arith.truncf %584 : vector<8x32xf32> to vector<8x32xbf16>
    %cst_459 = arith.constant dense<0.000000e+00> : vector<8x128xf32>
    %589 = tpu.matmul %588, %583, %cst_459 {dimension_numbers = #tpu.dot_dimension_numbers<[1], [0], [0], [1], [0, 0, 1, 1], [], []>} : vector<8x32xbf16>, vector<32x128xbf16>, vector<8x128xf32> -> vector<8x128xf32>
    %590 = arith.addf %587, %589 : vector<8x128xf32>
    %591 = vector.extract_strided_slice %590 {offsets = [0, 0], sizes = [8, 96], strides = [1, 1]} : vector<8x128xf32> to vector<8x96xf32>
    %592 = arith.negf %591 : vector<8x96xf32>
    %593 = math.exp %592 : vector<8x96xf32>
    %cst_460 = arith.constant 1.000000e+00 : f32
    %594 = vector.broadcast %cst_460 : f32 to vector<8x96xf32>
    %595 = arith.addf %594, %593 : vector<8x96xf32>
    %596 = arith.divf %594, %595 : vector<8x96xf32>
    %597 = vector.extract_strided_slice %590 {offsets = [0, 96], sizes = [8, 32], strides = [1, 1]} : vector<8x128xf32> to vector<8x32xf32>
    %598 = math.tanh %597 : vector<8x32xf32>
    %599 = vector.extract_strided_slice %596 {offsets = [0, 0], sizes = [8, 32], strides = [1, 1]} : vector<8x96xf32> to vector<8x32xf32>
    %600 = vector.extract_strided_slice %596 {offsets = [0, 32], sizes = [8, 32], strides = [1, 1]} : vector<8x96xf32> to vector<8x32xf32>
    %601 = vector.extract_strided_slice %596 {offsets = [0, 64], sizes = [8, 32], strides = [1, 1]} : vector<8x96xf32> to vector<8x32xf32>
    %602 = arith.mulf %600, %585 : vector<8x32xf32>
    %603 = arith.mulf %599, %598 : vector<8x32xf32>
    %604 = arith.addf %602, %603 : vector<8x32xf32>
    %605 = math.tanh %604 : vector<8x32xf32>
    %606 = arith.mulf %601, %605 : vector<8x32xf32>
    %607 = arith.addf %586, %606 : vector<8x32xf32>
    %608 = vector.extract_strided_slice %582 {offsets = [8, 0], sizes = [8, 128], strides = [1, 1]} : vector<64x128xf32> to vector<8x128xf32>
    %609 = arith.truncf %606 : vector<8x32xf32> to vector<8x32xbf16>
    %cst_461 = arith.constant dense<0.000000e+00> : vector<8x128xf32>
    %610 = tpu.matmul %609, %583, %cst_461 {dimension_numbers = #tpu.dot_dimension_numbers<[1], [0], [0], [1], [0, 0, 1, 1], [], []>} : vector<8x32xbf16>, vector<32x128xbf16>, vector<8x128xf32> -> vector<8x128xf32>
    %611 = arith.addf %608, %610 : vector<8x128xf32>
    %612 = vector.extract_strided_slice %611 {offsets = [0, 0], sizes = [8, 96], strides = [1, 1]} : vector<8x128xf32> to vector<8x96xf32>
    %613 = arith.negf %612 : vector<8x96xf32>
    %614 = math.exp %613 : vector<8x96xf32>
    %cst_462 = arith.constant 1.000000e+00 : f32
    %615 = vector.broadcast %cst_462 : f32 to vector<8x96xf32>
    %616 = arith.addf %615, %614 : vector<8x96xf32>
    %617 = arith.divf %615, %616 : vector<8x96xf32>
    %618 = vector.extract_strided_slice %611 {offsets = [0, 96], sizes = [8, 32], strides = [1, 1]} : vector<8x128xf32> to vector<8x32xf32>
    %619 = math.tanh %618 : vector<8x32xf32>
    %620 = vector.extract_strided_slice %617 {offsets = [0, 0], sizes = [8, 32], strides = [1, 1]} : vector<8x96xf32> to vector<8x32xf32>
    %621 = vector.extract_strided_slice %617 {offsets = [0, 32], sizes = [8, 32], strides = [1, 1]} : vector<8x96xf32> to vector<8x32xf32>
    %622 = vector.extract_strided_slice %617 {offsets = [0, 64], sizes = [8, 32], strides = [1, 1]} : vector<8x96xf32> to vector<8x32xf32>
    %623 = arith.mulf %621, %604 : vector<8x32xf32>
    %624 = arith.mulf %620, %619 : vector<8x32xf32>
    %625 = arith.addf %623, %624 : vector<8x32xf32>
    %626 = math.tanh %625 : vector<8x32xf32>
    %627 = arith.mulf %622, %626 : vector<8x32xf32>
    %628 = arith.addf %607, %627 : vector<8x32xf32>
    %629 = vector.extract_strided_slice %582 {offsets = [16, 0], sizes = [8, 128], strides = [1, 1]} : vector<64x128xf32> to vector<8x128xf32>
    %630 = arith.truncf %627 : vector<8x32xf32> to vector<8x32xbf16>
    %cst_463 = arith.constant dense<0.000000e+00> : vector<8x128xf32>
    %631 = tpu.matmul %630, %583, %cst_463 {dimension_numbers = #tpu.dot_dimension_numbers<[1], [0], [0], [1], [0, 0, 1, 1], [], []>} : vector<8x32xbf16>, vector<32x128xbf16>, vector<8x128xf32> -> vector<8x128xf32>
    %632 = arith.addf %629, %631 : vector<8x128xf32>
    %633 = vector.extract_strided_slice %632 {offsets = [0, 0], sizes = [8, 96], strides = [1, 1]} : vector<8x128xf32> to vector<8x96xf32>
    %634 = arith.negf %633 : vector<8x96xf32>
    %635 = math.exp %634 : vector<8x96xf32>
    %cst_464 = arith.constant 1.000000e+00 : f32
    %636 = vector.broadcast %cst_464 : f32 to vector<8x96xf32>
    %637 = arith.addf %636, %635 : vector<8x96xf32>
    %638 = arith.divf %636, %637 : vector<8x96xf32>
    %639 = vector.extract_strided_slice %632 {offsets = [0, 96], sizes = [8, 32], strides = [1, 1]} : vector<8x128xf32> to vector<8x32xf32>
    %640 = math.tanh %639 : vector<8x32xf32>
    %641 = vector.extract_strided_slice %638 {offsets = [0, 0], sizes = [8, 32], strides = [1, 1]} : vector<8x96xf32> to vector<8x32xf32>
    %642 = vector.extract_strided_slice %638 {offsets = [0, 32], sizes = [8, 32], strides = [1, 1]} : vector<8x96xf32> to vector<8x32xf32>
    %643 = vector.extract_strided_slice %638 {offsets = [0, 64], sizes = [8, 32], strides = [1, 1]} : vector<8x96xf32> to vector<8x32xf32>
    %644 = arith.mulf %642, %625 : vector<8x32xf32>
    %645 = arith.mulf %641, %640 : vector<8x32xf32>
    %646 = arith.addf %644, %645 : vector<8x32xf32>
    %647 = math.tanh %646 : vector<8x32xf32>
    %648 = arith.mulf %643, %647 : vector<8x32xf32>
    %649 = arith.addf %628, %648 : vector<8x32xf32>
    %650 = vector.extract_strided_slice %582 {offsets = [24, 0], sizes = [8, 128], strides = [1, 1]} : vector<64x128xf32> to vector<8x128xf32>
    %651 = arith.truncf %648 : vector<8x32xf32> to vector<8x32xbf16>
    %cst_465 = arith.constant dense<0.000000e+00> : vector<8x128xf32>
    %652 = tpu.matmul %651, %583, %cst_465 {dimension_numbers = #tpu.dot_dimension_numbers<[1], [0], [0], [1], [0, 0, 1, 1], [], []>} : vector<8x32xbf16>, vector<32x128xbf16>, vector<8x128xf32> -> vector<8x128xf32>
    %653 = arith.addf %650, %652 : vector<8x128xf32>
    %654 = vector.extract_strided_slice %653 {offsets = [0, 0], sizes = [8, 96], strides = [1, 1]} : vector<8x128xf32> to vector<8x96xf32>
    %655 = arith.negf %654 : vector<8x96xf32>
    %656 = math.exp %655 : vector<8x96xf32>
    %cst_466 = arith.constant 1.000000e+00 : f32
    %657 = vector.broadcast %cst_466 : f32 to vector<8x96xf32>
    %658 = arith.addf %657, %656 : vector<8x96xf32>
    %659 = arith.divf %657, %658 : vector<8x96xf32>
    %660 = vector.extract_strided_slice %653 {offsets = [0, 96], sizes = [8, 32], strides = [1, 1]} : vector<8x128xf32> to vector<8x32xf32>
    %661 = math.tanh %660 : vector<8x32xf32>
    %662 = vector.extract_strided_slice %659 {offsets = [0, 0], sizes = [8, 32], strides = [1, 1]} : vector<8x96xf32> to vector<8x32xf32>
    %663 = vector.extract_strided_slice %659 {offsets = [0, 32], sizes = [8, 32], strides = [1, 1]} : vector<8x96xf32> to vector<8x32xf32>
    %664 = vector.extract_strided_slice %659 {offsets = [0, 64], sizes = [8, 32], strides = [1, 1]} : vector<8x96xf32> to vector<8x32xf32>
    %665 = arith.mulf %663, %646 : vector<8x32xf32>
    %666 = arith.mulf %662, %661 : vector<8x32xf32>
    %667 = arith.addf %665, %666 : vector<8x32xf32>
    %668 = math.tanh %667 : vector<8x32xf32>
    %669 = arith.mulf %664, %668 : vector<8x32xf32>
    %670 = arith.addf %649, %669 : vector<8x32xf32>
    %671 = vector.extract_strided_slice %582 {offsets = [32, 0], sizes = [8, 128], strides = [1, 1]} : vector<64x128xf32> to vector<8x128xf32>
    %672 = arith.truncf %669 : vector<8x32xf32> to vector<8x32xbf16>
    %cst_467 = arith.constant dense<0.000000e+00> : vector<8x128xf32>
    %673 = tpu.matmul %672, %583, %cst_467 {dimension_numbers = #tpu.dot_dimension_numbers<[1], [0], [0], [1], [0, 0, 1, 1], [], []>} : vector<8x32xbf16>, vector<32x128xbf16>, vector<8x128xf32> -> vector<8x128xf32>
    %674 = arith.addf %671, %673 : vector<8x128xf32>
    %675 = vector.extract_strided_slice %674 {offsets = [0, 0], sizes = [8, 96], strides = [1, 1]} : vector<8x128xf32> to vector<8x96xf32>
    %676 = arith.negf %675 : vector<8x96xf32>
    %677 = math.exp %676 : vector<8x96xf32>
    %cst_468 = arith.constant 1.000000e+00 : f32
    %678 = vector.broadcast %cst_468 : f32 to vector<8x96xf32>
    %679 = arith.addf %678, %677 : vector<8x96xf32>
    %680 = arith.divf %678, %679 : vector<8x96xf32>
    %681 = vector.extract_strided_slice %674 {offsets = [0, 96], sizes = [8, 32], strides = [1, 1]} : vector<8x128xf32> to vector<8x32xf32>
    %682 = math.tanh %681 : vector<8x32xf32>
    %683 = vector.extract_strided_slice %680 {offsets = [0, 0], sizes = [8, 32], strides = [1, 1]} : vector<8x96xf32> to vector<8x32xf32>
    %684 = vector.extract_strided_slice %680 {offsets = [0, 32], sizes = [8, 32], strides = [1, 1]} : vector<8x96xf32> to vector<8x32xf32>
    %685 = vector.extract_strided_slice %680 {offsets = [0, 64], sizes = [8, 32], strides = [1, 1]} : vector<8x96xf32> to vector<8x32xf32>
    %686 = arith.mulf %684, %667 : vector<8x32xf32>
    %687 = arith.mulf %683, %682 : vector<8x32xf32>
    %688 = arith.addf %686, %687 : vector<8x32xf32>
    %689 = math.tanh %688 : vector<8x32xf32>
    %690 = arith.mulf %685, %689 : vector<8x32xf32>
    %691 = arith.addf %670, %690 : vector<8x32xf32>
    %692 = vector.extract_strided_slice %582 {offsets = [40, 0], sizes = [8, 128], strides = [1, 1]} : vector<64x128xf32> to vector<8x128xf32>
    %693 = arith.truncf %690 : vector<8x32xf32> to vector<8x32xbf16>
    %cst_469 = arith.constant dense<0.000000e+00> : vector<8x128xf32>
    %694 = tpu.matmul %693, %583, %cst_469 {dimension_numbers = #tpu.dot_dimension_numbers<[1], [0], [0], [1], [0, 0, 1, 1], [], []>} : vector<8x32xbf16>, vector<32x128xbf16>, vector<8x128xf32> -> vector<8x128xf32>
    %695 = arith.addf %692, %694 : vector<8x128xf32>
    %696 = vector.extract_strided_slice %695 {offsets = [0, 0], sizes = [8, 96], strides = [1, 1]} : vector<8x128xf32> to vector<8x96xf32>
    %697 = arith.negf %696 : vector<8x96xf32>
    %698 = math.exp %697 : vector<8x96xf32>
    %cst_470 = arith.constant 1.000000e+00 : f32
    %699 = vector.broadcast %cst_470 : f32 to vector<8x96xf32>
    %700 = arith.addf %699, %698 : vector<8x96xf32>
    %701 = arith.divf %699, %700 : vector<8x96xf32>
    %702 = vector.extract_strided_slice %695 {offsets = [0, 96], sizes = [8, 32], strides = [1, 1]} : vector<8x128xf32> to vector<8x32xf32>
    %703 = math.tanh %702 : vector<8x32xf32>
    %704 = vector.extract_strided_slice %701 {offsets = [0, 0], sizes = [8, 32], strides = [1, 1]} : vector<8x96xf32> to vector<8x32xf32>
    %705 = vector.extract_strided_slice %701 {offsets = [0, 32], sizes = [8, 32], strides = [1, 1]} : vector<8x96xf32> to vector<8x32xf32>
    %706 = vector.extract_strided_slice %701 {offsets = [0, 64], sizes = [8, 32], strides = [1, 1]} : vector<8x96xf32> to vector<8x32xf32>
    %707 = arith.mulf %705, %688 : vector<8x32xf32>
    %708 = arith.mulf %704, %703 : vector<8x32xf32>
    %709 = arith.addf %707, %708 : vector<8x32xf32>
    %710 = math.tanh %709 : vector<8x32xf32>
    %711 = arith.mulf %706, %710 : vector<8x32xf32>
    %712 = arith.addf %691, %711 : vector<8x32xf32>
    %713 = vector.extract_strided_slice %582 {offsets = [48, 0], sizes = [8, 128], strides = [1, 1]} : vector<64x128xf32> to vector<8x128xf32>
    %714 = arith.truncf %711 : vector<8x32xf32> to vector<8x32xbf16>
    %cst_471 = arith.constant dense<0.000000e+00> : vector<8x128xf32>
    %715 = tpu.matmul %714, %583, %cst_471 {dimension_numbers = #tpu.dot_dimension_numbers<[1], [0], [0], [1], [0, 0, 1, 1], [], []>} : vector<8x32xbf16>, vector<32x128xbf16>, vector<8x128xf32> -> vector<8x128xf32>
    %716 = arith.addf %713, %715 : vector<8x128xf32>
    %717 = vector.extract_strided_slice %716 {offsets = [0, 0], sizes = [8, 96], strides = [1, 1]} : vector<8x128xf32> to vector<8x96xf32>
    %718 = arith.negf %717 : vector<8x96xf32>
    %719 = math.exp %718 : vector<8x96xf32>
    %cst_472 = arith.constant 1.000000e+00 : f32
    %720 = vector.broadcast %cst_472 : f32 to vector<8x96xf32>
    %721 = arith.addf %720, %719 : vector<8x96xf32>
    %722 = arith.divf %720, %721 : vector<8x96xf32>
    %723 = vector.extract_strided_slice %716 {offsets = [0, 96], sizes = [8, 32], strides = [1, 1]} : vector<8x128xf32> to vector<8x32xf32>
    %724 = math.tanh %723 : vector<8x32xf32>
    %725 = vector.extract_strided_slice %722 {offsets = [0, 0], sizes = [8, 32], strides = [1, 1]} : vector<8x96xf32> to vector<8x32xf32>
    %726 = vector.extract_strided_slice %722 {offsets = [0, 32], sizes = [8, 32], strides = [1, 1]} : vector<8x96xf32> to vector<8x32xf32>
    %727 = vector.extract_strided_slice %722 {offsets = [0, 64], sizes = [8, 32], strides = [1, 1]} : vector<8x96xf32> to vector<8x32xf32>
    %728 = arith.mulf %726, %709 : vector<8x32xf32>
    %729 = arith.mulf %725, %724 : vector<8x32xf32>
    %730 = arith.addf %728, %729 : vector<8x32xf32>
    %731 = math.tanh %730 : vector<8x32xf32>
    %732 = arith.mulf %727, %731 : vector<8x32xf32>
    %733 = arith.addf %712, %732 : vector<8x32xf32>
    %734 = vector.extract_strided_slice %582 {offsets = [56, 0], sizes = [8, 128], strides = [1, 1]} : vector<64x128xf32> to vector<8x128xf32>
    %735 = arith.truncf %732 : vector<8x32xf32> to vector<8x32xbf16>
    %cst_473 = arith.constant dense<0.000000e+00> : vector<8x128xf32>
    %736 = tpu.matmul %735, %583, %cst_473 {dimension_numbers = #tpu.dot_dimension_numbers<[1], [0], [0], [1], [0, 0, 1, 1], [], []>} : vector<8x32xbf16>, vector<32x128xbf16>, vector<8x128xf32> -> vector<8x128xf32>
    %737 = arith.addf %734, %736 : vector<8x128xf32>
    %738 = vector.extract_strided_slice %737 {offsets = [0, 0], sizes = [8, 96], strides = [1, 1]} : vector<8x128xf32> to vector<8x96xf32>
    %739 = arith.negf %738 : vector<8x96xf32>
    %740 = math.exp %739 : vector<8x96xf32>
    %cst_474 = arith.constant 1.000000e+00 : f32
    %741 = vector.broadcast %cst_474 : f32 to vector<8x96xf32>
    %742 = arith.addf %741, %740 : vector<8x96xf32>
    %743 = arith.divf %741, %742 : vector<8x96xf32>
    %744 = vector.extract_strided_slice %737 {offsets = [0, 96], sizes = [8, 32], strides = [1, 1]} : vector<8x128xf32> to vector<8x32xf32>
    %745 = math.tanh %744 : vector<8x32xf32>
    %746 = vector.extract_strided_slice %743 {offsets = [0, 0], sizes = [8, 32], strides = [1, 1]} : vector<8x96xf32> to vector<8x32xf32>
    %747 = vector.extract_strided_slice %743 {offsets = [0, 32], sizes = [8, 32], strides = [1, 1]} : vector<8x96xf32> to vector<8x32xf32>
    %748 = vector.extract_strided_slice %743 {offsets = [0, 64], sizes = [8, 32], strides = [1, 1]} : vector<8x96xf32> to vector<8x32xf32>
    %749 = arith.mulf %747, %730 : vector<8x32xf32>
    %750 = arith.mulf %746, %745 : vector<8x32xf32>
    %751 = arith.addf %749, %750 : vector<8x32xf32>
    %752 = math.tanh %751 : vector<8x32xf32>
    %753 = arith.mulf %748, %752 : vector<8x32xf32>
    %754 = arith.addf %733, %753 : vector<8x32xf32>
    %cst_475 = arith.constant 1.250000e-01 : f32
    %755 = vector.broadcast %cst_475 : f32 to vector<8x32xf32>
    %756 = arith.mulf %754, %755 : vector<8x32xf32>
    %c0_476 = arith.constant 0 : index
    %c0_477 = arith.constant 0 : index
    %757 = vector.load %arg5[%c0_476, %c0_477] : memref<1x32xf32, #tpu.memory_space<vmem>>, vector<1x32xf32>
    %758 = vector.broadcast %757 : vector<1x32xf32> to vector<8x32xf32>
    %759 = arith.mulf %756, %758 : vector<8x32xf32>
    %cst_478 = arith.constant dense<0.000000e+00> : vector<8xf32>
    %760 = vector.multi_reduction <add>, %759, %cst_478 [1] : vector<8x32xf32> to vector<8xf32>
    %761 = vector.shape_cast %760 : vector<8xf32> to vector<8x1xf32>
    %c0_479 = arith.constant 0 : index
    %c0_480 = arith.constant 0 : index
    %762 = vector.load %arg6[%c0_479, %c0_480] : memref<1x1xf32, #tpu.memory_space<vmem>>, vector<1x1xf32>
    %763 = vector.broadcast %762 : vector<1x1xf32> to vector<8x1xf32>
    %764 = arith.addf %761, %763 : vector<8x1xf32>
    %765 = arith.negf %764 : vector<8x1xf32>
    %766 = math.exp %765 : vector<8x1xf32>
    %cst_481 = arith.constant 1.000000e+00 : f32
    %767 = vector.broadcast %cst_481 : f32 to vector<8x1xf32>
    %768 = arith.addf %767, %766 : vector<8x1xf32>
    %769 = arith.divf %767, %768 : vector<8x1xf32>
    %c0_482 = arith.constant 0 : index
    %c0_483 = arith.constant 0 : index
    %770 = vector.load %arg7[%c0_482, %c0_483] : memref<8x1xf32, #tpu.memory_space<vmem>>, vector<8x1xf32>
    tpu.vector_store %arg7[%c0_482, %c0_483], %769 {strides = array<i32>} : memref<8x1xf32, #tpu.memory_space<vmem>>, vector<8x1xf32>,
    return
  }
}

</mosaic_0001>

<llo_original>
// kernel: tpu_custom_call.1
$region0: #{tpu_custom_call.1}
  #allocation0 [shape = 'u32[]', space=smem, size = 0x4, offset = 0x4, fixed_abs, tag = 'smem constant byte address 0x4 - core index']
  #allocation1 [shape = 'u32[144,128]{1,0:T(1,128)}', space=vmem, size = 0x12000, scoped, tag = 'internal scratch']
  #allocation2 [shape = 'f32[64,32]{1,0:T(8,128)}', space=vmem, size = 0x8000, scoped, tag = 'scratch operand']
  #allocation3 [shape = 's32[8]{0}', space=sflag, size = 0x20, scoped, tag = 'scratch operand']
  #allocation4 [shape = 'f32[1,1]{1,0:T(1,128)S(1)}', space=vmem, size = 0x200, scoped, tag = 'scoped memory for tpu_custom_call.1']
  #allocation7 [shape = 's32[]', space=sflag, size = 0x4, offset = 0, fixed_abs, tag = 'sflag constant byte address 0x0 - dummy sync flag']
  #allocation8 [shape = 's32[]', space=sflag, size = 0x4, offset = 0, fixed_abs, tag = 'sflag constant byte address 0x0 - dummy sync flag']
  #allocation9 [shape = 's32[]', space=sflag, size = 0x4, offset = 0, fixed_abs, tag = 'sflag constant byte address 0x0 - dummy sync flag']
  #allocation10 [shape = 's32[]', space=sflag, size = 0x4, offset = 0, fixed_abs, tag = 'sflag constant byte address 0x0 - dummy sync flag']
  #allocation11 [shape = 's32[]', space=sflag, size = 0x4, offset = 0, fixed_abs, tag = 'sflag constant byte address 0x0 - dummy sync flag']
  #allocation12 [shape = 's32[]', space=sflag, size = 0x4, offset = 0, fixed_abs, tag = 'sflag constant byte address 0x0 - dummy sync flag']
  #allocation13 [shape = 's32[]', space=sflag, size = 0x4, offset = 0, fixed_abs, tag = 'sflag constant byte address 0x0 - dummy sync flag']
  #allocation14 [shape = 's32[]', space=sflag, size = 0x4, offset = 0, fixed_abs, tag = 'sflag constant byte address 0x0 - dummy sync flag']
  #allocation15 [shape = 's32[]', space=sflag, size = 0x4, offset = 0, fixed_abs, tag = 'sflag constant byte address 0x0 - dummy sync flag']
  #allocation16 [shape = 's32[]', space=sflag, size = 0x4, offset = 0, fixed_abs, tag = 'sflag constant byte address 0x0 - dummy sync flag']
  #allocation17 [shape = 's32[]', space=sflag, size = 0x4, offset = 0, fixed_abs, tag = 'sflag constant byte address 0x0 - dummy sync flag']
  #allocation18 [shape = 's32[]', space=sflag, size = 0x4, offset = 0, fixed_abs, tag = 'sflag constant byte address 0x0 - dummy sync flag']
  #allocation19 [shape = 's32[]', space=sflag, size = 0x4, offset = 0, fixed_abs, tag = 'sflag constant byte address 0x0 - dummy sync flag']
  #allocation20 [shape = 's32[]', space=sflag, size = 0x4, offset = 0, fixed_abs, tag = 'sflag constant byte address 0x0 - dummy sync flag']
  #allocation21 [shape = 's32[]', space=sflag, size = 0x4, offset = 0, fixed_abs, tag = 'sflag constant byte address 0x0 - dummy sync flag']
  #allocation22 [shape = 's32[]', space=sflag, size = 0x4, offset = 0, fixed_abs, tag = 'sflag constant byte address 0x0 - dummy sync flag']
  #allocation23 [shape = 's32[]', space=sflag, size = 0x4, offset = 0, fixed_abs, tag = 'sflag constant byte address 0x0 - dummy sync flag']
  #allocation24 [shape = 's32[]', space=sflag, size = 0x4, offset = 0, fixed_abs, tag = 'sflag constant byte address 0x0 - dummy sync flag']
  #allocation25 [shape = 's32[]', space=sflag, size = 0x4, offset = 0, fixed_abs, tag = 'sflag constant byte address 0x0 - dummy sync flag']
  #allocation26 [shape = 's32[]', space=sflag, size = 0x4, offset = 0, fixed_abs, tag = 'sflag constant byte address 0x0 - dummy sync flag']
  #allocation27 [shape = 's32[]', space=sflag, size = 0x4, offset = 0, fixed_abs, tag = 'sflag constant byte address 0x0 - dummy sync flag']
  #allocation28 [shape = 's32[]', space=sflag, size = 0x4, offset = 0, fixed_abs, tag = 'sflag constant byte address 0x0 - dummy sync flag']
  #allocation29 [shape = 's32[]', space=sflag, size = 0x4, offset = 0, fixed_abs, tag = 'sflag constant byte address 0x0 - dummy sync flag']
  #allocation30 [shape = 's32[]', space=sflag, size = 0x4, offset = 0, fixed_abs, tag = 'sflag constant byte address 0x0 - dummy sync flag']
  #allocation31 [shape = 's32[]', space=sflag, size = 0x4, offset = 0, fixed_abs, tag = 'sflag constant byte address 0x0 - dummy sync flag']
  #allocation32 [shape = 's32[]', space=sflag, size = 0x4, offset = 0, fixed_abs, tag = 'sflag constant byte address 0x0 - dummy sync flag']
  #allocation33 [shape = 's32[]', space=sflag, size = 0x4, offset = 0, fixed_abs, tag = 'sflag constant byte address 0x0 - dummy sync flag']
  #allocation34 [shape = 's32[]', space=sflag, size = 0x4, offset = 0, fixed_abs, tag = 'sflag constant byte address 0x0 - dummy sync flag']
  #allocation35 [shape = 's32[]', space=sflag, size = 0x4, offset = 0, fixed_abs, tag = 'sflag constant byte address 0x0 - dummy sync flag']
  #allocation36 [shape = 's32[]', space=sflag, size = 0x4, offset = 0, fixed_abs, tag = 'sflag constant byte address 0x0 - dummy sync flag']
  #allocation37 [shape = 's32[]', space=sflag, size = 0x4, offset = 0, fixed_abs, tag = 'sflag constant byte address 0x0 - dummy sync flag']
  #allocation38 [shape = 's32[]', space=sflag, size = 0x4, offset = 0, fixed_abs, tag = 'sflag constant byte address 0x0 - dummy sync flag']
  #allocation39 [shape = 's32[]', space=sflag, size = 0x4, offset = 0, fixed_abs, tag = 'sflag constant byte address 0x0 - dummy sync flag']
  #allocation40 [shape = 's32[]', space=sflag, size = 0x4, offset = 0, fixed_abs, tag = 'sflag constant byte address 0x0 - dummy sync flag']
  #allocation41 [shape = 's32[]', space=sflag, size = 0x4, offset = 0, fixed_abs, tag = 'sflag constant byte address 0x0 - dummy sync flag']
  #allocation42 [shape = 's32[]', space=sflag, size = 0x4, offset = 0, fixed_abs, tag = 'sflag constant byte address 0x0 - dummy sync flag']
  #allocation43 [shape = 's32[]', space=sflag, size = 0x4, offset = 0, fixed_abs, tag = 'sflag constant byte address 0x0 - dummy sync flag']
  #allocation44 [shape = 's32[]', space=sflag, size = 0x4, offset = 0, fixed_abs, tag = 'sflag constant byte address 0x0 - dummy sync flag']
  #allocation45 [shape = 's32[]', space=sflag, size = 0x4, offset = 0, fixed_abs, tag = 'sflag constant byte address 0x0 - dummy sync flag']
  #allocation46 [shape = 's32[]', space=sflag, size = 0x4, offset = 0, fixed_abs, tag = 'sflag constant byte address 0x0 - dummy sync flag']
  #allocation47 [shape = 's32[]', space=sflag, size = 0x4, offset = 0, fixed_abs, tag = 'sflag constant byte address 0x0 - dummy sync flag']
  #allocation48 [shape = 's32[]', space=sflag, size = 0x4, offset = 0, fixed_abs, tag = 'sflag constant byte address 0x0 - dummy sync flag']
  #allocation49 [shape = 's32[]', space=sflag, size = 0x4, offset = 0, fixed_abs, tag = 'sflag constant byte address 0x0 - dummy sync flag']
  #allocation50 [shape = 's32[]', space=sflag, size = 0x4, offset = 0, fixed_abs, tag = 'sflag constant byte address 0x0 - dummy sync flag']
  #allocation51 [shape = 's32[]', space=sflag, size = 0x4, offset = 0, fixed_abs, tag = 'sflag constant byte address 0x0 - dummy sync flag']
  #allocation52 [shape = 's32[]', space=sflag, size = 0x4, offset = 0, fixed_abs, tag = 'sflag constant byte address 0x0 - dummy sync flag']
  #allocation53 [shape = 's32[]', space=sflag, size = 0x4, offset = 0, fixed_abs, tag = 'sflag constant byte address 0x0 - dummy sync flag']
  #allocation54 [shape = 's32[]', space=sflag, size = 0x4, offset = 0, fixed_abs, tag = 'sflag constant byte address 0x0 - dummy sync flag']
  #allocation55 [shape = 's32[]', space=sflag, size = 0x4, offset = 0, fixed_abs, tag = 'sflag constant byte address 0x0 - dummy sync flag']
  #allocation56 [shape = 's32[]', space=sflag, size = 0x4, offset = 0, fixed_abs, tag = 'sflag constant byte address 0x0 - dummy sync flag']
  #allocation57 [shape = 's32[]', space=sflag, size = 0x4, offset = 0, fixed_abs, tag = 'sflag constant byte address 0x0 - dummy sync flag']
  #allocation58 [shape = 's32[]', space=sflag, size = 0x4, offset = 0, fixed_abs, tag = 'sflag constant byte address 0x0 - dummy sync flag']
  #allocation59 [shape = 's32[]', space=sflag, size = 0x4, offset = 0, fixed_abs, tag = 'sflag constant byte address 0x0 - dummy sync flag']
  #allocation60 [shape = 's32[]', space=sflag, size = 0x4, offset = 0, fixed_abs, tag = 'sflag constant byte address 0x0 - dummy sync flag']
  #allocation61 [shape = 's32[]', space=sflag, size = 0x4, offset = 0, fixed_abs, tag = 'sflag constant byte address 0x0 - dummy sync flag']
  #allocation62 [shape = 's32[]', space=sflag, size = 0x4, offset = 0, fixed_abs, tag = 'sflag constant byte address 0x0 - dummy sync flag']
  #allocation63 [shape = 's32[]', space=sflag, size = 0x4, offset = 0, fixed_abs, tag = 'sflag constant byte address 0x0 - dummy sync flag']
  #allocation64 [shape = 's32[]', space=sflag, size = 0x4, offset = 0, fixed_abs, tag = 'sflag constant byte address 0x0 - dummy sync flag']
  #allocation65 [shape = 's32[]', space=sflag, size = 0x4, offset = 0, fixed_abs, tag = 'sflag constant byte address 0x0 - dummy sync flag']
  #allocation66 [shape = 's32[]', space=sflag, size = 0x4, offset = 0, fixed_abs, tag = 'sflag constant byte address 0x0 - dummy sync flag']
  #allocation67 [shape = 's32[]', space=sflag, size = 0x4, offset = 0, fixed_abs, tag = 'sflag constant byte address 0x0 - dummy sync flag']
  #allocation68 [shape = 's32[]', space=sflag, size = 0x4, offset = 0, fixed_abs, tag = 'sflag constant byte address 0x0 - dummy sync flag']
  #allocation69 [shape = 's32[]', space=sflag, size = 0x4, offset = 0, fixed_abs, tag = 'sflag constant byte address 0x0 - dummy sync flag']
  #allocation70 [shape = 's32[]', space=sflag, size = 0x4, offset = 0, fixed_abs, tag = 'sflag constant byte address 0x0 - dummy sync flag']
  %s0 = inlined_call_operand.vmem [shape: s32[64], index: 0, kind: input, shape index: {}]
  %s1 = inlined_call_operand.vmem [shape: f32[64,32], index: 1, kind: input, shape index: {}]
  %s2 = inlined_call_operand.vmem [shape: bf16[32,128], index: 2, kind: input, shape index: {}]
  %s3 = inlined_call_operand.vmem [shape: bf16[32,128], index: 3, kind: input, shape index: {}]
  %s4 = inlined_call_operand.vmem [shape: f32[1,128], index: 4, kind: input, shape index: {}]
  %s5 = inlined_call_operand.vmem [shape: f32[1,32], index: 5, kind: input, shape index: {}]
  %s6 = inlined_call_operand.<no memory space> [shape: f32[1,1], index: 6, kind: input, shape index: {}]
  %s7 = inlined_call_operand.vmem [shape: f32[8,1], index: 7, kind: output, shape index: {}]
  %s8 = sld [smem:[#allocation0]]
  $region1958: #{tpu_custom_call.1} parent=0
    _
  %s10 = ssub.s32 1, %s8
  %s11 = scalar_select 0, %s10, %s8
  %v12 = vstv %s6
  %13 = vst [vmem:[#allocation4] sm:$0x1] %v12
  $region1: #{tpu_custom_call.1} parent=0
    #allocation5 [shape = 'u8[512]{0}', space=smem, size = 0x200, scoped, tag = 'input window, operand 0, single buffered']
    #allocation6 [shape = 's32[1]{0}', space=sflag, size = 0x4, scoped, tag = 'scoped memory for tpu_custom_call.1']
    %14 = vsyncpa [#allocation6], 0
    // Predicated region
    $region2: #{tpu_custom_call.1} parent=1 // pred_check
      _
    $region3: #{tpu_custom_call.1} parent=1 // pred_check_branch
      %16 = sbr.rel (0) target = $region5
    $region4: #{tpu_custom_call.1} parent=1 // pred_region
      %s18 = ssub.s32 16, 16
      %19 = vsyncadd [#allocation6], %s18
      %s21 = sshll.u32 %s0, 4
      %s22 = int_to_ptr.vmem [resolvable:$true] %s21
      %24 = dma.vmem_to_smem %s22, 16, [#allocation5], [#allocation6]
    $region5: #{tpu_custom_call.1} parent=1 // pred_fallthru
      _
    // Predicated region
    $region6: #{tpu_custom_call.1} parent=1 // pred_check
      _
    $region7: #{tpu_custom_call.1} parent=1 // pred_check_branch
      %26 = sbr.rel (0) target = $region9
    $region8: #{tpu_custom_call.1} parent=1 // pred_region
      _
    $region9: #{tpu_custom_call.1} parent=1 // pred_fallthru
      _
    // Predicated region
    $region10: #{tpu_custom_call.1} parent=1 // pred_check
      _
    $region11: #{tpu_custom_call.1} parent=1 // pred_check_branch
      %28 = sbr.rel (0) target = $region13
    $region12: #{tpu_custom_call.1} parent=1 // pred_region
      _
    $region13: #{tpu_custom_call.1} parent=1 // pred_fallthru
      _
    // Predicated region
    $region14: #{tpu_custom_call.1} parent=1 // pred_check
      _
    $region15: #{tpu_custom_call.1} parent=1 // pred_check_branch
      %30 = sbr.rel (0) target = $region17
    $region16: #{tpu_custom_call.1} parent=1 // pred_region
      _
    $region17: #{tpu_custom_call.1} parent=1 // pred_fallthru
      _
    // Predicated region
    $region18: #{tpu_custom_call.1} parent=1 // pred_check
      _
    $region19: #{tpu_custom_call.1} parent=1 // pred_check_branch
      %32 = sbr.rel (0) target = $region21
    $region20: #{tpu_custom_call.1} parent=1 // pred_region
      _
    $region21: #{tpu_custom_call.1} parent=1 // pred_fallthru
      _
    // Predicated region
    $region22: #{tpu_custom_call.1} parent=1 // pred_check
      _
    $region23: #{tpu_custom_call.1} parent=1 // pred_check_branch
      %34 = sbr.rel (0) target = $region25
    $region24: #{tpu_custom_call.1} parent=1 // pred_region
      _
    $region25: #{tpu_custom_call.1} parent=1 // pred_fallthru
      _
    // Predicated region
    $region26: #{tpu_custom_call.1} parent=1 // pred_check
      _
    $region27: #{tpu_custom_call.1} parent=1 // pred_check_branch
      %36 = sbr.rel (0) target = $region29
    $region28: #{tpu_custom_call.1} parent=1 // pred_region
      %37 = dma.done [#allocation6], 16
    $region29: #{tpu_custom_call.1} parent=1 // pred_fallthru
      _
    %38 = sfence
    %s40 = sld [smem:[#allocation5]]
    %s41 = scalar_lea.vmem %s1, %s40
    %p43 = scmp.lt.u32.totalorder 1, 8
    %p44 = pneg %p43
    // Predicated region
    $region30: #{tpu_custom_call.1} parent=1 // pred_check
      _
    $region31: #{tpu_custom_call.1} parent=1 // pred_check_branch
      %46 = sbr.rel (%p43) target = $region33
    $region32: #{tpu_custom_call.1} parent=1 // pred_region
      %s61 = sand.u32 1, 7
      %p62 = scmp.eq.s32.totalorder %s61, 0
      %p63 = pneg %p62
      // Predicated region
      $region45: #{tpu_custom_call.1} parent=32 // pred_check
        _
      $region46: #{tpu_custom_call.1} parent=32 // pred_check_branch
        %65 = sbr.rel (%p62) target = $region48
      $region47: #{tpu_custom_call.1} parent=32 // pred_region
        %s66 = sand.u32 1, 7
        %s67 = ssub.s32 1, %s66
        %s68 = scalar_lea.vmem %s41, %s67
        %s69 = ssub.s32 1, %s66
        %s70 = scalar_lea.vmem [#allocation2], %s69
        %s71 = sshllo.u32 0, %s66
        loop: start=0, step=1, limit=1
        $region49: #{tpu_custom_call.1} parent=47 // loop_pre_header
          _
        $region50: #{tpu_custom_call.1} parent=47 // loop_header
          %s73 = sphi 0, %s77
          %p74 = scmp.ge.s32.totalorder %s73, 1
          %s78 = sphi %s68, %s68
          %s79 = sphi %s70, %s70
        $region51: #{tpu_custom_call.1} parent=47 // loop_header_branch
          %76 = sbr.rel (%p74) target = $region55
        $region52: #{tpu_custom_call.1} parent=47 // loop_body
          %v80 = vld [vmem:[%s78] sm:%s71]
          %81 = vst [vmem:[%s79] sm:%s71] %v80
        $region53: #{tpu_custom_call.1} parent=47 // loop_footer
          %s77 = sadd.s32 1, %s73
        $region54: #{tpu_custom_call.1} parent=47 // loop_footer_branch
          %72 = sbr.rel target = $region50
        $region55: #{tpu_custom_call.1} parent=47 // loop_exit
          _
      $region48: #{tpu_custom_call.1} parent=32 // pred_fallthru
        _
    $region33: #{tpu_custom_call.1} parent=1 // pred_fallthru
      _
    // Predicated region
    $region34: #{tpu_custom_call.1} parent=1 // pred_check
      %p47 = pneg %p43
    $region35: #{tpu_custom_call.1} parent=1 // pred_check_branch
      %49 = sbr.rel (%p47) target = $region37
    $region36: #{tpu_custom_call.1} parent=1 // pred_region
      %s50 = sshllo.u32 0, 1
      loop: start=0, step=1, limit=1
      $region38: #{tpu_custom_call.1} parent=36 // loop_pre_header
        _
      $region39: #{tpu_custom_call.1} parent=36 // loop_header
        %s52 = sphi 0, %s56
        %p53 = scmp.ge.s32.totalorder %s52, 1
        %s57 = sphi %s41, %s41
        %s58 = sphi [#allocation2], [#allocation2]
      $region40: #{tpu_custom_call.1} parent=36 // loop_header_branch
        %55 = sbr.rel (%p53) target = $region44
      $region41: #{tpu_custom_call.1} parent=36 // loop_body
        %v59 = vld [vmem:[%s57] sm:%s50]
        %60 = vst [vmem:[%s58] sm:%s50] %v59
      $region42: #{tpu_custom_call.1} parent=36 // loop_footer
        %s56 = sadd.s32 1, %s52
      $region43: #{tpu_custom_call.1} parent=36 // loop_footer_branch
        %51 = sbr.rel target = $region39
      $region44: #{tpu_custom_call.1} parent=36 // loop_exit
        _
    $region37: #{tpu_custom_call.1} parent=1 // pred_fallthru
      _
    // Predicated region
    $region56: #{tpu_custom_call.1} parent=1 // pred_check
      _
    $region57: #{tpu_custom_call.1} parent=1 // pred_check_branch
      %84 = sbr.rel (0) target = $region59
    $region58: #{tpu_custom_call.1} parent=1 // pred_region
      %85 = vsyncadd [#allocation3], 16
    $region59: #{tpu_custom_call.1} parent=1 // pred_fallthru
      _
    %s86 = sld [smem:[#allocation5 + $0x1]]
    %s87 = scalar_lea.vmem %s1, %s86
    %s88 = scalar_lea.vmem [#allocation2], 1
    %s89 = scalar_lea.sflag [#allocation3], 1
    %p91 = scmp.lt.u32.totalorder 1, 8
    %p92 = pneg %p91
    // Predicated region
    $region60: #{tpu_custom_call.1} parent=1 // pred_check
      _
    $region61: #{tpu_custom_call.1} parent=1 // pred_check_branch
      %94 = sbr.rel (%p91) target = $region63
    $region62: #{tpu_custom_call.1} parent=1 // pred_region
      %s109 = sand.u32 1, 7
      %p110 = scmp.eq.s32.totalorder %s109, 0
      %p111 = pneg %p110
      // Predicated region
      $region75: #{tpu_custom_call.1} parent=62 // pred_check
        _
      $region76: #{tpu_custom_call.1} parent=62 // pred_check_branch
        %113 = sbr.rel (%p110) target = $region78
      $region77: #{tpu_custom_call.1} parent=62 // pred_region
        %s114 = sand.u32 1, 7
        %s115 = ssub.s32 1, %s114
        %s116 = scalar_lea.vmem %s87, %s115
        %s117 = ssub.s32 1, %s114
        %s118 = scalar_lea.vmem %s88, %s117 [#allocation2]
        %s119 = sshllo.u32 0, %s114
        loop: start=0, step=1, limit=1
        $region79: #{tpu_custom_call.1} parent=77 // loop_pre_header
          _
        $region80: #{tpu_custom_call.1} parent=77 // loop_header
          %s121 = sphi 0, %s125
          %p122 = scmp.ge.s32.totalorder %s121, 1
          %s126 = sphi %s116, %s116
          %s127 = sphi %s118, %s118
        $region81: #{tpu_custom_call.1} parent=77 // loop_header_branch
          %124 = sbr.rel (%p122) target = $region85
        $region82: #{tpu_custom_call.1} parent=77 // loop_body
          %v128 = vld [vmem:[%s126] sm:%s119]
          %129 = vst [vmem:[%s127] sm:%s119] %v128
        $region83: #{tpu_custom_call.1} parent=77 // loop_footer
          %s125 = sadd.s32 1, %s121
        $region84: #{tpu_custom_call.1} parent=77 // loop_footer_branch
          %120 = sbr.rel target = $region80
        $region85: #{tpu_custom_call.1} parent=77 // loop_exit
          _
      $region78: #{tpu_custom_call.1} parent=62 // pred_fallthru
        _
    $region63: #{tpu_custom_call.1} parent=1 // pred_fallthru
      _
    // Predicated region
    $region64: #{tpu_custom_call.1} parent=1 // pred_check
      %p95 = pneg %p91
    $region65: #{tpu_custom_call.1} parent=1 // pred_check_branch
      %97 = sbr.rel (%p95) target = $region67
    $region66: #{tpu_custom_call.1} parent=1 // pred_region
      %s98 = sshllo.u32 0, 1
      loop: start=0, step=1, limit=1
      $region68: #{tpu_custom_call.1} parent=66 // loop_pre_header
        _
      $region69: #{tpu_custom_call.1} parent=66 // loop_header
        %s100 = sphi 0, %s104
        %p101 = scmp.ge.s32.totalorder %s100, 1
        %s105 = sphi %s87, %s87
        %s106 = sphi %s88, %s88
      $region70: #{tpu_custom_call.1} parent=66 // loop_header_branch
        %103 = sbr.rel (%p101) target = $region74
      $region71: #{tpu_custom_call.1} parent=66 // loop_body
        %v107 = vld [vmem:[%s105] sm:%s98]
        %108 = vst [vmem:[%s106] sm:%s98] %v107
      $region72: #{tpu_custom_call.1} parent=66 // loop_footer
        %s104 = sadd.s32 1, %s100
      $region73: #{tpu_custom_call.1} parent=66 // loop_footer_branch
        %99 = sbr.rel target = $region69
      $region74: #{tpu_custom_call.1} parent=66 // loop_exit
        _
    $region67: #{tpu_custom_call.1} parent=1 // pred_fallthru
      _
    // Predicated region
    $region86: #{tpu_custom_call.1} parent=1 // pred_check
      _
    $region87: #{tpu_custom_call.1} parent=1 // pred_check_branch
      %132 = sbr.rel (0) target = $region89
    $region88: #{tpu_custom_call.1} parent=1 // pred_region
      %133 = vsyncadd %s89, 16
    $region89: #{tpu_custom_call.1} parent=1 // pred_fallthru
      _
    %s134 = sld [smem:[#allocation5 + $0x2]]
    %s135 = scalar_lea.vmem %s1, %s134
    %s136 = scalar_lea.vmem [#allocation2], 2
    %s137 = scalar_lea.sflag [#allocation3], 2
    %p139 = scmp.lt.u32.totalorder 1, 8
    %p140 = pneg %p139
    // Predicated region
    $region90: #{tpu_custom_call.1} parent=1 // pred_check
      _
    $region91: #{tpu_custom_call.1} parent=1 // pred_check_branch
      %142 = sbr.rel (%p139) target = $region93
    $region92: #{tpu_custom_call.1} parent=1 // pred_region
      %s157 = sand.u32 1, 7
      %p158 = scmp.eq.s32.totalorder %s157, 0
      %p159 = pneg %p158
      // Predicated region
      $region105: #{tpu_custom_call.1} parent=92 // pred_check
        _
      $region106: #{tpu_custom_call.1} parent=92 // pred_check_branch
        %161 = sbr.rel (%p158) target = $region108
      $region107: #{tpu_custom_call.1} parent=92 // pred_region
        %s162 = sand.u32 1, 7
        %s163 = ssub.s32 1, %s162
        %s164 = scalar_lea.vmem %s135, %s163
        %s165 = ssub.s32 1, %s162
        %s166 = scalar_lea.vmem %s136, %s165 [#allocation2]
        %s167 = sshllo.u32 0, %s162
        loop: start=0, step=1, limit=1
        $region109: #{tpu_custom_call.1} parent=107 // loop_pre_header
          _
        $region110: #{tpu_custom_call.1} parent=107 // loop_header
          %s169 = sphi 0, %s173
          %p170 = scmp.ge.s32.totalorder %s169, 1
          %s174 = sphi %s164, %s164
          %s175 = sphi %s166, %s166
        $region111: #{tpu_custom_call.1} parent=107 // loop_header_branch
          %172 = sbr.rel (%p170) target = $region115
        $region112: #{tpu_custom_call.1} parent=107 // loop_body
          %v176 = vld [vmem:[%s174] sm:%s167]
          %177 = vst [vmem:[%s175] sm:%s167] %v176
        $region113: #{tpu_custom_call.1} parent=107 // loop_footer
          %s173 = sadd.s32 1, %s169
        $region114: #{tpu_custom_call.1} parent=107 // loop_footer_branch
          %168 = sbr.rel target = $region110
        $region115: #{tpu_custom_call.1} parent=107 // loop_exit
          _
      $region108: #{tpu_custom_call.1} parent=92 // pred_fallthru
        _
    $region93: #{tpu_custom_call.1} parent=1 // pred_fallthru
      _
    // Predicated region
    $region94: #{tpu_custom_call.1} parent=1 // pred_check
      %p143 = pneg %p139
    $region95: #{tpu_custom_call.1} parent=1 // pred_check_branch
      %145 = sbr.rel (%p143) target = $region97
    $region96: #{tpu_custom_call.1} parent=1 // pred_region
      %s146 = sshllo.u32 0, 1
      loop: start=0, step=1, limit=1
      $region98: #{tpu_custom_call.1} parent=96 // loop_pre_header
        _
      $region99: #{tpu_custom_call.1} parent=96 // loop_header
        %s148 = sphi 0, %s152
        %p149 = scmp.ge.s32.totalorder %s148, 1
        %s153 = sphi %s135, %s135
        %s154 = sphi %s136, %s136
      $region100: #{tpu_custom_call.1} parent=96 // loop_header_branch
        %151 = sbr.rel (%p149) target = $region104
      $region101: #{tpu_custom_call.1} parent=96 // loop_body
        %v155 = vld [vmem:[%s153] sm:%s146]
        %156 = vst [vmem:[%s154] sm:%s146] %v155
      $region102: #{tpu_custom_call.1} parent=96 // loop_footer
        %s152 = sadd.s32 1, %s148
      $region103: #{tpu_custom_call.1} parent=96 // loop_footer_branch
        %147 = sbr.rel target = $region99
      $region104: #{tpu_custom_call.1} parent=96 // loop_exit
        _
    $region97: #{tpu_custom_call.1} parent=1 // pred_fallthru
      _
    // Predicated region
    $region116: #{tpu_custom_call.1} parent=1 // pred_check
      _
    $region117: #{tpu_custom_call.1} parent=1 // pred_check_branch
      %180 = sbr.rel (0) target = $region119
    $region118: #{tpu_custom_call.1} parent=1 // pred_region
      %181 = vsyncadd %s137, 16
    $region119: #{tpu_custom_call.1} parent=1 // pred_fallthru
      _
    %s182 = sld [smem:[#allocation5 + $0x3]]
    %s183 = scalar_lea.vmem %s1, %s182
    %s184 = scalar_lea.vmem [#allocation2], 3
    %s185 = scalar_lea.sflag [#allocation3], 3
    %p187 = scmp.lt.u32.totalorder 1, 8
    %p188 = pneg %p187
    // Predicated region
    $region120: #{tpu_custom_call.1} parent=1 // pred_check
      _
    $region121: #{tpu_custom_call.1} parent=1 // pred_check_branch
      %190 = sbr.rel (%p187) target = $region123
    $region122: #{tpu_custom_call.1} parent=1 // pred_region
      %s205 = sand.u32 1, 7
      %p206 = scmp.eq.s32.totalorder %s205, 0
      %p207 = pneg %p206
      // Predicated region
      $region135: #{tpu_custom_call.1} parent=122 // pred_check
        _
      $region136: #{tpu_custom_call.1} parent=122 // pred_check_branch
        %209 = sbr.rel (%p206) target = $region138
      $region137: #{tpu_custom_call.1} parent=122 // pred_region
        %s210 = sand.u32 1, 7
        %s211 = ssub.s32 1, %s210
        %s212 = scalar_lea.vmem %s183, %s211
        %s213 = ssub.s32 1, %s210
        %s214 = scalar_lea.vmem %s184, %s213 [#allocation2]
        %s215 = sshllo.u32 0, %s210
        loop: start=0, step=1, limit=1
        $region139: #{tpu_custom_call.1} parent=137 // loop_pre_header
          _
        $region140: #{tpu_custom_call.1} parent=137 // loop_header
          %s217 = sphi 0, %s221
          %p218 = scmp.ge.s32.totalorder %s217, 1
          %s222 = sphi %s212, %s212
          %s223 = sphi %s214, %s214
        $region141: #{tpu_custom_call.1} parent=137 // loop_header_branch
          %220 = sbr.rel (%p218) target = $region145
        $region142: #{tpu_custom_call.1} parent=137 // loop_body
          %v224 = vld [vmem:[%s222] sm:%s215]
          %225 = vst [vmem:[%s223] sm:%s215] %v224
        $region143: #{tpu_custom_call.1} parent=137 // loop_footer
          %s221 = sadd.s32 1, %s217
        $region144: #{tpu_custom_call.1} parent=137 // loop_footer_branch
          %216 = sbr.rel target = $region140
        $region145: #{tpu_custom_call.1} parent=137 // loop_exit
          _
      $region138: #{tpu_custom_call.1} parent=122 // pred_fallthru
        _
    $region123: #{tpu_custom_call.1} parent=1 // pred_fallthru
      _
    // Predicated region
    $region124: #{tpu_custom_call.1} parent=1 // pred_check
      %p191 = pneg %p187
    $region125: #{tpu_custom_call.1} parent=1 // pred_check_branch
      %193 = sbr.rel (%p191) target = $region127
    $region126: #{tpu_custom_call.1} parent=1 // pred_region
      %s194 = sshllo.u32 0, 1
      loop: start=0, step=1, limit=1
      $region128: #{tpu_custom_call.1} parent=126 // loop_pre_header
        _
      $region129: #{tpu_custom_call.1} parent=126 // loop_header
        %s196 = sphi 0, %s200
        %p197 = scmp.ge.s32.totalorder %s196, 1
        %s201 = sphi %s183, %s183
        %s202 = sphi %s184, %s184
      $region130: #{tpu_custom_call.1} parent=126 // loop_header_branch
        %199 = sbr.rel (%p197) target = $region134
      $region131: #{tpu_custom_call.1} parent=126 // loop_body
        %v203 = vld [vmem:[%s201] sm:%s194]
        %204 = vst [vmem:[%s202] sm:%s194] %v203
      $region132: #{tpu_custom_call.1} parent=126 // loop_footer
        %s200 = sadd.s32 1, %s196
      $region133: #{tpu_custom_call.1} parent=126 // loop_footer_branch
        %195 = sbr.rel target = $region129
      $region134: #{tpu_custom_call.1} parent=126 // loop_exit
        _
    $region127: #{tpu_custom_call.1} parent=1 // pred_fallthru
      _
    // Predicated region
    $region146: #{tpu_custom_call.1} parent=1 // pred_check
      _
    $region147: #{tpu_custom_call.1} parent=1 // pred_check_branch
      %228 = sbr.rel (0) target = $region149
    $region148: #{tpu_custom_call.1} parent=1 // pred_region
      %229 = vsyncadd %s185, 16
    $region149: #{tpu_custom_call.1} parent=1 // pred_fallthru
      _
    %s230 = sld [smem:[#allocation5 + $0x4]]
    %s231 = scalar_lea.vmem %s1, %s230
    %s232 = scalar_lea.vmem [#allocation2], 4
    %s233 = scalar_lea.sflag [#allocation3], 4
    %p235 = scmp.lt.u32.totalorder 1, 8
    %p236 = pneg %p235
    // Predicated region
    $region150: #{tpu_custom_call.1} parent=1 // pred_check
      _
    $region151: #{tpu_custom_call.1} parent=1 // pred_check_branch
      %238 = sbr.rel (%p235) target = $region153
    $region152: #{tpu_custom_call.1} parent=1 // pred_region
      %s253 = sand.u32 1, 7
      %p254 = scmp.eq.s32.totalorder %s253, 0
      %p255 = pneg %p254
      // Predicated region
      $region165: #{tpu_custom_call.1} parent=152 // pred_check
        _
      $region166: #{tpu_custom_call.1} parent=152 // pred_check_branch
        %257 = sbr.rel (%p254) target = $region168
      $region167: #{tpu_custom_call.1} parent=152 // pred_region
        %s258 = sand.u32 1, 7
        %s259 = ssub.s32 1, %s258
        %s260 = scalar_lea.vmem %s231, %s259
        %s261 = ssub.s32 1, %s258
        %s262 = scalar_lea.vmem %s232, %s261 [#allocation2]
        %s263 = sshllo.u32 0, %s258
        loop: start=0, step=1, limit=1
        $region169: #{tpu_custom_call.1} parent=167 // loop_pre_header
          _
        $region170: #{tpu_custom_call.1} parent=167 // loop_header
          %s265 = sphi 0, %s269
          %p266 = scmp.ge.s32.totalorder %s265, 1
          %s270 = sphi %s260, %s260
          %s271 = sphi %s262, %s262
        $region171: #{tpu_custom_call.1} parent=167 // loop_header_branch
          %268 = sbr.rel (%p266) target = $region175
        $region172: #{tpu_custom_call.1} parent=167 // loop_body
          %v272 = vld [vmem:[%s270] sm:%s263]
          %273 = vst [vmem:[%s271] sm:%s263] %v272
        $region173: #{tpu_custom_call.1} parent=167 // loop_footer
          %s269 = sadd.s32 1, %s265
        $region174: #{tpu_custom_call.1} parent=167 // loop_footer_branch
          %264 = sbr.rel target = $region170
        $region175: #{tpu_custom_call.1} parent=167 // loop_exit
          _
      $region168: #{tpu_custom_call.1} parent=152 // pred_fallthru
        _
    $region153: #{tpu_custom_call.1} parent=1 // pred_fallthru
      _
    // Predicated region
    $region154: #{tpu_custom_call.1} parent=1 // pred_check
      %p239 = pneg %p235
    $region155: #{tpu_custom_call.1} parent=1 // pred_check_branch
      %241 = sbr.rel (%p239) target = $region157
    $region156: #{tpu_custom_call.1} parent=1 // pred_region
      %s242 = sshllo.u32 0, 1
      loop: start=0, step=1, limit=1
      $region158: #{tpu_custom_call.1} parent=156 // loop_pre_header
        _
      $region159: #{tpu_custom_call.1} parent=156 // loop_header
        %s244 = sphi 0, %s248
        %p245 = scmp.ge.s32.totalorder %s244, 1
        %s249 = sphi %s231, %s231
        %s250 = sphi %s232, %s232
      $region160: #{tpu_custom_call.1} parent=156 // loop_header_branch
        %247 = sbr.rel (%p245) target = $region164
      $region161: #{tpu_custom_call.1} parent=156 // loop_body
        %v251 = vld [vmem:[%s249] sm:%s242]
        %252 = vst [vmem:[%s250] sm:%s242] %v251
      $region162: #{tpu_custom_call.1} parent=156 // loop_footer
        %s248 = sadd.s32 1, %s244
      $region163: #{tpu_custom_call.1} parent=156 // loop_footer_branch
        %243 = sbr.rel target = $region159
      $region164: #{tpu_custom_call.1} parent=156 // loop_exit
        _
    $region157: #{tpu_custom_call.1} parent=1 // pred_fallthru
      _
    // Predicated region
    $region176: #{tpu_custom_call.1} parent=1 // pred_check
      _
    $region177: #{tpu_custom_call.1} parent=1 // pred_check_branch
      %276 = sbr.rel (0) target = $region179
    $region178: #{tpu_custom_call.1} parent=1 // pred_region
      %277 = vsyncadd %s233, 16
    $region179: #{tpu_custom_call.1} parent=1 // pred_fallthru
      _
    %s278 = sld [smem:[#allocation5 + $0x5]]
    %s279 = scalar_lea.vmem %s1, %s278
    %s280 = scalar_lea.vmem [#allocation2], 5
    %s281 = scalar_lea.sflag [#allocation3], 5
    %p283 = scmp.lt.u32.totalorder 1, 8
    %p284 = pneg %p283
    // Predicated region
    $region180: #{tpu_custom_call.1} parent=1 // pred_check
      _
    $region181: #{tpu_custom_call.1} parent=1 // pred_check_branch
      %286 = sbr.rel (%p283) target = $region183
    $region182: #{tpu_custom_call.1} parent=1 // pred_region
      %s301 = sand.u32 1, 7
      %p302 = scmp.eq.s32.totalorder %s301, 0
      %p303 = pneg %p302
      // Predicated region
      $region195: #{tpu_custom_call.1} parent=182 // pred_check
        _
      $region196: #{tpu_custom_call.1} parent=182 // pred_check_branch
        %305 = sbr.rel (%p302) target = $region198
      $region197: #{tpu_custom_call.1} parent=182 // pred_region
        %s306 = sand.u32 1, 7
        %s307 = ssub.s32 1, %s306
        %s308 = scalar_lea.vmem %s279, %s307
        %s309 = ssub.s32 1, %s306
        %s310 = scalar_lea.vmem %s280, %s309 [#allocation2]
        %s311 = sshllo.u32 0, %s306
        loop: start=0, step=1, limit=1
        $region199: #{tpu_custom_call.1} parent=197 // loop_pre_header
          _
        $region200: #{tpu_custom_call.1} parent=197 // loop_header
          %s313 = sphi 0, %s317
          %p314 = scmp.ge.s32.totalorder %s313, 1
          %s318 = sphi %s308, %s308
          %s319 = sphi %s310, %s310
        $region201: #{tpu_custom_call.1} parent=197 // loop_header_branch
          %316 = sbr.rel (%p314) target = $region205
        $region202: #{tpu_custom_call.1} parent=197 // loop_body
          %v320 = vld [vmem:[%s318] sm:%s311]
          %321 = vst [vmem:[%s319] sm:%s311] %v320
        $region203: #{tpu_custom_call.1} parent=197 // loop_footer
          %s317 = sadd.s32 1, %s313
        $region204: #{tpu_custom_call.1} parent=197 // loop_footer_branch
          %312 = sbr.rel target = $region200
        $region205: #{tpu_custom_call.1} parent=197 // loop_exit
          _
      $region198: #{tpu_custom_call.1} parent=182 // pred_fallthru
        _
    $region183: #{tpu_custom_call.1} parent=1 // pred_fallthru
      _
    // Predicated region
    $region184: #{tpu_custom_call.1} parent=1 // pred_check
      %p287 = pneg %p283
    $region185: #{tpu_custom_call.1} parent=1 // pred_check_branch
      %289 = sbr.rel (%p287) target = $region187
    $region186: #{tpu_custom_call.1} parent=1 // pred_region
      %s290 = sshllo.u32 0, 1
      loop: start=0, step=1, limit=1
      $region188: #{tpu_custom_call.1} parent=186 // loop_pre_header
        _
      $region189: #{tpu_custom_call.1} parent=186 // loop_header
        %s292 = sphi 0, %s296
        %p293 = scmp.ge.s32.totalorder %s292, 1
        %s297 = sphi %s279, %s279
        %s298 = sphi %s280, %s280
      $region190: #{tpu_custom_call.1} parent=186 // loop_header_branch
        %295 = sbr.rel (%p293) target = $region194
      $region191: #{tpu_custom_call.1} parent=186 // loop_body
        %v299 = vld [vmem:[%s297] sm:%s290]
        %300 = vst [vmem:[%s298] sm:%s290] %v299
      $region192: #{tpu_custom_call.1} parent=186 // loop_footer
        %s296 = sadd.s32 1, %s292
      $region193: #{tpu_custom_call.1} parent=186 // loop_footer_branch
        %291 = sbr.rel target = $region189
      $region194: #{tpu_custom_call.1} parent=186 // loop_exit
        _
    $region187: #{tpu_custom_call.1} parent=1 // pred_fallthru
      _
    // Predicated region
    $region206: #{tpu_custom_call.1} parent=1 // pred_check
      _
    $region207: #{tpu_custom_call.1} parent=1 // pred_check_branch
      %324 = sbr.rel (0) target = $region209
    $region208: #{tpu_custom_call.1} parent=1 // pred_region
      %325 = vsyncadd %s281, 16
    $region209: #{tpu_custom_call.1} parent=1 // pred_fallthru
      _
    %s326 = sld [smem:[#allocation5 + $0x6]]
    %s327 = scalar_lea.vmem %s1, %s326
    %s328 = scalar_lea.vmem [#allocation2], 6
    %s329 = scalar_lea.sflag [#allocation3], 6
    %p331 = scmp.lt.u32.totalorder 1, 8
    %p332 = pneg %p331
    // Predicated region
    $region210: #{tpu_custom_call.1} parent=1 // pred_check
      _
    $region211: #{tpu_custom_call.1} parent=1 // pred_check_branch
      %334 = sbr.rel (%p331) target = $region213
    $region212: #{tpu_custom_call.1} parent=1 // pred_region
      %s349 = sand.u32 1, 7
      %p350 = scmp.eq.s32.totalorder %s349, 0
      %p351 = pneg %p350
      // Predicated region
      $region225: #{tpu_custom_call.1} parent=212 // pred_check
        _
      $region226: #{tpu_custom_call.1} parent=212 // pred_check_branch
        %353 = sbr.rel (%p350) target = $region228
      $region227: #{tpu_custom_call.1} parent=212 // pred_region
        %s354 = sand.u32 1, 7
        %s355 = ssub.s32 1, %s354
        %s356 = scalar_lea.vmem %s327, %s355
        %s357 = ssub.s32 1, %s354
        %s358 = scalar_lea.vmem %s328, %s357 [#allocation2]
        %s359 = sshllo.u32 0, %s354
        loop: start=0, step=1, limit=1
        $region229: #{tpu_custom_call.1} parent=227 // loop_pre_header
          _
        $region230: #{tpu_custom_call.1} parent=227 // loop_header
          %s361 = sphi 0, %s365
          %p362 = scmp.ge.s32.totalorder %s361, 1
          %s366 = sphi %s356, %s356
          %s367 = sphi %s358, %s358
        $region231: #{tpu_custom_call.1} parent=227 // loop_header_branch
          %364 = sbr.rel (%p362) target = $region235
        $region232: #{tpu_custom_call.1} parent=227 // loop_body
          %v368 = vld [vmem:[%s366] sm:%s359]
          %369 = vst [vmem:[%s367] sm:%s359] %v368
        $region233: #{tpu_custom_call.1} parent=227 // loop_footer
          %s365 = sadd.s32 1, %s361
        $region234: #{tpu_custom_call.1} parent=227 // loop_footer_branch
          %360 = sbr.rel target = $region230
        $region235: #{tpu_custom_call.1} parent=227 // loop_exit
          _
      $region228: #{tpu_custom_call.1} parent=212 // pred_fallthru
        _
    $region213: #{tpu_custom_call.1} parent=1 // pred_fallthru
      _
    // Predicated region
    $region214: #{tpu_custom_call.1} parent=1 // pred_check
      %p335 = pneg %p331
    $region215: #{tpu_custom_call.1} parent=1 // pred_check_branch
      %337 = sbr.rel (%p335) target = $region217
    $region216: #{tpu_custom_call.1} parent=1 // pred_region
      %s338 = sshllo.u32 0, 1
      loop: start=0, step=1, limit=1
      $region218: #{tpu_custom_call.1} parent=216 // loop_pre_header
        _
      $region219: #{tpu_custom_call.1} parent=216 // loop_header
        %s340 = sphi 0, %s344
        %p341 = scmp.ge.s32.totalorder %s340, 1
        %s345 = sphi %s327, %s327
        %s346 = sphi %s328, %s328
      $region220: #{tpu_custom_call.1} parent=216 // loop_header_branch
        %343 = sbr.rel (%p341) target = $region224
      $region221: #{tpu_custom_call.1} parent=216 // loop_body
        %v347 = vld [vmem:[%s345] sm:%s338]
        %348 = vst [vmem:[%s346] sm:%s338] %v347
      $region222: #{tpu_custom_call.1} parent=216 // loop_footer
        %s344 = sadd.s32 1, %s340
      $region223: #{tpu_custom_call.1} parent=216 // loop_footer_branch
        %339 = sbr.rel target = $region219
      $region224: #{tpu_custom_call.1} parent=216 // loop_exit
        _
    $region217: #{tpu_custom_call.1} parent=1 // pred_fallthru
      _
    // Predicated region
    $region236: #{tpu_custom_call.1} parent=1 // pred_check
      _
    $region237: #{tpu_custom_call.1} parent=1 // pred_check_branch
      %372 = sbr.rel (0) target = $region239
    $region238: #{tpu_custom_call.1} parent=1 // pred_region
      %373 = vsyncadd %s329, 16
    $region239: #{tpu_custom_call.1} parent=1 // pred_fallthru
      _
    %s374 = sld [smem:[#allocation5 + $0x7]]
    %s375 = scalar_lea.vmem %s1, %s374
    %s376 = scalar_lea.vmem [#allocation2], 7
    %s377 = scalar_lea.sflag [#allocation3], 7
    %p379 = scmp.lt.u32.totalorder 1, 8
    %p380 = pneg %p379
    // Predicated region
    $region240: #{tpu_custom_call.1} parent=1 // pred_check
      _
    $region241: #{tpu_custom_call.1} parent=1 // pred_check_branch
      %382 = sbr.rel (%p379) target = $region243
    $region242: #{tpu_custom_call.1} parent=1 // pred_region
      %s397 = sand.u32 1, 7
      %p398 = scmp.eq.s32.totalorder %s397, 0
      %p399 = pneg %p398
      // Predicated region
      $region255: #{tpu_custom_call.1} parent=242 // pred_check
        _
      $region256: #{tpu_custom_call.1} parent=242 // pred_check_branch
        %401 = sbr.rel (%p398) target = $region258
      $region257: #{tpu_custom_call.1} parent=242 // pred_region
        %s402 = sand.u32 1, 7
        %s403 = ssub.s32 1, %s402
        %s404 = scalar_lea.vmem %s375, %s403
        %s405 = ssub.s32 1, %s402
        %s406 = scalar_lea.vmem %s376, %s405 [#allocation2]
        %s407 = sshllo.u32 0, %s402
        loop: start=0, step=1, limit=1
        $region259: #{tpu_custom_call.1} parent=257 // loop_pre_header
          _
        $region260: #{tpu_custom_call.1} parent=257 // loop_header
          %s409 = sphi 0, %s413
          %p410 = scmp.ge.s32.totalorder %s409, 1
          %s414 = sphi %s404, %s404
          %s415 = sphi %s406, %s406
        $region261: #{tpu_custom_call.1} parent=257 // loop_header_branch
          %412 = sbr.rel (%p410) target = $region265
        $region262: #{tpu_custom_call.1} parent=257 // loop_body
          %v416 = vld [vmem:[%s414] sm:%s407]
          %417 = vst [vmem:[%s415] sm:%s407] %v416
        $region263: #{tpu_custom_call.1} parent=257 // loop_footer
          %s413 = sadd.s32 1, %s409
        $region264: #{tpu_custom_call.1} parent=257 // loop_footer_branch
          %408 = sbr.rel target = $region260
        $region265: #{tpu_custom_call.1} parent=257 // loop_exit
          _
      $region258: #{tpu_custom_call.1} parent=242 // pred_fallthru
        _
    $region243: #{tpu_custom_call.1} parent=1 // pred_fallthru
      _
    // Predicated region
    $region244: #{tpu_custom_call.1} parent=1 // pred_check
      %p383 = pneg %p379
    $region245: #{tpu_custom_call.1} parent=1 // pred_check_branch
      %385 = sbr.rel (%p383) target = $region247
    $region246: #{tpu_custom_call.1} parent=1 // pred_region
      %s386 = sshllo.u32 0, 1
      loop: start=0, step=1, limit=1
      $region248: #{tpu_custom_call.1} parent=246 // loop_pre_header
        _
      $region249: #{tpu_custom_call.1} parent=246 // loop_header
        %s388 = sphi 0, %s392
        %p389 = scmp.ge.s32.totalorder %s388, 1
        %s393 = sphi %s375, %s375
        %s394 = sphi %s376, %s376
      $region250: #{tpu_custom_call.1} parent=246 // loop_header_branch
        %391 = sbr.rel (%p389) target = $region254
      $region251: #{tpu_custom_call.1} parent=246 // loop_body
        %v395 = vld [vmem:[%s393] sm:%s386]
        %396 = vst [vmem:[%s394] sm:%s386] %v395
      $region252: #{tpu_custom_call.1} parent=246 // loop_footer
        %s392 = sadd.s32 1, %s388
      $region253: #{tpu_custom_call.1} parent=246 // loop_footer_branch
        %387 = sbr.rel target = $region249
      $region254: #{tpu_custom_call.1} parent=246 // loop_exit
        _
    $region247: #{tpu_custom_call.1} parent=1 // pred_fallthru
      _
    // Predicated region
    $region266: #{tpu_custom_call.1} parent=1 // pred_check
      _
    $region267: #{tpu_custom_call.1} parent=1 // pred_check_branch
      %420 = sbr.rel (0) target = $region269
    $region268: #{tpu_custom_call.1} parent=1 // pred_region
      %421 = vsyncadd %s377, 16
    $region269: #{tpu_custom_call.1} parent=1 // pred_fallthru
      _
    %s422 = sld [smem:[#allocation5 + $0x8]]
    %s423 = scalar_lea.vmem %s1, %s422
    %s424 = scalar_lea.vmem [#allocation2], 8
    %p426 = scmp.lt.u32.totalorder 1, 8
    %p427 = pneg %p426
    // Predicated region
    $region270: #{tpu_custom_call.1} parent=1 // pred_check
      _
    $region271: #{tpu_custom_call.1} parent=1 // pred_check_branch
      %429 = sbr.rel (%p426) target = $region273
    $region272: #{tpu_custom_call.1} parent=1 // pred_region
      %s444 = sand.u32 1, 7
      %p445 = scmp.eq.s32.totalorder %s444, 0
      %p446 = pneg %p445
      // Predicated region
      $region285: #{tpu_custom_call.1} parent=272 // pred_check
        _
      $region286: #{tpu_custom_call.1} parent=272 // pred_check_branch
        %448 = sbr.rel (%p445) target = $region288
      $region287: #{tpu_custom_call.1} parent=272 // pred_region
        %s449 = sand.u32 1, 7
        %s450 = ssub.s32 1, %s449
        %s451 = scalar_lea.vmem %s423, %s450
        %s452 = ssub.s32 1, %s449
        %s453 = scalar_lea.vmem %s424, %s452 [#allocation2]
        %s454 = sshllo.u32 0, %s449
        loop: start=0, step=1, limit=1
        $region289: #{tpu_custom_call.1} parent=287 // loop_pre_header
          _
        $region290: #{tpu_custom_call.1} parent=287 // loop_header
          %s456 = sphi 0, %s460
          %p457 = scmp.ge.s32.totalorder %s456, 1
          %s461 = sphi %s451, %s451
          %s462 = sphi %s453, %s453
        $region291: #{tpu_custom_call.1} parent=287 // loop_header_branch
          %459 = sbr.rel (%p457) target = $region295
        $region292: #{tpu_custom_call.1} parent=287 // loop_body
          %v463 = vld [vmem:[%s461] sm:%s454]
          %464 = vst [vmem:[%s462] sm:%s454] %v463
        $region293: #{tpu_custom_call.1} parent=287 // loop_footer
          %s460 = sadd.s32 1, %s456
        $region294: #{tpu_custom_call.1} parent=287 // loop_footer_branch
          %455 = sbr.rel target = $region290
        $region295: #{tpu_custom_call.1} parent=287 // loop_exit
          _
      $region288: #{tpu_custom_call.1} parent=272 // pred_fallthru
        _
    $region273: #{tpu_custom_call.1} parent=1 // pred_fallthru
      _
    // Predicated region
    $region274: #{tpu_custom_call.1} parent=1 // pred_check
      %p430 = pneg %p426
    $region275: #{tpu_custom_call.1} parent=1 // pred_check_branch
      %432 = sbr.rel (%p430) target = $region277
    $region276: #{tpu_custom_call.1} parent=1 // pred_region
      %s433 = sshllo.u32 0, 1
      loop: start=0, step=1, limit=1
      $region278: #{tpu_custom_call.1} parent=276 // loop_pre_header
        _
      $region279: #{tpu_custom_call.1} parent=276 // loop_header
        %s435 = sphi 0, %s439
        %p436 = scmp.ge.s32.totalorder %s435, 1
        %s440 = sphi %s423, %s423
        %s441 = sphi %s424, %s424
      $region280: #{tpu_custom_call.1} parent=276 // loop_header_branch
        %438 = sbr.rel (%p436) target = $region284
      $region281: #{tpu_custom_call.1} parent=276 // loop_body
        %v442 = vld [vmem:[%s440] sm:%s433]
        %443 = vst [vmem:[%s441] sm:%s433] %v442
      $region282: #{tpu_custom_call.1} parent=276 // loop_footer
        %s439 = sadd.s32 1, %s435
      $region283: #{tpu_custom_call.1} parent=276 // loop_footer_branch
        %434 = sbr.rel target = $region279
      $region284: #{tpu_custom_call.1} parent=276 // loop_exit
        _
    $region277: #{tpu_custom_call.1} parent=1 // pred_fallthru
      _
    // Predicated region
    $region296: #{tpu_custom_call.1} parent=1 // pred_check
      _
    $region297: #{tpu_custom_call.1} parent=1 // pred_check_branch
      %467 = sbr.rel (0) target = $region299
    $region298: #{tpu_custom_call.1} parent=1 // pred_region
      %468 = vsyncadd [#allocation3], 16
    $region299: #{tpu_custom_call.1} parent=1 // pred_fallthru
      _
    %s469 = sld [smem:[#allocation5 + $0x9]]
    %s470 = scalar_lea.vmem %s1, %s469
    %s471 = scalar_lea.vmem [#allocation2], 9
    %p473 = scmp.lt.u32.totalorder 1, 8
    %p474 = pneg %p473
    // Predicated region
    $region300: #{tpu_custom_call.1} parent=1 // pred_check
      _
    $region301: #{tpu_custom_call.1} parent=1 // pred_check_branch
      %476 = sbr.rel (%p473) target = $region303
    $region302: #{tpu_custom_call.1} parent=1 // pred_region
      %s491 = sand.u32 1, 7
      %p492 = scmp.eq.s32.totalorder %s491, 0
      %p493 = pneg %p492
      // Predicated region
      $region315: #{tpu_custom_call.1} parent=302 // pred_check
        _
      $region316: #{tpu_custom_call.1} parent=302 // pred_check_branch
        %495 = sbr.rel (%p492) target = $region318
      $region317: #{tpu_custom_call.1} parent=302 // pred_region
        %s496 = sand.u32 1, 7
        %s497 = ssub.s32 1, %s496
        %s498 = scalar_lea.vmem %s470, %s497
        %s499 = ssub.s32 1, %s496
        %s500 = scalar_lea.vmem %s471, %s499 [#allocation2]
        %s501 = sshllo.u32 0, %s496
        loop: start=0, step=1, limit=1
        $region319: #{tpu_custom_call.1} parent=317 // loop_pre_header
          _
        $region320: #{tpu_custom_call.1} parent=317 // loop_header
          %s503 = sphi 0, %s507
          %p504 = scmp.ge.s32.totalorder %s503, 1
          %s508 = sphi %s498, %s498
          %s509 = sphi %s500, %s500
        $region321: #{tpu_custom_call.1} parent=317 // loop_header_branch
          %506 = sbr.rel (%p504) target = $region325
        $region322: #{tpu_custom_call.1} parent=317 // loop_body
          %v510 = vld [vmem:[%s508] sm:%s501]
          %511 = vst [vmem:[%s509] sm:%s501] %v510
        $region323: #{tpu_custom_call.1} parent=317 // loop_footer
          %s507 = sadd.s32 1, %s503
        $region324: #{tpu_custom_call.1} parent=317 // loop_footer_branch
          %502 = sbr.rel target = $region320
        $region325: #{tpu_custom_call.1} parent=317 // loop_exit
          _
      $region318: #{tpu_custom_call.1} parent=302 // pred_fallthru
        _
    $region303: #{tpu_custom_call.1} parent=1 // pred_fallthru
      _
    // Predicated region
    $region304: #{tpu_custom_call.1} parent=1 // pred_check
      %p477 = pneg %p473
    $region305: #{tpu_custom_call.1} parent=1 // pred_check_branch
      %479 = sbr.rel (%p477) target = $region307
    $region306: #{tpu_custom_call.1} parent=1 // pred_region
      %s480 = sshllo.u32 0, 1
      loop: start=0, step=1, limit=1
      $region308: #{tpu_custom_call.1} parent=306 // loop_pre_header
        _
      $region309: #{tpu_custom_call.1} parent=306 // loop_header
        %s482 = sphi 0, %s486
        %p483 = scmp.ge.s32.totalorder %s482, 1
        %s487 = sphi %s470, %s470
        %s488 = sphi %s471, %s471
      $region310: #{tpu_custom_call.1} parent=306 // loop_header_branch
        %485 = sbr.rel (%p483) target = $region314
      $region311: #{tpu_custom_call.1} parent=306 // loop_body
        %v489 = vld [vmem:[%s487] sm:%s480]
        %490 = vst [vmem:[%s488] sm:%s480] %v489
      $region312: #{tpu_custom_call.1} parent=306 // loop_footer
        %s486 = sadd.s32 1, %s482
      $region313: #{tpu_custom_call.1} parent=306 // loop_footer_branch
        %481 = sbr.rel target = $region309
      $region314: #{tpu_custom_call.1} parent=306 // loop_exit
        _
    $region307: #{tpu_custom_call.1} parent=1 // pred_fallthru
      _
    // Predicated region
    $region326: #{tpu_custom_call.1} parent=1 // pred_check
      _
    $region327: #{tpu_custom_call.1} parent=1 // pred_check_branch
      %514 = sbr.rel (0) target = $region329
    $region328: #{tpu_custom_call.1} parent=1 // pred_region
      %515 = vsyncadd %s89, 16
    $region329: #{tpu_custom_call.1} parent=1 // pred_fallthru
      _
    %s516 = sld [smem:[#allocation5 + $0xa]]
    %s517 = scalar_lea.vmem %s1, %s516
    %s518 = scalar_lea.vmem [#allocation2], 10
    %p520 = scmp.lt.u32.totalorder 1, 8
    %p521 = pneg %p520
    // Predicated region
    $region330: #{tpu_custom_call.1} parent=1 // pred_check
      _
    $region331: #{tpu_custom_call.1} parent=1 // pred_check_branch
      %523 = sbr.rel (%p520) target = $region333
    $region332: #{tpu_custom_call.1} parent=1 // pred_region
      %s538 = sand.u32 1, 7
      %p539 = scmp.eq.s32.totalorder %s538, 0
      %p540 = pneg %p539
      // Predicated region
      $region345: #{tpu_custom_call.1} parent=332 // pred_check
        _
      $region346: #{tpu_custom_call.1} parent=332 // pred_check_branch
        %542 = sbr.rel (%p539) target = $region348
      $region347: #{tpu_custom_call.1} parent=332 // pred_region
        %s543 = sand.u32 1, 7
        %s544 = ssub.s32 1, %s543
        %s545 = scalar_lea.vmem %s517, %s544
        %s546 = ssub.s32 1, %s543
        %s547 = scalar_lea.vmem %s518, %s546 [#allocation2]
        %s548 = sshllo.u32 0, %s543
        loop: start=0, step=1, limit=1
        $region349: #{tpu_custom_call.1} parent=347 // loop_pre_header
          _
        $region350: #{tpu_custom_call.1} parent=347 // loop_header
          %s550 = sphi 0, %s554
          %p551 = scmp.ge.s32.totalorder %s550, 1
          %s555 = sphi %s545, %s545
          %s556 = sphi %s547, %s547
        $region351: #{tpu_custom_call.1} parent=347 // loop_header_branch
          %553 = sbr.rel (%p551) target = $region355
        $region352: #{tpu_custom_call.1} parent=347 // loop_body
          %v557 = vld [vmem:[%s555] sm:%s548]
          %558 = vst [vmem:[%s556] sm:%s548] %v557
        $region353: #{tpu_custom_call.1} parent=347 // loop_footer
          %s554 = sadd.s32 1, %s550
        $region354: #{tpu_custom_call.1} parent=347 // loop_footer_branch
          %549 = sbr.rel target = $region350
        $region355: #{tpu_custom_call.1} parent=347 // loop_exit
          _
      $region348: #{tpu_custom_call.1} parent=332 // pred_fallthru
        _
    $region333: #{tpu_custom_call.1} parent=1 // pred_fallthru
      _
    // Predicated region
    $region334: #{tpu_custom_call.1} parent=1 // pred_check
      %p524 = pneg %p520
    $region335: #{tpu_custom_call.1} parent=1 // pred_check_branch
      %526 = sbr.rel (%p524) target = $region337
    $region336: #{tpu_custom_call.1} parent=1 // pred_region
      %s527 = sshllo.u32 0, 1
      loop: start=0, step=1, limit=1
      $region338: #{tpu_custom_call.1} parent=336 // loop_pre_header
        _
      $region339: #{tpu_custom_call.1} parent=336 // loop_header
        %s529 = sphi 0, %s533
        %p530 = scmp.ge.s32.totalorder %s529, 1
        %s534 = sphi %s517, %s517
        %s535 = sphi %s518, %s518
      $region340: #{tpu_custom_call.1} parent=336 // loop_header_branch
        %532 = sbr.rel (%p530) target = $region344
      $region341: #{tpu_custom_call.1} parent=336 // loop_body
        %v536 = vld [vmem:[%s534] sm:%s527]
        %537 = vst [vmem:[%s535] sm:%s527] %v536
      $region342: #{tpu_custom_call.1} parent=336 // loop_footer
        %s533 = sadd.s32 1, %s529
      $region343: #{tpu_custom_call.1} parent=336 // loop_footer_branch
        %528 = sbr.rel target = $region339
      $region344: #{tpu_custom_call.1} parent=336 // loop_exit
        _
    $region337: #{tpu_custom_call.1} parent=1 // pred_fallthru
      _
    // Predicated region
    $region356: #{tpu_custom_call.1} parent=1 // pred_check
      _
    $region357: #{tpu_custom_call.1} parent=1 // pred_check_branch
      %561 = sbr.rel (0) target = $region359
    $region358: #{tpu_custom_call.1} parent=1 // pred_region
      %562 = vsyncadd %s137, 16
    $region359: #{tpu_custom_call.1} parent=1 // pred_fallthru
      _
    %s563 = sld [smem:[#allocation5 + $0xb]]
    %s564 = scalar_lea.vmem %s1, %s563
    %s565 = scalar_lea.vmem [#allocation2], 11
    %p567 = scmp.lt.u32.totalorder 1, 8
    %p568 = pneg %p567
    // Predicated region
    $region360: #{tpu_custom_call.1} parent=1 // pred_check
      _
    $region361: #{tpu_custom_call.1} parent=1 // pred_check_branch
      %570 = sbr.rel (%p567) target = $region363
    $region362: #{tpu_custom_call.1} parent=1 // pred_region
      %s585 = sand.u32 1, 7
      %p586 = scmp.eq.s32.totalorder %s585, 0
      %p587 = pneg %p586
      // Predicated region
      $region375: #{tpu_custom_call.1} parent=362 // pred_check
        _
      $region376: #{tpu_custom_call.1} parent=362 // pred_check_branch
        %589 = sbr.rel (%p586) target = $region378
      $region377: #{tpu_custom_call.1} parent=362 // pred_region
        %s590 = sand.u32 1, 7
        %s591 = ssub.s32 1, %s590
        %s592 = scalar_lea.vmem %s564, %s591
        %s593 = ssub.s32 1, %s590
        %s594 = scalar_lea.vmem %s565, %s593 [#allocation2]
        %s595 = sshllo.u32 0, %s590
        loop: start=0, step=1, limit=1
        $region379: #{tpu_custom_call.1} parent=377 // loop_pre_header
          _
        $region380: #{tpu_custom_call.1} parent=377 // loop_header
          %s597 = sphi 0, %s601
          %p598 = scmp.ge.s32.totalorder %s597, 1
          %s602 = sphi %s592, %s592
          %s603 = sphi %s594, %s594
        $region381: #{tpu_custom_call.1} parent=377 // loop_header_branch
          %600 = sbr.rel (%p598) target = $region385
        $region382: #{tpu_custom_call.1} parent=377 // loop_body
          %v604 = vld [vmem:[%s602] sm:%s595]
          %605 = vst [vmem:[%s603] sm:%s595] %v604
        $region383: #{tpu_custom_call.1} parent=377 // loop_footer
          %s601 = sadd.s32 1, %s597
        $region384: #{tpu_custom_call.1} parent=377 // loop_footer_branch
          %596 = sbr.rel target = $region380
        $region385: #{tpu_custom_call.1} parent=377 // loop_exit
          _
      $region378: #{tpu_custom_call.1} parent=362 // pred_fallthru
        _
    $region363: #{tpu_custom_call.1} parent=1 // pred_fallthru
      _
    // Predicated region
    $region364: #{tpu_custom_call.1} parent=1 // pred_check
      %p571 = pneg %p567
    $region365: #{tpu_custom_call.1} parent=1 // pred_check_branch
      %573 = sbr.rel (%p571) target = $region367
    $region366: #{tpu_custom_call.1} parent=1 // pred_region
      %s574 = sshllo.u32 0, 1
      loop: start=0, step=1, limit=1
      $region368: #{tpu_custom_call.1} parent=366 // loop_pre_header
        _
      $region369: #{tpu_custom_call.1} parent=366 // loop_header
        %s576 = sphi 0, %s580
        %p577 = scmp.ge.s32.totalorder %s576, 1
        %s581 = sphi %s564, %s564
        %s582 = sphi %s565, %s565
      $region370: #{tpu_custom_call.1} parent=366 // loop_header_branch
        %579 = sbr.rel (%p577) target = $region374
      $region371: #{tpu_custom_call.1} parent=366 // loop_body
        %v583 = vld [vmem:[%s581] sm:%s574]
        %584 = vst [vmem:[%s582] sm:%s574] %v583
      $region372: #{tpu_custom_call.1} parent=366 // loop_footer
        %s580 = sadd.s32 1, %s576
      $region373: #{tpu_custom_call.1} parent=366 // loop_footer_branch
        %575 = sbr.rel target = $region369
      $region374: #{tpu_custom_call.1} parent=366 // loop_exit
        _
    $region367: #{tpu_custom_call.1} parent=1 // pred_fallthru
      _
    // Predicated region
    $region386: #{tpu_custom_call.1} parent=1 // pred_check
      _
    $region387: #{tpu_custom_call.1} parent=1 // pred_check_branch
      %608 = sbr.rel (0) target = $region389
    $region388: #{tpu_custom_call.1} parent=1 // pred_region
      %609 = vsyncadd %s185, 16
    $region389: #{tpu_custom_call.1} parent=1 // pred_fallthru
      _
    %s610 = sld [smem:[#allocation5 + $0xc]]
    %s611 = scalar_lea.vmem %s1, %s610
    %s612 = scalar_lea.vmem [#allocation2], 12
    %p614 = scmp.lt.u32.totalorder 1, 8
    %p615 = pneg %p614
    // Predicated region
    $region390: #{tpu_custom_call.1} parent=1 // pred_check
      _
    $region391: #{tpu_custom_call.1} parent=1 // pred_check_branch
      %617 = sbr.rel (%p614) target = $region393
    $region392: #{tpu_custom_call.1} parent=1 // pred_region
      %s632 = sand.u32 1, 7
      %p633 = scmp.eq.s32.totalorder %s632, 0
      %p634 = pneg %p633
      // Predicated region
      $region405: #{tpu_custom_call.1} parent=392 // pred_check
        _
      $region406: #{tpu_custom_call.1} parent=392 // pred_check_branch
        %636 = sbr.rel (%p633) target = $region408
      $region407: #{tpu_custom_call.1} parent=392 // pred_region
        %s637 = sand.u32 1, 7
        %s638 = ssub.s32 1, %s637
        %s639 = scalar_lea.vmem %s611, %s638
        %s640 = ssub.s32 1, %s637
        %s641 = scalar_lea.vmem %s612, %s640 [#allocation2]
        %s642 = sshllo.u32 0, %s637
        loop: start=0, step=1, limit=1
        $region409: #{tpu_custom_call.1} parent=407 // loop_pre_header
          _
        $region410: #{tpu_custom_call.1} parent=407 // loop_header
          %s644 = sphi 0, %s648
          %p645 = scmp.ge.s32.totalorder %s644, 1
          %s649 = sphi %s639, %s639
          %s650 = sphi %s641, %s641
        $region411: #{tpu_custom_call.1} parent=407 // loop_header_branch
          %647 = sbr.rel (%p645) target = $region415
        $region412: #{tpu_custom_call.1} parent=407 // loop_body
          %v651 = vld [vmem:[%s649] sm:%s642]
          %652 = vst [vmem:[%s650] sm:%s642] %v651
        $region413: #{tpu_custom_call.1} parent=407 // loop_footer
          %s648 = sadd.s32 1, %s644
        $region414: #{tpu_custom_call.1} parent=407 // loop_footer_branch
          %643 = sbr.rel target = $region410
        $region415: #{tpu_custom_call.1} parent=407 // loop_exit
          _
      $region408: #{tpu_custom_call.1} parent=392 // pred_fallthru
        _
    $region393: #{tpu_custom_call.1} parent=1 // pred_fallthru
      _
    // Predicated region
    $region394: #{tpu_custom_call.1} parent=1 // pred_check
      %p618 = pneg %p614
    $region395: #{tpu_custom_call.1} parent=1 // pred_check_branch
      %620 = sbr.rel (%p618) target = $region397
    $region396: #{tpu_custom_call.1} parent=1 // pred_region
      %s621 = sshllo.u32 0, 1
      loop: start=0, step=1, limit=1
      $region398: #{tpu_custom_call.1} parent=396 // loop_pre_header
        _
      $region399: #{tpu_custom_call.1} parent=396 // loop_header
        %s623 = sphi 0, %s627
        %p624 = scmp.ge.s32.totalorder %s623, 1
        %s628 = sphi %s611, %s611
        %s629 = sphi %s612, %s612
      $region400: #{tpu_custom_call.1} parent=396 // loop_header_branch
        %626 = sbr.rel (%p624) target = $region404
      $region401: #{tpu_custom_call.1} parent=396 // loop_body
        %v630 = vld [vmem:[%s628] sm:%s621]
        %631 = vst [vmem:[%s629] sm:%s621] %v630
      $region402: #{tpu_custom_call.1} parent=396 // loop_footer
        %s627 = sadd.s32 1, %s623
      $region403: #{tpu_custom_call.1} parent=396 // loop_footer_branch
        %622 = sbr.rel target = $region399
      $region404: #{tpu_custom_call.1} parent=396 // loop_exit
        _
    $region397: #{tpu_custom_call.1} parent=1 // pred_fallthru
      _
    // Predicated region
    $region416: #{tpu_custom_call.1} parent=1 // pred_check
      _
    $region417: #{tpu_custom_call.1} parent=1 // pred_check_branch
      %655 = sbr.rel (0) target = $region419
    $region418: #{tpu_custom_call.1} parent=1 // pred_region
      %656 = vsyncadd %s233, 16
    $region419: #{tpu_custom_call.1} parent=1 // pred_fallthru
      _
    %s657 = sld [smem:[#allocation5 + $0xd]]
    %s658 = scalar_lea.vmem %s1, %s657
    %s659 = scalar_lea.vmem [#allocation2], 13
    %p661 = scmp.lt.u32.totalorder 1, 8
    %p662 = pneg %p661
    // Predicated region
    $region420: #{tpu_custom_call.1} parent=1 // pred_check
      _
    $region421: #{tpu_custom_call.1} parent=1 // pred_check_branch
      %664 = sbr.rel (%p661) target = $region423
    $region422: #{tpu_custom_call.1} parent=1 // pred_region
      %s679 = sand.u32 1, 7
      %p680 = scmp.eq.s32.totalorder %s679, 0
      %p681 = pneg %p680
      // Predicated region
      $region435: #{tpu_custom_call.1} parent=422 // pred_check
        _
      $region436: #{tpu_custom_call.1} parent=422 // pred_check_branch
        %683 = sbr.rel (%p680) target = $region438
      $region437: #{tpu_custom_call.1} parent=422 // pred_region
        %s684 = sand.u32 1, 7
        %s685 = ssub.s32 1, %s684
        %s686 = scalar_lea.vmem %s658, %s685
        %s687 = ssub.s32 1, %s684
        %s688 = scalar_lea.vmem %s659, %s687 [#allocation2]
        %s689 = sshllo.u32 0, %s684
        loop: start=0, step=1, limit=1
        $region439: #{tpu_custom_call.1} parent=437 // loop_pre_header
          _
        $region440: #{tpu_custom_call.1} parent=437 // loop_header
          %s691 = sphi 0, %s695
          %p692 = scmp.ge.s32.totalorder %s691, 1
          %s696 = sphi %s686, %s686
          %s697 = sphi %s688, %s688
        $region441: #{tpu_custom_call.1} parent=437 // loop_header_branch
          %694 = sbr.rel (%p692) target = $region445
        $region442: #{tpu_custom_call.1} parent=437 // loop_body
          %v698 = vld [vmem:[%s696] sm:%s689]
          %699 = vst [vmem:[%s697] sm:%s689] %v698
        $region443: #{tpu_custom_call.1} parent=437 // loop_footer
          %s695 = sadd.s32 1, %s691
        $region444: #{tpu_custom_call.1} parent=437 // loop_footer_branch
          %690 = sbr.rel target = $region440
        $region445: #{tpu_custom_call.1} parent=437 // loop_exit
          _
      $region438: #{tpu_custom_call.1} parent=422 // pred_fallthru
        _
    $region423: #{tpu_custom_call.1} parent=1 // pred_fallthru
      _
    // Predicated region
    $region424: #{tpu_custom_call.1} parent=1 // pred_check
      %p665 = pneg %p661
    $region425: #{tpu_custom_call.1} parent=1 // pred_check_branch
      %667 = sbr.rel (%p665) target = $region427
    $region426: #{tpu_custom_call.1} parent=1 // pred_region
      %s668 = sshllo.u32 0, 1
      loop: start=0, step=1, limit=1
      $region428: #{tpu_custom_call.1} parent=426 // loop_pre_header
        _
      $region429: #{tpu_custom_call.1} parent=426 // loop_header
        %s670 = sphi 0, %s674
        %p671 = scmp.ge.s32.totalorder %s670, 1
        %s675 = sphi %s658, %s658
        %s676 = sphi %s659, %s659
      $region430: #{tpu_custom_call.1} parent=426 // loop_header_branch
        %673 = sbr.rel (%p671) target = $region434
      $region431: #{tpu_custom_call.1} parent=426 // loop_body
        %v677 = vld [vmem:[%s675] sm:%s668]
        %678 = vst [vmem:[%s676] sm:%s668] %v677
      $region432: #{tpu_custom_call.1} parent=426 // loop_footer
        %s674 = sadd.s32 1, %s670
      $region433: #{tpu_custom_call.1} parent=426 // loop_footer_branch
        %669 = sbr.rel target = $region429
      $region434: #{tpu_custom_call.1} parent=426 // loop_exit
        _
    $region427: #{tpu_custom_call.1} parent=1 // pred_fallthru
      _
    // Predicated region
    $region446: #{tpu_custom_call.1} parent=1 // pred_check
      _
    $region447: #{tpu_custom_call.1} parent=1 // pred_check_branch
      %702 = sbr.rel (0) target = $region449
    $region448: #{tpu_custom_call.1} parent=1 // pred_region
      %703 = vsyncadd %s281, 16
    $region449: #{tpu_custom_call.1} parent=1 // pred_fallthru
      _
    %s704 = sld [smem:[#allocation5 + $0xe]]
    %s705 = scalar_lea.vmem %s1, %s704
    %s706 = scalar_lea.vmem [#allocation2], 14
    %p708 = scmp.lt.u32.totalorder 1, 8
    %p709 = pneg %p708
    // Predicated region
    $region450: #{tpu_custom_call.1} parent=1 // pred_check
      _
    $region451: #{tpu_custom_call.1} parent=1 // pred_check_branch
      %711 = sbr.rel (%p708) target = $region453
    $region452: #{tpu_custom_call.1} parent=1 // pred_region
      %s726 = sand.u32 1, 7
      %p727 = scmp.eq.s32.totalorder %s726, 0
      %p728 = pneg %p727
      // Predicated region
      $region465: #{tpu_custom_call.1} parent=452 // pred_check
        _
      $region466: #{tpu_custom_call.1} parent=452 // pred_check_branch
        %730 = sbr.rel (%p727) target = $region468
      $region467: #{tpu_custom_call.1} parent=452 // pred_region
        %s731 = sand.u32 1, 7
        %s732 = ssub.s32 1, %s731
        %s733 = scalar_lea.vmem %s705, %s732
        %s734 = ssub.s32 1, %s731
        %s735 = scalar_lea.vmem %s706, %s734 [#allocation2]
        %s736 = sshllo.u32 0, %s731
        loop: start=0, step=1, limit=1
        $region469: #{tpu_custom_call.1} parent=467 // loop_pre_header
          _
        $region470: #{tpu_custom_call.1} parent=467 // loop_header
          %s738 = sphi 0, %s742
          %p739 = scmp.ge.s32.totalorder %s738, 1
          %s743 = sphi %s733, %s733
          %s744 = sphi %s735, %s735
        $region471: #{tpu_custom_call.1} parent=467 // loop_header_branch
          %741 = sbr.rel (%p739) target = $region475
        $region472: #{tpu_custom_call.1} parent=467 // loop_body
          %v745 = vld [vmem:[%s743] sm:%s736]
          %746 = vst [vmem:[%s744] sm:%s736] %v745
        $region473: #{tpu_custom_call.1} parent=467 // loop_footer
          %s742 = sadd.s32 1, %s738
        $region474: #{tpu_custom_call.1} parent=467 // loop_footer_branch
          %737 = sbr.rel target = $region470
        $region475: #{tpu_custom_call.1} parent=467 // loop_exit
          _
      $region468: #{tpu_custom_call.1} parent=452 // pred_fallthru
        _
    $region453: #{tpu_custom_call.1} parent=1 // pred_fallthru
      _
    // Predicated region
    $region454: #{tpu_custom_call.1} parent=1 // pred_check
      %p712 = pneg %p708
    $region455: #{tpu_custom_call.1} parent=1 // pred_check_branch
      %714 = sbr.rel (%p712) target = $region457
    $region456: #{tpu_custom_call.1} parent=1 // pred_region
      %s715 = sshllo.u32 0, 1
      loop: start=0, step=1, limit=1
      $region458: #{tpu_custom_call.1} parent=456 // loop_pre_header
        _
      $region459: #{tpu_custom_call.1} parent=456 // loop_header
        %s717 = sphi 0, %s721
        %p718 = scmp.ge.s32.totalorder %s717, 1
        %s722 = sphi %s705, %s705
        %s723 = sphi %s706, %s706
      $region460: #{tpu_custom_call.1} parent=456 // loop_header_branch
        %720 = sbr.rel (%p718) target = $region464
      $region461: #{tpu_custom_call.1} parent=456 // loop_body
        %v724 = vld [vmem:[%s722] sm:%s715]
        %725 = vst [vmem:[%s723] sm:%s715] %v724
      $region462: #{tpu_custom_call.1} parent=456 // loop_footer
        %s721 = sadd.s32 1, %s717
      $region463: #{tpu_custom_call.1} parent=456 // loop_footer_branch
        %716 = sbr.rel target = $region459
      $region464: #{tpu_custom_call.1} parent=456 // loop_exit
        _
    $region457: #{tpu_custom_call.1} parent=1 // pred_fallthru
      _
    // Predicated region
    $region476: #{tpu_custom_call.1} parent=1 // pred_check
      _
    $region477: #{tpu_custom_call.1} parent=1 // pred_check_branch
      %749 = sbr.rel (0) target = $region479
    $region478: #{tpu_custom_call.1} parent=1 // pred_region
      %750 = vsyncadd %s329, 16
    $region479: #{tpu_custom_call.1} parent=1 // pred_fallthru
      _
    %s751 = sld [smem:[#allocation5 + $0xf]]
    %s752 = scalar_lea.vmem %s1, %s751
    %s753 = scalar_lea.vmem [#allocation2], 15
    %p755 = scmp.lt.u32.totalorder 1, 8
    %p756 = pneg %p755
    // Predicated region
    $region480: #{tpu_custom_call.1} parent=1 // pred_check
      _
    $region481: #{tpu_custom_call.1} parent=1 // pred_check_branch
      %758 = sbr.rel (%p755) target = $region483
    $region482: #{tpu_custom_call.1} parent=1 // pred_region
      %s773 = sand.u32 1, 7
      %p774 = scmp.eq.s32.totalorder %s773, 0
      %p775 = pneg %p774
      // Predicated region
      $region495: #{tpu_custom_call.1} parent=482 // pred_check
        _
      $region496: #{tpu_custom_call.1} parent=482 // pred_check_branch
        %777 = sbr.rel (%p774) target = $region498
      $region497: #{tpu_custom_call.1} parent=482 // pred_region
        %s778 = sand.u32 1, 7
        %s779 = ssub.s32 1, %s778
        %s780 = scalar_lea.vmem %s752, %s779
        %s781 = ssub.s32 1, %s778
        %s782 = scalar_lea.vmem %s753, %s781 [#allocation2]
        %s783 = sshllo.u32 0, %s778
        loop: start=0, step=1, limit=1
        $region499: #{tpu_custom_call.1} parent=497 // loop_pre_header
          _
        $region500: #{tpu_custom_call.1} parent=497 // loop_header
          %s785 = sphi 0, %s789
          %p786 = scmp.ge.s32.totalorder %s785, 1
          %s790 = sphi %s780, %s780
          %s791 = sphi %s782, %s782
        $region501: #{tpu_custom_call.1} parent=497 // loop_header_branch
          %788 = sbr.rel (%p786) target = $region505
        $region502: #{tpu_custom_call.1} parent=497 // loop_body
          %v792 = vld [vmem:[%s790] sm:%s783]
          %793 = vst [vmem:[%s791] sm:%s783] %v792
        $region503: #{tpu_custom_call.1} parent=497 // loop_footer
          %s789 = sadd.s32 1, %s785
        $region504: #{tpu_custom_call.1} parent=497 // loop_footer_branch
          %784 = sbr.rel target = $region500
        $region505: #{tpu_custom_call.1} parent=497 // loop_exit
          _
      $region498: #{tpu_custom_call.1} parent=482 // pred_fallthru
        _
    $region483: #{tpu_custom_call.1} parent=1 // pred_fallthru
      _
    // Predicated region
    $region484: #{tpu_custom_call.1} parent=1 // pred_check
      %p759 = pneg %p755
    $region485: #{tpu_custom_call.1} parent=1 // pred_check_branch
      %761 = sbr.rel (%p759) target = $region487
    $region486: #{tpu_custom_call.1} parent=1 // pred_region
      %s762 = sshllo.u32 0, 1
      loop: start=0, step=1, limit=1
      $region488: #{tpu_custom_call.1} parent=486 // loop_pre_header
        _
      $region489: #{tpu_custom_call.1} parent=486 // loop_header
        %s764 = sphi 0, %s768
        %p765 = scmp.ge.s32.totalorder %s764, 1
        %s769 = sphi %s752, %s752
        %s770 = sphi %s753, %s753
      $region490: #{tpu_custom_call.1} parent=486 // loop_header_branch
        %767 = sbr.rel (%p765) target = $region494
      $region491: #{tpu_custom_call.1} parent=486 // loop_body
        %v771 = vld [vmem:[%s769] sm:%s762]
        %772 = vst [vmem:[%s770] sm:%s762] %v771
      $region492: #{tpu_custom_call.1} parent=486 // loop_footer
        %s768 = sadd.s32 1, %s764
      $region493: #{tpu_custom_call.1} parent=486 // loop_footer_branch
        %763 = sbr.rel target = $region489
      $region494: #{tpu_custom_call.1} parent=486 // loop_exit
        _
    $region487: #{tpu_custom_call.1} parent=1 // pred_fallthru
      _
    // Predicated region
    $region506: #{tpu_custom_call.1} parent=1 // pred_check
      _
    $region507: #{tpu_custom_call.1} parent=1 // pred_check_branch
      %796 = sbr.rel (0) target = $region509
    $region508: #{tpu_custom_call.1} parent=1 // pred_region
      %797 = vsyncadd %s377, 16
    $region509: #{tpu_custom_call.1} parent=1 // pred_fallthru
      _
    %s798 = sld [smem:[#allocation5 + $0x10]]
    %s799 = scalar_lea.vmem %s1, %s798
    %s800 = scalar_lea.vmem [#allocation2], 16
    %p802 = scmp.lt.u32.totalorder 1, 8
    %p803 = pneg %p802
    // Predicated region
    $region510: #{tpu_custom_call.1} parent=1 // pred_check
      _
    $region511: #{tpu_custom_call.1} parent=1 // pred_check_branch
      %805 = sbr.rel (%p802) target = $region513
    $region512: #{tpu_custom_call.1} parent=1 // pred_region
      %s820 = sand.u32 1, 7
      %p821 = scmp.eq.s32.totalorder %s820, 0
      %p822 = pneg %p821
      // Predicated region
      $region525: #{tpu_custom_call.1} parent=512 // pred_check
        _
      $region526: #{tpu_custom_call.1} parent=512 // pred_check_branch
        %824 = sbr.rel (%p821) target = $region528
      $region527: #{tpu_custom_call.1} parent=512 // pred_region
        %s825 = sand.u32 1, 7
        %s826 = ssub.s32 1, %s825
        %s827 = scalar_lea.vmem %s799, %s826
        %s828 = ssub.s32 1, %s825
        %s829 = scalar_lea.vmem %s800, %s828 [#allocation2]
        %s830 = sshllo.u32 0, %s825
        loop: start=0, step=1, limit=1
        $region529: #{tpu_custom_call.1} parent=527 // loop_pre_header
          _
        $region530: #{tpu_custom_call.1} parent=527 // loop_header
          %s832 = sphi 0, %s836
          %p833 = scmp.ge.s32.totalorder %s832, 1
          %s837 = sphi %s827, %s827
          %s838 = sphi %s829, %s829
        $region531: #{tpu_custom_call.1} parent=527 // loop_header_branch
          %835 = sbr.rel (%p833) target = $region535
        $region532: #{tpu_custom_call.1} parent=527 // loop_body
          %v839 = vld [vmem:[%s837] sm:%s830]
          %840 = vst [vmem:[%s838] sm:%s830] %v839
        $region533: #{tpu_custom_call.1} parent=527 // loop_footer
          %s836 = sadd.s32 1, %s832
        $region534: #{tpu_custom_call.1} parent=527 // loop_footer_branch
          %831 = sbr.rel target = $region530
        $region535: #{tpu_custom_call.1} parent=527 // loop_exit
          _
      $region528: #{tpu_custom_call.1} parent=512 // pred_fallthru
        _
    $region513: #{tpu_custom_call.1} parent=1 // pred_fallthru
      _
    // Predicated region
    $region514: #{tpu_custom_call.1} parent=1 // pred_check
      %p806 = pneg %p802
    $region515: #{tpu_custom_call.1} parent=1 // pred_check_branch
      %808 = sbr.rel (%p806) target = $region517
    $region516: #{tpu_custom_call.1} parent=1 // pred_region
      %s809 = sshllo.u32 0, 1
      loop: start=0, step=1, limit=1
      $region518: #{tpu_custom_call.1} parent=516 // loop_pre_header
        _
      $region519: #{tpu_custom_call.1} parent=516 // loop_header
        %s811 = sphi 0, %s815
        %p812 = scmp.ge.s32.totalorder %s811, 1
        %s816 = sphi %s799, %s799
        %s817 = sphi %s800, %s800
      $region520: #{tpu_custom_call.1} parent=516 // loop_header_branch
        %814 = sbr.rel (%p812) target = $region524
      $region521: #{tpu_custom_call.1} parent=516 // loop_body
        %v818 = vld [vmem:[%s816] sm:%s809]
        %819 = vst [vmem:[%s817] sm:%s809] %v818
      $region522: #{tpu_custom_call.1} parent=516 // loop_footer
        %s815 = sadd.s32 1, %s811
      $region523: #{tpu_custom_call.1} parent=516 // loop_footer_branch
        %810 = sbr.rel target = $region519
      $region524: #{tpu_custom_call.1} parent=516 // loop_exit
        _
    $region517: #{tpu_custom_call.1} parent=1 // pred_fallthru
      _
    // Predicated region
    $region536: #{tpu_custom_call.1} parent=1 // pred_check
      _
    $region537: #{tpu_custom_call.1} parent=1 // pred_check_branch
      %843 = sbr.rel (0) target = $region539
    $region538: #{tpu_custom_call.1} parent=1 // pred_region
      %844 = vsyncadd [#allocation3], 16
    $region539: #{tpu_custom_call.1} parent=1 // pred_fallthru
      _
    %s845 = sld [smem:[#allocation5 + $0x11]]
    %s846 = scalar_lea.vmem %s1, %s845
    %s847 = scalar_lea.vmem [#allocation2], 17
    %p849 = scmp.lt.u32.totalorder 1, 8
    %p850 = pneg %p849
    // Predicated region
    $region540: #{tpu_custom_call.1} parent=1 // pred_check
      _
    $region541: #{tpu_custom_call.1} parent=1 // pred_check_branch
      %852 = sbr.rel (%p849) target = $region543
    $region542: #{tpu_custom_call.1} parent=1 // pred_region
      %s867 = sand.u32 1, 7
      %p868 = scmp.eq.s32.totalorder %s867, 0
      %p869 = pneg %p868
      // Predicated region
      $region555: #{tpu_custom_call.1} parent=542 // pred_check
        _
      $region556: #{tpu_custom_call.1} parent=542 // pred_check_branch
        %871 = sbr.rel (%p868) target = $region558
      $region557: #{tpu_custom_call.1} parent=542 // pred_region
        %s872 = sand.u32 1, 7
        %s873 = ssub.s32 1, %s872
        %s874 = scalar_lea.vmem %s846, %s873
        %s875 = ssub.s32 1, %s872
        %s876 = scalar_lea.vmem %s847, %s875 [#allocation2]
        %s877 = sshllo.u32 0, %s872
        loop: start=0, step=1, limit=1
        $region559: #{tpu_custom_call.1} parent=557 // loop_pre_header
          _
        $region560: #{tpu_custom_call.1} parent=557 // loop_header
          %s879 = sphi 0, %s883
          %p880 = scmp.ge.s32.totalorder %s879, 1
          %s884 = sphi %s874, %s874
          %s885 = sphi %s876, %s876
        $region561: #{tpu_custom_call.1} parent=557 // loop_header_branch
          %882 = sbr.rel (%p880) target = $region565
        $region562: #{tpu_custom_call.1} parent=557 // loop_body
          %v886 = vld [vmem:[%s884] sm:%s877]
          %887 = vst [vmem:[%s885] sm:%s877] %v886
        $region563: #{tpu_custom_call.1} parent=557 // loop_footer
          %s883 = sadd.s32 1, %s879
        $region564: #{tpu_custom_call.1} parent=557 // loop_footer_branch
          %878 = sbr.rel target = $region560
        $region565: #{tpu_custom_call.1} parent=557 // loop_exit
          _
      $region558: #{tpu_custom_call.1} parent=542 // pred_fallthru
        _
    $region543: #{tpu_custom_call.1} parent=1 // pred_fallthru
      _
    // Predicated region
    $region544: #{tpu_custom_call.1} parent=1 // pred_check
      %p853 = pneg %p849
    $region545: #{tpu_custom_call.1} parent=1 // pred_check_branch
      %855 = sbr.rel (%p853) target = $region547
    $region546: #{tpu_custom_call.1} parent=1 // pred_region
      %s856 = sshllo.u32 0, 1
      loop: start=0, step=1, limit=1
      $region548: #{tpu_custom_call.1} parent=546 // loop_pre_header
        _
      $region549: #{tpu_custom_call.1} parent=546 // loop_header
        %s858 = sphi 0, %s862
        %p859 = scmp.ge.s32.totalorder %s858, 1
        %s863 = sphi %s846, %s846
        %s864 = sphi %s847, %s847
      $region550: #{tpu_custom_call.1} parent=546 // loop_header_branch
        %861 = sbr.rel (%p859) target = $region554
      $region551: #{tpu_custom_call.1} parent=546 // loop_body
        %v865 = vld [vmem:[%s863] sm:%s856]
        %866 = vst [vmem:[%s864] sm:%s856] %v865
      $region552: #{tpu_custom_call.1} parent=546 // loop_footer
        %s862 = sadd.s32 1, %s858
      $region553: #{tpu_custom_call.1} parent=546 // loop_footer_branch
        %857 = sbr.rel target = $region549
      $region554: #{tpu_custom_call.1} parent=546 // loop_exit
        _
    $region547: #{tpu_custom_call.1} parent=1 // pred_fallthru
      _
    // Predicated region
    $region566: #{tpu_custom_call.1} parent=1 // pred_check
      _
    $region567: #{tpu_custom_call.1} parent=1 // pred_check_branch
      %890 = sbr.rel (0) target = $region569
    $region568: #{tpu_custom_call.1} parent=1 // pred_region
      %891 = vsyncadd %s89, 16
    $region569: #{tpu_custom_call.1} parent=1 // pred_fallthru
      _
    %s892 = sld [smem:[#allocation5 + $0x12]]
    %s893 = scalar_lea.vmem %s1, %s892
    %s894 = scalar_lea.vmem [#allocation2], 18
    %p896 = scmp.lt.u32.totalorder 1, 8
    %p897 = pneg %p896
    // Predicated region
    $region570: #{tpu_custom_call.1} parent=1 // pred_check
      _
    $region571: #{tpu_custom_call.1} parent=1 // pred_check_branch
      %899 = sbr.rel (%p896) target = $region573
    $region572: #{tpu_custom_call.1} parent=1 // pred_region
      %s914 = sand.u32 1, 7
      %p915 = scmp.eq.s32.totalorder %s914, 0
      %p916 = pneg %p915
      // Predicated region
      $region585: #{tpu_custom_call.1} parent=572 // pred_check
        _
      $region586: #{tpu_custom_call.1} parent=572 // pred_check_branch
        %918 = sbr.rel (%p915) target = $region588
      $region587: #{tpu_custom_call.1} parent=572 // pred_region
        %s919 = sand.u32 1, 7
        %s920 = ssub.s32 1, %s919
        %s921 = scalar_lea.vmem %s893, %s920
        %s922 = ssub.s32 1, %s919
        %s923 = scalar_lea.vmem %s894, %s922 [#allocation2]
        %s924 = sshllo.u32 0, %s919
        loop: start=0, step=1, limit=1
        $region589: #{tpu_custom_call.1} parent=587 // loop_pre_header
          _
        $region590: #{tpu_custom_call.1} parent=587 // loop_header
          %s926 = sphi 0, %s930
          %p927 = scmp.ge.s32.totalorder %s926, 1
          %s931 = sphi %s921, %s921
          %s932 = sphi %s923, %s923
        $region591: #{tpu_custom_call.1} parent=587 // loop_header_branch
          %929 = sbr.rel (%p927) target = $region595
        $region592: #{tpu_custom_call.1} parent=587 // loop_body
          %v933 = vld [vmem:[%s931] sm:%s924]
          %934 = vst [vmem:[%s932] sm:%s924] %v933
        $region593: #{tpu_custom_call.1} parent=587 // loop_footer
          %s930 = sadd.s32 1, %s926
        $region594: #{tpu_custom_call.1} parent=587 // loop_footer_branch
          %925 = sbr.rel target = $region590
        $region595: #{tpu_custom_call.1} parent=587 // loop_exit
          _
      $region588: #{tpu_custom_call.1} parent=572 // pred_fallthru
        _
    $region573: #{tpu_custom_call.1} parent=1 // pred_fallthru
      _
    // Predicated region
    $region574: #{tpu_custom_call.1} parent=1 // pred_check
      %p900 = pneg %p896
    $region575: #{tpu_custom_call.1} parent=1 // pred_check_branch
      %902 = sbr.rel (%p900) target = $region577
    $region576: #{tpu_custom_call.1} parent=1 // pred_region
      %s903 = sshllo.u32 0, 1
      loop: start=0, step=1, limit=1
      $region578: #{tpu_custom_call.1} parent=576 // loop_pre_header
        _
      $region579: #{tpu_custom_call.1} parent=576 // loop_header
        %s905 = sphi 0, %s909
        %p906 = scmp.ge.s32.totalorder %s905, 1
        %s910 = sphi %s893, %s893
        %s911 = sphi %s894, %s894
      $region580: #{tpu_custom_call.1} parent=576 // loop_header_branch
        %908 = sbr.rel (%p906) target = $region584
      $region581: #{tpu_custom_call.1} parent=576 // loop_body
        %v912 = vld [vmem:[%s910] sm:%s903]
        %913 = vst [vmem:[%s911] sm:%s903] %v912
      $region582: #{tpu_custom_call.1} parent=576 // loop_footer
        %s909 = sadd.s32 1, %s905
      $region583: #{tpu_custom_call.1} parent=576 // loop_footer_branch
        %904 = sbr.rel target = $region579
      $region584: #{tpu_custom_call.1} parent=576 // loop_exit
        _
    $region577: #{tpu_custom_call.1} parent=1 // pred_fallthru
      _
    // Predicated region
    $region596: #{tpu_custom_call.1} parent=1 // pred_check
      _
    $region597: #{tpu_custom_call.1} parent=1 // pred_check_branch
      %937 = sbr.rel (0) target = $region599
    $region598: #{tpu_custom_call.1} parent=1 // pred_region
      %938 = vsyncadd %s137, 16
    $region599: #{tpu_custom_call.1} parent=1 // pred_fallthru
      _
    %s939 = sld [smem:[#allocation5 + $0x13]]
    %s940 = scalar_lea.vmem %s1, %s939
    %s941 = scalar_lea.vmem [#allocation2], 19
    %p943 = scmp.lt.u32.totalorder 1, 8
    %p944 = pneg %p943
    // Predicated region
    $region600: #{tpu_custom_call.1} parent=1 // pred_check
      _
    $region601: #{tpu_custom_call.1} parent=1 // pred_check_branch
      %946 = sbr.rel (%p943) target = $region603
    $region602: #{tpu_custom_call.1} parent=1 // pred_region
      %s961 = sand.u32 1, 7
      %p962 = scmp.eq.s32.totalorder %s961, 0
      %p963 = pneg %p962
      // Predicated region
      $region615: #{tpu_custom_call.1} parent=602 // pred_check
        _
      $region616: #{tpu_custom_call.1} parent=602 // pred_check_branch
        %965 = sbr.rel (%p962) target = $region618
      $region617: #{tpu_custom_call.1} parent=602 // pred_region
        %s966 = sand.u32 1, 7
        %s967 = ssub.s32 1, %s966
        %s968 = scalar_lea.vmem %s940, %s967
        %s969 = ssub.s32 1, %s966
        %s970 = scalar_lea.vmem %s941, %s969 [#allocation2]
        %s971 = sshllo.u32 0, %s966
        loop: start=0, step=1, limit=1
        $region619: #{tpu_custom_call.1} parent=617 // loop_pre_header
          _
        $region620: #{tpu_custom_call.1} parent=617 // loop_header
          %s973 = sphi 0, %s977
          %p974 = scmp.ge.s32.totalorder %s973, 1
          %s978 = sphi %s968, %s968
          %s979 = sphi %s970, %s970
        $region621: #{tpu_custom_call.1} parent=617 // loop_header_branch
          %976 = sbr.rel (%p974) target = $region625
        $region622: #{tpu_custom_call.1} parent=617 // loop_body
          %v980 = vld [vmem:[%s978] sm:%s971]
          %981 = vst [vmem:[%s979] sm:%s971] %v980
        $region623: #{tpu_custom_call.1} parent=617 // loop_footer
          %s977 = sadd.s32 1, %s973
        $region624: #{tpu_custom_call.1} parent=617 // loop_footer_branch
          %972 = sbr.rel target = $region620
        $region625: #{tpu_custom_call.1} parent=617 // loop_exit
          _
      $region618: #{tpu_custom_call.1} parent=602 // pred_fallthru
        _
    $region603: #{tpu_custom_call.1} parent=1 // pred_fallthru
      _
    // Predicated region
    $region604: #{tpu_custom_call.1} parent=1 // pred_check
      %p947 = pneg %p943
    $region605: #{tpu_custom_call.1} parent=1 // pred_check_branch
      %949 = sbr.rel (%p947) target = $region607
    $region606: #{tpu_custom_call.1} parent=1 // pred_region
      %s950 = sshllo.u32 0, 1
      loop: start=0, step=1, limit=1
      $region608: #{tpu_custom_call.1} parent=606 // loop_pre_header
        _
      $region609: #{tpu_custom_call.1} parent=606 // loop_header
        %s952 = sphi 0, %s956
        %p953 = scmp.ge.s32.totalorder %s952, 1
        %s957 = sphi %s940, %s940
        %s958 = sphi %s941, %s941
      $region610: #{tpu_custom_call.1} parent=606 // loop_header_branch
        %955 = sbr.rel (%p953) target = $region614
      $region611: #{tpu_custom_call.1} parent=606 // loop_body
        %v959 = vld [vmem:[%s957] sm:%s950]
        %960 = vst [vmem:[%s958] sm:%s950] %v959
      $region612: #{tpu_custom_call.1} parent=606 // loop_footer
        %s956 = sadd.s32 1, %s952
      $region613: #{tpu_custom_call.1} parent=606 // loop_footer_branch
        %951 = sbr.rel target = $region609
      $region614: #{tpu_custom_call.1} parent=606 // loop_exit
        _
    $region607: #{tpu_custom_call.1} parent=1 // pred_fallthru
      _
    // Predicated region
    $region626: #{tpu_custom_call.1} parent=1 // pred_check
      _
    $region627: #{tpu_custom_call.1} parent=1 // pred_check_branch
      %984 = sbr.rel (0) target = $region629
    $region628: #{tpu_custom_call.1} parent=1 // pred_region
      %985 = vsyncadd %s185, 16
    $region629: #{tpu_custom_call.1} parent=1 // pred_fallthru
      _
    %s986 = sld [smem:[#allocation5 + $0x14]]
    %s987 = scalar_lea.vmem %s1, %s986
    %s988 = scalar_lea.vmem [#allocation2], 20
    %p990 = scmp.lt.u32.totalorder 1, 8
    %p991 = pneg %p990
    // Predicated region
    $region630: #{tpu_custom_call.1} parent=1 // pred_check
      _
    $region631: #{tpu_custom_call.1} parent=1 // pred_check_branch
      %993 = sbr.rel (%p990) target = $region633
    $region632: #{tpu_custom_call.1} parent=1 // pred_region
      %s1008 = sand.u32 1, 7
      %p1009 = scmp.eq.s32.totalorder %s1008, 0
      %p1010 = pneg %p1009
      // Predicated region
      $region645: #{tpu_custom_call.1} parent=632 // pred_check
        _
      $region646: #{tpu_custom_call.1} parent=632 // pred_check_branch
        %1012 = sbr.rel (%p1009) target = $region648
      $region647: #{tpu_custom_call.1} parent=632 // pred_region
        %s1013 = sand.u32 1, 7
        %s1014 = ssub.s32 1, %s1013
        %s1015 = scalar_lea.vmem %s987, %s1014
        %s1016 = ssub.s32 1, %s1013
        %s1017 = scalar_lea.vmem %s988, %s1016 [#allocation2]
        %s1018 = sshllo.u32 0, %s1013
        loop: start=0, step=1, limit=1
        $region649: #{tpu_custom_call.1} parent=647 // loop_pre_header
          _
        $region650: #{tpu_custom_call.1} parent=647 // loop_header
          %s1020 = sphi 0, %s1024
          %p1021 = scmp.ge.s32.totalorder %s1020, 1
          %s1025 = sphi %s1015, %s1015
          %s1026 = sphi %s1017, %s1017
        $region651: #{tpu_custom_call.1} parent=647 // loop_header_branch
          %1023 = sbr.rel (%p1021) target = $region655
        $region652: #{tpu_custom_call.1} parent=647 // loop_body
          %v1027 = vld [vmem:[%s1025] sm:%s1018]
          %1028 = vst [vmem:[%s1026] sm:%s1018] %v1027
        $region653: #{tpu_custom_call.1} parent=647 // loop_footer
          %s1024 = sadd.s32 1, %s1020
        $region654: #{tpu_custom_call.1} parent=647 // loop_footer_branch
          %1019 = sbr.rel target = $region650
        $region655: #{tpu_custom_call.1} parent=647 // loop_exit
          _
      $region648: #{tpu_custom_call.1} parent=632 // pred_fallthru
        _
    $region633: #{tpu_custom_call.1} parent=1 // pred_fallthru
      _
    // Predicated region
    $region634: #{tpu_custom_call.1} parent=1 // pred_check
      %p994 = pneg %p990
    $region635: #{tpu_custom_call.1} parent=1 // pred_check_branch
      %996 = sbr.rel (%p994) target = $region637
    $region636: #{tpu_custom_call.1} parent=1 // pred_region
      %s997 = sshllo.u32 0, 1
      loop: start=0, step=1, limit=1
      $region638: #{tpu_custom_call.1} parent=636 // loop_pre_header
        _
      $region639: #{tpu_custom_call.1} parent=636 // loop_header
        %s999 = sphi 0, %s1003
        %p1000 = scmp.ge.s32.totalorder %s999, 1
        %s1004 = sphi %s987, %s987
        %s1005 = sphi %s988, %s988
      $region640: #{tpu_custom_call.1} parent=636 // loop_header_branch
        %1002 = sbr.rel (%p1000) target = $region644
      $region641: #{tpu_custom_call.1} parent=636 // loop_body
        %v1006 = vld [vmem:[%s1004] sm:%s997]
        %1007 = vst [vmem:[%s1005] sm:%s997] %v1006
      $region642: #{tpu_custom_call.1} parent=636 // loop_footer
        %s1003 = sadd.s32 1, %s999
      $region643: #{tpu_custom_call.1} parent=636 // loop_footer_branch
        %998 = sbr.rel target = $region639
      $region644: #{tpu_custom_call.1} parent=636 // loop_exit
        _
    $region637: #{tpu_custom_call.1} parent=1 // pred_fallthru
      _
    // Predicated region
    $region656: #{tpu_custom_call.1} parent=1 // pred_check
      _
    $region657: #{tpu_custom_call.1} parent=1 // pred_check_branch
      %1031 = sbr.rel (0) target = $region659
    $region658: #{tpu_custom_call.1} parent=1 // pred_region
      %1032 = vsyncadd %s233, 16
    $region659: #{tpu_custom_call.1} parent=1 // pred_fallthru
      _
    %s1033 = sld [smem:[#allocation5 + $0x15]]
    %s1034 = scalar_lea.vmem %s1, %s1033
    %s1035 = scalar_lea.vmem [#allocation2], 21
    %p1037 = scmp.lt.u32.totalorder 1, 8
    %p1038 = pneg %p1037
    // Predicated region
    $region660: #{tpu_custom_call.1} parent=1 // pred_check
      _
    $region661: #{tpu_custom_call.1} parent=1 // pred_check_branch
      %1040 = sbr.rel (%p1037) target = $region663
    $region662: #{tpu_custom_call.1} parent=1 // pred_region
      %s1055 = sand.u32 1, 7
      %p1056 = scmp.eq.s32.totalorder %s1055, 0
      %p1057 = pneg %p1056
      // Predicated region
      $region675: #{tpu_custom_call.1} parent=662 // pred_check
        _
      $region676: #{tpu_custom_call.1} parent=662 // pred_check_branch
        %1059 = sbr.rel (%p1056) target = $region678
      $region677: #{tpu_custom_call.1} parent=662 // pred_region
        %s1060 = sand.u32 1, 7
        %s1061 = ssub.s32 1, %s1060
        %s1062 = scalar_lea.vmem %s1034, %s1061
        %s1063 = ssub.s32 1, %s1060
        %s1064 = scalar_lea.vmem %s1035, %s1063 [#allocation2]
        %s1065 = sshllo.u32 0, %s1060
        loop: start=0, step=1, limit=1
        $region679: #{tpu_custom_call.1} parent=677 // loop_pre_header
          _
        $region680: #{tpu_custom_call.1} parent=677 // loop_header
          %s1067 = sphi 0, %s1071
          %p1068 = scmp.ge.s32.totalorder %s1067, 1
          %s1072 = sphi %s1062, %s1062
          %s1073 = sphi %s1064, %s1064
        $region681: #{tpu_custom_call.1} parent=677 // loop_header_branch
          %1070 = sbr.rel (%p1068) target = $region685
        $region682: #{tpu_custom_call.1} parent=677 // loop_body
          %v1074 = vld [vmem:[%s1072] sm:%s1065]
          %1075 = vst [vmem:[%s1073] sm:%s1065] %v1074
        $region683: #{tpu_custom_call.1} parent=677 // loop_footer
          %s1071 = sadd.s32 1, %s1067
        $region684: #{tpu_custom_call.1} parent=677 // loop_footer_branch
          %1066 = sbr.rel target = $region680
        $region685: #{tpu_custom_call.1} parent=677 // loop_exit
          _
      $region678: #{tpu_custom_call.1} parent=662 // pred_fallthru
        _
    $region663: #{tpu_custom_call.1} parent=1 // pred_fallthru
      _
    // Predicated region
    $region664: #{tpu_custom_call.1} parent=1 // pred_check
      %p1041 = pneg %p1037
    $region665: #{tpu_custom_call.1} parent=1 // pred_check_branch
      %1043 = sbr.rel (%p1041) target = $region667
    $region666: #{tpu_custom_call.1} parent=1 // pred_region
      %s1044 = sshllo.u32 0, 1
      loop: start=0, step=1, limit=1
      $region668: #{tpu_custom_call.1} parent=666 // loop_pre_header
        _
      $region669: #{tpu_custom_call.1} parent=666 // loop_header
        %s1046 = sphi 0, %s1050
        %p1047 = scmp.ge.s32.totalorder %s1046, 1
        %s1051 = sphi %s1034, %s1034
        %s1052 = sphi %s1035, %s1035
      $region670: #{tpu_custom_call.1} parent=666 // loop_header_branch
        %1049 = sbr.rel (%p1047) target = $region674
      $region671: #{tpu_custom_call.1} parent=666 // loop_body
        %v1053 = vld [vmem:[%s1051] sm:%s1044]
        %1054 = vst [vmem:[%s1052] sm:%s1044] %v1053
      $region672: #{tpu_custom_call.1} parent=666 // loop_footer
        %s1050 = sadd.s32 1, %s1046
      $region673: #{tpu_custom_call.1} parent=666 // loop_footer_branch
        %1045 = sbr.rel target = $region669
      $region674: #{tpu_custom_call.1} parent=666 // loop_exit
        _
    $region667: #{tpu_custom_call.1} parent=1 // pred_fallthru
      _
    // Predicated region
    $region686: #{tpu_custom_call.1} parent=1 // pred_check
      _
    $region687: #{tpu_custom_call.1} parent=1 // pred_check_branch
      %1078 = sbr.rel (0) target = $region689
    $region688: #{tpu_custom_call.1} parent=1 // pred_region
      %1079 = vsyncadd %s281, 16
    $region689: #{tpu_custom_call.1} parent=1 // pred_fallthru
      _
    %s1080 = sld [smem:[#allocation5 + $0x16]]
    %s1081 = scalar_lea.vmem %s1, %s1080
    %s1082 = scalar_lea.vmem [#allocation2], 22
    %p1084 = scmp.lt.u32.totalorder 1, 8
    %p1085 = pneg %p1084
    // Predicated region
    $region690: #{tpu_custom_call.1} parent=1 // pred_check
      _
    $region691: #{tpu_custom_call.1} parent=1 // pred_check_branch
      %1087 = sbr.rel (%p1084) target = $region693
    $region692: #{tpu_custom_call.1} parent=1 // pred_region
      %s1102 = sand.u32 1, 7
      %p1103 = scmp.eq.s32.totalorder %s1102, 0
      %p1104 = pneg %p1103
      // Predicated region
      $region705: #{tpu_custom_call.1} parent=692 // pred_check
        _
      $region706: #{tpu_custom_call.1} parent=692 // pred_check_branch
        %1106 = sbr.rel (%p1103) target = $region708
      $region707: #{tpu_custom_call.1} parent=692 // pred_region
        %s1107 = sand.u32 1, 7
        %s1108 = ssub.s32 1, %s1107
        %s1109 = scalar_lea.vmem %s1081, %s1108
        %s1110 = ssub.s32 1, %s1107
        %s1111 = scalar_lea.vmem %s1082, %s1110 [#allocation2]
        %s1112 = sshllo.u32 0, %s1107
        loop: start=0, step=1, limit=1
        $region709: #{tpu_custom_call.1} parent=707 // loop_pre_header
          _
        $region710: #{tpu_custom_call.1} parent=707 // loop_header
          %s1114 = sphi 0, %s1118
          %p1115 = scmp.ge.s32.totalorder %s1114, 1
          %s1119 = sphi %s1109, %s1109
          %s1120 = sphi %s1111, %s1111
        $region711: #{tpu_custom_call.1} parent=707 // loop_header_branch
          %1117 = sbr.rel (%p1115) target = $region715
        $region712: #{tpu_custom_call.1} parent=707 // loop_body
          %v1121 = vld [vmem:[%s1119] sm:%s1112]
          %1122 = vst [vmem:[%s1120] sm:%s1112] %v1121
        $region713: #{tpu_custom_call.1} parent=707 // loop_footer
          %s1118 = sadd.s32 1, %s1114
        $region714: #{tpu_custom_call.1} parent=707 // loop_footer_branch
          %1113 = sbr.rel target = $region710
        $region715: #{tpu_custom_call.1} parent=707 // loop_exit
          _
      $region708: #{tpu_custom_call.1} parent=692 // pred_fallthru
        _
    $region693: #{tpu_custom_call.1} parent=1 // pred_fallthru
      _
    // Predicated region
    $region694: #{tpu_custom_call.1} parent=1 // pred_check
      %p1088 = pneg %p1084
    $region695: #{tpu_custom_call.1} parent=1 // pred_check_branch
      %1090 = sbr.rel (%p1088) target = $region697
    $region696: #{tpu_custom_call.1} parent=1 // pred_region
      %s1091 = sshllo.u32 0, 1
      loop: start=0, step=1, limit=1
      $region698: #{tpu_custom_call.1} parent=696 // loop_pre_header
        _
      $region699: #{tpu_custom_call.1} parent=696 // loop_header
        %s1093 = sphi 0, %s1097
        %p1094 = scmp.ge.s32.totalorder %s1093, 1
        %s1098 = sphi %s1081, %s1081
        %s1099 = sphi %s1082, %s1082
      $region700: #{tpu_custom_call.1} parent=696 // loop_header_branch
        %1096 = sbr.rel (%p1094) target = $region704
      $region701: #{tpu_custom_call.1} parent=696 // loop_body
        %v1100 = vld [vmem:[%s1098] sm:%s1091]
        %1101 = vst [vmem:[%s1099] sm:%s1091] %v1100
      $region702: #{tpu_custom_call.1} parent=696 // loop_footer
        %s1097 = sadd.s32 1, %s1093
      $region703: #{tpu_custom_call.1} parent=696 // loop_footer_branch
        %1092 = sbr.rel target = $region699
      $region704: #{tpu_custom_call.1} parent=696 // loop_exit
        _
    $region697: #{tpu_custom_call.1} parent=1 // pred_fallthru
      _
    // Predicated region
    $region716: #{tpu_custom_call.1} parent=1 // pred_check
      _
    $region717: #{tpu_custom_call.1} parent=1 // pred_check_branch
      %1125 = sbr.rel (0) target = $region719
    $region718: #{tpu_custom_call.1} parent=1 // pred_region
      %1126 = vsyncadd %s329, 16
    $region719: #{tpu_custom_call.1} parent=1 // pred_fallthru
      _
    %s1127 = sld [smem:[#allocation5 + $0x17]]
    %s1128 = scalar_lea.vmem %s1, %s1127
    %s1129 = scalar_lea.vmem [#allocation2], 23
    %p1131 = scmp.lt.u32.totalorder 1, 8
    %p1132 = pneg %p1131
    // Predicated region
    $region720: #{tpu_custom_call.1} parent=1 // pred_check
      _
    $region721: #{tpu_custom_call.1} parent=1 // pred_check_branch
      %1134 = sbr.rel (%p1131) target = $region723
    $region722: #{tpu_custom_call.1} parent=1 // pred_region
      %s1149 = sand.u32 1, 7
      %p1150 = scmp.eq.s32.totalorder %s1149, 0
      %p1151 = pneg %p1150
      // Predicated region
      $region735: #{tpu_custom_call.1} parent=722 // pred_check
        _
      $region736: #{tpu_custom_call.1} parent=722 // pred_check_branch
        %1153 = sbr.rel (%p1150) target = $region738
      $region737: #{tpu_custom_call.1} parent=722 // pred_region
        %s1154 = sand.u32 1, 7
        %s1155 = ssub.s32 1, %s1154
        %s1156 = scalar_lea.vmem %s1128, %s1155
        %s1157 = ssub.s32 1, %s1154
        %s1158 = scalar_lea.vmem %s1129, %s1157 [#allocation2]
        %s1159 = sshllo.u32 0, %s1154
        loop: start=0, step=1, limit=1
        $region739: #{tpu_custom_call.1} parent=737 // loop_pre_header
          _
        $region740: #{tpu_custom_call.1} parent=737 // loop_header
          %s1161 = sphi 0, %s1165
          %p1162 = scmp.ge.s32.totalorder %s1161, 1
          %s1166 = sphi %s1156, %s1156
          %s1167 = sphi %s1158, %s1158
        $region741: #{tpu_custom_call.1} parent=737 // loop_header_branch
          %1164 = sbr.rel (%p1162) target = $region745
        $region742: #{tpu_custom_call.1} parent=737 // loop_body
          %v1168 = vld [vmem:[%s1166] sm:%s1159]
          %1169 = vst [vmem:[%s1167] sm:%s1159] %v1168
        $region743: #{tpu_custom_call.1} parent=737 // loop_footer
          %s1165 = sadd.s32 1, %s1161
        $region744: #{tpu_custom_call.1} parent=737 // loop_footer_branch
          %1160 = sbr.rel target = $region740
        $region745: #{tpu_custom_call.1} parent=737 // loop_exit
          _
      $region738: #{tpu_custom_call.1} parent=722 // pred_fallthru
        _
    $region723: #{tpu_custom_call.1} parent=1 // pred_fallthru
      _
    // Predicated region
    $region724: #{tpu_custom_call.1} parent=1 // pred_check
      %p1135 = pneg %p1131
    $region725: #{tpu_custom_call.1} parent=1 // pred_check_branch
      %1137 = sbr.rel (%p1135) target = $region727
    $region726: #{tpu_custom_call.1} parent=1 // pred_region
      %s1138 = sshllo.u32 0, 1
      loop: start=0, step=1, limit=1
      $region728: #{tpu_custom_call.1} parent=726 // loop_pre_header
        _
      $region729: #{tpu_custom_call.1} parent=726 // loop_header
        %s1140 = sphi 0, %s1144
        %p1141 = scmp.ge.s32.totalorder %s1140, 1
        %s1145 = sphi %s1128, %s1128
        %s1146 = sphi %s1129, %s1129
      $region730: #{tpu_custom_call.1} parent=726 // loop_header_branch
        %1143 = sbr.rel (%p1141) target = $region734
      $region731: #{tpu_custom_call.1} parent=726 // loop_body
        %v1147 = vld [vmem:[%s1145] sm:%s1138]
        %1148 = vst [vmem:[%s1146] sm:%s1138] %v1147
      $region732: #{tpu_custom_call.1} parent=726 // loop_footer
        %s1144 = sadd.s32 1, %s1140
      $region733: #{tpu_custom_call.1} parent=726 // loop_footer_branch
        %1139 = sbr.rel target = $region729
      $region734: #{tpu_custom_call.1} parent=726 // loop_exit
        _
    $region727: #{tpu_custom_call.1} parent=1 // pred_fallthru
      _
    // Predicated region
    $region746: #{tpu_custom_call.1} parent=1 // pred_check
      _
    $region747: #{tpu_custom_call.1} parent=1 // pred_check_branch
      %1172 = sbr.rel (0) target = $region749
    $region748: #{tpu_custom_call.1} parent=1 // pred_region
      %1173 = vsyncadd %s377, 16
    $region749: #{tpu_custom_call.1} parent=1 // pred_fallthru
      _
    %s1174 = sld [smem:[#allocation5 + $0x18]]
    %s1175 = scalar_lea.vmem %s1, %s1174
    %s1176 = scalar_lea.vmem [#allocation2], 24
    %p1178 = scmp.lt.u32.totalorder 1, 8
    %p1179 = pneg %p1178
    // Predicated region
    $region750: #{tpu_custom_call.1} parent=1 // pred_check
      _
    $region751: #{tpu_custom_call.1} parent=1 // pred_check_branch
      %1181 = sbr.rel (%p1178) target = $region753
    $region752: #{tpu_custom_call.1} parent=1 // pred_region
      %s1196 = sand.u32 1, 7
      %p1197 = scmp.eq.s32.totalorder %s1196, 0
      %p1198 = pneg %p1197
      // Predicated region
      $region765: #{tpu_custom_call.1} parent=752 // pred_check
        _
      $region766: #{tpu_custom_call.1} parent=752 // pred_check_branch
        %1200 = sbr.rel (%p1197) target = $region768
      $region767: #{tpu_custom_call.1} parent=752 // pred_region
        %s1201 = sand.u32 1, 7
        %s1202 = ssub.s32 1, %s1201
        %s1203 = scalar_lea.vmem %s1175, %s1202
        %s1204 = ssub.s32 1, %s1201
        %s1205 = scalar_lea.vmem %s1176, %s1204 [#allocation2]
        %s1206 = sshllo.u32 0, %s1201
        loop: start=0, step=1, limit=1
        $region769: #{tpu_custom_call.1} parent=767 // loop_pre_header
          _
        $region770: #{tpu_custom_call.1} parent=767 // loop_header
          %s1208 = sphi 0, %s1212
          %p1209 = scmp.ge.s32.totalorder %s1208, 1
          %s1213 = sphi %s1203, %s1203
          %s1214 = sphi %s1205, %s1205
        $region771: #{tpu_custom_call.1} parent=767 // loop_header_branch
          %1211 = sbr.rel (%p1209) target = $region775
        $region772: #{tpu_custom_call.1} parent=767 // loop_body
          %v1215 = vld [vmem:[%s1213] sm:%s1206]
          %1216 = vst [vmem:[%s1214] sm:%s1206] %v1215
        $region773: #{tpu_custom_call.1} parent=767 // loop_footer
          %s1212 = sadd.s32 1, %s1208
        $region774: #{tpu_custom_call.1} parent=767 // loop_footer_branch
          %1207 = sbr.rel target = $region770
        $region775: #{tpu_custom_call.1} parent=767 // loop_exit
          _
      $region768: #{tpu_custom_call.1} parent=752 // pred_fallthru
        _
    $region753: #{tpu_custom_call.1} parent=1 // pred_fallthru
      _
    // Predicated region
    $region754: #{tpu_custom_call.1} parent=1 // pred_check
      %p1182 = pneg %p1178
    $region755: #{tpu_custom_call.1} parent=1 // pred_check_branch
      %1184 = sbr.rel (%p1182) target = $region757
    $region756: #{tpu_custom_call.1} parent=1 // pred_region
      %s1185 = sshllo.u32 0, 1
      loop: start=0, step=1, limit=1
      $region758: #{tpu_custom_call.1} parent=756 // loop_pre_header
        _
      $region759: #{tpu_custom_call.1} parent=756 // loop_header
        %s1187 = sphi 0, %s1191
        %p1188 = scmp.ge.s32.totalorder %s1187, 1
        %s1192 = sphi %s1175, %s1175
        %s1193 = sphi %s1176, %s1176
      $region760: #{tpu_custom_call.1} parent=756 // loop_header_branch
        %1190 = sbr.rel (%p1188) target = $region764
      $region761: #{tpu_custom_call.1} parent=756 // loop_body
        %v1194 = vld [vmem:[%s1192] sm:%s1185]
        %1195 = vst [vmem:[%s1193] sm:%s1185] %v1194
      $region762: #{tpu_custom_call.1} parent=756 // loop_footer
        %s1191 = sadd.s32 1, %s1187
      $region763: #{tpu_custom_call.1} parent=756 // loop_footer_branch
        %1186 = sbr.rel target = $region759
      $region764: #{tpu_custom_call.1} parent=756 // loop_exit
        _
    $region757: #{tpu_custom_call.1} parent=1 // pred_fallthru
      _
    // Predicated region
    $region776: #{tpu_custom_call.1} parent=1 // pred_check
      _
    $region777: #{tpu_custom_call.1} parent=1 // pred_check_branch
      %1219 = sbr.rel (0) target = $region779
    $region778: #{tpu_custom_call.1} parent=1 // pred_region
      %1220 = vsyncadd [#allocation3], 16
    $region779: #{tpu_custom_call.1} parent=1 // pred_fallthru
      _
    %s1221 = sld [smem:[#allocation5 + $0x19]]
    %s1222 = scalar_lea.vmem %s1, %s1221
    %s1223 = scalar_lea.vmem [#allocation2], 25
    %p1225 = scmp.lt.u32.totalorder 1, 8
    %p1226 = pneg %p1225
    // Predicated region
    $region780: #{tpu_custom_call.1} parent=1 // pred_check
      _
    $region781: #{tpu_custom_call.1} parent=1 // pred_check_branch
      %1228 = sbr.rel (%p1225) target = $region783
    $region782: #{tpu_custom_call.1} parent=1 // pred_region
      %s1243 = sand.u32 1, 7
      %p1244 = scmp.eq.s32.totalorder %s1243, 0
      %p1245 = pneg %p1244
      // Predicated region
      $region795: #{tpu_custom_call.1} parent=782 // pred_check
        _
      $region796: #{tpu_custom_call.1} parent=782 // pred_check_branch
        %1247 = sbr.rel (%p1244) target = $region798
      $region797: #{tpu_custom_call.1} parent=782 // pred_region
        %s1248 = sand.u32 1, 7
        %s1249 = ssub.s32 1, %s1248
        %s1250 = scalar_lea.vmem %s1222, %s1249
        %s1251 = ssub.s32 1, %s1248
        %s1252 = scalar_lea.vmem %s1223, %s1251 [#allocation2]
        %s1253 = sshllo.u32 0, %s1248
        loop: start=0, step=1, limit=1
        $region799: #{tpu_custom_call.1} parent=797 // loop_pre_header
          _
        $region800: #{tpu_custom_call.1} parent=797 // loop_header
          %s1255 = sphi 0, %s1259
          %p1256 = scmp.ge.s32.totalorder %s1255, 1
          %s1260 = sphi %s1250, %s1250
          %s1261 = sphi %s1252, %s1252
        $region801: #{tpu_custom_call.1} parent=797 // loop_header_branch
          %1258 = sbr.rel (%p1256) target = $region805
        $region802: #{tpu_custom_call.1} parent=797 // loop_body
          %v1262 = vld [vmem:[%s1260] sm:%s1253]
          %1263 = vst [vmem:[%s1261] sm:%s1253] %v1262
        $region803: #{tpu_custom_call.1} parent=797 // loop_footer
          %s1259 = sadd.s32 1, %s1255
        $region804: #{tpu_custom_call.1} parent=797 // loop_footer_branch
          %1254 = sbr.rel target = $region800
        $region805: #{tpu_custom_call.1} parent=797 // loop_exit
          _
      $region798: #{tpu_custom_call.1} parent=782 // pred_fallthru
        _
    $region783: #{tpu_custom_call.1} parent=1 // pred_fallthru
      _
    // Predicated region
    $region784: #{tpu_custom_call.1} parent=1 // pred_check
      %p1229 = pneg %p1225
    $region785: #{tpu_custom_call.1} parent=1 // pred_check_branch
      %1231 = sbr.rel (%p1229) target = $region787
    $region786: #{tpu_custom_call.1} parent=1 // pred_region
      %s1232 = sshllo.u32 0, 1
      loop: start=0, step=1, limit=1
      $region788: #{tpu_custom_call.1} parent=786 // loop_pre_header
        _
      $region789: #{tpu_custom_call.1} parent=786 // loop_header
        %s1234 = sphi 0, %s1238
        %p1235 = scmp.ge.s32.totalorder %s1234, 1
        %s1239 = sphi %s1222, %s1222
        %s1240 = sphi %s1223, %s1223
      $region790: #{tpu_custom_call.1} parent=786 // loop_header_branch
        %1237 = sbr.rel (%p1235) target = $region794
      $region791: #{tpu_custom_call.1} parent=786 // loop_body
        %v1241 = vld [vmem:[%s1239] sm:%s1232]
        %1242 = vst [vmem:[%s1240] sm:%s1232] %v1241
      $region792: #{tpu_custom_call.1} parent=786 // loop_footer
        %s1238 = sadd.s32 1, %s1234
      $region793: #{tpu_custom_call.1} parent=786 // loop_footer_branch
        %1233 = sbr.rel target = $region789
      $region794: #{tpu_custom_call.1} parent=786 // loop_exit
        _
    $region787: #{tpu_custom_call.1} parent=1 // pred_fallthru
      _
    // Predicated region
    $region806: #{tpu_custom_call.1} parent=1 // pred_check
      _
    $region807: #{tpu_custom_call.1} parent=1 // pred_check_branch
      %1266 = sbr.rel (0) target = $region809
    $region808: #{tpu_custom_call.1} parent=1 // pred_region
      %1267 = vsyncadd %s89, 16
    $region809: #{tpu_custom_call.1} parent=1 // pred_fallthru
      _
    %s1268 = sld [smem:[#allocation5 + $0x1a]]
    %s1269 = scalar_lea.vmem %s1, %s1268
    %s1270 = scalar_lea.vmem [#allocation2], 26
    %p1272 = scmp.lt.u32.totalorder 1, 8
    %p1273 = pneg %p1272
    // Predicated region
    $region810: #{tpu_custom_call.1} parent=1 // pred_check
      _
    $region811: #{tpu_custom_call.1} parent=1 // pred_check_branch
      %1275 = sbr.rel (%p1272) target = $region813
    $region812: #{tpu_custom_call.1} parent=1 // pred_region
      %s1290 = sand.u32 1, 7
      %p1291 = scmp.eq.s32.totalorder %s1290, 0
      %p1292 = pneg %p1291
      // Predicated region
      $region825: #{tpu_custom_call.1} parent=812 // pred_check
        _
      $region826: #{tpu_custom_call.1} parent=812 // pred_check_branch
        %1294 = sbr.rel (%p1291) target = $region828
      $region827: #{tpu_custom_call.1} parent=812 // pred_region
        %s1295 = sand.u32 1, 7
        %s1296 = ssub.s32 1, %s1295
        %s1297 = scalar_lea.vmem %s1269, %s1296
        %s1298 = ssub.s32 1, %s1295
        %s1299 = scalar_lea.vmem %s1270, %s1298 [#allocation2]
        %s1300 = sshllo.u32 0, %s1295
        loop: start=0, step=1, limit=1
        $region829: #{tpu_custom_call.1} parent=827 // loop_pre_header
          _
        $region830: #{tpu_custom_call.1} parent=827 // loop_header
          %s1302 = sphi 0, %s1306
          %p1303 = scmp.ge.s32.totalorder %s1302, 1
          %s1307 = sphi %s1297, %s1297
          %s1308 = sphi %s1299, %s1299
        $region831: #{tpu_custom_call.1} parent=827 // loop_header_branch
          %1305 = sbr.rel (%p1303) target = $region835
        $region832: #{tpu_custom_call.1} parent=827 // loop_body
          %v1309 = vld [vmem:[%s1307] sm:%s1300]
          %1310 = vst [vmem:[%s1308] sm:%s1300] %v1309
        $region833: #{tpu_custom_call.1} parent=827 // loop_footer
          %s1306 = sadd.s32 1, %s1302
        $region834: #{tpu_custom_call.1} parent=827 // loop_footer_branch
          %1301 = sbr.rel target = $region830
        $region835: #{tpu_custom_call.1} parent=827 // loop_exit
          _
      $region828: #{tpu_custom_call.1} parent=812 // pred_fallthru
        _
    $region813: #{tpu_custom_call.1} parent=1 // pred_fallthru
      _
    // Predicated region
    $region814: #{tpu_custom_call.1} parent=1 // pred_check
      %p1276 = pneg %p1272
    $region815: #{tpu_custom_call.1} parent=1 // pred_check_branch
      %1278 = sbr.rel (%p1276) target = $region817
    $region816: #{tpu_custom_call.1} parent=1 // pred_region
      %s1279 = sshllo.u32 0, 1
      loop: start=0, step=1, limit=1
      $region818: #{tpu_custom_call.1} parent=816 // loop_pre_header
        _
      $region819: #{tpu_custom_call.1} parent=816 // loop_header
        %s1281 = sphi 0, %s1285
        %p1282 = scmp.ge.s32.totalorder %s1281, 1
        %s1286 = sphi %s1269, %s1269
        %s1287 = sphi %s1270, %s1270
      $region820: #{tpu_custom_call.1} parent=816 // loop_header_branch
        %1284 = sbr.rel (%p1282) target = $region824
      $region821: #{tpu_custom_call.1} parent=816 // loop_body
        %v1288 = vld [vmem:[%s1286] sm:%s1279]
        %1289 = vst [vmem:[%s1287] sm:%s1279] %v1288
      $region822: #{tpu_custom_call.1} parent=816 // loop_footer
        %s1285 = sadd.s32 1, %s1281
      $region823: #{tpu_custom_call.1} parent=816 // loop_footer_branch
        %1280 = sbr.rel target = $region819
      $region824: #{tpu_custom_call.1} parent=816 // loop_exit
        _
    $region817: #{tpu_custom_call.1} parent=1 // pred_fallthru
      _
    // Predicated region
    $region836: #{tpu_custom_call.1} parent=1 // pred_check
      _
    $region837: #{tpu_custom_call.1} parent=1 // pred_check_branch
      %1313 = sbr.rel (0) target = $region839
    $region838: #{tpu_custom_call.1} parent=1 // pred_region
      %1314 = vsyncadd %s137, 16
    $region839: #{tpu_custom_call.1} parent=1 // pred_fallthru
      _
    %s1315 = sld [smem:[#allocation5 + $0x1b]]
    %s1316 = scalar_lea.vmem %s1, %s1315
    %s1317 = scalar_lea.vmem [#allocation2], 27
    %p1319 = scmp.lt.u32.totalorder 1, 8
    %p1320 = pneg %p1319
    // Predicated region
    $region840: #{tpu_custom_call.1} parent=1 // pred_check
      _
    $region841: #{tpu_custom_call.1} parent=1 // pred_check_branch
      %1322 = sbr.rel (%p1319) target = $region843
    $region842: #{tpu_custom_call.1} parent=1 // pred_region
      %s1337 = sand.u32 1, 7
      %p1338 = scmp.eq.s32.totalorder %s1337, 0
      %p1339 = pneg %p1338
      // Predicated region
      $region855: #{tpu_custom_call.1} parent=842 // pred_check
        _
      $region856: #{tpu_custom_call.1} parent=842 // pred_check_branch
        %1341 = sbr.rel (%p1338) target = $region858
      $region857: #{tpu_custom_call.1} parent=842 // pred_region
        %s1342 = sand.u32 1, 7
        %s1343 = ssub.s32 1, %s1342
        %s1344 = scalar_lea.vmem %s1316, %s1343
        %s1345 = ssub.s32 1, %s1342
        %s1346 = scalar_lea.vmem %s1317, %s1345 [#allocation2]
        %s1347 = sshllo.u32 0, %s1342
        loop: start=0, step=1, limit=1
        $region859: #{tpu_custom_call.1} parent=857 // loop_pre_header
          _
        $region860: #{tpu_custom_call.1} parent=857 // loop_header
          %s1349 = sphi 0, %s1353
          %p1350 = scmp.ge.s32.totalorder %s1349, 1
          %s1354 = sphi %s1344, %s1344
          %s1355 = sphi %s1346, %s1346
        $region861: #{tpu_custom_call.1} parent=857 // loop_header_branch
          %1352 = sbr.rel (%p1350) target = $region865
        $region862: #{tpu_custom_call.1} parent=857 // loop_body
          %v1356 = vld [vmem:[%s1354] sm:%s1347]
          %1357 = vst [vmem:[%s1355] sm:%s1347] %v1356
        $region863: #{tpu_custom_call.1} parent=857 // loop_footer
          %s1353 = sadd.s32 1, %s1349
        $region864: #{tpu_custom_call.1} parent=857 // loop_footer_branch
          %1348 = sbr.rel target = $region860
        $region865: #{tpu_custom_call.1} parent=857 // loop_exit
          _
      $region858: #{tpu_custom_call.1} parent=842 // pred_fallthru
        _
    $region843: #{tpu_custom_call.1} parent=1 // pred_fallthru
      _
    // Predicated region
    $region844: #{tpu_custom_call.1} parent=1 // pred_check
      %p1323 = pneg %p1319
    $region845: #{tpu_custom_call.1} parent=1 // pred_check_branch
      %1325 = sbr.rel (%p1323) target = $region847
    $region846: #{tpu_custom_call.1} parent=1 // pred_region
      %s1326 = sshllo.u32 0, 1
      loop: start=0, step=1, limit=1
      $region848: #{tpu_custom_call.1} parent=846 // loop_pre_header
        _
      $region849: #{tpu_custom_call.1} parent=846 // loop_header
        %s1328 = sphi 0, %s1332
        %p1329 = scmp.ge.s32.totalorder %s1328, 1
        %s1333 = sphi %s1316, %s1316
        %s1334 = sphi %s1317, %s1317
      $region850: #{tpu_custom_call.1} parent=846 // loop_header_branch
        %1331 = sbr.rel (%p1329) target = $region854
      $region851: #{tpu_custom_call.1} parent=846 // loop_body
        %v1335 = vld [vmem:[%s1333] sm:%s1326]
        %1336 = vst [vmem:[%s1334] sm:%s1326] %v1335
      $region852: #{tpu_custom_call.1} parent=846 // loop_footer
        %s1332 = sadd.s32 1, %s1328
      $region853: #{tpu_custom_call.1} parent=846 // loop_footer_branch
        %1327 = sbr.rel target = $region849
      $region854: #{tpu_custom_call.1} parent=846 // loop_exit
        _
    $region847: #{tpu_custom_call.1} parent=1 // pred_fallthru
      _
    // Predicated region
    $region866: #{tpu_custom_call.1} parent=1 // pred_check
      _
    $region867: #{tpu_custom_call.1} parent=1 // pred_check_branch
      %1360 = sbr.rel (0) target = $region869
    $region868: #{tpu_custom_call.1} parent=1 // pred_region
      %1361 = vsyncadd %s185, 16
    $region869: #{tpu_custom_call.1} parent=1 // pred_fallthru
      _
    %s1362 = sld [smem:[#allocation5 + $0x1c]]
    %s1363 = scalar_lea.vmem %s1, %s1362
    %s1364 = scalar_lea.vmem [#allocation2], 28
    %p1366 = scmp.lt.u32.totalorder 1, 8
    %p1367 = pneg %p1366
    // Predicated region
    $region870: #{tpu_custom_call.1} parent=1 // pred_check
      _
    $region871: #{tpu_custom_call.1} parent=1 // pred_check_branch
      %1369 = sbr.rel (%p1366) target = $region873
    $region872: #{tpu_custom_call.1} parent=1 // pred_region
      %s1384 = sand.u32 1, 7
      %p1385 = scmp.eq.s32.totalorder %s1384, 0
      %p1386 = pneg %p1385
      // Predicated region
      $region885: #{tpu_custom_call.1} parent=872 // pred_check
        _
      $region886: #{tpu_custom_call.1} parent=872 // pred_check_branch
        %1388 = sbr.rel (%p1385) target = $region888
      $region887: #{tpu_custom_call.1} parent=872 // pred_region
        %s1389 = sand.u32 1, 7
        %s1390 = ssub.s32 1, %s1389
        %s1391 = scalar_lea.vmem %s1363, %s1390
        %s1392 = ssub.s32 1, %s1389
        %s1393 = scalar_lea.vmem %s1364, %s1392 [#allocation2]
        %s1394 = sshllo.u32 0, %s1389
        loop: start=0, step=1, limit=1
        $region889: #{tpu_custom_call.1} parent=887 // loop_pre_header
          _
        $region890: #{tpu_custom_call.1} parent=887 // loop_header
          %s1396 = sphi 0, %s1400
          %p1397 = scmp.ge.s32.totalorder %s1396, 1
          %s1401 = sphi %s1391, %s1391
          %s1402 = sphi %s1393, %s1393
        $region891: #{tpu_custom_call.1} parent=887 // loop_header_branch
          %1399 = sbr.rel (%p1397) target = $region895
        $region892: #{tpu_custom_call.1} parent=887 // loop_body
          %v1403 = vld [vmem:[%s1401] sm:%s1394]
          %1404 = vst [vmem:[%s1402] sm:%s1394] %v1403
        $region893: #{tpu_custom_call.1} parent=887 // loop_footer
          %s1400 = sadd.s32 1, %s1396
        $region894: #{tpu_custom_call.1} parent=887 // loop_footer_branch
          %1395 = sbr.rel target = $region890
        $region895: #{tpu_custom_call.1} parent=887 // loop_exit
          _
      $region888: #{tpu_custom_call.1} parent=872 // pred_fallthru
        _
    $region873: #{tpu_custom_call.1} parent=1 // pred_fallthru
      _
    // Predicated region
    $region874: #{tpu_custom_call.1} parent=1 // pred_check
      %p1370 = pneg %p1366
    $region875: #{tpu_custom_call.1} parent=1 // pred_check_branch
      %1372 = sbr.rel (%p1370) target = $region877
    $region876: #{tpu_custom_call.1} parent=1 // pred_region
      %s1373 = sshllo.u32 0, 1
      loop: start=0, step=1, limit=1
      $region878: #{tpu_custom_call.1} parent=876 // loop_pre_header
        _
      $region879: #{tpu_custom_call.1} parent=876 // loop_header
        %s1375 = sphi 0, %s1379
        %p1376 = scmp.ge.s32.totalorder %s1375, 1
        %s1380 = sphi %s1363, %s1363
        %s1381 = sphi %s1364, %s1364
      $region880: #{tpu_custom_call.1} parent=876 // loop_header_branch
        %1378 = sbr.rel (%p1376) target = $region884
      $region881: #{tpu_custom_call.1} parent=876 // loop_body
        %v1382 = vld [vmem:[%s1380] sm:%s1373]
        %1383 = vst [vmem:[%s1381] sm:%s1373] %v1382
      $region882: #{tpu_custom_call.1} parent=876 // loop_footer
        %s1379 = sadd.s32 1, %s1375
      $region883: #{tpu_custom_call.1} parent=876 // loop_footer_branch
        %1374 = sbr.rel target = $region879
      $region884: #{tpu_custom_call.1} parent=876 // loop_exit
        _
    $region877: #{tpu_custom_call.1} parent=1 // pred_fallthru
      _
    // Predicated region
    $region896: #{tpu_custom_call.1} parent=1 // pred_check
      _
    $region897: #{tpu_custom_call.1} parent=1 // pred_check_branch
      %1407 = sbr.rel (0) target = $region899
    $region898: #{tpu_custom_call.1} parent=1 // pred_region
      %1408 = vsyncadd %s233, 16
    $region899: #{tpu_custom_call.1} parent=1 // pred_fallthru
      _
    %s1409 = sld [smem:[#allocation5 + $0x1d]]
    %s1410 = scalar_lea.vmem %s1, %s1409
    %s1411 = scalar_lea.vmem [#allocation2], 29
    %p1413 = scmp.lt.u32.totalorder 1, 8
    %p1414 = pneg %p1413
    // Predicated region
    $region900: #{tpu_custom_call.1} parent=1 // pred_check
      _
    $region901: #{tpu_custom_call.1} parent=1 // pred_check_branch
      %1416 = sbr.rel (%p1413) target = $region903
    $region902: #{tpu_custom_call.1} parent=1 // pred_region
      %s1431 = sand.u32 1, 7
      %p1432 = scmp.eq.s32.totalorder %s1431, 0
      %p1433 = pneg %p1432
      // Predicated region
      $region915: #{tpu_custom_call.1} parent=902 // pred_check
        _
      $region916: #{tpu_custom_call.1} parent=902 // pred_check_branch
        %1435 = sbr.rel (%p1432) target = $region918
      $region917: #{tpu_custom_call.1} parent=902 // pred_region
        %s1436 = sand.u32 1, 7
        %s1437 = ssub.s32 1, %s1436
        %s1438 = scalar_lea.vmem %s1410, %s1437
        %s1439 = ssub.s32 1, %s1436
        %s1440 = scalar_lea.vmem %s1411, %s1439 [#allocation2]
        %s1441 = sshllo.u32 0, %s1436
        loop: start=0, step=1, limit=1
        $region919: #{tpu_custom_call.1} parent=917 // loop_pre_header
          _
        $region920: #{tpu_custom_call.1} parent=917 // loop_header
          %s1443 = sphi 0, %s1447
          %p1444 = scmp.ge.s32.totalorder %s1443, 1
          %s1448 = sphi %s1438, %s1438
          %s1449 = sphi %s1440, %s1440
        $region921: #{tpu_custom_call.1} parent=917 // loop_header_branch
          %1446 = sbr.rel (%p1444) target = $region925
        $region922: #{tpu_custom_call.1} parent=917 // loop_body
          %v1450 = vld [vmem:[%s1448] sm:%s1441]
          %1451 = vst [vmem:[%s1449] sm:%s1441] %v1450
        $region923: #{tpu_custom_call.1} parent=917 // loop_footer
          %s1447 = sadd.s32 1, %s1443
        $region924: #{tpu_custom_call.1} parent=917 // loop_footer_branch
          %1442 = sbr.rel target = $region920
        $region925: #{tpu_custom_call.1} parent=917 // loop_exit
          _
      $region918: #{tpu_custom_call.1} parent=902 // pred_fallthru
        _
    $region903: #{tpu_custom_call.1} parent=1 // pred_fallthru
      _
    // Predicated region
    $region904: #{tpu_custom_call.1} parent=1 // pred_check
      %p1417 = pneg %p1413
    $region905: #{tpu_custom_call.1} parent=1 // pred_check_branch
      %1419 = sbr.rel (%p1417) target = $region907
    $region906: #{tpu_custom_call.1} parent=1 // pred_region
      %s1420 = sshllo.u32 0, 1
      loop: start=0, step=1, limit=1
      $region908: #{tpu_custom_call.1} parent=906 // loop_pre_header
        _
      $region909: #{tpu_custom_call.1} parent=906 // loop_header
        %s1422 = sphi 0, %s1426
        %p1423 = scmp.ge.s32.totalorder %s1422, 1
        %s1427 = sphi %s1410, %s1410
        %s1428 = sphi %s1411, %s1411
      $region910: #{tpu_custom_call.1} parent=906 // loop_header_branch
        %1425 = sbr.rel (%p1423) target = $region914
      $region911: #{tpu_custom_call.1} parent=906 // loop_body
        %v1429 = vld [vmem:[%s1427] sm:%s1420]
        %1430 = vst [vmem:[%s1428] sm:%s1420] %v1429
      $region912: #{tpu_custom_call.1} parent=906 // loop_footer
        %s1426 = sadd.s32 1, %s1422
      $region913: #{tpu_custom_call.1} parent=906 // loop_footer_branch
        %1421 = sbr.rel target = $region909
      $region914: #{tpu_custom_call.1} parent=906 // loop_exit
        _
    $region907: #{tpu_custom_call.1} parent=1 // pred_fallthru
      _
    // Predicated region
    $region926: #{tpu_custom_call.1} parent=1 // pred_check
      _
    $region927: #{tpu_custom_call.1} parent=1 // pred_check_branch
      %1454 = sbr.rel (0) target = $region929
    $region928: #{tpu_custom_call.1} parent=1 // pred_region
      %1455 = vsyncadd %s281, 16
    $region929: #{tpu_custom_call.1} parent=1 // pred_fallthru
      _
    %s1456 = sld [smem:[#allocation5 + $0x1e]]
    %s1457 = scalar_lea.vmem %s1, %s1456
    %s1458 = scalar_lea.vmem [#allocation2], 30
    %p1460 = scmp.lt.u32.totalorder 1, 8
    %p1461 = pneg %p1460
    // Predicated region
    $region930: #{tpu_custom_call.1} parent=1 // pred_check
      _
    $region931: #{tpu_custom_call.1} parent=1 // pred_check_branch
      %1463 = sbr.rel (%p1460) target = $region933
    $region932: #{tpu_custom_call.1} parent=1 // pred_region
      %s1478 = sand.u32 1, 7
      %p1479 = scmp.eq.s32.totalorder %s1478, 0
      %p1480 = pneg %p1479
      // Predicated region
      $region945: #{tpu_custom_call.1} parent=932 // pred_check
        _
      $region946: #{tpu_custom_call.1} parent=932 // pred_check_branch
        %1482 = sbr.rel (%p1479) target = $region948
      $region947: #{tpu_custom_call.1} parent=932 // pred_region
        %s1483 = sand.u32 1, 7
        %s1484 = ssub.s32 1, %s1483
        %s1485 = scalar_lea.vmem %s1457, %s1484
        %s1486 = ssub.s32 1, %s1483
        %s1487 = scalar_lea.vmem %s1458, %s1486 [#allocation2]
        %s1488 = sshllo.u32 0, %s1483
        loop: start=0, step=1, limit=1
        $region949: #{tpu_custom_call.1} parent=947 // loop_pre_header
          _
        $region950: #{tpu_custom_call.1} parent=947 // loop_header
          %s1490 = sphi 0, %s1494
          %p1491 = scmp.ge.s32.totalorder %s1490, 1
          %s1495 = sphi %s1485, %s1485
          %s1496 = sphi %s1487, %s1487
        $region951: #{tpu_custom_call.1} parent=947 // loop_header_branch
          %1493 = sbr.rel (%p1491) target = $region955
        $region952: #{tpu_custom_call.1} parent=947 // loop_body
          %v1497 = vld [vmem:[%s1495] sm:%s1488]
          %1498 = vst [vmem:[%s1496] sm:%s1488] %v1497
        $region953: #{tpu_custom_call.1} parent=947 // loop_footer
          %s1494 = sadd.s32 1, %s1490
        $region954: #{tpu_custom_call.1} parent=947 // loop_footer_branch
          %1489 = sbr.rel target = $region950
        $region955: #{tpu_custom_call.1} parent=947 // loop_exit
          _
      $region948: #{tpu_custom_call.1} parent=932 // pred_fallthru
        _
    $region933: #{tpu_custom_call.1} parent=1 // pred_fallthru
      _
    // Predicated region
    $region934: #{tpu_custom_call.1} parent=1 // pred_check
      %p1464 = pneg %p1460
    $region935: #{tpu_custom_call.1} parent=1 // pred_check_branch
      %1466 = sbr.rel (%p1464) target = $region937
    $region936: #{tpu_custom_call.1} parent=1 // pred_region
      %s1467 = sshllo.u32 0, 1
      loop: start=0, step=1, limit=1
      $region938: #{tpu_custom_call.1} parent=936 // loop_pre_header
        _
      $region939: #{tpu_custom_call.1} parent=936 // loop_header
        %s1469 = sphi 0, %s1473
        %p1470 = scmp.ge.s32.totalorder %s1469, 1
        %s1474 = sphi %s1457, %s1457
        %s1475 = sphi %s1458, %s1458
      $region940: #{tpu_custom_call.1} parent=936 // loop_header_branch
        %1472 = sbr.rel (%p1470) target = $region944
      $region941: #{tpu_custom_call.1} parent=936 // loop_body
        %v1476 = vld [vmem:[%s1474] sm:%s1467]
        %1477 = vst [vmem:[%s1475] sm:%s1467] %v1476
      $region942: #{tpu_custom_call.1} parent=936 // loop_footer
        %s1473 = sadd.s32 1, %s1469
      $region943: #{tpu_custom_call.1} parent=936 // loop_footer_branch
        %1468 = sbr.rel target = $region939
      $region944: #{tpu_custom_call.1} parent=936 // loop_exit
        _
    $region937: #{tpu_custom_call.1} parent=1 // pred_fallthru
      _
    // Predicated region
    $region956: #{tpu_custom_call.1} parent=1 // pred_check
      _
    $region957: #{tpu_custom_call.1} parent=1 // pred_check_branch
      %1501 = sbr.rel (0) target = $region959
    $region958: #{tpu_custom_call.1} parent=1 // pred_region
      %1502 = vsyncadd %s329, 16
    $region959: #{tpu_custom_call.1} parent=1 // pred_fallthru
      _
    %s1503 = sld [smem:[#allocation5 + $0x1f]]
    %s1504 = scalar_lea.vmem %s1, %s1503
    %s1505 = scalar_lea.vmem [#allocation2], 31
    %p1507 = scmp.lt.u32.totalorder 1, 8
    %p1508 = pneg %p1507
    // Predicated region
    $region960: #{tpu_custom_call.1} parent=1 // pred_check
      _
    $region961: #{tpu_custom_call.1} parent=1 // pred_check_branch
      %1510 = sbr.rel (%p1507) target = $region963
    $region962: #{tpu_custom_call.1} parent=1 // pred_region
      %s1525 = sand.u32 1, 7
      %p1526 = scmp.eq.s32.totalorder %s1525, 0
      %p1527 = pneg %p1526
      // Predicated region
      $region975: #{tpu_custom_call.1} parent=962 // pred_check
        _
      $region976: #{tpu_custom_call.1} parent=962 // pred_check_branch
        %1529 = sbr.rel (%p1526) target = $region978
      $region977: #{tpu_custom_call.1} parent=962 // pred_region
        %s1530 = sand.u32 1, 7
        %s1531 = ssub.s32 1, %s1530
        %s1532 = scalar_lea.vmem %s1504, %s1531
        %s1533 = ssub.s32 1, %s1530
        %s1534 = scalar_lea.vmem %s1505, %s1533 [#allocation2]
        %s1535 = sshllo.u32 0, %s1530
        loop: start=0, step=1, limit=1
        $region979: #{tpu_custom_call.1} parent=977 // loop_pre_header
          _
        $region980: #{tpu_custom_call.1} parent=977 // loop_header
          %s1537 = sphi 0, %s1541
          %p1538 = scmp.ge.s32.totalorder %s1537, 1
          %s1542 = sphi %s1532, %s1532
          %s1543 = sphi %s1534, %s1534
        $region981: #{tpu_custom_call.1} parent=977 // loop_header_branch
          %1540 = sbr.rel (%p1538) target = $region985
        $region982: #{tpu_custom_call.1} parent=977 // loop_body
          %v1544 = vld [vmem:[%s1542] sm:%s1535]
          %1545 = vst [vmem:[%s1543] sm:%s1535] %v1544
        $region983: #{tpu_custom_call.1} parent=977 // loop_footer
          %s1541 = sadd.s32 1, %s1537
        $region984: #{tpu_custom_call.1} parent=977 // loop_footer_branch
          %1536 = sbr.rel target = $region980
        $region985: #{tpu_custom_call.1} parent=977 // loop_exit
          _
      $region978: #{tpu_custom_call.1} parent=962 // pred_fallthru
        _
    $region963: #{tpu_custom_call.1} parent=1 // pred_fallthru
      _
    // Predicated region
    $region964: #{tpu_custom_call.1} parent=1 // pred_check
      %p1511 = pneg %p1507
    $region965: #{tpu_custom_call.1} parent=1 // pred_check_branch
      %1513 = sbr.rel (%p1511) target = $region967
    $region966: #{tpu_custom_call.1} parent=1 // pred_region
      %s1514 = sshllo.u32 0, 1
      loop: start=0, step=1, limit=1
      $region968: #{tpu_custom_call.1} parent=966 // loop_pre_header
        _
      $region969: #{tpu_custom_call.1} parent=966 // loop_header
        %s1516 = sphi 0, %s1520
        %p1517 = scmp.ge.s32.totalorder %s1516, 1
        %s1521 = sphi %s1504, %s1504
        %s1522 = sphi %s1505, %s1505
      $region970: #{tpu_custom_call.1} parent=966 // loop_header_branch
        %1519 = sbr.rel (%p1517) target = $region974
      $region971: #{tpu_custom_call.1} parent=966 // loop_body
        %v1523 = vld [vmem:[%s1521] sm:%s1514]
        %1524 = vst [vmem:[%s1522] sm:%s1514] %v1523
      $region972: #{tpu_custom_call.1} parent=966 // loop_footer
        %s1520 = sadd.s32 1, %s1516
      $region973: #{tpu_custom_call.1} parent=966 // loop_footer_branch
        %1515 = sbr.rel target = $region969
      $region974: #{tpu_custom_call.1} parent=966 // loop_exit
        _
    $region967: #{tpu_custom_call.1} parent=1 // pred_fallthru
      _
    // Predicated region
    $region986: #{tpu_custom_call.1} parent=1 // pred_check
      _
    $region987: #{tpu_custom_call.1} parent=1 // pred_check_branch
      %1548 = sbr.rel (0) target = $region989
    $region988: #{tpu_custom_call.1} parent=1 // pred_region
      %1549 = vsyncadd %s377, 16
    $region989: #{tpu_custom_call.1} parent=1 // pred_fallthru
      _
    %s1550 = sld [smem:[#allocation5 + $0x20]]
    %s1551 = scalar_lea.vmem %s1, %s1550
    %s1552 = scalar_lea.vmem [#allocation2], 32
    %p1554 = scmp.lt.u32.totalorder 1, 8
    %p1555 = pneg %p1554
    // Predicated region
    $region990: #{tpu_custom_call.1} parent=1 // pred_check
      _
    $region991: #{tpu_custom_call.1} parent=1 // pred_check_branch
      %1557 = sbr.rel (%p1554) target = $region993
    $region992: #{tpu_custom_call.1} parent=1 // pred_region
      %s1572 = sand.u32 1, 7
      %p1573 = scmp.eq.s32.totalorder %s1572, 0
      %p1574 = pneg %p1573
      // Predicated region
      $region1005: #{tpu_custom_call.1} parent=992 // pred_check
        _
      $region1006: #{tpu_custom_call.1} parent=992 // pred_check_branch
        %1576 = sbr.rel (%p1573) target = $region1008
      $region1007: #{tpu_custom_call.1} parent=992 // pred_region
        %s1577 = sand.u32 1, 7
        %s1578 = ssub.s32 1, %s1577
        %s1579 = scalar_lea.vmem %s1551, %s1578
        %s1580 = ssub.s32 1, %s1577
        %s1581 = scalar_lea.vmem %s1552, %s1580 [#allocation2]
        %s1582 = sshllo.u32 0, %s1577
        loop: start=0, step=1, limit=1
        $region1009: #{tpu_custom_call.1} parent=1007 // loop_pre_header
          _
        $region1010: #{tpu_custom_call.1} parent=1007 // loop_header
          %s1584 = sphi 0, %s1588
          %p1585 = scmp.ge.s32.totalorder %s1584, 1
          %s1589 = sphi %s1579, %s1579
          %s1590 = sphi %s1581, %s1581
        $region1011: #{tpu_custom_call.1} parent=1007 // loop_header_branch
          %1587 = sbr.rel (%p1585) target = $region1015
        $region1012: #{tpu_custom_call.1} parent=1007 // loop_body
          %v1591 = vld [vmem:[%s1589] sm:%s1582]
          %1592 = vst [vmem:[%s1590] sm:%s1582] %v1591
        $region1013: #{tpu_custom_call.1} parent=1007 // loop_footer
          %s1588 = sadd.s32 1, %s1584
        $region1014: #{tpu_custom_call.1} parent=1007 // loop_footer_branch
          %1583 = sbr.rel target = $region1010
        $region1015: #{tpu_custom_call.1} parent=1007 // loop_exit
          _
      $region1008: #{tpu_custom_call.1} parent=992 // pred_fallthru
        _
    $region993: #{tpu_custom_call.1} parent=1 // pred_fallthru
      _
    // Predicated region
    $region994: #{tpu_custom_call.1} parent=1 // pred_check
      %p1558 = pneg %p1554
    $region995: #{tpu_custom_call.1} parent=1 // pred_check_branch
      %1560 = sbr.rel (%p1558) target = $region997
    $region996: #{tpu_custom_call.1} parent=1 // pred_region
      %s1561 = sshllo.u32 0, 1
      loop: start=0, step=1, limit=1
      $region998: #{tpu_custom_call.1} parent=996 // loop_pre_header
        _
      $region999: #{tpu_custom_call.1} parent=996 // loop_header
        %s1563 = sphi 0, %s1567
        %p1564 = scmp.ge.s32.totalorder %s1563, 1
        %s1568 = sphi %s1551, %s1551
        %s1569 = sphi %s1552, %s1552
      $region1000: #{tpu_custom_call.1} parent=996 // loop_header_branch
        %1566 = sbr.rel (%p1564) target = $region1004
      $region1001: #{tpu_custom_call.1} parent=996 // loop_body
        %v1570 = vld [vmem:[%s1568] sm:%s1561]
        %1571 = vst [vmem:[%s1569] sm:%s1561] %v1570
      $region1002: #{tpu_custom_call.1} parent=996 // loop_footer
        %s1567 = sadd.s32 1, %s1563
      $region1003: #{tpu_custom_call.1} parent=996 // loop_footer_branch
        %1562 = sbr.rel target = $region999
      $region1004: #{tpu_custom_call.1} parent=996 // loop_exit
        _
    $region997: #{tpu_custom_call.1} parent=1 // pred_fallthru
      _
    // Predicated region
    $region1016: #{tpu_custom_call.1} parent=1 // pred_check
      _
    $region1017: #{tpu_custom_call.1} parent=1 // pred_check_branch
      %1595 = sbr.rel (0) target = $region1019
    $region1018: #{tpu_custom_call.1} parent=1 // pred_region
      %1596 = vsyncadd [#allocation3], 16
    $region1019: #{tpu_custom_call.1} parent=1 // pred_fallthru
      _
    %s1597 = sld [smem:[#allocation5 + $0x21]]
    %s1598 = scalar_lea.vmem %s1, %s1597
    %s1599 = scalar_lea.vmem [#allocation2], 33
    %p1601 = scmp.lt.u32.totalorder 1, 8
    %p1602 = pneg %p1601
    // Predicated region
    $region1020: #{tpu_custom_call.1} parent=1 // pred_check
      _
    $region1021: #{tpu_custom_call.1} parent=1 // pred_check_branch
      %1604 = sbr.rel (%p1601) target = $region1023
    $region1022: #{tpu_custom_call.1} parent=1 // pred_region
      %s1619 = sand.u32 1, 7
      %p1620 = scmp.eq.s32.totalorder %s1619, 0
      %p1621 = pneg %p1620
      // Predicated region
      $region1035: #{tpu_custom_call.1} parent=1022 // pred_check
        _
      $region1036: #{tpu_custom_call.1} parent=1022 // pred_check_branch
        %1623 = sbr.rel (%p1620) target = $region1038
      $region1037: #{tpu_custom_call.1} parent=1022 // pred_region
        %s1624 = sand.u32 1, 7
        %s1625 = ssub.s32 1, %s1624
        %s1626 = scalar_lea.vmem %s1598, %s1625
        %s1627 = ssub.s32 1, %s1624
        %s1628 = scalar_lea.vmem %s1599, %s1627 [#allocation2]
        %s1629 = sshllo.u32 0, %s1624
        loop: start=0, step=1, limit=1
        $region1039: #{tpu_custom_call.1} parent=1037 // loop_pre_header
          _
        $region1040: #{tpu_custom_call.1} parent=1037 // loop_header
          %s1631 = sphi 0, %s1635
          %p1632 = scmp.ge.s32.totalorder %s1631, 1
          %s1636 = sphi %s1626, %s1626
          %s1637 = sphi %s1628, %s1628
        $region1041: #{tpu_custom_call.1} parent=1037 // loop_header_branch
          %1634 = sbr.rel (%p1632) target = $region1045
        $region1042: #{tpu_custom_call.1} parent=1037 // loop_body
          %v1638 = vld [vmem:[%s1636] sm:%s1629]
          %1639 = vst [vmem:[%s1637] sm:%s1629] %v1638
        $region1043: #{tpu_custom_call.1} parent=1037 // loop_footer
          %s1635 = sadd.s32 1, %s1631
        $region1044: #{tpu_custom_call.1} parent=1037 // loop_footer_branch
          %1630 = sbr.rel target = $region1040
        $region1045: #{tpu_custom_call.1} parent=1037 // loop_exit
          _
      $region1038: #{tpu_custom_call.1} parent=1022 // pred_fallthru
        _
    $region1023: #{tpu_custom_call.1} parent=1 // pred_fallthru
      _
    // Predicated region
    $region1024: #{tpu_custom_call.1} parent=1 // pred_check
      %p1605 = pneg %p1601
    $region1025: #{tpu_custom_call.1} parent=1 // pred_check_branch
      %1607 = sbr.rel (%p1605) target = $region1027
    $region1026: #{tpu_custom_call.1} parent=1 // pred_region
      %s1608 = sshllo.u32 0, 1
      loop: start=0, step=1, limit=1
      $region1028: #{tpu_custom_call.1} parent=1026 // loop_pre_header
        _
      $region1029: #{tpu_custom_call.1} parent=1026 // loop_header
        %s1610 = sphi 0, %s1614
        %p1611 = scmp.ge.s32.totalorder %s1610, 1
        %s1615 = sphi %s1598, %s1598
        %s1616 = sphi %s1599, %s1599
      $region1030: #{tpu_custom_call.1} parent=1026 // loop_header_branch
        %1613 = sbr.rel (%p1611) target = $region1034
      $region1031: #{tpu_custom_call.1} parent=1026 // loop_body
        %v1617 = vld [vmem:[%s1615] sm:%s1608]
        %1618 = vst [vmem:[%s1616] sm:%s1608] %v1617
      $region1032: #{tpu_custom_call.1} parent=1026 // loop_footer
        %s1614 = sadd.s32 1, %s1610
      $region1033: #{tpu_custom_call.1} parent=1026 // loop_footer_branch
        %1609 = sbr.rel target = $region1029
      $region1034: #{tpu_custom_call.1} parent=1026 // loop_exit
        _
    $region1027: #{tpu_custom_call.1} parent=1 // pred_fallthru
      _
    // Predicated region
    $region1046: #{tpu_custom_call.1} parent=1 // pred_check
      _
    $region1047: #{tpu_custom_call.1} parent=1 // pred_check_branch
      %1642 = sbr.rel (0) target = $region1049
    $region1048: #{tpu_custom_call.1} parent=1 // pred_region
      %1643 = vsyncadd %s89, 16
    $region1049: #{tpu_custom_call.1} parent=1 // pred_fallthru
      _
    %s1644 = sld [smem:[#allocation5 + $0x22]]
    %s1645 = scalar_lea.vmem %s1, %s1644
    %s1646 = scalar_lea.vmem [#allocation2], 34
    %p1648 = scmp.lt.u32.totalorder 1, 8
    %p1649 = pneg %p1648
    // Predicated region
    $region1050: #{tpu_custom_call.1} parent=1 // pred_check
      _
    $region1051: #{tpu_custom_call.1} parent=1 // pred_check_branch
      %1651 = sbr.rel (%p1648) target = $region1053
    $region1052: #{tpu_custom_call.1} parent=1 // pred_region
      %s1666 = sand.u32 1, 7
      %p1667 = scmp.eq.s32.totalorder %s1666, 0
      %p1668 = pneg %p1667
      // Predicated region
      $region1065: #{tpu_custom_call.1} parent=1052 // pred_check
        _
      $region1066: #{tpu_custom_call.1} parent=1052 // pred_check_branch
        %1670 = sbr.rel (%p1667) target = $region1068
      $region1067: #{tpu_custom_call.1} parent=1052 // pred_region
        %s1671 = sand.u32 1, 7
        %s1672 = ssub.s32 1, %s1671
        %s1673 = scalar_lea.vmem %s1645, %s1672
        %s1674 = ssub.s32 1, %s1671
        %s1675 = scalar_lea.vmem %s1646, %s1674 [#allocation2]
        %s1676 = sshllo.u32 0, %s1671
        loop: start=0, step=1, limit=1
        $region1069: #{tpu_custom_call.1} parent=1067 // loop_pre_header
          _
        $region1070: #{tpu_custom_call.1} parent=1067 // loop_header
          %s1678 = sphi 0, %s1682
          %p1679 = scmp.ge.s32.totalorder %s1678, 1
          %s1683 = sphi %s1673, %s1673
          %s1684 = sphi %s1675, %s1675
        $region1071: #{tpu_custom_call.1} parent=1067 // loop_header_branch
          %1681 = sbr.rel (%p1679) target = $region1075
        $region1072: #{tpu_custom_call.1} parent=1067 // loop_body
          %v1685 = vld [vmem:[%s1683] sm:%s1676]
          %1686 = vst [vmem:[%s1684] sm:%s1676] %v1685
        $region1073: #{tpu_custom_call.1} parent=1067 // loop_footer
          %s1682 = sadd.s32 1, %s1678
        $region1074: #{tpu_custom_call.1} parent=1067 // loop_footer_branch
          %1677 = sbr.rel target = $region1070
        $region1075: #{tpu_custom_call.1} parent=1067 // loop_exit
          _
      $region1068: #{tpu_custom_call.1} parent=1052 // pred_fallthru
        _
    $region1053: #{tpu_custom_call.1} parent=1 // pred_fallthru
      _
    // Predicated region
    $region1054: #{tpu_custom_call.1} parent=1 // pred_check
      %p1652 = pneg %p1648
    $region1055: #{tpu_custom_call.1} parent=1 // pred_check_branch
      %1654 = sbr.rel (%p1652) target = $region1057
    $region1056: #{tpu_custom_call.1} parent=1 // pred_region
      %s1655 = sshllo.u32 0, 1
      loop: start=0, step=1, limit=1
      $region1058: #{tpu_custom_call.1} parent=1056 // loop_pre_header
        _
      $region1059: #{tpu_custom_call.1} parent=1056 // loop_header
        %s1657 = sphi 0, %s1661
        %p1658 = scmp.ge.s32.totalorder %s1657, 1
        %s1662 = sphi %s1645, %s1645
        %s1663 = sphi %s1646, %s1646
      $region1060: #{tpu_custom_call.1} parent=1056 // loop_header_branch
        %1660 = sbr.rel (%p1658) target = $region1064
      $region1061: #{tpu_custom_call.1} parent=1056 // loop_body
        %v1664 = vld [vmem:[%s1662] sm:%s1655]
        %1665 = vst [vmem:[%s1663] sm:%s1655] %v1664
      $region1062: #{tpu_custom_call.1} parent=1056 // loop_footer
        %s1661 = sadd.s32 1, %s1657
      $region1063: #{tpu_custom_call.1} parent=1056 // loop_footer_branch
        %1656 = sbr.rel target = $region1059
      $region1064: #{tpu_custom_call.1} parent=1056 // loop_exit
        _
    $region1057: #{tpu_custom_call.1} parent=1 // pred_fallthru
      _
    // Predicated region
    $region1076: #{tpu_custom_call.1} parent=1 // pred_check
      _
    $region1077: #{tpu_custom_call.1} parent=1 // pred_check_branch
      %1689 = sbr.rel (0) target = $region1079
    $region1078: #{tpu_custom_call.1} parent=1 // pred_region
      %1690 = vsyncadd %s137, 16
    $region1079: #{tpu_custom_call.1} parent=1 // pred_fallthru
      _
    %s1691 = sld [smem:[#allocation5 + $0x23]]
    %s1692 = scalar_lea.vmem %s1, %s1691
    %s1693 = scalar_lea.vmem [#allocation2], 35
    %p1695 = scmp.lt.u32.totalorder 1, 8
    %p1696 = pneg %p1695
    // Predicated region
    $region1080: #{tpu_custom_call.1} parent=1 // pred_check
      _
    $region1081: #{tpu_custom_call.1} parent=1 // pred_check_branch
      %1698 = sbr.rel (%p1695) target = $region1083
    $region1082: #{tpu_custom_call.1} parent=1 // pred_region
      %s1713 = sand.u32 1, 7
      %p1714 = scmp.eq.s32.totalorder %s1713, 0
      %p1715 = pneg %p1714
      // Predicated region
      $region1095: #{tpu_custom_call.1} parent=1082 // pred_check
        _
      $region1096: #{tpu_custom_call.1} parent=1082 // pred_check_branch
        %1717 = sbr.rel (%p1714) target = $region1098
      $region1097: #{tpu_custom_call.1} parent=1082 // pred_region
        %s1718 = sand.u32 1, 7
        %s1719 = ssub.s32 1, %s1718
        %s1720 = scalar_lea.vmem %s1692, %s1719
        %s1721 = ssub.s32 1, %s1718
        %s1722 = scalar_lea.vmem %s1693, %s1721 [#allocation2]
        %s1723 = sshllo.u32 0, %s1718
        loop: start=0, step=1, limit=1
        $region1099: #{tpu_custom_call.1} parent=1097 // loop_pre_header
          _
        $region1100: #{tpu_custom_call.1} parent=1097 // loop_header
          %s1725 = sphi 0, %s1729
          %p1726 = scmp.ge.s32.totalorder %s1725, 1
          %s1730 = sphi %s1720, %s1720
          %s1731 = sphi %s1722, %s1722
        $region1101: #{tpu_custom_call.1} parent=1097 // loop_header_branch
          %1728 = sbr.rel (%p1726) target = $region1105
        $region1102: #{tpu_custom_call.1} parent=1097 // loop_body
          %v1732 = vld [vmem:[%s1730] sm:%s1723]
          %1733 = vst [vmem:[%s1731] sm:%s1723] %v1732
        $region1103: #{tpu_custom_call.1} parent=1097 // loop_footer
          %s1729 = sadd.s32 1, %s1725
        $region1104: #{tpu_custom_call.1} parent=1097 // loop_footer_branch
          %1724 = sbr.rel target = $region1100
        $region1105: #{tpu_custom_call.1} parent=1097 // loop_exit
          _
      $region1098: #{tpu_custom_call.1} parent=1082 // pred_fallthru
        _
    $region1083: #{tpu_custom_call.1} parent=1 // pred_fallthru
      _
    // Predicated region
    $region1084: #{tpu_custom_call.1} parent=1 // pred_check
      %p1699 = pneg %p1695
    $region1085: #{tpu_custom_call.1} parent=1 // pred_check_branch
      %1701 = sbr.rel (%p1699) target = $region1087
    $region1086: #{tpu_custom_call.1} parent=1 // pred_region
      %s1702 = sshllo.u32 0, 1
      loop: start=0, step=1, limit=1
      $region1088: #{tpu_custom_call.1} parent=1086 // loop_pre_header
        _
      $region1089: #{tpu_custom_call.1} parent=1086 // loop_header
        %s1704 = sphi 0, %s1708
        %p1705 = scmp.ge.s32.totalorder %s1704, 1
        %s1709 = sphi %s1692, %s1692
        %s1710 = sphi %s1693, %s1693
      $region1090: #{tpu_custom_call.1} parent=1086 // loop_header_branch
        %1707 = sbr.rel (%p1705) target = $region1094
      $region1091: #{tpu_custom_call.1} parent=1086 // loop_body
        %v1711 = vld [vmem:[%s1709] sm:%s1702]
        %1712 = vst [vmem:[%s1710] sm:%s1702] %v1711
      $region1092: #{tpu_custom_call.1} parent=1086 // loop_footer
        %s1708 = sadd.s32 1, %s1704
      $region1093: #{tpu_custom_call.1} parent=1086 // loop_footer_branch
        %1703 = sbr.rel target = $region1089
      $region1094: #{tpu_custom_call.1} parent=1086 // loop_exit
        _
    $region1087: #{tpu_custom_call.1} parent=1 // pred_fallthru
      _
    // Predicated region
    $region1106: #{tpu_custom_call.1} parent=1 // pred_check
      _
    $region1107: #{tpu_custom_call.1} parent=1 // pred_check_branch
      %1736 = sbr.rel (0) target = $region1109
    $region1108: #{tpu_custom_call.1} parent=1 // pred_region
      %1737 = vsyncadd %s185, 16
    $region1109: #{tpu_custom_call.1} parent=1 // pred_fallthru
      _
    %s1738 = sld [smem:[#allocation5 + $0x24]]
    %s1739 = scalar_lea.vmem %s1, %s1738
    %s1740 = scalar_lea.vmem [#allocation2], 36
    %p1742 = scmp.lt.u32.totalorder 1, 8
    %p1743 = pneg %p1742
    // Predicated region
    $region1110: #{tpu_custom_call.1} parent=1 // pred_check
      _
    $region1111: #{tpu_custom_call.1} parent=1 // pred_check_branch
      %1745 = sbr.rel (%p1742) target = $region1113
    $region1112: #{tpu_custom_call.1} parent=1 // pred_region
      %s1760 = sand.u32 1, 7
      %p1761 = scmp.eq.s32.totalorder %s1760, 0
      %p1762 = pneg %p1761
      // Predicated region
      $region1125: #{tpu_custom_call.1} parent=1112 // pred_check
        _
      $region1126: #{tpu_custom_call.1} parent=1112 // pred_check_branch
        %1764 = sbr.rel (%p1761) target = $region1128
      $region1127: #{tpu_custom_call.1} parent=1112 // pred_region
        %s1765 = sand.u32 1, 7
        %s1766 = ssub.s32 1, %s1765
        %s1767 = scalar_lea.vmem %s1739, %s1766
        %s1768 = ssub.s32 1, %s1765
        %s1769 = scalar_lea.vmem %s1740, %s1768 [#allocation2]
        %s1770 = sshllo.u32 0, %s1765
        loop: start=0, step=1, limit=1
        $region1129: #{tpu_custom_call.1} parent=1127 // loop_pre_header
          _
        $region1130: #{tpu_custom_call.1} parent=1127 // loop_header
          %s1772 = sphi 0, %s1776
          %p1773 = scmp.ge.s32.totalorder %s1772, 1
          %s1777 = sphi %s1767, %s1767
          %s1778 = sphi %s1769, %s1769
        $region1131: #{tpu_custom_call.1} parent=1127 // loop_header_branch
          %1775 = sbr.rel (%p1773) target = $region1135
        $region1132: #{tpu_custom_call.1} parent=1127 // loop_body
          %v1779 = vld [vmem:[%s1777] sm:%s1770]
          %1780 = vst [vmem:[%s1778] sm:%s1770] %v1779
        $region1133: #{tpu_custom_call.1} parent=1127 // loop_footer
          %s1776 = sadd.s32 1, %s1772
        $region1134: #{tpu_custom_call.1} parent=1127 // loop_footer_branch
          %1771 = sbr.rel target = $region1130
        $region1135: #{tpu_custom_call.1} parent=1127 // loop_exit
          _
      $region1128: #{tpu_custom_call.1} parent=1112 // pred_fallthru
        _
    $region1113: #{tpu_custom_call.1} parent=1 // pred_fallthru
      _
    // Predicated region
    $region1114: #{tpu_custom_call.1} parent=1 // pred_check
      %p1746 = pneg %p1742
    $region1115: #{tpu_custom_call.1} parent=1 // pred_check_branch
      %1748 = sbr.rel (%p1746) target = $region1117
    $region1116: #{tpu_custom_call.1} parent=1 // pred_region
      %s1749 = sshllo.u32 0, 1
      loop: start=0, step=1, limit=1
      $region1118: #{tpu_custom_call.1} parent=1116 // loop_pre_header
        _
      $region1119: #{tpu_custom_call.1} parent=1116 // loop_header
        %s1751 = sphi 0, %s1755
        %p1752 = scmp.ge.s32.totalorder %s1751, 1
        %s1756 = sphi %s1739, %s1739
        %s1757 = sphi %s1740, %s1740
      $region1120: #{tpu_custom_call.1} parent=1116 // loop_header_branch
        %1754 = sbr.rel (%p1752) target = $region1124
      $region1121: #{tpu_custom_call.1} parent=1116 // loop_body
        %v1758 = vld [vmem:[%s1756] sm:%s1749]
        %1759 = vst [vmem:[%s1757] sm:%s1749] %v1758
      $region1122: #{tpu_custom_call.1} parent=1116 // loop_footer
        %s1755 = sadd.s32 1, %s1751
      $region1123: #{tpu_custom_call.1} parent=1116 // loop_footer_branch
        %1750 = sbr.rel target = $region1119
      $region1124: #{tpu_custom_call.1} parent=1116 // loop_exit
        _
    $region1117: #{tpu_custom_call.1} parent=1 // pred_fallthru
      _
    // Predicated region
    $region1136: #{tpu_custom_call.1} parent=1 // pred_check
      _
    $region1137: #{tpu_custom_call.1} parent=1 // pred_check_branch
      %1783 = sbr.rel (0) target = $region1139
    $region1138: #{tpu_custom_call.1} parent=1 // pred_region
      %1784 = vsyncadd %s233, 16
    $region1139: #{tpu_custom_call.1} parent=1 // pred_fallthru
      _
    %s1785 = sld [smem:[#allocation5 + $0x25]]
    %s1786 = scalar_lea.vmem %s1, %s1785
    %s1787 = scalar_lea.vmem [#allocation2], 37
    %p1789 = scmp.lt.u32.totalorder 1, 8
    %p1790 = pneg %p1789
    // Predicated region
    $region1140: #{tpu_custom_call.1} parent=1 // pred_check
      _
    $region1141: #{tpu_custom_call.1} parent=1 // pred_check_branch
      %1792 = sbr.rel (%p1789) target = $region1143
    $region1142: #{tpu_custom_call.1} parent=1 // pred_region
      %s1807 = sand.u32 1, 7
      %p1808 = scmp.eq.s32.totalorder %s1807, 0
      %p1809 = pneg %p1808
      // Predicated region
      $region1155: #{tpu_custom_call.1} parent=1142 // pred_check
        _
      $region1156: #{tpu_custom_call.1} parent=1142 // pred_check_branch
        %1811 = sbr.rel (%p1808) target = $region1158
      $region1157: #{tpu_custom_call.1} parent=1142 // pred_region
        %s1812 = sand.u32 1, 7
        %s1813 = ssub.s32 1, %s1812
        %s1814 = scalar_lea.vmem %s1786, %s1813
        %s1815 = ssub.s32 1, %s1812
        %s1816 = scalar_lea.vmem %s1787, %s1815 [#allocation2]
        %s1817 = sshllo.u32 0, %s1812
        loop: start=0, step=1, limit=1
        $region1159: #{tpu_custom_call.1} parent=1157 // loop_pre_header
          _
        $region1160: #{tpu_custom_call.1} parent=1157 // loop_header
          %s1819 = sphi 0, %s1823
          %p1820 = scmp.ge.s32.totalorder %s1819, 1
          %s1824 = sphi %s1814, %s1814
          %s1825 = sphi %s1816, %s1816
        $region1161: #{tpu_custom_call.1} parent=1157 // loop_header_branch
          %1822 = sbr.rel (%p1820) target = $region1165
        $region1162: #{tpu_custom_call.1} parent=1157 // loop_body
          %v1826 = vld [vmem:[%s1824] sm:%s1817]
          %1827 = vst [vmem:[%s1825] sm:%s1817] %v1826
        $region1163: #{tpu_custom_call.1} parent=1157 // loop_footer
          %s1823 = sadd.s32 1, %s1819
        $region1164: #{tpu_custom_call.1} parent=1157 // loop_footer_branch
          %1818 = sbr.rel target = $region1160
        $region1165: #{tpu_custom_call.1} parent=1157 // loop_exit
          _
      $region1158: #{tpu_custom_call.1} parent=1142 // pred_fallthru
        _
    $region1143: #{tpu_custom_call.1} parent=1 // pred_fallthru
      _
    // Predicated region
    $region1144: #{tpu_custom_call.1} parent=1 // pred_check
      %p1793 = pneg %p1789
    $region1145: #{tpu_custom_call.1} parent=1 // pred_check_branch
      %1795 = sbr.rel (%p1793) target = $region1147
    $region1146: #{tpu_custom_call.1} parent=1 // pred_region
      %s1796 = sshllo.u32 0, 1
      loop: start=0, step=1, limit=1
      $region1148: #{tpu_custom_call.1} parent=1146 // loop_pre_header
        _
      $region1149: #{tpu_custom_call.1} parent=1146 // loop_header
        %s1798 = sphi 0, %s1802
        %p1799 = scmp.ge.s32.totalorder %s1798, 1
        %s1803 = sphi %s1786, %s1786
        %s1804 = sphi %s1787, %s1787
      $region1150: #{tpu_custom_call.1} parent=1146 // loop_header_branch
        %1801 = sbr.rel (%p1799) target = $region1154
      $region1151: #{tpu_custom_call.1} parent=1146 // loop_body
        %v1805 = vld [vmem:[%s1803] sm:%s1796]
        %1806 = vst [vmem:[%s1804] sm:%s1796] %v1805
      $region1152: #{tpu_custom_call.1} parent=1146 // loop_footer
        %s1802 = sadd.s32 1, %s1798
      $region1153: #{tpu_custom_call.1} parent=1146 // loop_footer_branch
        %1797 = sbr.rel target = $region1149
      $region1154: #{tpu_custom_call.1} parent=1146 // loop_exit
        _
    $region1147: #{tpu_custom_call.1} parent=1 // pred_fallthru
      _
    // Predicated region
    $region1166: #{tpu_custom_call.1} parent=1 // pred_check
      _
    $region1167: #{tpu_custom_call.1} parent=1 // pred_check_branch
      %1830 = sbr.rel (0) target = $region1169
    $region1168: #{tpu_custom_call.1} parent=1 // pred_region
      %1831 = vsyncadd %s281, 16
    $region1169: #{tpu_custom_call.1} parent=1 // pred_fallthru
      _
    %s1832 = sld [smem:[#allocation5 + $0x26]]
    %s1833 = scalar_lea.vmem %s1, %s1832
    %s1834 = scalar_lea.vmem [#allocation2], 38
    %p1836 = scmp.lt.u32.totalorder 1, 8
    %p1837 = pneg %p1836
    // Predicated region
    $region1170: #{tpu_custom_call.1} parent=1 // pred_check
      _
    $region1171: #{tpu_custom_call.1} parent=1 // pred_check_branch
      %1839 = sbr.rel (%p1836) target = $region1173
    $region1172: #{tpu_custom_call.1} parent=1 // pred_region
      %s1854 = sand.u32 1, 7
      %p1855 = scmp.eq.s32.totalorder %s1854, 0
      %p1856 = pneg %p1855
      // Predicated region
      $region1185: #{tpu_custom_call.1} parent=1172 // pred_check
        _
      $region1186: #{tpu_custom_call.1} parent=1172 // pred_check_branch
        %1858 = sbr.rel (%p1855) target = $region1188
      $region1187: #{tpu_custom_call.1} parent=1172 // pred_region
        %s1859 = sand.u32 1, 7
        %s1860 = ssub.s32 1, %s1859
        %s1861 = scalar_lea.vmem %s1833, %s1860
        %s1862 = ssub.s32 1, %s1859
        %s1863 = scalar_lea.vmem %s1834, %s1862 [#allocation2]
        %s1864 = sshllo.u32 0, %s1859
        loop: start=0, step=1, limit=1
        $region1189: #{tpu_custom_call.1} parent=1187 // loop_pre_header
          _
        $region1190: #{tpu_custom_call.1} parent=1187 // loop_header
          %s1866 = sphi 0, %s1870
          %p1867 = scmp.ge.s32.totalorder %s1866, 1
          %s1871 = sphi %s1861, %s1861
          %s1872 = sphi %s1863, %s1863
        $region1191: #{tpu_custom_call.1} parent=1187 // loop_header_branch
          %1869 = sbr.rel (%p1867) target = $region1195
        $region1192: #{tpu_custom_call.1} parent=1187 // loop_body
          %v1873 = vld [vmem:[%s1871] sm:%s1864]
          %1874 = vst [vmem:[%s1872] sm:%s1864] %v1873
        $region1193: #{tpu_custom_call.1} parent=1187 // loop_footer
          %s1870 = sadd.s32 1, %s1866
        $region1194: #{tpu_custom_call.1} parent=1187 // loop_footer_branch
          %1865 = sbr.rel target = $region1190
        $region1195: #{tpu_custom_call.1} parent=1187 // loop_exit
          _
      $region1188: #{tpu_custom_call.1} parent=1172 // pred_fallthru
        _
    $region1173: #{tpu_custom_call.1} parent=1 // pred_fallthru
      _
    // Predicated region
    $region1174: #{tpu_custom_call.1} parent=1 // pred_check
      %p1840 = pneg %p1836
    $region1175: #{tpu_custom_call.1} parent=1 // pred_check_branch
      %1842 = sbr.rel (%p1840) target = $region1177
    $region1176: #{tpu_custom_call.1} parent=1 // pred_region
      %s1843 = sshllo.u32 0, 1
      loop: start=0, step=1, limit=1
      $region1178: #{tpu_custom_call.1} parent=1176 // loop_pre_header
        _
      $region1179: #{tpu_custom_call.1} parent=1176 // loop_header
        %s1845 = sphi 0, %s1849
        %p1846 = scmp.ge.s32.totalorder %s1845, 1
        %s1850 = sphi %s1833, %s1833
        %s1851 = sphi %s1834, %s1834
      $region1180: #{tpu_custom_call.1} parent=1176 // loop_header_branch
        %1848 = sbr.rel (%p1846) target = $region1184
      $region1181: #{tpu_custom_call.1} parent=1176 // loop_body
        %v1852 = vld [vmem:[%s1850] sm:%s1843]
        %1853 = vst [vmem:[%s1851] sm:%s1843] %v1852
      $region1182: #{tpu_custom_call.1} parent=1176 // loop_footer
        %s1849 = sadd.s32 1, %s1845
      $region1183: #{tpu_custom_call.1} parent=1176 // loop_footer_branch
        %1844 = sbr.rel target = $region1179
      $region1184: #{tpu_custom_call.1} parent=1176 // loop_exit
        _
    $region1177: #{tpu_custom_call.1} parent=1 // pred_fallthru
      _
    // Predicated region
    $region1196: #{tpu_custom_call.1} parent=1 // pred_check
      _
    $region1197: #{tpu_custom_call.1} parent=1 // pred_check_branch
      %1877 = sbr.rel (0) target = $region1199
    $region1198: #{tpu_custom_call.1} parent=1 // pred_region
      %1878 = vsyncadd %s329, 16
    $region1199: #{tpu_custom_call.1} parent=1 // pred_fallthru
      _
    %s1879 = sld [smem:[#allocation5 + $0x27]]
    %s1880 = scalar_lea.vmem %s1, %s1879
    %s1881 = scalar_lea.vmem [#allocation2], 39
    %p1883 = scmp.lt.u32.totalorder 1, 8
    %p1884 = pneg %p1883
    // Predicated region
    $region1200: #{tpu_custom_call.1} parent=1 // pred_check
      _
    $region1201: #{tpu_custom_call.1} parent=1 // pred_check_branch
      %1886 = sbr.rel (%p1883) target = $region1203
    $region1202: #{tpu_custom_call.1} parent=1 // pred_region
      %s1901 = sand.u32 1, 7
      %p1902 = scmp.eq.s32.totalorder %s1901, 0
      %p1903 = pneg %p1902
      // Predicated region
      $region1215: #{tpu_custom_call.1} parent=1202 // pred_check
        _
      $region1216: #{tpu_custom_call.1} parent=1202 // pred_check_branch
        %1905 = sbr.rel (%p1902) target = $region1218
      $region1217: #{tpu_custom_call.1} parent=1202 // pred_region
        %s1906 = sand.u32 1, 7
        %s1907 = ssub.s32 1, %s1906
        %s1908 = scalar_lea.vmem %s1880, %s1907
        %s1909 = ssub.s32 1, %s1906
        %s1910 = scalar_lea.vmem %s1881, %s1909 [#allocation2]
        %s1911 = sshllo.u32 0, %s1906
        loop: start=0, step=1, limit=1
        $region1219: #{tpu_custom_call.1} parent=1217 // loop_pre_header
          _
        $region1220: #{tpu_custom_call.1} parent=1217 // loop_header
          %s1913 = sphi 0, %s1917
          %p1914 = scmp.ge.s32.totalorder %s1913, 1
          %s1918 = sphi %s1908, %s1908
          %s1919 = sphi %s1910, %s1910
        $region1221: #{tpu_custom_call.1} parent=1217 // loop_header_branch
          %1916 = sbr.rel (%p1914) target = $region1225
        $region1222: #{tpu_custom_call.1} parent=1217 // loop_body
          %v1920 = vld [vmem:[%s1918] sm:%s1911]
          %1921 = vst [vmem:[%s1919] sm:%s1911] %v1920
        $region1223: #{tpu_custom_call.1} parent=1217 // loop_footer
          %s1917 = sadd.s32 1, %s1913
        $region1224: #{tpu_custom_call.1} parent=1217 // loop_footer_branch
          %1912 = sbr.rel target = $region1220
        $region1225: #{tpu_custom_call.1} parent=1217 // loop_exit
          _
      $region1218: #{tpu_custom_call.1} parent=1202 // pred_fallthru
        _
    $region1203: #{tpu_custom_call.1} parent=1 // pred_fallthru
      _
    // Predicated region
    $region1204: #{tpu_custom_call.1} parent=1 // pred_check
      %p1887 = pneg %p1883
    $region1205: #{tpu_custom_call.1} parent=1 // pred_check_branch
      %1889 = sbr.rel (%p1887) target = $region1207
    $region1206: #{tpu_custom_call.1} parent=1 // pred_region
      %s1890 = sshllo.u32 0, 1
      loop: start=0, step=1, limit=1
      $region1208: #{tpu_custom_call.1} parent=1206 // loop_pre_header
        _
      $region1209: #{tpu_custom_call.1} parent=1206 // loop_header
        %s1892 = sphi 0, %s1896
        %p1893 = scmp.ge.s32.totalorder %s1892, 1
        %s1897 = sphi %s1880, %s1880
        %s1898 = sphi %s1881, %s1881
      $region1210: #{tpu_custom_call.1} parent=1206 // loop_header_branch
        %1895 = sbr.rel (%p1893) target = $region1214
      $region1211: #{tpu_custom_call.1} parent=1206 // loop_body
        %v1899 = vld [vmem:[%s1897] sm:%s1890]
        %1900 = vst [vmem:[%s1898] sm:%s1890] %v1899
      $region1212: #{tpu_custom_call.1} parent=1206 // loop_footer
        %s1896 = sadd.s32 1, %s1892
      $region1213: #{tpu_custom_call.1} parent=1206 // loop_footer_branch
        %1891 = sbr.rel target = $region1209
      $region1214: #{tpu_custom_call.1} parent=1206 // loop_exit
        _
    $region1207: #{tpu_custom_call.1} parent=1 // pred_fallthru
      _
    // Predicated region
    $region1226: #{tpu_custom_call.1} parent=1 // pred_check
      _
    $region1227: #{tpu_custom_call.1} parent=1 // pred_check_branch
      %1924 = sbr.rel (0) target = $region1229
    $region1228: #{tpu_custom_call.1} parent=1 // pred_region
      %1925 = vsyncadd %s377, 16
    $region1229: #{tpu_custom_call.1} parent=1 // pred_fallthru
      _
    %s1926 = sld [smem:[#allocation5 + $0x28]]
    %s1927 = scalar_lea.vmem %s1, %s1926
    %s1928 = scalar_lea.vmem [#allocation2], 40
    %p1930 = scmp.lt.u32.totalorder 1, 8
    %p1931 = pneg %p1930
    // Predicated region
    $region1230: #{tpu_custom_call.1} parent=1 // pred_check
      _
    $region1231: #{tpu_custom_call.1} parent=1 // pred_check_branch
      %1933 = sbr.rel (%p1930) target = $region1233
    $region1232: #{tpu_custom_call.1} parent=1 // pred_region
      %s1948 = sand.u32 1, 7
      %p1949 = scmp.eq.s32.totalorder %s1948, 0
      %p1950 = pneg %p1949
      // Predicated region
      $region1245: #{tpu_custom_call.1} parent=1232 // pred_check
        _
      $region1246: #{tpu_custom_call.1} parent=1232 // pred_check_branch
        %1952 = sbr.rel (%p1949) target = $region1248
      $region1247: #{tpu_custom_call.1} parent=1232 // pred_region
        %s1953 = sand.u32 1, 7
        %s1954 = ssub.s32 1, %s1953
        %s1955 = scalar_lea.vmem %s1927, %s1954
        %s1956 = ssub.s32 1, %s1953
        %s1957 = scalar_lea.vmem %s1928, %s1956 [#allocation2]
        %s1958 = sshllo.u32 0, %s1953
        loop: start=0, step=1, limit=1
        $region1249: #{tpu_custom_call.1} parent=1247 // loop_pre_header
          _
        $region1250: #{tpu_custom_call.1} parent=1247 // loop_header
          %s1960 = sphi 0, %s1964
          %p1961 = scmp.ge.s32.totalorder %s1960, 1
          %s1965 = sphi %s1955, %s1955
          %s1966 = sphi %s1957, %s1957
        $region1251: #{tpu_custom_call.1} parent=1247 // loop_header_branch
          %1963 = sbr.rel (%p1961) target = $region1255
        $region1252: #{tpu_custom_call.1} parent=1247 // loop_body
          %v1967 = vld [vmem:[%s1965] sm:%s1958]
          %1968 = vst [vmem:[%s1966] sm:%s1958] %v1967
        $region1253: #{tpu_custom_call.1} parent=1247 // loop_footer
          %s1964 = sadd.s32 1, %s1960
        $region1254: #{tpu_custom_call.1} parent=1247 // loop_footer_branch
          %1959 = sbr.rel target = $region1250
        $region1255: #{tpu_custom_call.1} parent=1247 // loop_exit
          _
      $region1248: #{tpu_custom_call.1} parent=1232 // pred_fallthru
        _
    $region1233: #{tpu_custom_call.1} parent=1 // pred_fallthru
      _
    // Predicated region
    $region1234: #{tpu_custom_call.1} parent=1 // pred_check
      %p1934 = pneg %p1930
    $region1235: #{tpu_custom_call.1} parent=1 // pred_check_branch
      %1936 = sbr.rel (%p1934) target = $region1237
    $region1236: #{tpu_custom_call.1} parent=1 // pred_region
      %s1937 = sshllo.u32 0, 1
      loop: start=0, step=1, limit=1
      $region1238: #{tpu_custom_call.1} parent=1236 // loop_pre_header
        _
      $region1239: #{tpu_custom_call.1} parent=1236 // loop_header
        %s1939 = sphi 0, %s1943
        %p1940 = scmp.ge.s32.totalorder %s1939, 1
        %s1944 = sphi %s1927, %s1927
        %s1945 = sphi %s1928, %s1928
      $region1240: #{tpu_custom_call.1} parent=1236 // loop_header_branch
        %1942 = sbr.rel (%p1940) target = $region1244
      $region1241: #{tpu_custom_call.1} parent=1236 // loop_body
        %v1946 = vld [vmem:[%s1944] sm:%s1937]
        %1947 = vst [vmem:[%s1945] sm:%s1937] %v1946
      $region1242: #{tpu_custom_call.1} parent=1236 // loop_footer
        %s1943 = sadd.s32 1, %s1939
      $region1243: #{tpu_custom_call.1} parent=1236 // loop_footer_branch
        %1938 = sbr.rel target = $region1239
      $region1244: #{tpu_custom_call.1} parent=1236 // loop_exit
        _
    $region1237: #{tpu_custom_call.1} parent=1 // pred_fallthru
      _
    // Predicated region
    $region1256: #{tpu_custom_call.1} parent=1 // pred_check
      _
    $region1257: #{tpu_custom_call.1} parent=1 // pred_check_branch
      %1971 = sbr.rel (0) target = $region1259
    $region1258: #{tpu_custom_call.1} parent=1 // pred_region
      %1972 = vsyncadd [#allocation3], 16
    $region1259: #{tpu_custom_call.1} parent=1 // pred_fallthru
      _
    %s1973 = sld [smem:[#allocation5 + $0x29]]
    %s1974 = scalar_lea.vmem %s1, %s1973
    %s1975 = scalar_lea.vmem [#allocation2], 41
    %p1977 = scmp.lt.u32.totalorder 1, 8
    %p1978 = pneg %p1977
    // Predicated region
    $region1260: #{tpu_custom_call.1} parent=1 // pred_check
      _
    $region1261: #{tpu_custom_call.1} parent=1 // pred_check_branch
      %1980 = sbr.rel (%p1977) target = $region1263
    $region1262: #{tpu_custom_call.1} parent=1 // pred_region
      %s1995 = sand.u32 1, 7
      %p1996 = scmp.eq.s32.totalorder %s1995, 0
      %p1997 = pneg %p1996
      // Predicated region
      $region1275: #{tpu_custom_call.1} parent=1262 // pred_check
        _
      $region1276: #{tpu_custom_call.1} parent=1262 // pred_check_branch
        %1999 = sbr.rel (%p1996) target = $region1278
      $region1277: #{tpu_custom_call.1} parent=1262 // pred_region
        %s2000 = sand.u32 1, 7
        %s2001 = ssub.s32 1, %s2000
        %s2002 = scalar_lea.vmem %s1974, %s2001
        %s2003 = ssub.s32 1, %s2000
        %s2004 = scalar_lea.vmem %s1975, %s2003 [#allocation2]
        %s2005 = sshllo.u32 0, %s2000
        loop: start=0, step=1, limit=1
        $region1279: #{tpu_custom_call.1} parent=1277 // loop_pre_header
          _
        $region1280: #{tpu_custom_call.1} parent=1277 // loop_header
          %s2007 = sphi 0, %s2011
          %p2008 = scmp.ge.s32.totalorder %s2007, 1
          %s2012 = sphi %s2002, %s2002
          %s2013 = sphi %s2004, %s2004
        $region1281: #{tpu_custom_call.1} parent=1277 // loop_header_branch
          %2010 = sbr.rel (%p2008) target = $region1285
        $region1282: #{tpu_custom_call.1} parent=1277 // loop_body
          %v2014 = vld [vmem:[%s2012] sm:%s2005]
          %2015 = vst [vmem:[%s2013] sm:%s2005] %v2014
        $region1283: #{tpu_custom_call.1} parent=1277 // loop_footer
          %s2011 = sadd.s32 1, %s2007
        $region1284: #{tpu_custom_call.1} parent=1277 // loop_footer_branch
          %2006 = sbr.rel target = $region1280
        $region1285: #{tpu_custom_call.1} parent=1277 // loop_exit
          _
      $region1278: #{tpu_custom_call.1} parent=1262 // pred_fallthru
        _
    $region1263: #{tpu_custom_call.1} parent=1 // pred_fallthru
      _
    // Predicated region
    $region1264: #{tpu_custom_call.1} parent=1 // pred_check
      %p1981 = pneg %p1977
    $region1265: #{tpu_custom_call.1} parent=1 // pred_check_branch
      %1983 = sbr.rel (%p1981) target = $region1267
    $region1266: #{tpu_custom_call.1} parent=1 // pred_region
      %s1984 = sshllo.u32 0, 1
      loop: start=0, step=1, limit=1
      $region1268: #{tpu_custom_call.1} parent=1266 // loop_pre_header
        _
      $region1269: #{tpu_custom_call.1} parent=1266 // loop_header
        %s1986 = sphi 0, %s1990
        %p1987 = scmp.ge.s32.totalorder %s1986, 1
        %s1991 = sphi %s1974, %s1974
        %s1992 = sphi %s1975, %s1975
      $region1270: #{tpu_custom_call.1} parent=1266 // loop_header_branch
        %1989 = sbr.rel (%p1987) target = $region1274
      $region1271: #{tpu_custom_call.1} parent=1266 // loop_body
        %v1993 = vld [vmem:[%s1991] sm:%s1984]
        %1994 = vst [vmem:[%s1992] sm:%s1984] %v1993
      $region1272: #{tpu_custom_call.1} parent=1266 // loop_footer
        %s1990 = sadd.s32 1, %s1986
      $region1273: #{tpu_custom_call.1} parent=1266 // loop_footer_branch
        %1985 = sbr.rel target = $region1269
      $region1274: #{tpu_custom_call.1} parent=1266 // loop_exit
        _
    $region1267: #{tpu_custom_call.1} parent=1 // pred_fallthru
      _
    // Predicated region
    $region1286: #{tpu_custom_call.1} parent=1 // pred_check
      _
    $region1287: #{tpu_custom_call.1} parent=1 // pred_check_branch
      %2018 = sbr.rel (0) target = $region1289
    $region1288: #{tpu_custom_call.1} parent=1 // pred_region
      %2019 = vsyncadd %s89, 16
    $region1289: #{tpu_custom_call.1} parent=1 // pred_fallthru
      _
    %s2020 = sld [smem:[#allocation5 + $0x2a]]
    %s2021 = scalar_lea.vmem %s1, %s2020
    %s2022 = scalar_lea.vmem [#allocation2], 42
    %p2024 = scmp.lt.u32.totalorder 1, 8
    %p2025 = pneg %p2024
    // Predicated region
    $region1290: #{tpu_custom_call.1} parent=1 // pred_check
      _
    $region1291: #{tpu_custom_call.1} parent=1 // pred_check_branch
      %2027 = sbr.rel (%p2024) target = $region1293
    $region1292: #{tpu_custom_call.1} parent=1 // pred_region
      %s2042 = sand.u32 1, 7
      %p2043 = scmp.eq.s32.totalorder %s2042, 0
      %p2044 = pneg %p2043
      // Predicated region
      $region1305: #{tpu_custom_call.1} parent=1292 // pred_check
        _
      $region1306: #{tpu_custom_call.1} parent=1292 // pred_check_branch
        %2046 = sbr.rel (%p2043) target = $region1308
      $region1307: #{tpu_custom_call.1} parent=1292 // pred_region
        %s2047 = sand.u32 1, 7
        %s2048 = ssub.s32 1, %s2047
        %s2049 = scalar_lea.vmem %s2021, %s2048
        %s2050 = ssub.s32 1, %s2047
        %s2051 = scalar_lea.vmem %s2022, %s2050 [#allocation2]
        %s2052 = sshllo.u32 0, %s2047
        loop: start=0, step=1, limit=1
        $region1309: #{tpu_custom_call.1} parent=1307 // loop_pre_header
          _
        $region1310: #{tpu_custom_call.1} parent=1307 // loop_header
          %s2054 = sphi 0, %s2058
          %p2055 = scmp.ge.s32.totalorder %s2054, 1
          %s2059 = sphi %s2049, %s2049
          %s2060 = sphi %s2051, %s2051
        $region1311: #{tpu_custom_call.1} parent=1307 // loop_header_branch
          %2057 = sbr.rel (%p2055) target = $region1315
        $region1312: #{tpu_custom_call.1} parent=1307 // loop_body
          %v2061 = vld [vmem:[%s2059] sm:%s2052]
          %2062 = vst [vmem:[%s2060] sm:%s2052] %v2061
        $region1313: #{tpu_custom_call.1} parent=1307 // loop_footer
          %s2058 = sadd.s32 1, %s2054
        $region1314: #{tpu_custom_call.1} parent=1307 // loop_footer_branch
          %2053 = sbr.rel target = $region1310
        $region1315: #{tpu_custom_call.1} parent=1307 // loop_exit
          _
      $region1308: #{tpu_custom_call.1} parent=1292 // pred_fallthru
        _
    $region1293: #{tpu_custom_call.1} parent=1 // pred_fallthru
      _
    // Predicated region
    $region1294: #{tpu_custom_call.1} parent=1 // pred_check
      %p2028 = pneg %p2024
    $region1295: #{tpu_custom_call.1} parent=1 // pred_check_branch
      %2030 = sbr.rel (%p2028) target = $region1297
    $region1296: #{tpu_custom_call.1} parent=1 // pred_region
      %s2031 = sshllo.u32 0, 1
      loop: start=0, step=1, limit=1
      $region1298: #{tpu_custom_call.1} parent=1296 // loop_pre_header
        _
      $region1299: #{tpu_custom_call.1} parent=1296 // loop_header
        %s2033 = sphi 0, %s2037
        %p2034 = scmp.ge.s32.totalorder %s2033, 1
        %s2038 = sphi %s2021, %s2021
        %s2039 = sphi %s2022, %s2022
      $region1300: #{tpu_custom_call.1} parent=1296 // loop_header_branch
        %2036 = sbr.rel (%p2034) target = $region1304
      $region1301: #{tpu_custom_call.1} parent=1296 // loop_body
        %v2040 = vld [vmem:[%s2038] sm:%s2031]
        %2041 = vst [vmem:[%s2039] sm:%s2031] %v2040
      $region1302: #{tpu_custom_call.1} parent=1296 // loop_footer
        %s2037 = sadd.s32 1, %s2033
      $region1303: #{tpu_custom_call.1} parent=1296 // loop_footer_branch
        %2032 = sbr.rel target = $region1299
      $region1304: #{tpu_custom_call.1} parent=1296 // loop_exit
        _
    $region1297: #{tpu_custom_call.1} parent=1 // pred_fallthru
      _
    // Predicated region
    $region1316: #{tpu_custom_call.1} parent=1 // pred_check
      _
    $region1317: #{tpu_custom_call.1} parent=1 // pred_check_branch
      %2065 = sbr.rel (0) target = $region1319
    $region1318: #{tpu_custom_call.1} parent=1 // pred_region
      %2066 = vsyncadd %s137, 16
    $region1319: #{tpu_custom_call.1} parent=1 // pred_fallthru
      _
    %s2067 = sld [smem:[#allocation5 + $0x2b]]
    %s2068 = scalar_lea.vmem %s1, %s2067
    %s2069 = scalar_lea.vmem [#allocation2], 43
    %p2071 = scmp.lt.u32.totalorder 1, 8
    %p2072 = pneg %p2071
    // Predicated region
    $region1320: #{tpu_custom_call.1} parent=1 // pred_check
      _
    $region1321: #{tpu_custom_call.1} parent=1 // pred_check_branch
      %2074 = sbr.rel (%p2071) target = $region1323
    $region1322: #{tpu_custom_call.1} parent=1 // pred_region
      %s2089 = sand.u32 1, 7
      %p2090 = scmp.eq.s32.totalorder %s2089, 0
      %p2091 = pneg %p2090
      // Predicated region
      $region1335: #{tpu_custom_call.1} parent=1322 // pred_check
        _
      $region1336: #{tpu_custom_call.1} parent=1322 // pred_check_branch
        %2093 = sbr.rel (%p2090) target = $region1338
      $region1337: #{tpu_custom_call.1} parent=1322 // pred_region
        %s2094 = sand.u32 1, 7
        %s2095 = ssub.s32 1, %s2094
        %s2096 = scalar_lea.vmem %s2068, %s2095
        %s2097 = ssub.s32 1, %s2094
        %s2098 = scalar_lea.vmem %s2069, %s2097 [#allocation2]
        %s2099 = sshllo.u32 0, %s2094
        loop: start=0, step=1, limit=1
        $region1339: #{tpu_custom_call.1} parent=1337 // loop_pre_header
          _
        $region1340: #{tpu_custom_call.1} parent=1337 // loop_header
          %s2101 = sphi 0, %s2105
          %p2102 = scmp.ge.s32.totalorder %s2101, 1
          %s2106 = sphi %s2096, %s2096
          %s2107 = sphi %s2098, %s2098
        $region1341: #{tpu_custom_call.1} parent=1337 // loop_header_branch
          %2104 = sbr.rel (%p2102) target = $region1345
        $region1342: #{tpu_custom_call.1} parent=1337 // loop_body
          %v2108 = vld [vmem:[%s2106] sm:%s2099]
          %2109 = vst [vmem:[%s2107] sm:%s2099] %v2108
        $region1343: #{tpu_custom_call.1} parent=1337 // loop_footer
          %s2105 = sadd.s32 1, %s2101
        $region1344: #{tpu_custom_call.1} parent=1337 // loop_footer_branch
          %2100 = sbr.rel target = $region1340
        $region1345: #{tpu_custom_call.1} parent=1337 // loop_exit
          _
      $region1338: #{tpu_custom_call.1} parent=1322 // pred_fallthru
        _
    $region1323: #{tpu_custom_call.1} parent=1 // pred_fallthru
      _
    // Predicated region
    $region1324: #{tpu_custom_call.1} parent=1 // pred_check
      %p2075 = pneg %p2071
    $region1325: #{tpu_custom_call.1} parent=1 // pred_check_branch
      %2077 = sbr.rel (%p2075) target = $region1327
    $region1326: #{tpu_custom_call.1} parent=1 // pred_region
      %s2078 = sshllo.u32 0, 1
      loop: start=0, step=1, limit=1
      $region1328: #{tpu_custom_call.1} parent=1326 // loop_pre_header
        _
      $region1329: #{tpu_custom_call.1} parent=1326 // loop_header
        %s2080 = sphi 0, %s2084
        %p2081 = scmp.ge.s32.totalorder %s2080, 1
        %s2085 = sphi %s2068, %s2068
        %s2086 = sphi %s2069, %s2069
      $region1330: #{tpu_custom_call.1} parent=1326 // loop_header_branch
        %2083 = sbr.rel (%p2081) target = $region1334
      $region1331: #{tpu_custom_call.1} parent=1326 // loop_body
        %v2087 = vld [vmem:[%s2085] sm:%s2078]
        %2088 = vst [vmem:[%s2086] sm:%s2078] %v2087
      $region1332: #{tpu_custom_call.1} parent=1326 // loop_footer
        %s2084 = sadd.s32 1, %s2080
      $region1333: #{tpu_custom_call.1} parent=1326 // loop_footer_branch
        %2079 = sbr.rel target = $region1329
      $region1334: #{tpu_custom_call.1} parent=1326 // loop_exit
        _
    $region1327: #{tpu_custom_call.1} parent=1 // pred_fallthru
      _
    // Predicated region
    $region1346: #{tpu_custom_call.1} parent=1 // pred_check
      _
    $region1347: #{tpu_custom_call.1} parent=1 // pred_check_branch
      %2112 = sbr.rel (0) target = $region1349
    $region1348: #{tpu_custom_call.1} parent=1 // pred_region
      %2113 = vsyncadd %s185, 16
    $region1349: #{tpu_custom_call.1} parent=1 // pred_fallthru
      _
    %s2114 = sld [smem:[#allocation5 + $0x2c]]
    %s2115 = scalar_lea.vmem %s1, %s2114
    %s2116 = scalar_lea.vmem [#allocation2], 44
    %p2118 = scmp.lt.u32.totalorder 1, 8
    %p2119 = pneg %p2118
    // Predicated region
    $region1350: #{tpu_custom_call.1} parent=1 // pred_check
      _
    $region1351: #{tpu_custom_call.1} parent=1 // pred_check_branch
      %2121 = sbr.rel (%p2118) target = $region1353
    $region1352: #{tpu_custom_call.1} parent=1 // pred_region
      %s2136 = sand.u32 1, 7
      %p2137 = scmp.eq.s32.totalorder %s2136, 0
      %p2138 = pneg %p2137
      // Predicated region
      $region1365: #{tpu_custom_call.1} parent=1352 // pred_check
        _
      $region1366: #{tpu_custom_call.1} parent=1352 // pred_check_branch
        %2140 = sbr.rel (%p2137) target = $region1368
      $region1367: #{tpu_custom_call.1} parent=1352 // pred_region
        %s2141 = sand.u32 1, 7
        %s2142 = ssub.s32 1, %s2141
        %s2143 = scalar_lea.vmem %s2115, %s2142
        %s2144 = ssub.s32 1, %s2141
        %s2145 = scalar_lea.vmem %s2116, %s2144 [#allocation2]
        %s2146 = sshllo.u32 0, %s2141
        loop: start=0, step=1, limit=1
        $region1369: #{tpu_custom_call.1} parent=1367 // loop_pre_header
          _
        $region1370: #{tpu_custom_call.1} parent=1367 // loop_header
          %s2148 = sphi 0, %s2152
          %p2149 = scmp.ge.s32.totalorder %s2148, 1
          %s2153 = sphi %s2143, %s2143
          %s2154 = sphi %s2145, %s2145
        $region1371: #{tpu_custom_call.1} parent=1367 // loop_header_branch
          %2151 = sbr.rel (%p2149) target = $region1375
        $region1372: #{tpu_custom_call.1} parent=1367 // loop_body
          %v2155 = vld [vmem:[%s2153] sm:%s2146]
          %2156 = vst [vmem:[%s2154] sm:%s2146] %v2155
        $region1373: #{tpu_custom_call.1} parent=1367 // loop_footer
          %s2152 = sadd.s32 1, %s2148
        $region1374: #{tpu_custom_call.1} parent=1367 // loop_footer_branch
          %2147 = sbr.rel target = $region1370
        $region1375: #{tpu_custom_call.1} parent=1367 // loop_exit
          _
      $region1368: #{tpu_custom_call.1} parent=1352 // pred_fallthru
        _
    $region1353: #{tpu_custom_call.1} parent=1 // pred_fallthru
      _
    // Predicated region
    $region1354: #{tpu_custom_call.1} parent=1 // pred_check
      %p2122 = pneg %p2118
    $region1355: #{tpu_custom_call.1} parent=1 // pred_check_branch
      %2124 = sbr.rel (%p2122) target = $region1357
    $region1356: #{tpu_custom_call.1} parent=1 // pred_region
      %s2125 = sshllo.u32 0, 1
      loop: start=0, step=1, limit=1
      $region1358: #{tpu_custom_call.1} parent=1356 // loop_pre_header
        _
      $region1359: #{tpu_custom_call.1} parent=1356 // loop_header
        %s2127 = sphi 0, %s2131
        %p2128 = scmp.ge.s32.totalorder %s2127, 1
        %s2132 = sphi %s2115, %s2115
        %s2133 = sphi %s2116, %s2116
      $region1360: #{tpu_custom_call.1} parent=1356 // loop_header_branch
        %2130 = sbr.rel (%p2128) target = $region1364
      $region1361: #{tpu_custom_call.1} parent=1356 // loop_body
        %v2134 = vld [vmem:[%s2132] sm:%s2125]
        %2135 = vst [vmem:[%s2133] sm:%s2125] %v2134
      $region1362: #{tpu_custom_call.1} parent=1356 // loop_footer
        %s2131 = sadd.s32 1, %s2127
      $region1363: #{tpu_custom_call.1} parent=1356 // loop_footer_branch
        %2126 = sbr.rel target = $region1359
      $region1364: #{tpu_custom_call.1} parent=1356 // loop_exit
        _
    $region1357: #{tpu_custom_call.1} parent=1 // pred_fallthru
      _
    // Predicated region
    $region1376: #{tpu_custom_call.1} parent=1 // pred_check
      _
    $region1377: #{tpu_custom_call.1} parent=1 // pred_check_branch
      %2159 = sbr.rel (0) target = $region1379
    $region1378: #{tpu_custom_call.1} parent=1 // pred_region
      %2160 = vsyncadd %s233, 16
    $region1379: #{tpu_custom_call.1} parent=1 // pred_fallthru
      _
    %s2161 = sld [smem:[#allocation5 + $0x2d]]
    %s2162 = scalar_lea.vmem %s1, %s2161
    %s2163 = scalar_lea.vmem [#allocation2], 45
    %p2165 = scmp.lt.u32.totalorder 1, 8
    %p2166 = pneg %p2165
    // Predicated region
    $region1380: #{tpu_custom_call.1} parent=1 // pred_check
      _
    $region1381: #{tpu_custom_call.1} parent=1 // pred_check_branch
      %2168 = sbr.rel (%p2165) target = $region1383
    $region1382: #{tpu_custom_call.1} parent=1 // pred_region
      %s2183 = sand.u32 1, 7
      %p2184 = scmp.eq.s32.totalorder %s2183, 0
      %p2185 = pneg %p2184
      // Predicated region
      $region1395: #{tpu_custom_call.1} parent=1382 // pred_check
        _
      $region1396: #{tpu_custom_call.1} parent=1382 // pred_check_branch
        %2187 = sbr.rel (%p2184) target = $region1398
      $region1397: #{tpu_custom_call.1} parent=1382 // pred_region
        %s2188 = sand.u32 1, 7
        %s2189 = ssub.s32 1, %s2188
        %s2190 = scalar_lea.vmem %s2162, %s2189
        %s2191 = ssub.s32 1, %s2188
        %s2192 = scalar_lea.vmem %s2163, %s2191 [#allocation2]
        %s2193 = sshllo.u32 0, %s2188
        loop: start=0, step=1, limit=1
        $region1399: #{tpu_custom_call.1} parent=1397 // loop_pre_header
          _
        $region1400: #{tpu_custom_call.1} parent=1397 // loop_header
          %s2195 = sphi 0, %s2199
          %p2196 = scmp.ge.s32.totalorder %s2195, 1
          %s2200 = sphi %s2190, %s2190
          %s2201 = sphi %s2192, %s2192
        $region1401: #{tpu_custom_call.1} parent=1397 // loop_header_branch
          %2198 = sbr.rel (%p2196) target = $region1405
        $region1402: #{tpu_custom_call.1} parent=1397 // loop_body
          %v2202 = vld [vmem:[%s2200] sm:%s2193]
          %2203 = vst [vmem:[%s2201] sm:%s2193] %v2202
        $region1403: #{tpu_custom_call.1} parent=1397 // loop_footer
          %s2199 = sadd.s32 1, %s2195
        $region1404: #{tpu_custom_call.1} parent=1397 // loop_footer_branch
          %2194 = sbr.rel target = $region1400
        $region1405: #{tpu_custom_call.1} parent=1397 // loop_exit
          _
      $region1398: #{tpu_custom_call.1} parent=1382 // pred_fallthru
        _
    $region1383: #{tpu_custom_call.1} parent=1 // pred_fallthru
      _
    // Predicated region
    $region1384: #{tpu_custom_call.1} parent=1 // pred_check
      %p2169 = pneg %p2165
    $region1385: #{tpu_custom_call.1} parent=1 // pred_check_branch
      %2171 = sbr.rel (%p2169) target = $region1387
    $region1386: #{tpu_custom_call.1} parent=1 // pred_region
      %s2172 = sshllo.u32 0, 1
      loop: start=0, step=1, limit=1
      $region1388: #{tpu_custom_call.1} parent=1386 // loop_pre_header
        _
      $region1389: #{tpu_custom_call.1} parent=1386 // loop_header
        %s2174 = sphi 0, %s2178
        %p2175 = scmp.ge.s32.totalorder %s2174, 1
        %s2179 = sphi %s2162, %s2162
        %s2180 = sphi %s2163, %s2163
      $region1390: #{tpu_custom_call.1} parent=1386 // loop_header_branch
        %2177 = sbr.rel (%p2175) target = $region1394
      $region1391: #{tpu_custom_call.1} parent=1386 // loop_body
        %v2181 = vld [vmem:[%s2179] sm:%s2172]
        %2182 = vst [vmem:[%s2180] sm:%s2172] %v2181
      $region1392: #{tpu_custom_call.1} parent=1386 // loop_footer
        %s2178 = sadd.s32 1, %s2174
      $region1393: #{tpu_custom_call.1} parent=1386 // loop_footer_branch
        %2173 = sbr.rel target = $region1389
      $region1394: #{tpu_custom_call.1} parent=1386 // loop_exit
        _
    $region1387: #{tpu_custom_call.1} parent=1 // pred_fallthru
      _
    // Predicated region
    $region1406: #{tpu_custom_call.1} parent=1 // pred_check
      _
    $region1407: #{tpu_custom_call.1} parent=1 // pred_check_branch
      %2206 = sbr.rel (0) target = $region1409
    $region1408: #{tpu_custom_call.1} parent=1 // pred_region
      %2207 = vsyncadd %s281, 16
    $region1409: #{tpu_custom_call.1} parent=1 // pred_fallthru
      _
    %s2208 = sld [smem:[#allocation5 + $0x2e]]
    %s2209 = scalar_lea.vmem %s1, %s2208
    %s2210 = scalar_lea.vmem [#allocation2], 46
    %p2212 = scmp.lt.u32.totalorder 1, 8
    %p2213 = pneg %p2212
    // Predicated region
    $region1410: #{tpu_custom_call.1} parent=1 // pred_check
      _
    $region1411: #{tpu_custom_call.1} parent=1 // pred_check_branch
      %2215 = sbr.rel (%p2212) target = $region1413
    $region1412: #{tpu_custom_call.1} parent=1 // pred_region
      %s2230 = sand.u32 1, 7
      %p2231 = scmp.eq.s32.totalorder %s2230, 0
      %p2232 = pneg %p2231
      // Predicated region
      $region1425: #{tpu_custom_call.1} parent=1412 // pred_check
        _
      $region1426: #{tpu_custom_call.1} parent=1412 // pred_check_branch
        %2234 = sbr.rel (%p2231) target = $region1428
      $region1427: #{tpu_custom_call.1} parent=1412 // pred_region
        %s2235 = sand.u32 1, 7
        %s2236 = ssub.s32 1, %s2235
        %s2237 = scalar_lea.vmem %s2209, %s2236
        %s2238 = ssub.s32 1, %s2235
        %s2239 = scalar_lea.vmem %s2210, %s2238 [#allocation2]
        %s2240 = sshllo.u32 0, %s2235
        loop: start=0, step=1, limit=1
        $region1429: #{tpu_custom_call.1} parent=1427 // loop_pre_header
          _
        $region1430: #{tpu_custom_call.1} parent=1427 // loop_header
          %s2242 = sphi 0, %s2246
          %p2243 = scmp.ge.s32.totalorder %s2242, 1
          %s2247 = sphi %s2237, %s2237
          %s2248 = sphi %s2239, %s2239
        $region1431: #{tpu_custom_call.1} parent=1427 // loop_header_branch
          %2245 = sbr.rel (%p2243) target = $region1435
        $region1432: #{tpu_custom_call.1} parent=1427 // loop_body
          %v2249 = vld [vmem:[%s2247] sm:%s2240]
          %2250 = vst [vmem:[%s2248] sm:%s2240] %v2249
        $region1433: #{tpu_custom_call.1} parent=1427 // loop_footer
          %s2246 = sadd.s32 1, %s2242
        $region1434: #{tpu_custom_call.1} parent=1427 // loop_footer_branch
          %2241 = sbr.rel target = $region1430
        $region1435: #{tpu_custom_call.1} parent=1427 // loop_exit
          _
      $region1428: #{tpu_custom_call.1} parent=1412 // pred_fallthru
        _
    $region1413: #{tpu_custom_call.1} parent=1 // pred_fallthru
      _
    // Predicated region
    $region1414: #{tpu_custom_call.1} parent=1 // pred_check
      %p2216 = pneg %p2212
    $region1415: #{tpu_custom_call.1} parent=1 // pred_check_branch
      %2218 = sbr.rel (%p2216) target = $region1417
    $region1416: #{tpu_custom_call.1} parent=1 // pred_region
      %s2219 = sshllo.u32 0, 1
      loop: start=0, step=1, limit=1
      $region1418: #{tpu_custom_call.1} parent=1416 // loop_pre_header
        _
      $region1419: #{tpu_custom_call.1} parent=1416 // loop_header
        %s2221 = sphi 0, %s2225
        %p2222 = scmp.ge.s32.totalorder %s2221, 1
        %s2226 = sphi %s2209, %s2209
        %s2227 = sphi %s2210, %s2210
      $region1420: #{tpu_custom_call.1} parent=1416 // loop_header_branch
        %2224 = sbr.rel (%p2222) target = $region1424
      $region1421: #{tpu_custom_call.1} parent=1416 // loop_body
        %v2228 = vld [vmem:[%s2226] sm:%s2219]
        %2229 = vst [vmem:[%s2227] sm:%s2219] %v2228
      $region1422: #{tpu_custom_call.1} parent=1416 // loop_footer
        %s2225 = sadd.s32 1, %s2221
      $region1423: #{tpu_custom_call.1} parent=1416 // loop_footer_branch
        %2220 = sbr.rel target = $region1419
      $region1424: #{tpu_custom_call.1} parent=1416 // loop_exit
        _
    $region1417: #{tpu_custom_call.1} parent=1 // pred_fallthru
      _
    // Predicated region
    $region1436: #{tpu_custom_call.1} parent=1 // pred_check
      _
    $region1437: #{tpu_custom_call.1} parent=1 // pred_check_branch
      %2253 = sbr.rel (0) target = $region1439
    $region1438: #{tpu_custom_call.1} parent=1 // pred_region
      %2254 = vsyncadd %s329, 16
    $region1439: #{tpu_custom_call.1} parent=1 // pred_fallthru
      _
    %s2255 = sld [smem:[#allocation5 + $0x2f]]
    %s2256 = scalar_lea.vmem %s1, %s2255
    %s2257 = scalar_lea.vmem [#allocation2], 47
    %p2259 = scmp.lt.u32.totalorder 1, 8
    %p2260 = pneg %p2259
    // Predicated region
    $region1440: #{tpu_custom_call.1} parent=1 // pred_check
      _
    $region1441: #{tpu_custom_call.1} parent=1 // pred_check_branch
      %2262 = sbr.rel (%p2259) target = $region1443
    $region1442: #{tpu_custom_call.1} parent=1 // pred_region
      %s2277 = sand.u32 1, 7
      %p2278 = scmp.eq.s32.totalorder %s2277, 0
      %p2279 = pneg %p2278
      // Predicated region
      $region1455: #{tpu_custom_call.1} parent=1442 // pred_check
        _
      $region1456: #{tpu_custom_call.1} parent=1442 // pred_check_branch
        %2281 = sbr.rel (%p2278) target = $region1458
      $region1457: #{tpu_custom_call.1} parent=1442 // pred_region
        %s2282 = sand.u32 1, 7
        %s2283 = ssub.s32 1, %s2282
        %s2284 = scalar_lea.vmem %s2256, %s2283
        %s2285 = ssub.s32 1, %s2282
        %s2286 = scalar_lea.vmem %s2257, %s2285 [#allocation2]
        %s2287 = sshllo.u32 0, %s2282
        loop: start=0, step=1, limit=1
        $region1459: #{tpu_custom_call.1} parent=1457 // loop_pre_header
          _
        $region1460: #{tpu_custom_call.1} parent=1457 // loop_header
          %s2289 = sphi 0, %s2293
          %p2290 = scmp.ge.s32.totalorder %s2289, 1
          %s2294 = sphi %s2284, %s2284
          %s2295 = sphi %s2286, %s2286
        $region1461: #{tpu_custom_call.1} parent=1457 // loop_header_branch
          %2292 = sbr.rel (%p2290) target = $region1465
        $region1462: #{tpu_custom_call.1} parent=1457 // loop_body
          %v2296 = vld [vmem:[%s2294] sm:%s2287]
          %2297 = vst [vmem:[%s2295] sm:%s2287] %v2296
        $region1463: #{tpu_custom_call.1} parent=1457 // loop_footer
          %s2293 = sadd.s32 1, %s2289
        $region1464: #{tpu_custom_call.1} parent=1457 // loop_footer_branch
          %2288 = sbr.rel target = $region1460
        $region1465: #{tpu_custom_call.1} parent=1457 // loop_exit
          _
      $region1458: #{tpu_custom_call.1} parent=1442 // pred_fallthru
        _
    $region1443: #{tpu_custom_call.1} parent=1 // pred_fallthru
      _
    // Predicated region
    $region1444: #{tpu_custom_call.1} parent=1 // pred_check
      %p2263 = pneg %p2259
    $region1445: #{tpu_custom_call.1} parent=1 // pred_check_branch
      %2265 = sbr.rel (%p2263) target = $region1447
    $region1446: #{tpu_custom_call.1} parent=1 // pred_region
      %s2266 = sshllo.u32 0, 1
      loop: start=0, step=1, limit=1
      $region1448: #{tpu_custom_call.1} parent=1446 // loop_pre_header
        _
      $region1449: #{tpu_custom_call.1} parent=1446 // loop_header
        %s2268 = sphi 0, %s2272
        %p2269 = scmp.ge.s32.totalorder %s2268, 1
        %s2273 = sphi %s2256, %s2256
        %s2274 = sphi %s2257, %s2257
      $region1450: #{tpu_custom_call.1} parent=1446 // loop_header_branch
        %2271 = sbr.rel (%p2269) target = $region1454
      $region1451: #{tpu_custom_call.1} parent=1446 // loop_body
        %v2275 = vld [vmem:[%s2273] sm:%s2266]
        %2276 = vst [vmem:[%s2274] sm:%s2266] %v2275
      $region1452: #{tpu_custom_call.1} parent=1446 // loop_footer
        %s2272 = sadd.s32 1, %s2268
      $region1453: #{tpu_custom_call.1} parent=1446 // loop_footer_branch
        %2267 = sbr.rel target = $region1449
      $region1454: #{tpu_custom_call.1} parent=1446 // loop_exit
        _
    $region1447: #{tpu_custom_call.1} parent=1 // pred_fallthru
      _
    // Predicated region
    $region1466: #{tpu_custom_call.1} parent=1 // pred_check
      _
    $region1467: #{tpu_custom_call.1} parent=1 // pred_check_branch
      %2300 = sbr.rel (0) target = $region1469
    $region1468: #{tpu_custom_call.1} parent=1 // pred_region
      %2301 = vsyncadd %s377, 16
    $region1469: #{tpu_custom_call.1} parent=1 // pred_fallthru
      _
    %s2302 = sld [smem:[#allocation5 + $0x30]]
    %s2303 = scalar_lea.vmem %s1, %s2302
    %s2304 = scalar_lea.vmem [#allocation2], 48
    %p2306 = scmp.lt.u32.totalorder 1, 8
    %p2307 = pneg %p2306
    // Predicated region
    $region1470: #{tpu_custom_call.1} parent=1 // pred_check
      _
    $region1471: #{tpu_custom_call.1} parent=1 // pred_check_branch
      %2309 = sbr.rel (%p2306) target = $region1473
    $region1472: #{tpu_custom_call.1} parent=1 // pred_region
      %s2324 = sand.u32 1, 7
      %p2325 = scmp.eq.s32.totalorder %s2324, 0
      %p2326 = pneg %p2325
      // Predicated region
      $region1485: #{tpu_custom_call.1} parent=1472 // pred_check
        _
      $region1486: #{tpu_custom_call.1} parent=1472 // pred_check_branch
        %2328 = sbr.rel (%p2325) target = $region1488
      $region1487: #{tpu_custom_call.1} parent=1472 // pred_region
        %s2329 = sand.u32 1, 7
        %s2330 = ssub.s32 1, %s2329
        %s2331 = scalar_lea.vmem %s2303, %s2330
        %s2332 = ssub.s32 1, %s2329
        %s2333 = scalar_lea.vmem %s2304, %s2332 [#allocation2]
        %s2334 = sshllo.u32 0, %s2329
        loop: start=0, step=1, limit=1
        $region1489: #{tpu_custom_call.1} parent=1487 // loop_pre_header
          _
        $region1490: #{tpu_custom_call.1} parent=1487 // loop_header
          %s2336 = sphi 0, %s2340
          %p2337 = scmp.ge.s32.totalorder %s2336, 1
          %s2341 = sphi %s2331, %s2331
          %s2342 = sphi %s2333, %s2333
        $region1491: #{tpu_custom_call.1} parent=1487 // loop_header_branch
          %2339 = sbr.rel (%p2337) target = $region1495
        $region1492: #{tpu_custom_call.1} parent=1487 // loop_body
          %v2343 = vld [vmem:[%s2341] sm:%s2334]
          %2344 = vst [vmem:[%s2342] sm:%s2334] %v2343
        $region1493: #{tpu_custom_call.1} parent=1487 // loop_footer
          %s2340 = sadd.s32 1, %s2336
        $region1494: #{tpu_custom_call.1} parent=1487 // loop_footer_branch
          %2335 = sbr.rel target = $region1490
        $region1495: #{tpu_custom_call.1} parent=1487 // loop_exit
          _
      $region1488: #{tpu_custom_call.1} parent=1472 // pred_fallthru
        _
    $region1473: #{tpu_custom_call.1} parent=1 // pred_fallthru
      _
    // Predicated region
    $region1474: #{tpu_custom_call.1} parent=1 // pred_check
      %p2310 = pneg %p2306
    $region1475: #{tpu_custom_call.1} parent=1 // pred_check_branch
      %2312 = sbr.rel (%p2310) target = $region1477
    $region1476: #{tpu_custom_call.1} parent=1 // pred_region
      %s2313 = sshllo.u32 0, 1
      loop: start=0, step=1, limit=1
      $region1478: #{tpu_custom_call.1} parent=1476 // loop_pre_header
        _
      $region1479: #{tpu_custom_call.1} parent=1476 // loop_header
        %s2315 = sphi 0, %s2319
        %p2316 = scmp.ge.s32.totalorder %s2315, 1
        %s2320 = sphi %s2303, %s2303
        %s2321 = sphi %s2304, %s2304
      $region1480: #{tpu_custom_call.1} parent=1476 // loop_header_branch
        %2318 = sbr.rel (%p2316) target = $region1484
      $region1481: #{tpu_custom_call.1} parent=1476 // loop_body
        %v2322 = vld [vmem:[%s2320] sm:%s2313]
        %2323 = vst [vmem:[%s2321] sm:%s2313] %v2322
      $region1482: #{tpu_custom_call.1} parent=1476 // loop_footer
        %s2319 = sadd.s32 1, %s2315
      $region1483: #{tpu_custom_call.1} parent=1476 // loop_footer_branch
        %2314 = sbr.rel target = $region1479
      $region1484: #{tpu_custom_call.1} parent=1476 // loop_exit
        _
    $region1477: #{tpu_custom_call.1} parent=1 // pred_fallthru
      _
    // Predicated region
    $region1496: #{tpu_custom_call.1} parent=1 // pred_check
      _
    $region1497: #{tpu_custom_call.1} parent=1 // pred_check_branch
      %2347 = sbr.rel (0) target = $region1499
    $region1498: #{tpu_custom_call.1} parent=1 // pred_region
      %2348 = vsyncadd [#allocation3], 16
    $region1499: #{tpu_custom_call.1} parent=1 // pred_fallthru
      _
    %s2349 = sld [smem:[#allocation5 + $0x31]]
    %s2350 = scalar_lea.vmem %s1, %s2349
    %s2351 = scalar_lea.vmem [#allocation2], 49
    %p2353 = scmp.lt.u32.totalorder 1, 8
    %p2354 = pneg %p2353
    // Predicated region
    $region1500: #{tpu_custom_call.1} parent=1 // pred_check
      _
    $region1501: #{tpu_custom_call.1} parent=1 // pred_check_branch
      %2356 = sbr.rel (%p2353) target = $region1503
    $region1502: #{tpu_custom_call.1} parent=1 // pred_region
      %s2371 = sand.u32 1, 7
      %p2372 = scmp.eq.s32.totalorder %s2371, 0
      %p2373 = pneg %p2372
      // Predicated region
      $region1515: #{tpu_custom_call.1} parent=1502 // pred_check
        _
      $region1516: #{tpu_custom_call.1} parent=1502 // pred_check_branch
        %2375 = sbr.rel (%p2372) target = $region1518
      $region1517: #{tpu_custom_call.1} parent=1502 // pred_region
        %s2376 = sand.u32 1, 7
        %s2377 = ssub.s32 1, %s2376
        %s2378 = scalar_lea.vmem %s2350, %s2377
        %s2379 = ssub.s32 1, %s2376
        %s2380 = scalar_lea.vmem %s2351, %s2379 [#allocation2]
        %s2381 = sshllo.u32 0, %s2376
        loop: start=0, step=1, limit=1
        $region1519: #{tpu_custom_call.1} parent=1517 // loop_pre_header
          _
        $region1520: #{tpu_custom_call.1} parent=1517 // loop_header
          %s2383 = sphi 0, %s2387
          %p2384 = scmp.ge.s32.totalorder %s2383, 1
          %s2388 = sphi %s2378, %s2378
          %s2389 = sphi %s2380, %s2380
        $region1521: #{tpu_custom_call.1} parent=1517 // loop_header_branch
          %2386 = sbr.rel (%p2384) target = $region1525
        $region1522: #{tpu_custom_call.1} parent=1517 // loop_body
          %v2390 = vld [vmem:[%s2388] sm:%s2381]
          %2391 = vst [vmem:[%s2389] sm:%s2381] %v2390
        $region1523: #{tpu_custom_call.1} parent=1517 // loop_footer
          %s2387 = sadd.s32 1, %s2383
        $region1524: #{tpu_custom_call.1} parent=1517 // loop_footer_branch
          %2382 = sbr.rel target = $region1520
        $region1525: #{tpu_custom_call.1} parent=1517 // loop_exit
          _
      $region1518: #{tpu_custom_call.1} parent=1502 // pred_fallthru
        _
    $region1503: #{tpu_custom_call.1} parent=1 // pred_fallthru
      _
    // Predicated region
    $region1504: #{tpu_custom_call.1} parent=1 // pred_check
      %p2357 = pneg %p2353
    $region1505: #{tpu_custom_call.1} parent=1 // pred_check_branch
      %2359 = sbr.rel (%p2357) target = $region1507
    $region1506: #{tpu_custom_call.1} parent=1 // pred_region
      %s2360 = sshllo.u32 0, 1
      loop: start=0, step=1, limit=1
      $region1508: #{tpu_custom_call.1} parent=1506 // loop_pre_header
        _
      $region1509: #{tpu_custom_call.1} parent=1506 // loop_header
        %s2362 = sphi 0, %s2366
        %p2363 = scmp.ge.s32.totalorder %s2362, 1
        %s2367 = sphi %s2350, %s2350
        %s2368 = sphi %s2351, %s2351
      $region1510: #{tpu_custom_call.1} parent=1506 // loop_header_branch
        %2365 = sbr.rel (%p2363) target = $region1514
      $region1511: #{tpu_custom_call.1} parent=1506 // loop_body
        %v2369 = vld [vmem:[%s2367] sm:%s2360]
        %2370 = vst [vmem:[%s2368] sm:%s2360] %v2369
      $region1512: #{tpu_custom_call.1} parent=1506 // loop_footer
        %s2366 = sadd.s32 1, %s2362
      $region1513: #{tpu_custom_call.1} parent=1506 // loop_footer_branch
        %2361 = sbr.rel target = $region1509
      $region1514: #{tpu_custom_call.1} parent=1506 // loop_exit
        _
    $region1507: #{tpu_custom_call.1} parent=1 // pred_fallthru
      _
    // Predicated region
    $region1526: #{tpu_custom_call.1} parent=1 // pred_check
      _
    $region1527: #{tpu_custom_call.1} parent=1 // pred_check_branch
      %2394 = sbr.rel (0) target = $region1529
    $region1528: #{tpu_custom_call.1} parent=1 // pred_region
      %2395 = vsyncadd %s89, 16
    $region1529: #{tpu_custom_call.1} parent=1 // pred_fallthru
      _
    %s2396 = sld [smem:[#allocation5 + $0x32]]
    %s2397 = scalar_lea.vmem %s1, %s2396
    %s2398 = scalar_lea.vmem [#allocation2], 50
    %p2400 = scmp.lt.u32.totalorder 1, 8
    %p2401 = pneg %p2400
    // Predicated region
    $region1530: #{tpu_custom_call.1} parent=1 // pred_check
      _
    $region1531: #{tpu_custom_call.1} parent=1 // pred_check_branch
      %2403 = sbr.rel (%p2400) target = $region1533
    $region1532: #{tpu_custom_call.1} parent=1 // pred_region
      %s2418 = sand.u32 1, 7
      %p2419 = scmp.eq.s32.totalorder %s2418, 0
      %p2420 = pneg %p2419
      // Predicated region
      $region1545: #{tpu_custom_call.1} parent=1532 // pred_check
        _
      $region1546: #{tpu_custom_call.1} parent=1532 // pred_check_branch
        %2422 = sbr.rel (%p2419) target = $region1548
      $region1547: #{tpu_custom_call.1} parent=1532 // pred_region
        %s2423 = sand.u32 1, 7
        %s2424 = ssub.s32 1, %s2423
        %s2425 = scalar_lea.vmem %s2397, %s2424
        %s2426 = ssub.s32 1, %s2423
        %s2427 = scalar_lea.vmem %s2398, %s2426 [#allocation2]
        %s2428 = sshllo.u32 0, %s2423
        loop: start=0, step=1, limit=1
        $region1549: #{tpu_custom_call.1} parent=1547 // loop_pre_header
          _
        $region1550: #{tpu_custom_call.1} parent=1547 // loop_header
          %s2430 = sphi 0, %s2434
          %p2431 = scmp.ge.s32.totalorder %s2430, 1
          %s2435 = sphi %s2425, %s2425
          %s2436 = sphi %s2427, %s2427
        $region1551: #{tpu_custom_call.1} parent=1547 // loop_header_branch
          %2433 = sbr.rel (%p2431) target = $region1555
        $region1552: #{tpu_custom_call.1} parent=1547 // loop_body
          %v2437 = vld [vmem:[%s2435] sm:%s2428]
          %2438 = vst [vmem:[%s2436] sm:%s2428] %v2437
        $region1553: #{tpu_custom_call.1} parent=1547 // loop_footer
          %s2434 = sadd.s32 1, %s2430
        $region1554: #{tpu_custom_call.1} parent=1547 // loop_footer_branch
          %2429 = sbr.rel target = $region1550
        $region1555: #{tpu_custom_call.1} parent=1547 // loop_exit
          _
      $region1548: #{tpu_custom_call.1} parent=1532 // pred_fallthru
        _
    $region1533: #{tpu_custom_call.1} parent=1 // pred_fallthru
      _
    // Predicated region
    $region1534: #{tpu_custom_call.1} parent=1 // pred_check
      %p2404 = pneg %p2400
    $region1535: #{tpu_custom_call.1} parent=1 // pred_check_branch
      %2406 = sbr.rel (%p2404) target = $region1537
    $region1536: #{tpu_custom_call.1} parent=1 // pred_region
      %s2407 = sshllo.u32 0, 1
      loop: start=0, step=1, limit=1
      $region1538: #{tpu_custom_call.1} parent=1536 // loop_pre_header
        _
      $region1539: #{tpu_custom_call.1} parent=1536 // loop_header
        %s2409 = sphi 0, %s2413
        %p2410 = scmp.ge.s32.totalorder %s2409, 1
        %s2414 = sphi %s2397, %s2397
        %s2415 = sphi %s2398, %s2398
      $region1540: #{tpu_custom_call.1} parent=1536 // loop_header_branch
        %2412 = sbr.rel (%p2410) target = $region1544
      $region1541: #{tpu_custom_call.1} parent=1536 // loop_body
        %v2416 = vld [vmem:[%s2414] sm:%s2407]
        %2417 = vst [vmem:[%s2415] sm:%s2407] %v2416
      $region1542: #{tpu_custom_call.1} parent=1536 // loop_footer
        %s2413 = sadd.s32 1, %s2409
      $region1543: #{tpu_custom_call.1} parent=1536 // loop_footer_branch
        %2408 = sbr.rel target = $region1539
      $region1544: #{tpu_custom_call.1} parent=1536 // loop_exit
        _
    $region1537: #{tpu_custom_call.1} parent=1 // pred_fallthru
      _
    // Predicated region
    $region1556: #{tpu_custom_call.1} parent=1 // pred_check
      _
    $region1557: #{tpu_custom_call.1} parent=1 // pred_check_branch
      %2441 = sbr.rel (0) target = $region1559
    $region1558: #{tpu_custom_call.1} parent=1 // pred_region
      %2442 = vsyncadd %s137, 16
    $region1559: #{tpu_custom_call.1} parent=1 // pred_fallthru
      _
    %s2443 = sld [smem:[#allocation5 + $0x33]]
    %s2444 = scalar_lea.vmem %s1, %s2443
    %s2445 = scalar_lea.vmem [#allocation2], 51
    %p2447 = scmp.lt.u32.totalorder 1, 8
    %p2448 = pneg %p2447
    // Predicated region
    $region1560: #{tpu_custom_call.1} parent=1 // pred_check
      _
    $region1561: #{tpu_custom_call.1} parent=1 // pred_check_branch
      %2450 = sbr.rel (%p2447) target = $region1563
    $region1562: #{tpu_custom_call.1} parent=1 // pred_region
      %s2465 = sand.u32 1, 7
      %p2466 = scmp.eq.s32.totalorder %s2465, 0
      %p2467 = pneg %p2466
      // Predicated region
      $region1575: #{tpu_custom_call.1} parent=1562 // pred_check
        _
      $region1576: #{tpu_custom_call.1} parent=1562 // pred_check_branch
        %2469 = sbr.rel (%p2466) target = $region1578
      $region1577: #{tpu_custom_call.1} parent=1562 // pred_region
        %s2470 = sand.u32 1, 7
        %s2471 = ssub.s32 1, %s2470
        %s2472 = scalar_lea.vmem %s2444, %s2471
        %s2473 = ssub.s32 1, %s2470
        %s2474 = scalar_lea.vmem %s2445, %s2473 [#allocation2]
        %s2475 = sshllo.u32 0, %s2470
        loop: start=0, step=1, limit=1
        $region1579: #{tpu_custom_call.1} parent=1577 // loop_pre_header
          _
        $region1580: #{tpu_custom_call.1} parent=1577 // loop_header
          %s2477 = sphi 0, %s2481
          %p2478 = scmp.ge.s32.totalorder %s2477, 1
          %s2482 = sphi %s2472, %s2472
          %s2483 = sphi %s2474, %s2474
        $region1581: #{tpu_custom_call.1} parent=1577 // loop_header_branch
          %2480 = sbr.rel (%p2478) target = $region1585
        $region1582: #{tpu_custom_call.1} parent=1577 // loop_body
          %v2484 = vld [vmem:[%s2482] sm:%s2475]
          %2485 = vst [vmem:[%s2483] sm:%s2475] %v2484
        $region1583: #{tpu_custom_call.1} parent=1577 // loop_footer
          %s2481 = sadd.s32 1, %s2477
        $region1584: #{tpu_custom_call.1} parent=1577 // loop_footer_branch
          %2476 = sbr.rel target = $region1580
        $region1585: #{tpu_custom_call.1} parent=1577 // loop_exit
          _
      $region1578: #{tpu_custom_call.1} parent=1562 // pred_fallthru
        _
    $region1563: #{tpu_custom_call.1} parent=1 // pred_fallthru
      _
    // Predicated region
    $region1564: #{tpu_custom_call.1} parent=1 // pred_check
      %p2451 = pneg %p2447
    $region1565: #{tpu_custom_call.1} parent=1 // pred_check_branch
      %2453 = sbr.rel (%p2451) target = $region1567
    $region1566: #{tpu_custom_call.1} parent=1 // pred_region
      %s2454 = sshllo.u32 0, 1
      loop: start=0, step=1, limit=1
      $region1568: #{tpu_custom_call.1} parent=1566 // loop_pre_header
        _
      $region1569: #{tpu_custom_call.1} parent=1566 // loop_header
        %s2456 = sphi 0, %s2460
        %p2457 = scmp.ge.s32.totalorder %s2456, 1
        %s2461 = sphi %s2444, %s2444
        %s2462 = sphi %s2445, %s2445
      $region1570: #{tpu_custom_call.1} parent=1566 // loop_header_branch
        %2459 = sbr.rel (%p2457) target = $region1574
      $region1571: #{tpu_custom_call.1} parent=1566 // loop_body
        %v2463 = vld [vmem:[%s2461] sm:%s2454]
        %2464 = vst [vmem:[%s2462] sm:%s2454] %v2463
      $region1572: #{tpu_custom_call.1} parent=1566 // loop_footer
        %s2460 = sadd.s32 1, %s2456
      $region1573: #{tpu_custom_call.1} parent=1566 // loop_footer_branch
        %2455 = sbr.rel target = $region1569
      $region1574: #{tpu_custom_call.1} parent=1566 // loop_exit
        _
    $region1567: #{tpu_custom_call.1} parent=1 // pred_fallthru
      _
    // Predicated region
    $region1586: #{tpu_custom_call.1} parent=1 // pred_check
      _
    $region1587: #{tpu_custom_call.1} parent=1 // pred_check_branch
      %2488 = sbr.rel (0) target = $region1589
    $region1588: #{tpu_custom_call.1} parent=1 // pred_region
      %2489 = vsyncadd %s185, 16
    $region1589: #{tpu_custom_call.1} parent=1 // pred_fallthru
      _
    %s2490 = sld [smem:[#allocation5 + $0x34]]
    %s2491 = scalar_lea.vmem %s1, %s2490
    %s2492 = scalar_lea.vmem [#allocation2], 52
    %p2494 = scmp.lt.u32.totalorder 1, 8
    %p2495 = pneg %p2494
    // Predicated region
    $region1590: #{tpu_custom_call.1} parent=1 // pred_check
      _
    $region1591: #{tpu_custom_call.1} parent=1 // pred_check_branch
      %2497 = sbr.rel (%p2494) target = $region1593
    $region1592: #{tpu_custom_call.1} parent=1 // pred_region
      %s2512 = sand.u32 1, 7
      %p2513 = scmp.eq.s32.totalorder %s2512, 0
      %p2514 = pneg %p2513
      // Predicated region
      $region1605: #{tpu_custom_call.1} parent=1592 // pred_check
        _
      $region1606: #{tpu_custom_call.1} parent=1592 // pred_check_branch
        %2516 = sbr.rel (%p2513) target = $region1608
      $region1607: #{tpu_custom_call.1} parent=1592 // pred_region
        %s2517 = sand.u32 1, 7
        %s2518 = ssub.s32 1, %s2517
        %s2519 = scalar_lea.vmem %s2491, %s2518
        %s2520 = ssub.s32 1, %s2517
        %s2521 = scalar_lea.vmem %s2492, %s2520 [#allocation2]
        %s2522 = sshllo.u32 0, %s2517
        loop: start=0, step=1, limit=1
        $region1609: #{tpu_custom_call.1} parent=1607 // loop_pre_header
          _
        $region1610: #{tpu_custom_call.1} parent=1607 // loop_header
          %s2524 = sphi 0, %s2528
          %p2525 = scmp.ge.s32.totalorder %s2524, 1
          %s2529 = sphi %s2519, %s2519
          %s2530 = sphi %s2521, %s2521
        $region1611: #{tpu_custom_call.1} parent=1607 // loop_header_branch
          %2527 = sbr.rel (%p2525) target = $region1615
        $region1612: #{tpu_custom_call.1} parent=1607 // loop_body
          %v2531 = vld [vmem:[%s2529] sm:%s2522]
          %2532 = vst [vmem:[%s2530] sm:%s2522] %v2531
        $region1613: #{tpu_custom_call.1} parent=1607 // loop_footer
          %s2528 = sadd.s32 1, %s2524
        $region1614: #{tpu_custom_call.1} parent=1607 // loop_footer_branch
          %2523 = sbr.rel target = $region1610
        $region1615: #{tpu_custom_call.1} parent=1607 // loop_exit
          _
      $region1608: #{tpu_custom_call.1} parent=1592 // pred_fallthru
        _
    $region1593: #{tpu_custom_call.1} parent=1 // pred_fallthru
      _
    // Predicated region
    $region1594: #{tpu_custom_call.1} parent=1 // pred_check
      %p2498 = pneg %p2494
    $region1595: #{tpu_custom_call.1} parent=1 // pred_check_branch
      %2500 = sbr.rel (%p2498) target = $region1597
    $region1596: #{tpu_custom_call.1} parent=1 // pred_region
      %s2501 = sshllo.u32 0, 1
      loop: start=0, step=1, limit=1
      $region1598: #{tpu_custom_call.1} parent=1596 // loop_pre_header
        _
      $region1599: #{tpu_custom_call.1} parent=1596 // loop_header
        %s2503 = sphi 0, %s2507
        %p2504 = scmp.ge.s32.totalorder %s2503, 1
        %s2508 = sphi %s2491, %s2491
        %s2509 = sphi %s2492, %s2492
      $region1600: #{tpu_custom_call.1} parent=1596 // loop_header_branch
        %2506 = sbr.rel (%p2504) target = $region1604
      $region1601: #{tpu_custom_call.1} parent=1596 // loop_body
        %v2510 = vld [vmem:[%s2508] sm:%s2501]
        %2511 = vst [vmem:[%s2509] sm:%s2501] %v2510
      $region1602: #{tpu_custom_call.1} parent=1596 // loop_footer
        %s2507 = sadd.s32 1, %s2503
      $region1603: #{tpu_custom_call.1} parent=1596 // loop_footer_branch
        %2502 = sbr.rel target = $region1599
      $region1604: #{tpu_custom_call.1} parent=1596 // loop_exit
        _
    $region1597: #{tpu_custom_call.1} parent=1 // pred_fallthru
      _
    // Predicated region
    $region1616: #{tpu_custom_call.1} parent=1 // pred_check
      _
    $region1617: #{tpu_custom_call.1} parent=1 // pred_check_branch
      %2535 = sbr.rel (0) target = $region1619
    $region1618: #{tpu_custom_call.1} parent=1 // pred_region
      %2536 = vsyncadd %s233, 16
    $region1619: #{tpu_custom_call.1} parent=1 // pred_fallthru
      _
    %s2537 = sld [smem:[#allocation5 + $0x35]]
    %s2538 = scalar_lea.vmem %s1, %s2537
    %s2539 = scalar_lea.vmem [#allocation2], 53
    %p2541 = scmp.lt.u32.totalorder 1, 8
    %p2542 = pneg %p2541
    // Predicated region
    $region1620: #{tpu_custom_call.1} parent=1 // pred_check
      _
    $region1621: #{tpu_custom_call.1} parent=1 // pred_check_branch
      %2544 = sbr.rel (%p2541) target = $region1623
    $region1622: #{tpu_custom_call.1} parent=1 // pred_region
      %s2559 = sand.u32 1, 7
      %p2560 = scmp.eq.s32.totalorder %s2559, 0
      %p2561 = pneg %p2560
      // Predicated region
      $region1635: #{tpu_custom_call.1} parent=1622 // pred_check
        _
      $region1636: #{tpu_custom_call.1} parent=1622 // pred_check_branch
        %2563 = sbr.rel (%p2560) target = $region1638
      $region1637: #{tpu_custom_call.1} parent=1622 // pred_region
        %s2564 = sand.u32 1, 7
        %s2565 = ssub.s32 1, %s2564
        %s2566 = scalar_lea.vmem %s2538, %s2565
        %s2567 = ssub.s32 1, %s2564
        %s2568 = scalar_lea.vmem %s2539, %s2567 [#allocation2]
        %s2569 = sshllo.u32 0, %s2564
        loop: start=0, step=1, limit=1
        $region1639: #{tpu_custom_call.1} parent=1637 // loop_pre_header
          _
        $region1640: #{tpu_custom_call.1} parent=1637 // loop_header
          %s2571 = sphi 0, %s2575
          %p2572 = scmp.ge.s32.totalorder %s2571, 1
          %s2576 = sphi %s2566, %s2566
          %s2577 = sphi %s2568, %s2568
        $region1641: #{tpu_custom_call.1} parent=1637 // loop_header_branch
          %2574 = sbr.rel (%p2572) target = $region1645
        $region1642: #{tpu_custom_call.1} parent=1637 // loop_body
          %v2578 = vld [vmem:[%s2576] sm:%s2569]
          %2579 = vst [vmem:[%s2577] sm:%s2569] %v2578
        $region1643: #{tpu_custom_call.1} parent=1637 // loop_footer
          %s2575 = sadd.s32 1, %s2571
        $region1644: #{tpu_custom_call.1} parent=1637 // loop_footer_branch
          %2570 = sbr.rel target = $region1640
        $region1645: #{tpu_custom_call.1} parent=1637 // loop_exit
          _
      $region1638: #{tpu_custom_call.1} parent=1622 // pred_fallthru
        _
    $region1623: #{tpu_custom_call.1} parent=1 // pred_fallthru
      _
    // Predicated region
    $region1624: #{tpu_custom_call.1} parent=1 // pred_check
      %p2545 = pneg %p2541
    $region1625: #{tpu_custom_call.1} parent=1 // pred_check_branch
      %2547 = sbr.rel (%p2545) target = $region1627
    $region1626: #{tpu_custom_call.1} parent=1 // pred_region
      %s2548 = sshllo.u32 0, 1
      loop: start=0, step=1, limit=1
      $region1628: #{tpu_custom_call.1} parent=1626 // loop_pre_header
        _
      $region1629: #{tpu_custom_call.1} parent=1626 // loop_header
        %s2550 = sphi 0, %s2554
        %p2551 = scmp.ge.s32.totalorder %s2550, 1
        %s2555 = sphi %s2538, %s2538
        %s2556 = sphi %s2539, %s2539
      $region1630: #{tpu_custom_call.1} parent=1626 // loop_header_branch
        %2553 = sbr.rel (%p2551) target = $region1634
      $region1631: #{tpu_custom_call.1} parent=1626 // loop_body
        %v2557 = vld [vmem:[%s2555] sm:%s2548]
        %2558 = vst [vmem:[%s2556] sm:%s2548] %v2557
      $region1632: #{tpu_custom_call.1} parent=1626 // loop_footer
        %s2554 = sadd.s32 1, %s2550
      $region1633: #{tpu_custom_call.1} parent=1626 // loop_footer_branch
        %2549 = sbr.rel target = $region1629
      $region1634: #{tpu_custom_call.1} parent=1626 // loop_exit
        _
    $region1627: #{tpu_custom_call.1} parent=1 // pred_fallthru
      _
    // Predicated region
    $region1646: #{tpu_custom_call.1} parent=1 // pred_check
      _
    $region1647: #{tpu_custom_call.1} parent=1 // pred_check_branch
      %2582 = sbr.rel (0) target = $region1649
    $region1648: #{tpu_custom_call.1} parent=1 // pred_region
      %2583 = vsyncadd %s281, 16
    $region1649: #{tpu_custom_call.1} parent=1 // pred_fallthru
      _
    %s2584 = sld [smem:[#allocation5 + $0x36]]
    %s2585 = scalar_lea.vmem %s1, %s2584
    %s2586 = scalar_lea.vmem [#allocation2], 54
    %p2588 = scmp.lt.u32.totalorder 1, 8
    %p2589 = pneg %p2588
    // Predicated region
    $region1650: #{tpu_custom_call.1} parent=1 // pred_check
      _
    $region1651: #{tpu_custom_call.1} parent=1 // pred_check_branch
      %2591 = sbr.rel (%p2588) target = $region1653
    $region1652: #{tpu_custom_call.1} parent=1 // pred_region
      %s2606 = sand.u32 1, 7
      %p2607 = scmp.eq.s32.totalorder %s2606, 0
      %p2608 = pneg %p2607
      // Predicated region
      $region1665: #{tpu_custom_call.1} parent=1652 // pred_check
        _
      $region1666: #{tpu_custom_call.1} parent=1652 // pred_check_branch
        %2610 = sbr.rel (%p2607) target = $region1668
      $region1667: #{tpu_custom_call.1} parent=1652 // pred_region
        %s2611 = sand.u32 1, 7
        %s2612 = ssub.s32 1, %s2611
        %s2613 = scalar_lea.vmem %s2585, %s2612
        %s2614 = ssub.s32 1, %s2611
        %s2615 = scalar_lea.vmem %s2586, %s2614 [#allocation2]
        %s2616 = sshllo.u32 0, %s2611
        loop: start=0, step=1, limit=1
        $region1669: #{tpu_custom_call.1} parent=1667 // loop_pre_header
          _
        $region1670: #{tpu_custom_call.1} parent=1667 // loop_header
          %s2618 = sphi 0, %s2622
          %p2619 = scmp.ge.s32.totalorder %s2618, 1
          %s2623 = sphi %s2613, %s2613
          %s2624 = sphi %s2615, %s2615
        $region1671: #{tpu_custom_call.1} parent=1667 // loop_header_branch
          %2621 = sbr.rel (%p2619) target = $region1675
        $region1672: #{tpu_custom_call.1} parent=1667 // loop_body
          %v2625 = vld [vmem:[%s2623] sm:%s2616]
          %2626 = vst [vmem:[%s2624] sm:%s2616] %v2625
        $region1673: #{tpu_custom_call.1} parent=1667 // loop_footer
          %s2622 = sadd.s32 1, %s2618
        $region1674: #{tpu_custom_call.1} parent=1667 // loop_footer_branch
          %2617 = sbr.rel target = $region1670
        $region1675: #{tpu_custom_call.1} parent=1667 // loop_exit
          _
      $region1668: #{tpu_custom_call.1} parent=1652 // pred_fallthru
        _
    $region1653: #{tpu_custom_call.1} parent=1 // pred_fallthru
      _
    // Predicated region
    $region1654: #{tpu_custom_call.1} parent=1 // pred_check
      %p2592 = pneg %p2588
    $region1655: #{tpu_custom_call.1} parent=1 // pred_check_branch
      %2594 = sbr.rel (%p2592) target = $region1657
    $region1656: #{tpu_custom_call.1} parent=1 // pred_region
      %s2595 = sshllo.u32 0, 1
      loop: start=0, step=1, limit=1
      $region1658: #{tpu_custom_call.1} parent=1656 // loop_pre_header
        _
      $region1659: #{tpu_custom_call.1} parent=1656 // loop_header
        %s2597 = sphi 0, %s2601
        %p2598 = scmp.ge.s32.totalorder %s2597, 1
        %s2602 = sphi %s2585, %s2585
        %s2603 = sphi %s2586, %s2586
      $region1660: #{tpu_custom_call.1} parent=1656 // loop_header_branch
        %2600 = sbr.rel (%p2598) target = $region1664
      $region1661: #{tpu_custom_call.1} parent=1656 // loop_body
        %v2604 = vld [vmem:[%s2602] sm:%s2595]
        %2605 = vst [vmem:[%s2603] sm:%s2595] %v2604
      $region1662: #{tpu_custom_call.1} parent=1656 // loop_footer
        %s2601 = sadd.s32 1, %s2597
      $region1663: #{tpu_custom_call.1} parent=1656 // loop_footer_branch
        %2596 = sbr.rel target = $region1659
      $region1664: #{tpu_custom_call.1} parent=1656 // loop_exit
        _
    $region1657: #{tpu_custom_call.1} parent=1 // pred_fallthru
      _
    // Predicated region
    $region1676: #{tpu_custom_call.1} parent=1 // pred_check
      _
    $region1677: #{tpu_custom_call.1} parent=1 // pred_check_branch
      %2629 = sbr.rel (0) target = $region1679
    $region1678: #{tpu_custom_call.1} parent=1 // pred_region
      %2630 = vsyncadd %s329, 16
    $region1679: #{tpu_custom_call.1} parent=1 // pred_fallthru
      _
    %s2631 = sld [smem:[#allocation5 + $0x37]]
    %s2632 = scalar_lea.vmem %s1, %s2631
    %s2633 = scalar_lea.vmem [#allocation2], 55
    %p2635 = scmp.lt.u32.totalorder 1, 8
    %p2636 = pneg %p2635
    // Predicated region
    $region1680: #{tpu_custom_call.1} parent=1 // pred_check
      _
    $region1681: #{tpu_custom_call.1} parent=1 // pred_check_branch
      %2638 = sbr.rel (%p2635) target = $region1683
    $region1682: #{tpu_custom_call.1} parent=1 // pred_region
      %s2653 = sand.u32 1, 7
      %p2654 = scmp.eq.s32.totalorder %s2653, 0
      %p2655 = pneg %p2654
      // Predicated region
      $region1695: #{tpu_custom_call.1} parent=1682 // pred_check
        _
      $region1696: #{tpu_custom_call.1} parent=1682 // pred_check_branch
        %2657 = sbr.rel (%p2654) target = $region1698
      $region1697: #{tpu_custom_call.1} parent=1682 // pred_region
        %s2658 = sand.u32 1, 7
        %s2659 = ssub.s32 1, %s2658
        %s2660 = scalar_lea.vmem %s2632, %s2659
        %s2661 = ssub.s32 1, %s2658
        %s2662 = scalar_lea.vmem %s2633, %s2661 [#allocation2]
        %s2663 = sshllo.u32 0, %s2658
        loop: start=0, step=1, limit=1
        $region1699: #{tpu_custom_call.1} parent=1697 // loop_pre_header
          _
        $region1700: #{tpu_custom_call.1} parent=1697 // loop_header
          %s2665 = sphi 0, %s2669
          %p2666 = scmp.ge.s32.totalorder %s2665, 1
          %s2670 = sphi %s2660, %s2660
          %s2671 = sphi %s2662, %s2662
        $region1701: #{tpu_custom_call.1} parent=1697 // loop_header_branch
          %2668 = sbr.rel (%p2666) target = $region1705
        $region1702: #{tpu_custom_call.1} parent=1697 // loop_body
          %v2672 = vld [vmem:[%s2670] sm:%s2663]
          %2673 = vst [vmem:[%s2671] sm:%s2663] %v2672
        $region1703: #{tpu_custom_call.1} parent=1697 // loop_footer
          %s2669 = sadd.s32 1, %s2665
        $region1704: #{tpu_custom_call.1} parent=1697 // loop_footer_branch
          %2664 = sbr.rel target = $region1700
        $region1705: #{tpu_custom_call.1} parent=1697 // loop_exit
          _
      $region1698: #{tpu_custom_call.1} parent=1682 // pred_fallthru
        _
    $region1683: #{tpu_custom_call.1} parent=1 // pred_fallthru
      _
    // Predicated region
    $region1684: #{tpu_custom_call.1} parent=1 // pred_check
      %p2639 = pneg %p2635
    $region1685: #{tpu_custom_call.1} parent=1 // pred_check_branch
      %2641 = sbr.rel (%p2639) target = $region1687
    $region1686: #{tpu_custom_call.1} parent=1 // pred_region
      %s2642 = sshllo.u32 0, 1
      loop: start=0, step=1, limit=1
      $region1688: #{tpu_custom_call.1} parent=1686 // loop_pre_header
        _
      $region1689: #{tpu_custom_call.1} parent=1686 // loop_header
        %s2644 = sphi 0, %s2648
        %p2645 = scmp.ge.s32.totalorder %s2644, 1
        %s2649 = sphi %s2632, %s2632
        %s2650 = sphi %s2633, %s2633
      $region1690: #{tpu_custom_call.1} parent=1686 // loop_header_branch
        %2647 = sbr.rel (%p2645) target = $region1694
      $region1691: #{tpu_custom_call.1} parent=1686 // loop_body
        %v2651 = vld [vmem:[%s2649] sm:%s2642]
        %2652 = vst [vmem:[%s2650] sm:%s2642] %v2651
      $region1692: #{tpu_custom_call.1} parent=1686 // loop_footer
        %s2648 = sadd.s32 1, %s2644
      $region1693: #{tpu_custom_call.1} parent=1686 // loop_footer_branch
        %2643 = sbr.rel target = $region1689
      $region1694: #{tpu_custom_call.1} parent=1686 // loop_exit
        _
    $region1687: #{tpu_custom_call.1} parent=1 // pred_fallthru
      _
    // Predicated region
    $region1706: #{tpu_custom_call.1} parent=1 // pred_check
      _
    $region1707: #{tpu_custom_call.1} parent=1 // pred_check_branch
      %2676 = sbr.rel (0) target = $region1709
    $region1708: #{tpu_custom_call.1} parent=1 // pred_region
      %2677 = vsyncadd %s377, 16
    $region1709: #{tpu_custom_call.1} parent=1 // pred_fallthru
      _
    %s2678 = sld [smem:[#allocation5 + $0x38]]
    %s2679 = scalar_lea.vmem %s1, %s2678
    %s2680 = scalar_lea.vmem [#allocation2], 56
    %p2682 = scmp.lt.u32.totalorder 1, 8
    %p2683 = pneg %p2682
    // Predicated region
    $region1710: #{tpu_custom_call.1} parent=1 // pred_check
      _
    $region1711: #{tpu_custom_call.1} parent=1 // pred_check_branch
      %2685 = sbr.rel (%p2682) target = $region1713
    $region1712: #{tpu_custom_call.1} parent=1 // pred_region
      %s2700 = sand.u32 1, 7
      %p2701 = scmp.eq.s32.totalorder %s2700, 0
      %p2702 = pneg %p2701
      // Predicated region
      $region1725: #{tpu_custom_call.1} parent=1712 // pred_check
        _
      $region1726: #{tpu_custom_call.1} parent=1712 // pred_check_branch
        %2704 = sbr.rel (%p2701) target = $region1728
      $region1727: #{tpu_custom_call.1} parent=1712 // pred_region
        %s2705 = sand.u32 1, 7
        %s2706 = ssub.s32 1, %s2705
        %s2707 = scalar_lea.vmem %s2679, %s2706
        %s2708 = ssub.s32 1, %s2705
        %s2709 = scalar_lea.vmem %s2680, %s2708 [#allocation2]
        %s2710 = sshllo.u32 0, %s2705
        loop: start=0, step=1, limit=1
        $region1729: #{tpu_custom_call.1} parent=1727 // loop_pre_header
          _
        $region1730: #{tpu_custom_call.1} parent=1727 // loop_header
          %s2712 = sphi 0, %s2716
          %p2713 = scmp.ge.s32.totalorder %s2712, 1
          %s2717 = sphi %s2707, %s2707
          %s2718 = sphi %s2709, %s2709
        $region1731: #{tpu_custom_call.1} parent=1727 // loop_header_branch
          %2715 = sbr.rel (%p2713) target = $region1735
        $region1732: #{tpu_custom_call.1} parent=1727 // loop_body
          %v2719 = vld [vmem:[%s2717] sm:%s2710]
          %2720 = vst [vmem:[%s2718] sm:%s2710] %v2719
        $region1733: #{tpu_custom_call.1} parent=1727 // loop_footer
          %s2716 = sadd.s32 1, %s2712
        $region1734: #{tpu_custom_call.1} parent=1727 // loop_footer_branch
          %2711 = sbr.rel target = $region1730
        $region1735: #{tpu_custom_call.1} parent=1727 // loop_exit
          _
      $region1728: #{tpu_custom_call.1} parent=1712 // pred_fallthru
        _
    $region1713: #{tpu_custom_call.1} parent=1 // pred_fallthru
      _
    // Predicated region
    $region1714: #{tpu_custom_call.1} parent=1 // pred_check
      %p2686 = pneg %p2682
    $region1715: #{tpu_custom_call.1} parent=1 // pred_check_branch
      %2688 = sbr.rel (%p2686) target = $region1717
    $region1716: #{tpu_custom_call.1} parent=1 // pred_region
      %s2689 = sshllo.u32 0, 1
      loop: start=0, step=1, limit=1
      $region1718: #{tpu_custom_call.1} parent=1716 // loop_pre_header
        _
      $region1719: #{tpu_custom_call.1} parent=1716 // loop_header
        %s2691 = sphi 0, %s2695
        %p2692 = scmp.ge.s32.totalorder %s2691, 1
        %s2696 = sphi %s2679, %s2679
        %s2697 = sphi %s2680, %s2680
      $region1720: #{tpu_custom_call.1} parent=1716 // loop_header_branch
        %2694 = sbr.rel (%p2692) target = $region1724
      $region1721: #{tpu_custom_call.1} parent=1716 // loop_body
        %v2698 = vld [vmem:[%s2696] sm:%s2689]
        %2699 = vst [vmem:[%s2697] sm:%s2689] %v2698
      $region1722: #{tpu_custom_call.1} parent=1716 // loop_footer
        %s2695 = sadd.s32 1, %s2691
      $region1723: #{tpu_custom_call.1} parent=1716 // loop_footer_branch
        %2690 = sbr.rel target = $region1719
      $region1724: #{tpu_custom_call.1} parent=1716 // loop_exit
        _
    $region1717: #{tpu_custom_call.1} parent=1 // pred_fallthru
      _
    // Predicated region
    $region1736: #{tpu_custom_call.1} parent=1 // pred_check
      _
    $region1737: #{tpu_custom_call.1} parent=1 // pred_check_branch
      %2723 = sbr.rel (0) target = $region1739
    $region1738: #{tpu_custom_call.1} parent=1 // pred_region
      %2724 = vsyncadd [#allocation3], 16
    $region1739: #{tpu_custom_call.1} parent=1 // pred_fallthru
      _
    %s2725 = sld [smem:[#allocation5 + $0x39]]
    %s2726 = scalar_lea.vmem %s1, %s2725
    %s2727 = scalar_lea.vmem [#allocation2], 57
    %p2729 = scmp.lt.u32.totalorder 1, 8
    %p2730 = pneg %p2729
    // Predicated region
    $region1740: #{tpu_custom_call.1} parent=1 // pred_check
      _
    $region1741: #{tpu_custom_call.1} parent=1 // pred_check_branch
      %2732 = sbr.rel (%p2729) target = $region1743
    $region1742: #{tpu_custom_call.1} parent=1 // pred_region
      %s2747 = sand.u32 1, 7
      %p2748 = scmp.eq.s32.totalorder %s2747, 0
      %p2749 = pneg %p2748
      // Predicated region
      $region1755: #{tpu_custom_call.1} parent=1742 // pred_check
        _
      $region1756: #{tpu_custom_call.1} parent=1742 // pred_check_branch
        %2751 = sbr.rel (%p2748) target = $region1758
      $region1757: #{tpu_custom_call.1} parent=1742 // pred_region
        %s2752 = sand.u32 1, 7
        %s2753 = ssub.s32 1, %s2752
        %s2754 = scalar_lea.vmem %s2726, %s2753
        %s2755 = ssub.s32 1, %s2752
        %s2756 = scalar_lea.vmem %s2727, %s2755 [#allocation2]
        %s2757 = sshllo.u32 0, %s2752
        loop: start=0, step=1, limit=1
        $region1759: #{tpu_custom_call.1} parent=1757 // loop_pre_header
          _
        $region1760: #{tpu_custom_call.1} parent=1757 // loop_header
          %s2759 = sphi 0, %s2763
          %p2760 = scmp.ge.s32.totalorder %s2759, 1
          %s2764 = sphi %s2754, %s2754
          %s2765 = sphi %s2756, %s2756
        $region1761: #{tpu_custom_call.1} parent=1757 // loop_header_branch
          %2762 = sbr.rel (%p2760) target = $region1765
        $region1762: #{tpu_custom_call.1} parent=1757 // loop_body
          %v2766 = vld [vmem:[%s2764] sm:%s2757]
          %2767 = vst [vmem:[%s2765] sm:%s2757] %v2766
        $region1763: #{tpu_custom_call.1} parent=1757 // loop_footer
          %s2763 = sadd.s32 1, %s2759
        $region1764: #{tpu_custom_call.1} parent=1757 // loop_footer_branch
          %2758 = sbr.rel target = $region1760
        $region1765: #{tpu_custom_call.1} parent=1757 // loop_exit
          _
      $region1758: #{tpu_custom_call.1} parent=1742 // pred_fallthru
        _
    $region1743: #{tpu_custom_call.1} parent=1 // pred_fallthru
      _
    // Predicated region
    $region1744: #{tpu_custom_call.1} parent=1 // pred_check
      %p2733 = pneg %p2729
    $region1745: #{tpu_custom_call.1} parent=1 // pred_check_branch
      %2735 = sbr.rel (%p2733) target = $region1747
    $region1746: #{tpu_custom_call.1} parent=1 // pred_region
      %s2736 = sshllo.u32 0, 1
      loop: start=0, step=1, limit=1
      $region1748: #{tpu_custom_call.1} parent=1746 // loop_pre_header
        _
      $region1749: #{tpu_custom_call.1} parent=1746 // loop_header
        %s2738 = sphi 0, %s2742
        %p2739 = scmp.ge.s32.totalorder %s2738, 1
        %s2743 = sphi %s2726, %s2726
        %s2744 = sphi %s2727, %s2727
      $region1750: #{tpu_custom_call.1} parent=1746 // loop_header_branch
        %2741 = sbr.rel (%p2739) target = $region1754
      $region1751: #{tpu_custom_call.1} parent=1746 // loop_body
        %v2745 = vld [vmem:[%s2743] sm:%s2736]
        %2746 = vst [vmem:[%s2744] sm:%s2736] %v2745
      $region1752: #{tpu_custom_call.1} parent=1746 // loop_footer
        %s2742 = sadd.s32 1, %s2738
      $region1753: #{tpu_custom_call.1} parent=1746 // loop_footer_branch
        %2737 = sbr.rel target = $region1749
      $region1754: #{tpu_custom_call.1} parent=1746 // loop_exit
        _
    $region1747: #{tpu_custom_call.1} parent=1 // pred_fallthru
      _
    // Predicated region
    $region1766: #{tpu_custom_call.1} parent=1 // pred_check
      _
    $region1767: #{tpu_custom_call.1} parent=1 // pred_check_branch
      %2770 = sbr.rel (0) target = $region1769
    $region1768: #{tpu_custom_call.1} parent=1 // pred_region
      %2771 = vsyncadd %s89, 16
    $region1769: #{tpu_custom_call.1} parent=1 // pred_fallthru
      _
    %s2772 = sld [smem:[#allocation5 + $0x3a]]
    %s2773 = scalar_lea.vmem %s1, %s2772
    %s2774 = scalar_lea.vmem [#allocation2], 58
    %p2776 = scmp.lt.u32.totalorder 1, 8
    %p2777 = pneg %p2776
    // Predicated region
    $region1770: #{tpu_custom_call.1} parent=1 // pred_check
      _
    $region1771: #{tpu_custom_call.1} parent=1 // pred_check_branch
      %2779 = sbr.rel (%p2776) target = $region1773
    $region1772: #{tpu_custom_call.1} parent=1 // pred_region
      %s2794 = sand.u32 1, 7
      %p2795 = scmp.eq.s32.totalorder %s2794, 0
      %p2796 = pneg %p2795
      // Predicated region
      $region1785: #{tpu_custom_call.1} parent=1772 // pred_check
        _
      $region1786: #{tpu_custom_call.1} parent=1772 // pred_check_branch
        %2798 = sbr.rel (%p2795) target = $region1788
      $region1787: #{tpu_custom_call.1} parent=1772 // pred_region
        %s2799 = sand.u32 1, 7
        %s2800 = ssub.s32 1, %s2799
        %s2801 = scalar_lea.vmem %s2773, %s2800
        %s2802 = ssub.s32 1, %s2799
        %s2803 = scalar_lea.vmem %s2774, %s2802 [#allocation2]
        %s2804 = sshllo.u32 0, %s2799
        loop: start=0, step=1, limit=1
        $region1789: #{tpu_custom_call.1} parent=1787 // loop_pre_header
          _
        $region1790: #{tpu_custom_call.1} parent=1787 // loop_header
          %s2806 = sphi 0, %s2810
          %p2807 = scmp.ge.s32.totalorder %s2806, 1
          %s2811 = sphi %s2801, %s2801
          %s2812 = sphi %s2803, %s2803
        $region1791: #{tpu_custom_call.1} parent=1787 // loop_header_branch
          %2809 = sbr.rel (%p2807) target = $region1795
        $region1792: #{tpu_custom_call.1} parent=1787 // loop_body
          %v2813 = vld [vmem:[%s2811] sm:%s2804]
          %2814 = vst [vmem:[%s2812] sm:%s2804] %v2813
        $region1793: #{tpu_custom_call.1} parent=1787 // loop_footer
          %s2810 = sadd.s32 1, %s2806
        $region1794: #{tpu_custom_call.1} parent=1787 // loop_footer_branch
          %2805 = sbr.rel target = $region1790
        $region1795: #{tpu_custom_call.1} parent=1787 // loop_exit
          _
      $region1788: #{tpu_custom_call.1} parent=1772 // pred_fallthru
        _
    $region1773: #{tpu_custom_call.1} parent=1 // pred_fallthru
      _
    // Predicated region
    $region1774: #{tpu_custom_call.1} parent=1 // pred_check
      %p2780 = pneg %p2776
    $region1775: #{tpu_custom_call.1} parent=1 // pred_check_branch
      %2782 = sbr.rel (%p2780) target = $region1777
    $region1776: #{tpu_custom_call.1} parent=1 // pred_region
      %s2783 = sshllo.u32 0, 1
      loop: start=0, step=1, limit=1
      $region1778: #{tpu_custom_call.1} parent=1776 // loop_pre_header
        _
      $region1779: #{tpu_custom_call.1} parent=1776 // loop_header
        %s2785 = sphi 0, %s2789
        %p2786 = scmp.ge.s32.totalorder %s2785, 1
        %s2790 = sphi %s2773, %s2773
        %s2791 = sphi %s2774, %s2774
      $region1780: #{tpu_custom_call.1} parent=1776 // loop_header_branch
        %2788 = sbr.rel (%p2786) target = $region1784
      $region1781: #{tpu_custom_call.1} parent=1776 // loop_body
        %v2792 = vld [vmem:[%s2790] sm:%s2783]
        %2793 = vst [vmem:[%s2791] sm:%s2783] %v2792
      $region1782: #{tpu_custom_call.1} parent=1776 // loop_footer
        %s2789 = sadd.s32 1, %s2785
      $region1783: #{tpu_custom_call.1} parent=1776 // loop_footer_branch
        %2784 = sbr.rel target = $region1779
      $region1784: #{tpu_custom_call.1} parent=1776 // loop_exit
        _
    $region1777: #{tpu_custom_call.1} parent=1 // pred_fallthru
      _
    // Predicated region
    $region1796: #{tpu_custom_call.1} parent=1 // pred_check
      _
    $region1797: #{tpu_custom_call.1} parent=1 // pred_check_branch
      %2817 = sbr.rel (0) target = $region1799
    $region1798: #{tpu_custom_call.1} parent=1 // pred_region
      %2818 = vsyncadd %s137, 16
    $region1799: #{tpu_custom_call.1} parent=1 // pred_fallthru
      _
    %s2819 = sld [smem:[#allocation5 + $0x3b]]
    %s2820 = scalar_lea.vmem %s1, %s2819
    %s2821 = scalar_lea.vmem [#allocation2], 59
    %p2823 = scmp.lt.u32.totalorder 1, 8
    %p2824 = pneg %p2823
    // Predicated region
    $region1800: #{tpu_custom_call.1} parent=1 // pred_check
      _
    $region1801: #{tpu_custom_call.1} parent=1 // pred_check_branch
      %2826 = sbr.rel (%p2823) target = $region1803
    $region1802: #{tpu_custom_call.1} parent=1 // pred_region
      %s2841 = sand.u32 1, 7
      %p2842 = scmp.eq.s32.totalorder %s2841, 0
      %p2843 = pneg %p2842
      // Predicated region
      $region1815: #{tpu_custom_call.1} parent=1802 // pred_check
        _
      $region1816: #{tpu_custom_call.1} parent=1802 // pred_check_branch
        %2845 = sbr.rel (%p2842) target = $region1818
      $region1817: #{tpu_custom_call.1} parent=1802 // pred_region
        %s2846 = sand.u32 1, 7
        %s2847 = ssub.s32 1, %s2846
        %s2848 = scalar_lea.vmem %s2820, %s2847
        %s2849 = ssub.s32 1, %s2846
        %s2850 = scalar_lea.vmem %s2821, %s2849 [#allocation2]
        %s2851 = sshllo.u32 0, %s2846
        loop: start=0, step=1, limit=1
        $region1819: #{tpu_custom_call.1} parent=1817 // loop_pre_header
          _
        $region1820: #{tpu_custom_call.1} parent=1817 // loop_header
          %s2853 = sphi 0, %s2857
          %p2854 = scmp.ge.s32.totalorder %s2853, 1
          %s2858 = sphi %s2848, %s2848
          %s2859 = sphi %s2850, %s2850
        $region1821: #{tpu_custom_call.1} parent=1817 // loop_header_branch
          %2856 = sbr.rel (%p2854) target = $region1825
        $region1822: #{tpu_custom_call.1} parent=1817 // loop_body
          %v2860 = vld [vmem:[%s2858] sm:%s2851]
          %2861 = vst [vmem:[%s2859] sm:%s2851] %v2860
        $region1823: #{tpu_custom_call.1} parent=1817 // loop_footer
          %s2857 = sadd.s32 1, %s2853
        $region1824: #{tpu_custom_call.1} parent=1817 // loop_footer_branch
          %2852 = sbr.rel target = $region1820
        $region1825: #{tpu_custom_call.1} parent=1817 // loop_exit
          _
      $region1818: #{tpu_custom_call.1} parent=1802 // pred_fallthru
        _
    $region1803: #{tpu_custom_call.1} parent=1 // pred_fallthru
      _
    // Predicated region
    $region1804: #{tpu_custom_call.1} parent=1 // pred_check
      %p2827 = pneg %p2823
    $region1805: #{tpu_custom_call.1} parent=1 // pred_check_branch
      %2829 = sbr.rel (%p2827) target = $region1807
    $region1806: #{tpu_custom_call.1} parent=1 // pred_region
      %s2830 = sshllo.u32 0, 1
      loop: start=0, step=1, limit=1
      $region1808: #{tpu_custom_call.1} parent=1806 // loop_pre_header
        _
      $region1809: #{tpu_custom_call.1} parent=1806 // loop_header
        %s2832 = sphi 0, %s2836
        %p2833 = scmp.ge.s32.totalorder %s2832, 1
        %s2837 = sphi %s2820, %s2820
        %s2838 = sphi %s2821, %s2821
      $region1810: #{tpu_custom_call.1} parent=1806 // loop_header_branch
        %2835 = sbr.rel (%p2833) target = $region1814
      $region1811: #{tpu_custom_call.1} parent=1806 // loop_body
        %v2839 = vld [vmem:[%s2837] sm:%s2830]
        %2840 = vst [vmem:[%s2838] sm:%s2830] %v2839
      $region1812: #{tpu_custom_call.1} parent=1806 // loop_footer
        %s2836 = sadd.s32 1, %s2832
      $region1813: #{tpu_custom_call.1} parent=1806 // loop_footer_branch
        %2831 = sbr.rel target = $region1809
      $region1814: #{tpu_custom_call.1} parent=1806 // loop_exit
        _
    $region1807: #{tpu_custom_call.1} parent=1 // pred_fallthru
      _
    // Predicated region
    $region1826: #{tpu_custom_call.1} parent=1 // pred_check
      _
    $region1827: #{tpu_custom_call.1} parent=1 // pred_check_branch
      %2864 = sbr.rel (0) target = $region1829
    $region1828: #{tpu_custom_call.1} parent=1 // pred_region
      %2865 = vsyncadd %s185, 16
    $region1829: #{tpu_custom_call.1} parent=1 // pred_fallthru
      _
    %s2866 = sld [smem:[#allocation5 + $0x3c]]
    %s2867 = scalar_lea.vmem %s1, %s2866
    %s2868 = scalar_lea.vmem [#allocation2], 60
    %p2870 = scmp.lt.u32.totalorder 1, 8
    %p2871 = pneg %p2870
    // Predicated region
    $region1830: #{tpu_custom_call.1} parent=1 // pred_check
      _
    $region1831: #{tpu_custom_call.1} parent=1 // pred_check_branch
      %2873 = sbr.rel (%p2870) target = $region1833
    $region1832: #{tpu_custom_call.1} parent=1 // pred_region
      %s2888 = sand.u32 1, 7
      %p2889 = scmp.eq.s32.totalorder %s2888, 0
      %p2890 = pneg %p2889
      // Predicated region
      $region1845: #{tpu_custom_call.1} parent=1832 // pred_check
        _
      $region1846: #{tpu_custom_call.1} parent=1832 // pred_check_branch
        %2892 = sbr.rel (%p2889) target = $region1848
      $region1847: #{tpu_custom_call.1} parent=1832 // pred_region
        %s2893 = sand.u32 1, 7
        %s2894 = ssub.s32 1, %s2893
        %s2895 = scalar_lea.vmem %s2867, %s2894
        %s2896 = ssub.s32 1, %s2893
        %s2897 = scalar_lea.vmem %s2868, %s2896 [#allocation2]
        %s2898 = sshllo.u32 0, %s2893
        loop: start=0, step=1, limit=1
        $region1849: #{tpu_custom_call.1} parent=1847 // loop_pre_header
          _
        $region1850: #{tpu_custom_call.1} parent=1847 // loop_header
          %s2900 = sphi 0, %s2904
          %p2901 = scmp.ge.s32.totalorder %s2900, 1
          %s2905 = sphi %s2895, %s2895
          %s2906 = sphi %s2897, %s2897
        $region1851: #{tpu_custom_call.1} parent=1847 // loop_header_branch
          %2903 = sbr.rel (%p2901) target = $region1855
        $region1852: #{tpu_custom_call.1} parent=1847 // loop_body
          %v2907 = vld [vmem:[%s2905] sm:%s2898]
          %2908 = vst [vmem:[%s2906] sm:%s2898] %v2907
        $region1853: #{tpu_custom_call.1} parent=1847 // loop_footer
          %s2904 = sadd.s32 1, %s2900
        $region1854: #{tpu_custom_call.1} parent=1847 // loop_footer_branch
          %2899 = sbr.rel target = $region1850
        $region1855: #{tpu_custom_call.1} parent=1847 // loop_exit
          _
      $region1848: #{tpu_custom_call.1} parent=1832 // pred_fallthru
        _
    $region1833: #{tpu_custom_call.1} parent=1 // pred_fallthru
      _
    // Predicated region
    $region1834: #{tpu_custom_call.1} parent=1 // pred_check
      %p2874 = pneg %p2870
    $region1835: #{tpu_custom_call.1} parent=1 // pred_check_branch
      %2876 = sbr.rel (%p2874) target = $region1837
    $region1836: #{tpu_custom_call.1} parent=1 // pred_region
      %s2877 = sshllo.u32 0, 1
      loop: start=0, step=1, limit=1
      $region1838: #{tpu_custom_call.1} parent=1836 // loop_pre_header
        _
      $region1839: #{tpu_custom_call.1} parent=1836 // loop_header
        %s2879 = sphi 0, %s2883
        %p2880 = scmp.ge.s32.totalorder %s2879, 1
        %s2884 = sphi %s2867, %s2867
        %s2885 = sphi %s2868, %s2868
      $region1840: #{tpu_custom_call.1} parent=1836 // loop_header_branch
        %2882 = sbr.rel (%p2880) target = $region1844
      $region1841: #{tpu_custom_call.1} parent=1836 // loop_body
        %v2886 = vld [vmem:[%s2884] sm:%s2877]
        %2887 = vst [vmem:[%s2885] sm:%s2877] %v2886
      $region1842: #{tpu_custom_call.1} parent=1836 // loop_footer
        %s2883 = sadd.s32 1, %s2879
      $region1843: #{tpu_custom_call.1} parent=1836 // loop_footer_branch
        %2878 = sbr.rel target = $region1839
      $region1844: #{tpu_custom_call.1} parent=1836 // loop_exit
        _
    $region1837: #{tpu_custom_call.1} parent=1 // pred_fallthru
      _
    // Predicated region
    $region1856: #{tpu_custom_call.1} parent=1 // pred_check
      _
    $region1857: #{tpu_custom_call.1} parent=1 // pred_check_branch
      %2911 = sbr.rel (0) target = $region1859
    $region1858: #{tpu_custom_call.1} parent=1 // pred_region
      %2912 = vsyncadd %s233, 16
    $region1859: #{tpu_custom_call.1} parent=1 // pred_fallthru
      _
    %s2913 = sld [smem:[#allocation5 + $0x3d]]
    %s2914 = scalar_lea.vmem %s1, %s2913
    %s2915 = scalar_lea.vmem [#allocation2], 61
    %p2917 = scmp.lt.u32.totalorder 1, 8
    %p2918 = pneg %p2917
    // Predicated region
    $region1860: #{tpu_custom_call.1} parent=1 // pred_check
      _
    $region1861: #{tpu_custom_call.1} parent=1 // pred_check_branch
      %2920 = sbr.rel (%p2917) target = $region1863
    $region1862: #{tpu_custom_call.1} parent=1 // pred_region
      %s2935 = sand.u32 1, 7
      %p2936 = scmp.eq.s32.totalorder %s2935, 0
      %p2937 = pneg %p2936
      // Predicated region
      $region1875: #{tpu_custom_call.1} parent=1862 // pred_check
        _
      $region1876: #{tpu_custom_call.1} parent=1862 // pred_check_branch
        %2939 = sbr.rel (%p2936) target = $region1878
      $region1877: #{tpu_custom_call.1} parent=1862 // pred_region
        %s2940 = sand.u32 1, 7
        %s2941 = ssub.s32 1, %s2940
        %s2942 = scalar_lea.vmem %s2914, %s2941
        %s2943 = ssub.s32 1, %s2940
        %s2944 = scalar_lea.vmem %s2915, %s2943 [#allocation2]
        %s2945 = sshllo.u32 0, %s2940
        loop: start=0, step=1, limit=1
        $region1879: #{tpu_custom_call.1} parent=1877 // loop_pre_header
          _
        $region1880: #{tpu_custom_call.1} parent=1877 // loop_header
          %s2947 = sphi 0, %s2951
          %p2948 = scmp.ge.s32.totalorder %s2947, 1
          %s2952 = sphi %s2942, %s2942
          %s2953 = sphi %s2944, %s2944
        $region1881: #{tpu_custom_call.1} parent=1877 // loop_header_branch
          %2950 = sbr.rel (%p2948) target = $region1885
        $region1882: #{tpu_custom_call.1} parent=1877 // loop_body
          %v2954 = vld [vmem:[%s2952] sm:%s2945]
          %2955 = vst [vmem:[%s2953] sm:%s2945] %v2954
        $region1883: #{tpu_custom_call.1} parent=1877 // loop_footer
          %s2951 = sadd.s32 1, %s2947
        $region1884: #{tpu_custom_call.1} parent=1877 // loop_footer_branch
          %2946 = sbr.rel target = $region1880
        $region1885: #{tpu_custom_call.1} parent=1877 // loop_exit
          _
      $region1878: #{tpu_custom_call.1} parent=1862 // pred_fallthru
        _
    $region1863: #{tpu_custom_call.1} parent=1 // pred_fallthru
      _
    // Predicated region
    $region1864: #{tpu_custom_call.1} parent=1 // pred_check
      %p2921 = pneg %p2917
    $region1865: #{tpu_custom_call.1} parent=1 // pred_check_branch
      %2923 = sbr.rel (%p2921) target = $region1867
    $region1866: #{tpu_custom_call.1} parent=1 // pred_region
      %s2924 = sshllo.u32 0, 1
      loop: start=0, step=1, limit=1
      $region1868: #{tpu_custom_call.1} parent=1866 // loop_pre_header
        _
      $region1869: #{tpu_custom_call.1} parent=1866 // loop_header
        %s2926 = sphi 0, %s2930
        %p2927 = scmp.ge.s32.totalorder %s2926, 1
        %s2931 = sphi %s2914, %s2914
        %s2932 = sphi %s2915, %s2915
      $region1870: #{tpu_custom_call.1} parent=1866 // loop_header_branch
        %2929 = sbr.rel (%p2927) target = $region1874
      $region1871: #{tpu_custom_call.1} parent=1866 // loop_body
        %v2933 = vld [vmem:[%s2931] sm:%s2924]
        %2934 = vst [vmem:[%s2932] sm:%s2924] %v2933
      $region1872: #{tpu_custom_call.1} parent=1866 // loop_footer
        %s2930 = sadd.s32 1, %s2926
      $region1873: #{tpu_custom_call.1} parent=1866 // loop_footer_branch
        %2925 = sbr.rel target = $region1869
      $region1874: #{tpu_custom_call.1} parent=1866 // loop_exit
        _
    $region1867: #{tpu_custom_call.1} parent=1 // pred_fallthru
      _
    // Predicated region
    $region1886: #{tpu_custom_call.1} parent=1 // pred_check
      _
    $region1887: #{tpu_custom_call.1} parent=1 // pred_check_branch
      %2958 = sbr.rel (0) target = $region1889
    $region1888: #{tpu_custom_call.1} parent=1 // pred_region
      %2959 = vsyncadd %s281, 16
    $region1889: #{tpu_custom_call.1} parent=1 // pred_fallthru
      _
    %s2960 = sld [smem:[#allocation5 + $0x3e]]
    %s2961 = scalar_lea.vmem %s1, %s2960
    %s2962 = scalar_lea.vmem [#allocation2], 62
    %p2964 = scmp.lt.u32.totalorder 1, 8
    %p2965 = pneg %p2964
    // Predicated region
    $region1890: #{tpu_custom_call.1} parent=1 // pred_check
      _
    $region1891: #{tpu_custom_call.1} parent=1 // pred_check_branch
      %2967 = sbr.rel (%p2964) target = $region1893
    $region1892: #{tpu_custom_call.1} parent=1 // pred_region
      %s2982 = sand.u32 1, 7
      %p2983 = scmp.eq.s32.totalorder %s2982, 0
      %p2984 = pneg %p2983
      // Predicated region
      $region1905: #{tpu_custom_call.1} parent=1892 // pred_check
        _
      $region1906: #{tpu_custom_call.1} parent=1892 // pred_check_branch
        %2986 = sbr.rel (%p2983) target = $region1908
      $region1907: #{tpu_custom_call.1} parent=1892 // pred_region
        %s2987 = sand.u32 1, 7
        %s2988 = ssub.s32 1, %s2987
        %s2989 = scalar_lea.vmem %s2961, %s2988
        %s2990 = ssub.s32 1, %s2987
        %s2991 = scalar_lea.vmem %s2962, %s2990 [#allocation2]
        %s2992 = sshllo.u32 0, %s2987
        loop: start=0, step=1, limit=1
        $region1909: #{tpu_custom_call.1} parent=1907 // loop_pre_header
          _
        $region1910: #{tpu_custom_call.1} parent=1907 // loop_header
          %s2994 = sphi 0, %s2998
          %p2995 = scmp.ge.s32.totalorder %s2994, 1
          %s2999 = sphi %s2989, %s2989
          %s3000 = sphi %s2991, %s2991
        $region1911: #{tpu_custom_call.1} parent=1907 // loop_header_branch
          %2997 = sbr.rel (%p2995) target = $region1915
        $region1912: #{tpu_custom_call.1} parent=1907 // loop_body
          %v3001 = vld [vmem:[%s2999] sm:%s2992]
          %3002 = vst [vmem:[%s3000] sm:%s2992] %v3001
        $region1913: #{tpu_custom_call.1} parent=1907 // loop_footer
          %s2998 = sadd.s32 1, %s2994
        $region1914: #{tpu_custom_call.1} parent=1907 // loop_footer_branch
          %2993 = sbr.rel target = $region1910
        $region1915: #{tpu_custom_call.1} parent=1907 // loop_exit
          _
      $region1908: #{tpu_custom_call.1} parent=1892 // pred_fallthru
        _
    $region1893: #{tpu_custom_call.1} parent=1 // pred_fallthru
      _
    // Predicated region
    $region1894: #{tpu_custom_call.1} parent=1 // pred_check
      %p2968 = pneg %p2964
    $region1895: #{tpu_custom_call.1} parent=1 // pred_check_branch
      %2970 = sbr.rel (%p2968) target = $region1897
    $region1896: #{tpu_custom_call.1} parent=1 // pred_region
      %s2971 = sshllo.u32 0, 1
      loop: start=0, step=1, limit=1
      $region1898: #{tpu_custom_call.1} parent=1896 // loop_pre_header
        _
      $region1899: #{tpu_custom_call.1} parent=1896 // loop_header
        %s2973 = sphi 0, %s2977
        %p2974 = scmp.ge.s32.totalorder %s2973, 1
        %s2978 = sphi %s2961, %s2961
        %s2979 = sphi %s2962, %s2962
      $region1900: #{tpu_custom_call.1} parent=1896 // loop_header_branch
        %2976 = sbr.rel (%p2974) target = $region1904
      $region1901: #{tpu_custom_call.1} parent=1896 // loop_body
        %v2980 = vld [vmem:[%s2978] sm:%s2971]
        %2981 = vst [vmem:[%s2979] sm:%s2971] %v2980
      $region1902: #{tpu_custom_call.1} parent=1896 // loop_footer
        %s2977 = sadd.s32 1, %s2973
      $region1903: #{tpu_custom_call.1} parent=1896 // loop_footer_branch
        %2972 = sbr.rel target = $region1899
      $region1904: #{tpu_custom_call.1} parent=1896 // loop_exit
        _
    $region1897: #{tpu_custom_call.1} parent=1 // pred_fallthru
      _
    // Predicated region
    $region1916: #{tpu_custom_call.1} parent=1 // pred_check
      _
    $region1917: #{tpu_custom_call.1} parent=1 // pred_check_branch
      %3005 = sbr.rel (0) target = $region1919
    $region1918: #{tpu_custom_call.1} parent=1 // pred_region
      %3006 = vsyncadd %s329, 16
    $region1919: #{tpu_custom_call.1} parent=1 // pred_fallthru
      _
    %s3007 = sld [smem:[#allocation5 + $0x3f]]
    %s3008 = scalar_lea.vmem %s1, %s3007
    %s3009 = scalar_lea.vmem [#allocation2], 63
    %p3011 = scmp.lt.u32.totalorder 1, 8
    %p3012 = pneg %p3011
    // Predicated region
    $region1920: #{tpu_custom_call.1} parent=1 // pred_check
      _
    $region1921: #{tpu_custom_call.1} parent=1 // pred_check_branch
      %3014 = sbr.rel (%p3011) target = $region1923
    $region1922: #{tpu_custom_call.1} parent=1 // pred_region
      %s3029 = sand.u32 1, 7
      %p3030 = scmp.eq.s32.totalorder %s3029, 0
      %p3031 = pneg %p3030
      // Predicated region
      $region1935: #{tpu_custom_call.1} parent=1922 // pred_check
        _
      $region1936: #{tpu_custom_call.1} parent=1922 // pred_check_branch
        %3033 = sbr.rel (%p3030) target = $region1938
      $region1937: #{tpu_custom_call.1} parent=1922 // pred_region
        %s3034 = sand.u32 1, 7
        %s3035 = ssub.s32 1, %s3034
        %s3036 = scalar_lea.vmem %s3008, %s3035
        %s3037 = ssub.s32 1, %s3034
        %s3038 = scalar_lea.vmem %s3009, %s3037 [#allocation2]
        %s3039 = sshllo.u32 0, %s3034
        loop: start=0, step=1, limit=1
        $region1939: #{tpu_custom_call.1} parent=1937 // loop_pre_header
          _
        $region1940: #{tpu_custom_call.1} parent=1937 // loop_header
          %s3041 = sphi 0, %s3045
          %p3042 = scmp.ge.s32.totalorder %s3041, 1
          %s3046 = sphi %s3036, %s3036
          %s3047 = sphi %s3038, %s3038
        $region1941: #{tpu_custom_call.1} parent=1937 // loop_header_branch
          %3044 = sbr.rel (%p3042) target = $region1945
        $region1942: #{tpu_custom_call.1} parent=1937 // loop_body
          %v3048 = vld [vmem:[%s3046] sm:%s3039]
          %3049 = vst [vmem:[%s3047] sm:%s3039] %v3048
        $region1943: #{tpu_custom_call.1} parent=1937 // loop_footer
          %s3045 = sadd.s32 1, %s3041
        $region1944: #{tpu_custom_call.1} parent=1937 // loop_footer_branch
          %3040 = sbr.rel target = $region1940
        $region1945: #{tpu_custom_call.1} parent=1937 // loop_exit
          _
      $region1938: #{tpu_custom_call.1} parent=1922 // pred_fallthru
        _
    $region1923: #{tpu_custom_call.1} parent=1 // pred_fallthru
      _
    // Predicated region
    $region1924: #{tpu_custom_call.1} parent=1 // pred_check
      %p3015 = pneg %p3011
    $region1925: #{tpu_custom_call.1} parent=1 // pred_check_branch
      %3017 = sbr.rel (%p3015) target = $region1927
    $region1926: #{tpu_custom_call.1} parent=1 // pred_region
      %s3018 = sshllo.u32 0, 1
      loop: start=0, step=1, limit=1
      $region1928: #{tpu_custom_call.1} parent=1926 // loop_pre_header
        _
      $region1929: #{tpu_custom_call.1} parent=1926 // loop_header
        %s3020 = sphi 0, %s3024
        %p3021 = scmp.ge.s32.totalorder %s3020, 1
        %s3025 = sphi %s3008, %s3008
        %s3026 = sphi %s3009, %s3009
      $region1930: #{tpu_custom_call.1} parent=1926 // loop_header_branch
        %3023 = sbr.rel (%p3021) target = $region1934
      $region1931: #{tpu_custom_call.1} parent=1926 // loop_body
        %v3027 = vld [vmem:[%s3025] sm:%s3018]
        %3028 = vst [vmem:[%s3026] sm:%s3018] %v3027
      $region1932: #{tpu_custom_call.1} parent=1926 // loop_footer
        %s3024 = sadd.s32 1, %s3020
      $region1933: #{tpu_custom_call.1} parent=1926 // loop_footer_branch
        %3019 = sbr.rel target = $region1929
      $region1934: #{tpu_custom_call.1} parent=1926 // loop_exit
        _
    $region1927: #{tpu_custom_call.1} parent=1 // pred_fallthru
      _
    // Predicated region
    $region1946: #{tpu_custom_call.1} parent=1 // pred_check
      _
    $region1947: #{tpu_custom_call.1} parent=1 // pred_check_branch
      %3052 = sbr.rel (0) target = $region1949
    $region1948: #{tpu_custom_call.1} parent=1 // pred_region
      %3053 = vsyncadd %s377, 16
    $region1949: #{tpu_custom_call.1} parent=1 // pred_fallthru
      _
    %s3054 = smul.u32 1, 1
    %s3055 = sshll.u32 %s3054, 4
    %3056 = dma.done [#allocation3], %s3055
    %s3057 = sshll.u32 %s3054, 4
    %3058 = dma.done %s89, %s3057
    %s3059 = sshll.u32 %s3054, 4
    %3060 = dma.done %s137, %s3059
    %s3061 = sshll.u32 %s3054, 4
    %3062 = dma.done %s185, %s3061
    %s3063 = sshll.u32 %s3054, 4
    %3064 = dma.done %s233, %s3063
    %s3065 = sshll.u32 %s3054, 4
    %3066 = dma.done %s281, %s3065
    %s3067 = sshll.u32 %s3054, 4
    %3068 = dma.done %s329, %s3067
    %s3069 = sshll.u32 %s3054, 4
    %3070 = dma.done %s377, %s3069
    %s3071 = sshll.u32 %s3054, 4
    %3072 = dma.done [#allocation3], %s3071
    %s3073 = sshll.u32 %s3054, 4
    %3074 = dma.done %s89, %s3073
    %s3075 = sshll.u32 %s3054, 4
    %3076 = dma.done %s137, %s3075
    %s3077 = sshll.u32 %s3054, 4
    %3078 = dma.done %s185, %s3077
    %s3079 = sshll.u32 %s3054, 4
    %3080 = dma.done %s233, %s3079
    %s3081 = sshll.u32 %s3054, 4
    %3082 = dma.done %s281, %s3081
    %s3083 = sshll.u32 %s3054, 4
    %3084 = dma.done %s329, %s3083
    %s3085 = sshll.u32 %s3054, 4
    %3086 = dma.done %s377, %s3085
    %s3087 = sshll.u32 %s3054, 4
    %3088 = dma.done [#allocation3], %s3087
    %s3089 = sshll.u32 %s3054, 4
    %3090 = dma.done %s89, %s3089
    %s3091 = sshll.u32 %s3054, 4
    %3092 = dma.done %s137, %s3091
    %s3093 = sshll.u32 %s3054, 4
    %3094 = dma.done %s185, %s3093
    %s3095 = sshll.u32 %s3054, 4
    %3096 = dma.done %s233, %s3095
    %s3097 = sshll.u32 %s3054, 4
    %3098 = dma.done %s281, %s3097
    %s3099 = sshll.u32 %s3054, 4
    %3100 = dma.done %s329, %s3099
    %s3101 = sshll.u32 %s3054, 4
    %3102 = dma.done %s377, %s3101
    %s3103 = sshll.u32 %s3054, 4
    %3104 = dma.done [#allocation3], %s3103
    %s3105 = sshll.u32 %s3054, 4
    %3106 = dma.done %s89, %s3105
    %s3107 = sshll.u32 %s3054, 4
    %3108 = dma.done %s137, %s3107
    %s3109 = sshll.u32 %s3054, 4
    %3110 = dma.done %s185, %s3109
    %s3111 = sshll.u32 %s3054, 4
    %3112 = dma.done %s233, %s3111
    %s3113 = sshll.u32 %s3054, 4
    %3114 = dma.done %s281, %s3113
    %s3115 = sshll.u32 %s3054, 4
    %3116 = dma.done %s329, %s3115
    %s3117 = sshll.u32 %s3054, 4
    %3118 = dma.done %s377, %s3117
    %s3119 = sshll.u32 %s3054, 4
    %3120 = dma.done [#allocation3], %s3119
    %s3121 = sshll.u32 %s3054, 4
    %3122 = dma.done %s89, %s3121
    %s3123 = sshll.u32 %s3054, 4
    %3124 = dma.done %s137, %s3123
    %s3125 = sshll.u32 %s3054, 4
    %3126 = dma.done %s185, %s3125
    %s3127 = sshll.u32 %s3054, 4
    %3128 = dma.done %s233, %s3127
    %s3129 = sshll.u32 %s3054, 4
    %3130 = dma.done %s281, %s3129
    %s3131 = sshll.u32 %s3054, 4
    %3132 = dma.done %s329, %s3131
    %s3133 = sshll.u32 %s3054, 4
    %3134 = dma.done %s377, %s3133
    %s3135 = sshll.u32 %s3054, 4
    %3136 = dma.done [#allocation3], %s3135
    %s3137 = sshll.u32 %s3054, 4
    %3138 = dma.done %s89, %s3137
    %s3139 = sshll.u32 %s3054, 4
    %3140 = dma.done %s137, %s3139
    %s3141 = sshll.u32 %s3054, 4
    %3142 = dma.done %s185, %s3141
    %s3143 = sshll.u32 %s3054, 4
    %3144 = dma.done %s233, %s3143
    %s3145 = sshll.u32 %s3054, 4
    %3146 = dma.done %s281, %s3145
    %s3147 = sshll.u32 %s3054, 4
    %3148 = dma.done %s329, %s3147
    %s3149 = sshll.u32 %s3054, 4
    %3150 = dma.done %s377, %s3149
    %s3151 = sshll.u32 %s3054, 4
    %3152 = dma.done [#allocation3], %s3151
    %s3153 = sshll.u32 %s3054, 4
    %3154 = dma.done %s89, %s3153
    %s3155 = sshll.u32 %s3054, 4
    %3156 = dma.done %s137, %s3155
    %s3157 = sshll.u32 %s3054, 4
    %3158 = dma.done %s185, %s3157
    %s3159 = sshll.u32 %s3054, 4
    %3160 = dma.done %s233, %s3159
    %s3161 = sshll.u32 %s3054, 4
    %3162 = dma.done %s281, %s3161
    %s3163 = sshll.u32 %s3054, 4
    %3164 = dma.done %s329, %s3163
    %s3165 = sshll.u32 %s3054, 4
    %3166 = dma.done %s377, %s3165
    %s3167 = sshll.u32 %s3054, 4
    %3168 = dma.done [#allocation3], %s3167
    %s3169 = sshll.u32 %s3054, 4
    %3170 = dma.done %s89, %s3169
    %s3171 = sshll.u32 %s3054, 4
    %3172 = dma.done %s137, %s3171
    %s3173 = sshll.u32 %s3054, 4
    %3174 = dma.done %s185, %s3173
    %s3175 = sshll.u32 %s3054, 4
    %3176 = dma.done %s233, %s3175
    %s3177 = sshll.u32 %s3054, 4
    %3178 = dma.done %s281, %s3177
    %s3179 = sshll.u32 %s3054, 4
    %3180 = dma.done %s329, %s3179
    %s3181 = sshll.u32 %s3054, 4
    %3182 = dma.done %s377, %s3181
    %v3183 = vld [vmem:[#allocation2] sm:$0xff]
    %v3184 = vld [vmem:[#allocation2 + $0x8] sm:$0xff]
    %v3185 = vld [vmem:[#allocation2 + $0x10] sm:$0xff]
    %v3186 = vld [vmem:[#allocation2 + $0x18] sm:$0xff]
    %v3187 = vld [vmem:[#allocation2 + $0x20] sm:$0xff]
    %v3188 = vld [vmem:[#allocation2 + $0x28] sm:$0xff]
    %v3189 = vld [vmem:[#allocation2 + $0x30] sm:$0xff]
    %v3190 = vld [vmem:[#allocation2 + $0x38] sm:$0xff]
    %v3191 = vpack.c.bf16 %v3184, %v3183
    %v3192 = vpack.c.bf16 %v3186, %v3185
    %v3193 = vpack.c.bf16 %v3188, %v3187
    %v3194 = vpack.c.bf16 %v3190, %v3189
    %v3195 = vld [vmem:[%s2] sm:$0xf]
    %v3196 = vld [vmem:[%s2 + $0x4] sm:$0xf]
    %v3197 = vld [vmem:[%s2 + $0x8] sm:$0xf]
    %v3198 = vld [vmem:[%s2 + $0xc] sm:$0xf]
    %v3199 = vld [vmem:[%s4] sm:$0x1]
    %v3201 = vlaneseq
    %v3202 = vshrl.u32 %v3201, 7
    %v3203 = vsub.s32 0, %v3202
    %v3204 = vrot.slane %v3199, %v3203
    %v3210 = vunpack.c.l.b16 %v3195
    %v3211 = vunpack.c.l.b16 %v3196
    %v3212 = vunpack.c.l.b16 %v3197
    %v3213 = vunpack.c.l.b16 %v3198
    %v3214 = vpack.c.b16 %v3211, %v3210
    %v3215 = vpack.c.b16 %v3213, %v3212
    %vm3218 = vcmask 261120
    %v3220 = vsel %vm3218, %v3191, 0
    %v3223 = vsel %vm3218, %v3192, 0
    %v3226 = vsel %vm3218, %v3193, 0
    %v3229 = vsel %vm3218, %v3194, 0
    %3231 = vmatprep.subr.bf16.mxu0 0
    %3232 = vmatpush1.bf16.msra.mxu0 %v3214
    %3233 = vmatprep.subr.bf16.mxu0 0
    %3234 = vmatpush1.bf16.msra.mxu0 %v3215
    %3235 = vmatprep.subr.bf16.mxu0 0
    %3236 = vmatpush1.bf16.msra.mxu0 0
    %3237 = vmatprep.subr.bf16.mxu0 0
    %3238 = vmatpush1.bf16.msra.mxu0 0
    %3239 = vmatprep.subr.bf16.mxu0 0
    %3240 = vmatpush1.bf16.msra.mxu0 0
    %3241 = vmatprep.subr.bf16.mxu0 0
    %3242 = vmatpush1.bf16.msra.mxu0 0
    %3243 = vmatprep.subr.bf16.mxu0 0
    %3244 = vmatpush1.bf16.msra.mxu0 0
    %3245 = vmatprep.subr.bf16.mxu0 0
    %3246 = vmatpush1.bf16.msra.mxu0 0
    %3247 = vmatprep.subr.bf16.mxu0 0
    %3248 = vmatpush1.bf16.msra.mxu0 0
    %3249 = vmatprep.subr.bf16.mxu0 0
    %3250 = vmatpush1.bf16.msra.mxu0 0
    %3251 = vmatprep.subr.bf16.mxu0 0
    %3252 = vmatpush1.bf16.msra.mxu0 0
    %3253 = vmatprep.subr.bf16.mxu0 0
    %3254 = vmatpush1.bf16.msra.mxu0 0
    %3255 = vmatprep.subr.bf16.mxu0 0
    %3256 = vmatpush1.bf16.msra.mxu0 0
    %3257 = vmatprep.subr.bf16.mxu0 0
    %3258 = vmatpush1.bf16.msra.mxu0 0
    %3259 = vmatprep.subr.bf16.mxu0 0
    %3260 = vmatpush1.bf16.msra.mxu0 0
    %3261 = vmatprep.subr.bf16.mxu0 0
    %3262 = vmatpush1.bf16.msra.mxu0 0
    %3263 = vmatprep.mubr.bf16.mxu0 0
    %3264 = vmatmul.mubr.bf16.gmra.mrb[0].mxu0 %v3220
    %v3265 = vpop.f32.mrb[0].mxu0
    %v3266 = vadd.f32 %v3204, %v3265
    %v3267 = vpop.f32.mrb[0].mxu0
    %v3268 = vpop.f32.mrb[0].mxu0
    %v3269 = vadd.f32 %v3204, %v3268
    %v3270 = vpop.f32.mrb[0].mxu0
    %3271 = vmatprep.mubr.bf16.mxu0 0
    %3272 = vmatmul.mubr.bf16.gmra.mrb[0].mxu0 %v3223
    %v3273 = vpop.f32.mrb[0].mxu0
    %v3274 = vadd.f32 %v3204, %v3273
    %v3275 = vpop.f32.mrb[0].mxu0
    %v3276 = vpop.f32.mrb[0].mxu0
    %v3277 = vadd.f32 %v3204, %v3276
    %v3278 = vpop.f32.mrb[0].mxu0
    %3279 = vmatprep.mubr.bf16.mxu0 0
    %3280 = vmatmul.mubr.bf16.gmra.mrb[0].mxu0 %v3226
    %v3281 = vpop.f32.mrb[0].mxu0
    %v3282 = vadd.f32 %v3204, %v3281
    %v3283 = vpop.f32.mrb[0].mxu0
    %v3284 = vpop.f32.mrb[0].mxu0
    %v3285 = vadd.f32 %v3204, %v3284
    %v3286 = vpop.f32.mrb[0].mxu0
    %3287 = vmatprep.mubr.bf16.mxu0 0
    %3288 = vmatmul.mubr.bf16.gmra.mrb[0].mxu0 %v3229
    %v3289 = vpop.f32.mrb[0].mxu0
    %v3290 = vadd.f32 %v3204, %v3289
    %v3291 = vpop.f32.mrb[0].mxu0
    %v3292 = vpop.f32.mrb[0].mxu0
    %v3293 = vadd.f32 %v3204, %v3292
    %v3294 = vpop.f32.mrb[0].mxu0
    %3295 = vdwg.mxu0
    %v3296 = vld [vmem:[%s3] sm:$0xf]
    %v3297 = vld [vmem:[%s3 + $0x4] sm:$0xf]
    %v3298 = vld [vmem:[%s3 + $0x8] sm:$0xf]
    %v3299 = vld [vmem:[%s3 + $0xc] sm:$0xf]
    %v3304 = vunpack.c.l.b16 %v3296
    %v3305 = vunpack.c.l.b16 %v3297
    %v3306 = vunpack.c.l.b16 %v3298
    %v3307 = vunpack.c.l.b16 %v3299
    %v3308 = vpack.c.b16 %v3305, %v3304
    %v3309 = vpack.c.b16 %v3307, %v3306
    %v3313 = vsel %vm3218, 0, 0
    %3315 = vmatprep.subr.bf16.mxu0 0
    %3316 = vmatpush1.bf16.msra.mxu0 %v3308
    %3317 = vmatprep.subr.bf16.mxu0 0
    %3318 = vmatpush1.bf16.msra.mxu0 %v3309
    %3319 = vmatprep.subr.bf16.mxu0 0
    %3320 = vmatpush1.bf16.msra.mxu0 0
    %3321 = vmatprep.subr.bf16.mxu0 0
    %3322 = vmatpush1.bf16.msra.mxu0 0
    %3323 = vmatprep.subr.bf16.mxu0 0
    %3324 = vmatpush1.bf16.msra.mxu0 0
    %3325 = vmatprep.subr.bf16.mxu0 0
    %3326 = vmatpush1.bf16.msra.mxu0 0
    %3327 = vmatprep.subr.bf16.mxu0 0
    %3328 = vmatpush1.bf16.msra.mxu0 0
    %3329 = vmatprep.subr.bf16.mxu0 0
    %3330 = vmatpush1.bf16.msra.mxu0 0
    %3331 = vmatprep.subr.bf16.mxu0 0
    %3332 = vmatpush1.bf16.msra.mxu0 0
    %3333 = vmatprep.subr.bf16.mxu0 0
    %3334 = vmatpush1.bf16.msra.mxu0 0
    %3335 = vmatprep.subr.bf16.mxu0 0
    %3336 = vmatpush1.bf16.msra.mxu0 0
    %3337 = vmatprep.subr.bf16.mxu0 0
    %3338 = vmatpush1.bf16.msra.mxu0 0
    %3339 = vmatprep.subr.bf16.mxu0 0
    %3340 = vmatpush1.bf16.msra.mxu0 0
    %3341 = vmatprep.subr.bf16.mxu0 0
    %3342 = vmatpush1.bf16.msra.mxu0 0
    %3343 = vmatprep.subr.bf16.mxu0 0
    %3344 = vmatpush1.bf16.msra.mxu0 0
    %3345 = vmatprep.subr.bf16.mxu0 0
    %3346 = vmatpush1.bf16.msra.mxu0 0
    %3347 = vmatprep.mubr.bf16.mxu0 0
    %3348 = vmatmul.mubr.bf16.gmra.mrb[0].mxu0 %v3313
    %v3349 = vpop.f32.mrb[0].mxu0
    %v3350 = vadd.f32 0.0, %v3349
    %v3351 = vpop.f32.mrb[0].mxu0
    %v3352 = vpop.f32.mrb[0].mxu0
    %v3353 = vpop.f32.mrb[0].mxu0
    %3354 = vdwg.mxu0
    %v3355 = vadd.f32 %v3266, %v3350
    %v3356 = vxor.u32 %v3355, 2147483648
    %v3357 = vmul.f32 %v3356, 1.442695
    %v3358 = vpow.pop %v3357
    %v3359 = vadd.f32 %v3358, 1.0
    %v3360 = vrcp.pop %v3359
    %v3361 = vmul.f32 1.0, %v3360
    %v3362 = vtanh.pop %v3355
    %v3363 = vmul.f32 %v3361, 0.0
    %3365 = vrot.lane.b32.xlu0 %v3362, 32
    %v3366 = vpop.permute.xlu0 %3365
    %v3368 = vmul.f32 %v3361, %v3366
    %3370 = vrot.lane.b32.xlu0 %v3368, 32
    %v3371 = vpop.permute.xlu0 %3370
    %v3373 = vadd.f32 %v3363, %v3371
    %v3374 = vtanh.pop %v3373
    %3376 = vrot.lane.b32.xlu0 %v3374, 32
    %v3377 = vpop.permute.xlu0 %3376
    %v3379 = vmul.f32 %v3361, %v3377
    %v3380 = vadd.f32 %v3379, 0.0
    %v3381 = vpack.c.bf16 %v3379, %v3379
    %3383 = vrot.lane.b32.xlu0 %v3381, 64
    %v3384 = vpop.permute.xlu0 %3383
    %v3386 = vsel %vm3218, %v3384, 0
    %3388 = vmatprep.subr.bf16.mxu0 0
    %3389 = vmatpush1.bf16.msra.mxu0 %v3308
    %3390 = vmatprep.subr.bf16.mxu0 0
    %3391 = vmatpush1.bf16.msra.mxu0 %v3309
    %3392 = vmatprep.subr.bf16.mxu0 0
    %3393 = vmatpush1.bf16.msra.mxu0 0
    %3394 = vmatprep.subr.bf16.mxu0 0
    %3395 = vmatpush1.bf16.msra.mxu0 0
    %3396 = vmatprep.subr.bf16.mxu0 0
    %3397 = vmatpush1.bf16.msra.mxu0 0
    %3398 = vmatprep.subr.bf16.mxu0 0
    %3399 = vmatpush1.bf16.msra.mxu0 0
    %3400 = vmatprep.subr.bf16.mxu0 0
    %3401 = vmatpush1.bf16.msra.mxu0 0
    %3402 = vmatprep.subr.bf16.mxu0 0
    %3403 = vmatpush1.bf16.msra.mxu0 0
    %3404 = vmatprep.subr.bf16.mxu0 0
    %3405 = vmatpush1.bf16.msra.mxu0 0
    %3406 = vmatprep.subr.bf16.mxu0 0
    %3407 = vmatpush1.bf16.msra.mxu0 0
    %3408 = vmatprep.subr.bf16.mxu0 0
    %3409 = vmatpush1.bf16.msra.mxu0 0
    %3410 = vmatprep.subr.bf16.mxu0 0
    %3411 = vmatpush1.bf16.msra.mxu0 0
    %3412 = vmatprep.subr.bf16.mxu0 0
    %3413 = vmatpush1.bf16.msra.mxu0 0
    %3414 = vmatprep.subr.bf16.mxu0 0
    %3415 = vmatpush1.bf16.msra.mxu0 0
    %3416 = vmatprep.subr.bf16.mxu0 0
    %3417 = vmatpush1.bf16.msra.mxu0 0
    %3418 = vmatprep.subr.bf16.mxu0 0
    %3419 = vmatpush1.bf16.msra.mxu0 0
    %3420 = vmatprep.mubr.bf16.mxu0 0
    %3421 = vmatmul.mubr.bf16.gmra.mrb[0].mxu0 %v3386
    %v3422 = vpop.f32.mrb[0].mxu0
    %v3423 = vadd.f32 0.0, %v3422
    %v3424 = vpop.f32.mrb[0].mxu0
    %v3425 = vpop.f32.mrb[0].mxu0
    %v3426 = vpop.f32.mrb[0].mxu0
    %3427 = vdwg.mxu0
    %v3428 = vadd.f32 %v3269, %v3423
    %v3429 = vxor.u32 %v3428, 2147483648
    %v3430 = vmul.f32 %v3429, 1.442695
    %v3431 = vpow.pop %v3430
    %v3432 = vadd.f32 %v3431, 1.0
    %v3433 = vrcp.pop %v3432
    %v3434 = vmul.f32 1.0, %v3433
    %v3435 = vtanh.pop %v3428
    %v3436 = vmul.f32 %v3434, %v3373
    %3438 = vrot.lane.b32.xlu0 %v3435, 32
    %v3439 = vpop.permute.xlu0 %3438
    %v3441 = vmul.f32 %v3434, %v3439
    %3443 = vrot.lane.b32.xlu0 %v3441, 32
    %v3444 = vpop.permute.xlu0 %3443
    %v3446 = vadd.f32 %v3436, %v3444
    %v3447 = vtanh.pop %v3446
    %3449 = vrot.lane.b32.xlu0 %v3447, 32
    %v3450 = vpop.permute.xlu0 %3449
    %v3452 = vmul.f32 %v3434, %v3450
    %v3453 = vadd.f32 %v3380, %v3452
    %v3454 = vpack.c.bf16 %v3452, %v3452
    %3456 = vrot.lane.b32.xlu0 %v3454, 64
    %v3457 = vpop.permute.xlu0 %3456
    %v3459 = vsel %vm3218, %v3457, 0
    %3461 = vmatprep.subr.bf16.mxu0 0
    %3462 = vmatpush1.bf16.msra.mxu0 %v3308
    %3463 = vmatprep.subr.bf16.mxu0 0
    %3464 = vmatpush1.bf16.msra.mxu0 %v3309
    %3465 = vmatprep.subr.bf16.mxu0 0
    %3466 = vmatpush1.bf16.msra.mxu0 0
    %3467 = vmatprep.subr.bf16.mxu0 0
    %3468 = vmatpush1.bf16.msra.mxu0 0
    %3469 = vmatprep.subr.bf16.mxu0 0
    %3470 = vmatpush1.bf16.msra.mxu0 0
    %3471 = vmatprep.subr.bf16.mxu0 0
    %3472 = vmatpush1.bf16.msra.mxu0 0
    %3473 = vmatprep.subr.bf16.mxu0 0
    %3474 = vmatpush1.bf16.msra.mxu0 0
    %3475 = vmatprep.subr.bf16.mxu0 0
    %3476 = vmatpush1.bf16.msra.mxu0 0
    %3477 = vmatprep.subr.bf16.mxu0 0
    %3478 = vmatpush1.bf16.msra.mxu0 0
    %3479 = vmatprep.subr.bf16.mxu0 0
    %3480 = vmatpush1.bf16.msra.mxu0 0
    %3481 = vmatprep.subr.bf16.mxu0 0
    %3482 = vmatpush1.bf16.msra.mxu0 0
    %3483 = vmatprep.subr.bf16.mxu0 0
    %3484 = vmatpush1.bf16.msra.mxu0 0
    %3485 = vmatprep.subr.bf16.mxu0 0
    %3486 = vmatpush1.bf16.msra.mxu0 0
    %3487 = vmatprep.subr.bf16.mxu0 0
    %3488 = vmatpush1.bf16.msra.mxu0 0
    %3489 = vmatprep.subr.bf16.mxu0 0
    %3490 = vmatpush1.bf16.msra.mxu0 0
    %3491 = vmatprep.subr.bf16.mxu0 0
    %3492 = vmatpush1.bf16.msra.mxu0 0
    %3493 = vmatprep.mubr.bf16.mxu0 0
    %3494 = vmatmul.mubr.bf16.gmra.mrb[0].mxu0 %v3459
    %v3495 = vpop.f32.mrb[0].mxu0
    %v3496 = vadd.f32 0.0, %v3495
    %v3497 = vpop.f32.mrb[0].mxu0
    %v3498 = vpop.f32.mrb[0].mxu0
    %v3499 = vpop.f32.mrb[0].mxu0
    %3500 = vdwg.mxu0
    %v3501 = vadd.f32 %v3274, %v3496
    %v3502 = vxor.u32 %v3501, 2147483648
    %v3503 = vmul.f32 %v3502, 1.442695
    %v3504 = vpow.pop %v3503
    %v3505 = vadd.f32 %v3504, 1.0
    %v3506 = vrcp.pop %v3505
    %v3507 = vmul.f32 1.0, %v3506
    %v3508 = vtanh.pop %v3501
    %v3509 = vmul.f32 %v3507, %v3446
    %3511 = vrot.lane.b32.xlu0 %v3508, 32
    %v3512 = vpop.permute.xlu0 %3511
    %v3514 = vmul.f32 %v3507, %v3512
    %3516 = vrot.lane.b32.xlu0 %v3514, 32
    %v3517 = vpop.permute.xlu0 %3516
    %v3519 = vadd.f32 %v3509, %v3517
    %v3520 = vtanh.pop %v3519
    %3522 = vrot.lane.b32.xlu0 %v3520, 32
    %v3523 = vpop.permute.xlu0 %3522
    %v3525 = vmul.f32 %v3507, %v3523
    %v3526 = vadd.f32 %v3453, %v3525
    %v3527 = vpack.c.bf16 %v3525, %v3525
    %3529 = vrot.lane.b32.xlu0 %v3527, 64
    %v3530 = vpop.permute.xlu0 %3529
    %v3532 = vsel %vm3218, %v3530, 0
    %3534 = vmatprep.subr.bf16.mxu0 0
    %3535 = vmatpush1.bf16.msra.mxu0 %v3308
    %3536 = vmatprep.subr.bf16.mxu0 0
    %3537 = vmatpush1.bf16.msra.mxu0 %v3309
    %3538 = vmatprep.subr.bf16.mxu0 0
    %3539 = vmatpush1.bf16.msra.mxu0 0
    %3540 = vmatprep.subr.bf16.mxu0 0
    %3541 = vmatpush1.bf16.msra.mxu0 0
    %3542 = vmatprep.subr.bf16.mxu0 0
    %3543 = vmatpush1.bf16.msra.mxu0 0
    %3544 = vmatprep.subr.bf16.mxu0 0
    %3545 = vmatpush1.bf16.msra.mxu0 0
    %3546 = vmatprep.subr.bf16.mxu0 0
    %3547 = vmatpush1.bf16.msra.mxu0 0
    %3548 = vmatprep.subr.bf16.mxu0 0
    %3549 = vmatpush1.bf16.msra.mxu0 0
    %3550 = vmatprep.subr.bf16.mxu0 0
    %3551 = vmatpush1.bf16.msra.mxu0 0
    %3552 = vmatprep.subr.bf16.mxu0 0
    %3553 = vmatpush1.bf16.msra.mxu0 0
    %3554 = vmatprep.subr.bf16.mxu0 0
    %3555 = vmatpush1.bf16.msra.mxu0 0
    %3556 = vmatprep.subr.bf16.mxu0 0
    %3557 = vmatpush1.bf16.msra.mxu0 0
    %3558 = vmatprep.subr.bf16.mxu0 0
    %3559 = vmatpush1.bf16.msra.mxu0 0
    %3560 = vmatprep.subr.bf16.mxu0 0
    %3561 = vmatpush1.bf16.msra.mxu0 0
    %3562 = vmatprep.subr.bf16.mxu0 0
    %3563 = vmatpush1.bf16.msra.mxu0 0
    %3564 = vmatprep.subr.bf16.mxu0 0
    %3565 = vmatpush1.bf16.msra.mxu0 0
    %3566 = vmatprep.mubr.bf16.mxu0 0
    %3567 = vmatmul.mubr.bf16.gmra.mrb[0].mxu0 %v3532
    %v3568 = vpop.f32.mrb[0].mxu0
    %v3569 = vadd.f32 0.0, %v3568
    %v3570 = vpop.f32.mrb[0].mxu0
    %v3571 = vpop.f32.mrb[0].mxu0
    %v3572 = vpop.f32.mrb[0].mxu0
    %3573 = vdwg.mxu0
    %v3574 = vadd.f32 %v3277, %v3569
    %v3575 = vxor.u32 %v3574, 2147483648
    %v3576 = vmul.f32 %v3575, 1.442695
    %v3577 = vpow.pop %v3576
    %v3578 = vadd.f32 %v3577, 1.0
    %v3579 = vrcp.pop %v3578
    %v3580 = vmul.f32 1.0, %v3579
    %v3581 = vtanh.pop %v3574
    %v3582 = vmul.f32 %v3580, %v3519
    %3584 = vrot.lane.b32.xlu0 %v3581, 32
    %v3585 = vpop.permute.xlu0 %3584
    %v3587 = vmul.f32 %v3580, %v3585
    %3589 = vrot.lane.b32.xlu0 %v3587, 32
    %v3590 = vpop.permute.xlu0 %3589
    %v3592 = vadd.f32 %v3582, %v3590
    %v3593 = vtanh.pop %v3592
    %3595 = vrot.lane.b32.xlu0 %v3593, 32
    %v3596 = vpop.permute.xlu0 %3595
    %v3598 = vmul.f32 %v3580, %v3596
    %v3599 = vadd.f32 %v3526, %v3598
    %v3600 = vpack.c.bf16 %v3598, %v3598
    %3602 = vrot.lane.b32.xlu0 %v3600, 64
    %v3603 = vpop.permute.xlu0 %3602
    %v3605 = vsel %vm3218, %v3603, 0
    %3607 = vmatprep.subr.bf16.mxu0 0
    %3608 = vmatpush1.bf16.msra.mxu0 %v3308
    %3609 = vmatprep.subr.bf16.mxu0 0
    %3610 = vmatpush1.bf16.msra.mxu0 %v3309
    %3611 = vmatprep.subr.bf16.mxu0 0
    %3612 = vmatpush1.bf16.msra.mxu0 0
    %3613 = vmatprep.subr.bf16.mxu0 0
    %3614 = vmatpush1.bf16.msra.mxu0 0
    %3615 = vmatprep.subr.bf16.mxu0 0
    %3616 = vmatpush1.bf16.msra.mxu0 0
    %3617 = vmatprep.subr.bf16.mxu0 0
    %3618 = vmatpush1.bf16.msra.mxu0 0
    %3619 = vmatprep.subr.bf16.mxu0 0
    %3620 = vmatpush1.bf16.msra.mxu0 0
    %3621 = vmatprep.subr.bf16.mxu0 0
    %3622 = vmatpush1.bf16.msra.mxu0 0
    %3623 = vmatprep.subr.bf16.mxu0 0
    %3624 = vmatpush1.bf16.msra.mxu0 0
    %3625 = vmatprep.subr.bf16.mxu0 0
    %3626 = vmatpush1.bf16.msra.mxu0 0
    %3627 = vmatprep.subr.bf16.mxu0 0
    %3628 = vmatpush1.bf16.msra.mxu0 0
    %3629 = vmatprep.subr.bf16.mxu0 0
    %3630 = vmatpush1.bf16.msra.mxu0 0
    %3631 = vmatprep.subr.bf16.mxu0 0
    %3632 = vmatpush1.bf16.msra.mxu0 0
    %3633 = vmatprep.subr.bf16.mxu0 0
    %3634 = vmatpush1.bf16.msra.mxu0 0
    %3635 = vmatprep.subr.bf16.mxu0 0
    %3636 = vmatpush1.bf16.msra.mxu0 0
    %3637 = vmatprep.subr.bf16.mxu0 0
    %3638 = vmatpush1.bf16.msra.mxu0 0
    %3639 = vmatprep.mubr.bf16.mxu0 0
    %3640 = vmatmul.mubr.bf16.gmra.mrb[0].mxu0 %v3605
    %v3641 = vpop.f32.mrb[0].mxu0
    %v3642 = vadd.f32 0.0, %v3641
    %v3643 = vpop.f32.mrb[0].mxu0
    %v3644 = vpop.f32.mrb[0].mxu0
    %v3645 = vpop.f32.mrb[0].mxu0
    %3646 = vdwg.mxu0
    %v3647 = vadd.f32 %v3282, %v3642
    %v3648 = vxor.u32 %v3647, 2147483648
    %v3649 = vmul.f32 %v3648, 1.442695
    %v3650 = vpow.pop %v3649
    %v3651 = vadd.f32 %v3650, 1.0
    %v3652 = vrcp.pop %v3651
    %v3653 = vmul.f32 1.0, %v3652
    %v3654 = vtanh.pop %v3647
    %v3655 = vmul.f32 %v3653, %v3592
    %3657 = vrot.lane.b32.xlu0 %v3654, 32
    %v3658 = vpop.permute.xlu0 %3657
    %v3660 = vmul.f32 %v3653, %v3658
    %3662 = vrot.lane.b32.xlu0 %v3660, 32
    %v3663 = vpop.permute.xlu0 %3662
    %v3665 = vadd.f32 %v3655, %v3663
    %v3666 = vtanh.pop %v3665
    %3668 = vrot.lane.b32.xlu0 %v3666, 32
    %v3669 = vpop.permute.xlu0 %3668
    %v3671 = vmul.f32 %v3653, %v3669
    %v3672 = vadd.f32 %v3599, %v3671
    %v3673 = vpack.c.bf16 %v3671, %v3671
    %3675 = vrot.lane.b32.xlu0 %v3673, 64
    %v3676 = vpop.permute.xlu0 %3675
    %v3678 = vsel %vm3218, %v3676, 0
    %3680 = vmatprep.subr.bf16.mxu0 0
    %3681 = vmatpush1.bf16.msra.mxu0 %v3308
    %3682 = vmatprep.subr.bf16.mxu0 0
    %3683 = vmatpush1.bf16.msra.mxu0 %v3309
    %3684 = vmatprep.subr.bf16.mxu0 0
    %3685 = vmatpush1.bf16.msra.mxu0 0
    %3686 = vmatprep.subr.bf16.mxu0 0
    %3687 = vmatpush1.bf16.msra.mxu0 0
    %3688 = vmatprep.subr.bf16.mxu0 0
    %3689 = vmatpush1.bf16.msra.mxu0 0
    %3690 = vmatprep.subr.bf16.mxu0 0
    %3691 = vmatpush1.bf16.msra.mxu0 0
    %3692 = vmatprep.subr.bf16.mxu0 0
    %3693 = vmatpush1.bf16.msra.mxu0 0
    %3694 = vmatprep.subr.bf16.mxu0 0
    %3695 = vmatpush1.bf16.msra.mxu0 0
    %3696 = vmatprep.subr.bf16.mxu0 0
    %3697 = vmatpush1.bf16.msra.mxu0 0
    %3698 = vmatprep.subr.bf16.mxu0 0
    %3699 = vmatpush1.bf16.msra.mxu0 0
    %3700 = vmatprep.subr.bf16.mxu0 0
    %3701 = vmatpush1.bf16.msra.mxu0 0
    %3702 = vmatprep.subr.bf16.mxu0 0
    %3703 = vmatpush1.bf16.msra.mxu0 0
    %3704 = vmatprep.subr.bf16.mxu0 0
    %3705 = vmatpush1.bf16.msra.mxu0 0
    %3706 = vmatprep.subr.bf16.mxu0 0
    %3707 = vmatpush1.bf16.msra.mxu0 0
    %3708 = vmatprep.subr.bf16.mxu0 0
    %3709 = vmatpush1.bf16.msra.mxu0 0
    %3710 = vmatprep.subr.bf16.mxu0 0
    %3711 = vmatpush1.bf16.msra.mxu0 0
    %3712 = vmatprep.mubr.bf16.mxu0 0
    %3713 = vmatmul.mubr.bf16.gmra.mrb[0].mxu0 %v3678
    %v3714 = vpop.f32.mrb[0].mxu0
    %v3715 = vadd.f32 0.0, %v3714
    %v3716 = vpop.f32.mrb[0].mxu0
    %v3717 = vpop.f32.mrb[0].mxu0
    %v3718 = vpop.f32.mrb[0].mxu0
    %3719 = vdwg.mxu0
    %v3720 = vadd.f32 %v3285, %v3715
    %v3721 = vxor.u32 %v3720, 2147483648
    %v3722 = vmul.f32 %v3721, 1.442695
    %v3723 = vpow.pop %v3722
    %v3724 = vadd.f32 %v3723, 1.0
    %v3725 = vrcp.pop %v3724
    %v3726 = vmul.f32 1.0, %v3725
    %v3727 = vtanh.pop %v3720
    %v3728 = vmul.f32 %v3726, %v3665
    %3730 = vrot.lane.b32.xlu0 %v3727, 32
    %v3731 = vpop.permute.xlu0 %3730
    %v3733 = vmul.f32 %v3726, %v3731
    %3735 = vrot.lane.b32.xlu0 %v3733, 32
    %v3736 = vpop.permute.xlu0 %3735
    %v3738 = vadd.f32 %v3728, %v3736
    %v3739 = vtanh.pop %v3738
    %3741 = vrot.lane.b32.xlu0 %v3739, 32
    %v3742 = vpop.permute.xlu0 %3741
    %v3744 = vmul.f32 %v3726, %v3742
    %v3745 = vadd.f32 %v3672, %v3744
    %v3746 = vpack.c.bf16 %v3744, %v3744
    %3748 = vrot.lane.b32.xlu0 %v3746, 64
    %v3749 = vpop.permute.xlu0 %3748
    %v3751 = vsel %vm3218, %v3749, 0
    %3753 = vmatprep.subr.bf16.mxu0 0
    %3754 = vmatpush1.bf16.msra.mxu0 %v3308
    %3755 = vmatprep.subr.bf16.mxu0 0
    %3756 = vmatpush1.bf16.msra.mxu0 %v3309
    %3757 = vmatprep.subr.bf16.mxu0 0
    %3758 = vmatpush1.bf16.msra.mxu0 0
    %3759 = vmatprep.subr.bf16.mxu0 0
    %3760 = vmatpush1.bf16.msra.mxu0 0
    %3761 = vmatprep.subr.bf16.mxu0 0
    %3762 = vmatpush1.bf16.msra.mxu0 0
    %3763 = vmatprep.subr.bf16.mxu0 0
    %3764 = vmatpush1.bf16.msra.mxu0 0
    %3765 = vmatprep.subr.bf16.mxu0 0
    %3766 = vmatpush1.bf16.msra.mxu0 0
    %3767 = vmatprep.subr.bf16.mxu0 0
    %3768 = vmatpush1.bf16.msra.mxu0 0
    %3769 = vmatprep.subr.bf16.mxu0 0
    %3770 = vmatpush1.bf16.msra.mxu0 0
    %3771 = vmatprep.subr.bf16.mxu0 0
    %3772 = vmatpush1.bf16.msra.mxu0 0
    %3773 = vmatprep.subr.bf16.mxu0 0
    %3774 = vmatpush1.bf16.msra.mxu0 0
    %3775 = vmatprep.subr.bf16.mxu0 0
    %3776 = vmatpush1.bf16.msra.mxu0 0
    %3777 = vmatprep.subr.bf16.mxu0 0
    %3778 = vmatpush1.bf16.msra.mxu0 0
    %3779 = vmatprep.subr.bf16.mxu0 0
    %3780 = vmatpush1.bf16.msra.mxu0 0
    %3781 = vmatprep.subr.bf16.mxu0 0
    %3782 = vmatpush1.bf16.msra.mxu0 0
    %3783 = vmatprep.subr.bf16.mxu0 0
    %3784 = vmatpush1.bf16.msra.mxu0 0
    %3785 = vmatprep.mubr.bf16.mxu0 0
    %3786 = vmatmul.mubr.bf16.gmra.mrb[0].mxu0 %v3751
    %v3787 = vpop.f32.mrb[0].mxu0
    %v3788 = vadd.f32 0.0, %v3787
    %v3789 = vpop.f32.mrb[0].mxu0
    %v3790 = vpop.f32.mrb[0].mxu0
    %v3791 = vpop.f32.mrb[0].mxu0
    %3792 = vdwg.mxu0
    %v3793 = vadd.f32 %v3290, %v3788
    %v3794 = vxor.u32 %v3793, 2147483648
    %v3795 = vmul.f32 %v3794, 1.442695
    %v3796 = vpow.pop %v3795
    %v3797 = vadd.f32 %v3796, 1.0
    %v3798 = vrcp.pop %v3797
    %v3799 = vmul.f32 1.0, %v3798
    %v3800 = vtanh.pop %v3793
    %v3801 = vmul.f32 %v3799, %v3738
    %3803 = vrot.lane.b32.xlu0 %v3800, 32
    %v3804 = vpop.permute.xlu0 %3803
    %v3806 = vmul.f32 %v3799, %v3804
    %3808 = vrot.lane.b32.xlu0 %v3806, 32
    %v3809 = vpop.permute.xlu0 %3808
    %v3811 = vadd.f32 %v3801, %v3809
    %v3812 = vtanh.pop %v3811
    %3814 = vrot.lane.b32.xlu0 %v3812, 32
    %v3815 = vpop.permute.xlu0 %3814
    %v3817 = vmul.f32 %v3799, %v3815
    %v3818 = vadd.f32 %v3745, %v3817
    %v3819 = vpack.c.bf16 %v3817, %v3817
    %3821 = vrot.lane.b32.xlu0 %v3819, 64
    %v3822 = vpop.permute.xlu0 %3821
    %v3824 = vsel %vm3218, %v3822, 0
    %3826 = vmatprep.subr.bf16.mxu0 0
    %3827 = vmatpush1.bf16.msra.mxu0 %v3308
    %3828 = vmatprep.subr.bf16.mxu0 0
    %3829 = vmatpush1.bf16.msra.mxu0 %v3309
    %3830 = vmatprep.subr.bf16.mxu0 0
    %3831 = vmatpush1.bf16.msra.mxu0 0
    %3832 = vmatprep.subr.bf16.mxu0 0
    %3833 = vmatpush1.bf16.msra.mxu0 0
    %3834 = vmatprep.subr.bf16.mxu0 0
    %3835 = vmatpush1.bf16.msra.mxu0 0
    %3836 = vmatprep.subr.bf16.mxu0 0
    %3837 = vmatpush1.bf16.msra.mxu0 0
    %3838 = vmatprep.subr.bf16.mxu0 0
    %3839 = vmatpush1.bf16.msra.mxu0 0
    %3840 = vmatprep.subr.bf16.mxu0 0
    %3841 = vmatpush1.bf16.msra.mxu0 0
    %3842 = vmatprep.subr.bf16.mxu0 0
    %3843 = vmatpush1.bf16.msra.mxu0 0
    %3844 = vmatprep.subr.bf16.mxu0 0
    %3845 = vmatpush1.bf16.msra.mxu0 0
    %3846 = vmatprep.subr.bf16.mxu0 0
    %3847 = vmatpush1.bf16.msra.mxu0 0
    %3848 = vmatprep.subr.bf16.mxu0 0
    %3849 = vmatpush1.bf16.msra.mxu0 0
    %3850 = vmatprep.subr.bf16.mxu0 0
    %3851 = vmatpush1.bf16.msra.mxu0 0
    %3852 = vmatprep.subr.bf16.mxu0 0
    %3853 = vmatpush1.bf16.msra.mxu0 0
    %3854 = vmatprep.subr.bf16.mxu0 0
    %3855 = vmatpush1.bf16.msra.mxu0 0
    %3856 = vmatprep.subr.bf16.mxu0 0
    %3857 = vmatpush1.bf16.msra.mxu0 0
    %3858 = vmatprep.mubr.bf16.mxu0 0
    %3859 = vmatmul.mubr.bf16.gmra.mrb[0].mxu0 %v3824
    %v3860 = vpop.f32.mrb[0].mxu0
    %v3861 = vadd.f32 0.0, %v3860
    %v3862 = vpop.f32.mrb[0].mxu0
    %v3863 = vpop.f32.mrb[0].mxu0
    %v3864 = vpop.f32.mrb[0].mxu0
    %3865 = vdwg.mxu0
    %v3866 = vadd.f32 %v3293, %v3861
    %v3867 = vxor.u32 %v3866, 2147483648
    %v3868 = vmul.f32 %v3867, 1.442695
    %v3869 = vpow.pop %v3868
    %v3870 = vadd.f32 %v3869, 1.0
    %v3871 = vrcp.pop %v3870
    %v3872 = vmul.f32 1.0, %v3871
    %v3873 = vtanh.pop %v3866
    %v3874 = vmul.f32 %v3872, %v3811
    %3876 = vrot.lane.b32.xlu0 %v3873, 32
    %v3877 = vpop.permute.xlu0 %3876
    %v3879 = vmul.f32 %v3872, %v3877
    %3881 = vrot.lane.b32.xlu0 %v3879, 32
    %v3882 = vpop.permute.xlu0 %3881
    %v3884 = vadd.f32 %v3874, %v3882
    %v3885 = vtanh.pop %v3884
    %3887 = vrot.lane.b32.xlu0 %v3885, 32
    %v3888 = vpop.permute.xlu0 %3887
    %v3890 = vmul.f32 %v3872, %v3888
    %v3891 = vadd.f32 %v3818, %v3890
    %v3892 = vmul.f32 %v3891, 0.125
    %v3893 = vld [vmem:[%s5] sm:$0x1]
    %v3895 = vlaneseq
    %v3896 = vshrl.u32 %v3895, 7
    %v3897 = vsub.s32 0, %v3896
    %v3898 = vrot.slane %v3893, %v3897
    %3899 = vrot.lane.b32.xlu0 %v3898, 64
    %v3900 = vpop.permute.xlu0 %3899
    %v3902 = vmul.f32 %v3892, %v3900
    %3904 = vrot.lane.b32.xlu0 %v3902, 64
    %v3905 = vpop.permute.xlu0 %3904
    %v3907 = vsel %vm3218, %v3905, 0.0
    %3908 = vadd.xlane.f32.xlu0 %v3907
    %v3909 = vpop.xlane.xlu0 %3908
    %v3910 = vld [vmem:[#allocation4] sm:$0x1]
    %v3912 = vlaneseq
    %v3913 = vshrl.u32 %v3912, 7
    %v3914 = vsub.s32 0, %v3913
    %v3915 = vrot.slane %v3910, %v3914
    %v3917 = vadd.f32 %v3909, %v3915
    %v3918 = vxor.u32 %v3917, 2147483648
    %v3919 = vmul.f32 %v3918, 1.442695
    %v3920 = vpow.pop %v3919
    %v3921 = vadd.f32 %v3920, 1.0
    %v3922 = vrcp.pop %v3921
    %v3923 = vmul.f32 1.0, %v3922
    %vm3924 = vcmask 7168
    %3925 = vst.msk [vmem:[%s7] sm:$0xff] %vm3924, %v3923
    // Predicated region
    $region1950: #{tpu_custom_call.1} parent=1 // pred_check
      _
    $region1951: #{tpu_custom_call.1} parent=1 // pred_check_branch
      %3927 = sbr.rel (0) target = $region1953
    $region1952: #{tpu_custom_call.1} parent=1 // pred_region
      _
    $region1953: #{tpu_custom_call.1} parent=1 // pred_fallthru
      _
    // Predicated region
    $region1954: #{tpu_custom_call.1} parent=1 // pred_check
      _
    $region1955: #{tpu_custom_call.1} parent=1 // pred_check_branch
      %3929 = sbr.rel (0) target = $region1957
    $region1956: #{tpu_custom_call.1} parent=1 // pred_region
      _
    $region1957: #{tpu_custom_call.1} parent=1 // pred_fallthru
      _
    %3930 = vsyncpa [#allocation6], 1
  %3931 = vsyncmov [#allocation3]
  %s3932 = vpop.sfrf %3931
  %p3933 = scmp.eq.s32.totalorder %s3932, 0
  %p3934 = pneg %p3933
  %3936 = shalt.err (%p3934)
  %s3937 = scalar_lea.sflag [#allocation3], 1
  %3938 = vsyncmov %s3937
  %s3939 = vpop.sfrf %3938
  %p3940 = scmp.eq.s32.totalorder %s3939, 0
  %p3941 = pneg %p3940
  %3943 = shalt.err (%p3941)
  %s3944 = scalar_lea.sflag [#allocation3], 2
  %3945 = vsyncmov %s3944
  %s3946 = vpop.sfrf %3945
  %p3947 = scmp.eq.s32.totalorder %s3946, 0
  %p3948 = pneg %p3947
  %3950 = shalt.err (%p3948)
  %s3951 = scalar_lea.sflag [#allocation3], 3
  %3952 = vsyncmov %s3951
  %s3953 = vpop.sfrf %3952
  %p3954 = scmp.eq.s32.totalorder %s3953, 0
  %p3955 = pneg %p3954
  %3957 = shalt.err (%p3955)
  %s3958 = scalar_lea.sflag [#allocation3], 4
  %3959 = vsyncmov %s3958
  %s3960 = vpop.sfrf %3959
  %p3961 = scmp.eq.s32.totalorder %s3960, 0
  %p3962 = pneg %p3961
  %3964 = shalt.err (%p3962)
  %s3965 = scalar_lea.sflag [#allocation3], 5
  %3966 = vsyncmov %s3965
  %s3967 = vpop.sfrf %3966
  %p3968 = scmp.eq.s32.totalorder %s3967, 0
  %p3969 = pneg %p3968
  %3971 = shalt.err (%p3969)
  %s3972 = scalar_lea.sflag [#allocation3], 6
  %3973 = vsyncmov %s3972
  %s3974 = vpop.sfrf %3973
  %p3975 = scmp.eq.s32.totalorder %s3974, 0
  %p3976 = pneg %p3975
  %3978 = shalt.err (%p3976)
  %s3979 = scalar_lea.sflag [#allocation3], 7
  %3980 = vsyncmov %s3979
  %s3981 = vpop.sfrf %3980
  %p3982 = scmp.eq.s32.totalorder %s3981, 0
  %p3983 = pneg %p3982
  %3985 = shalt.err (%p3983)

</llo_original>
